<compile_context>
chip_gen: v5e
topology: v5e:2x2
jax: 0.10.0
libtpu: 0.0.40
codegen_flags: <defaults>
</compile_context>

<pallas_src>
import functools

import jax
import jax.numpy as jnp
from jax.experimental import pallas as pl
from jax.experimental.pallas import tpu as pltpu


def _round_up(x, m):
    return ((x + m - 1) // m) * m


# ---------------------------------------------------------------------------
# Kernel A: implicit-im2col conv + bias + masked per-channel sum / sum-of-sq.
#   fuse_taps=True : stack 27 shifted slices into VMEM scratch, 1 MXU matmul.
#   fuse_taps=False: 27 shifted-slice bf16 matmuls accumulated in f32.
# ---------------------------------------------------------------------------
def _conv_stats_kernel(xw_ref, w_ref, b_ref, mask_ref,
                       y_ref, s1_ref, s2_ref, *scratch,
                       tap_offsets, fuse_taps):
    # xw_ref:   (1, 1, Cin, TW) bf16  haloed input window for this (b, s) tile
    # w_ref:    (C, 27*Cin) or (27, C, Cin) bf16
    # b_ref:    (C, 1) f32 ; mask_ref: (1, TS) f32 (1.0 on valid columns)
    # y_ref:    (1, C, TS) f32 ; s1/s2_ref: (1, C, 1) f32 accumulated over s.
    C = y_ref.shape[1]
    TS = y_ref.shape[2]
    cin = xw_ref.shape[2]

    if fuse_taps:
        stk_ref = scratch[0]                     # (27*Cin, TS) bf16 scratch
        for t, off in enumerate(tap_offsets):    # aligned stores (cin % 16 == 0)
            stk_ref[t * cin:(t + 1) * cin, :] = xw_ref[0, 0, :, off:off + TS]
        y = jnp.dot(w_ref[...], stk_ref[...],
                    preferred_element_type=jnp.float32) + b_ref[...]
    else:
        off0 = tap_offsets[0]
        acc = jnp.dot(w_ref[0], xw_ref[0, 0, :, off0:off0 + TS],
                      preferred_element_type=jnp.float32)
        for t in range(1, len(tap_offsets)):     # unrolled: 26 more MXU matmuls
            off = tap_offsets[t]
            acc = acc + jnp.dot(w_ref[t], xw_ref[0, 0, :, off:off + TS],
                                preferred_element_type=jnp.float32)
        y = acc + b_ref[...]

    y_ref[0] = y                                 # (C, TS) lane-dense store

    ym = y * mask_ref[...]                       # zero halo / pad columns
    s1 = jnp.sum(ym, axis=1, keepdims=True)      # (C, 1)
    s2 = jnp.sum(ym * ym, axis=1, keepdims=True)

    @pl.when(pl.program_id(1) == 0)
    def _():
        s1_ref[0] = jnp.zeros((C, 1), jnp.float32)
        s2_ref[0] = jnp.zeros((C, 1), jnp.float32)

    s1_ref[0] = s1_ref[0] + s1
    s2_ref[0] = s2_ref[0] + s2


# ---------------------------------------------------------------------------
# Kernel B: GroupNorm finalize as a fused per-channel affine (scale/shift
# precomputed in XLA) + ReLU, lane dense.
# ---------------------------------------------------------------------------
def _gn_relu_kernel(y_ref, scale_ref, shift_ref, o_ref):
    o_ref[0] = jnp.maximum(y_ref[0] * scale_ref[0] + shift_ref[0],
                           0.0).astype(o_ref.dtype)


# ---------------------------------------------------------------------------
# Conv3d(3x3x3, padding=1) + GroupNorm + ReLU block (used twice).
# ---------------------------------------------------------------------------
def conv3d_gn_relu_block(x, w_taps, bias, gamma, beta, *, num_groups,
                         out_dtype=jnp.float32, eps=1e-5, ts_target=512):
    """x: (B, Cin, D, H, W); w_taps: (27, C, Cin) bf16 -> (B, C, D, H, W)."""
    B, Cin, D, H, W = x.shape
    T, C, Cin_w = w_taps.shape
    assert T == 27 and Cin_w == Cin and C % num_groups == 0

    Dp, Hp, Wp = D + 2, H + 2, W + 2
    HpWp = Hp * Wp
    s_needed = D * HpWp                       # columns containing all valid voxels
    max_off = 2 * HpWp + 2 * Wp + 2           # largest tap offset (flat index)
    # S-tile width: lane-aligned and large vs. the halo so duplication stays low.
    TS = _round_up(max(ts_target, 2 * max_off), 128)
    TS = min(TS, _round_up(s_needed, 128))
    Sq = _round_up(s_needed, TS)
    NS = Sq // TS
    TW = _round_up(TS + max_off, 128)         # haloed input window per S tile
    L = (NS - 1) * TS + TW                    # flat padded length windows read from

    tap_offsets = tuple(kd * HpWp + kh * Wp + kw
                        for kd in range(3) for kh in range(3) for kw in range(3))

    # Fused single-matmul path: requires Cin aligned to the bf16 sublane
    # packing (16) so im2col scratch stores are unmasked, and a bounded scratch.
    fuse_taps = (Cin % 16 == 0) and (27 * Cin * TS * 2 <= 8 * 1024 * 1024)

    # Zero-pad spatially (padding=1), flatten, extend, cast matmul operand bf16.
    xp = jnp.pad(x, ((0, 0), (0, 0), (1, 1), (1, 1), (1, 1)))
    xp = xp.reshape(B, Cin, Dp * HpWp)
    xp = jnp.pad(xp, ((0, 0), (0, 0), (0, L - Dp * HpWp))).astype(jnp.bfloat16)
    # Overlapping per-S-tile windows (halo duplication ~max_off/TS << 27x im2col).
    xw = jnp.stack([xp[:, :, s * TS:s * TS + TW] for s in range(NS)], axis=1)

    # Validity mask over the Sq computed columns (drops h/w halo + tail padding).
    q = jnp.arange(Sq)
    valid = (q < D * HpWp) & ((q % HpWp) // Wp < H) & (q % Wp < W)
    mask = valid.astype(jnp.float32).reshape(1, Sq)

    bias_col = bias.astype(jnp.float32).reshape(C, 1)

    if fuse_taps:
        # Column order = tap-major (t*Cin + ci), matching the stacked scratch rows.
        w_arg = jnp.transpose(w_taps, (1, 0, 2)).reshape(C, 27 * Cin)
        w_spec = pl.BlockSpec((C, 27 * Cin), lambda b, s: (0, 0))
        scratch_shapes = [pltpu.VMEM((27 * Cin, TS), jnp.bfloat16)]
    else:
        w_arg = w_taps
        w_spec = pl.BlockSpec((27, C, Cin), lambda b, s: (0, 0, 0))
        scratch_shapes = []

    kernel_a = functools.partial(_conv_stats_kernel,
                                 tap_offsets=tap_offsets, fuse_taps=fuse_taps)
    y_raw, s1, s2 = pl.pallas_call(
        kernel_a,
        out_shape=(
            jax.ShapeDtypeStruct((B, C, Sq), jnp.float32),
            jax.ShapeDtypeStruct((B, C, 1), jnp.float32),
            jax.ShapeDtypeStruct((B, C, 1), jnp.float32),
        ),
        grid_spec=pltpu.PrefetchScalarGridSpec(
            num_scalar_prefetch=0,
            grid=(B, NS),
            in_specs=[
                pl.BlockSpec((1, 1, Cin, TW), lambda b, s: (b, s, 0, 0)),
                w_spec,
                pl.BlockSpec((C, 1), lambda b, s: (0, 0)),
                pl.BlockSpec((1, TS), lambda b, s: (0, s)),
            ],
            out_specs=[
                pl.BlockSpec((1, C, TS), lambda b, s: (b, 0, s)),
                pl.BlockSpec((1, C, 1), lambda b, s: (b, 0, 0)),
                pl.BlockSpec((1, C, 1), lambda b, s: (b, 0, 0)),
            ],
            scratch_shapes=scratch_shapes,
        ),
        compiler_params=pltpu.CompilerParams(
            dimension_semantics=("parallel", "arbitrary")),
    )(xw, w_arg, bias_col, mask)

    # Tiny per-group statistics in XLA (channels within a group are contiguous),
    # then fold GN into a single per-(batch, channel) affine: y*scale + shift.
    cpg = C // num_groups
    cnt = jnp.float32(D * H * W * cpg)
    s1g = s1[:, :, 0].reshape(B, num_groups, cpg).sum(axis=2)
    s2g = s2[:, :, 0].reshape(B, num_groups, cpg).sum(axis=2)
    mean_g = s1g / cnt
    var_g = jnp.maximum(s2g / cnt - mean_g * mean_g, 0.0)     # clamp: no NaN rsqrt
    rstd_g = jax.lax.rsqrt(var_g + eps)
    mean_c = jnp.repeat(mean_g, cpg, axis=1)                  # (B, C)
    rstd_c = jnp.repeat(rstd_g, cpg, axis=1)
    gamma_f = gamma.astype(jnp.float32)[None, :]
    beta_f = beta.astype(jnp.float32)[None, :]
    scale_c = (rstd_c * gamma_f).reshape(B, C, 1)
    shift_c = (beta_f - mean_c * rstd_c * gamma_f).reshape(B, C, 1)

    out_flat = pl.pallas_call(
        _gn_relu_kernel,
        out_shape=jax.ShapeDtypeStruct((B, C, Sq), out_dtype),
        grid_spec=pltpu.PrefetchScalarGridSpec(
            num_scalar_prefetch=0,
            grid=(B, NS),
            in_specs=[
                pl.BlockSpec((1, C, TS), lambda b, s: (b, 0, s)),
                pl.BlockSpec((1, C, 1), lambda b, s: (b, 0, 0)),
                pl.BlockSpec((1, C, 1), lambda b, s: (b, 0, 0)),
            ],
            out_specs=pl.BlockSpec((1, C, TS), lambda b, s: (b, 0, s)),
        ),
        compiler_params=pltpu.CompilerParams(
            dimension_semantics=("parallel", "parallel")),
    )(y_raw, scale_c, shift_c)

    # Extract valid voxels: q = d*Hp*Wp + h*Wp + w for d<D, h<H, w<W.
    out = out_flat[:, :, :D * HpWp].reshape(B, C, D, Hp, Wp)[:, :, :, :H, :W]
    return out


# ---------------------------------------------------------------------------
# Weight preparation: branch fusion + tap-major layout.
# ---------------------------------------------------------------------------
def _expand_to_3x3x3(w):
    """Center a (Cout, Cin, kd, kh, kw) weight inside a zero 3x3x3 tap set."""
    Cout, Cin, kd, kh, kw = w.shape
    full = jnp.zeros((Cout, Cin, 3, 3, 3), w.dtype)
    d0, h0, w0 = (3 - kd) // 2, (3 - kh) // 2, (3 - kw) // 2
    return full.at[:, :, d0:d0 + kd, h0:h0 + kh, w0:w0 + kw].set(w)


def _weights_to_taps(w):
    """(Cout, Cin, 3, 3, 3) -> (27, Cout, Cin) bf16, tap index = kd*9+kh*3+kw."""
    Cout, Cin = w.shape[0], w.shape[1]
    return jnp.transpose(w, (2, 3, 4, 0, 1)).reshape(27, Cout, Cin).astype(jnp.bfloat16)


def dsconv_forward(x, params):
    """x: (B, Cin, D, H, W) float32 -> (B, Cout, D, H, W) float32."""
    # ---- fuse conv / ds_x / ds_y / ds_z into one C = 4*Cout convolution ----
    w_c, b_c, g_c, be_c = params["conv"]
    w_x, b_x, g_x, be_x = params["ds_x"]
    w_y, b_y, g_y, be_y = params["ds_y"]
    w_z, b_z, g_z, be_z = params["ds_z"]
    cout = w_c.shape[0]

    w_fused = jnp.concatenate(
        [w_c, _expand_to_3x3x3(w_x), _expand_to_3x3x3(w_y), _expand_to_3x3x3(w_z)],
        axis=0)                                               # (4*Cout, Cin, 3,3,3)
    wt_fused = _weights_to_taps(w_fused)
    b_fused = jnp.concatenate([b_c, b_x, b_y, b_z])
    g_fused = jnp.concatenate([g_c, g_x, g_y, g_z])
    be_fused = jnp.concatenate([be_c, be_x, be_y, be_z])

    # Per-branch GroupNorm(out_ch//4) == fused GN with 4*(out_ch//4) groups of
    # 4 contiguous channels (branch boundaries are multiples of 4).
    h1 = conv3d_gn_relu_block(
        x, wt_fused, b_fused, g_fused, be_fused,
        num_groups=4 * (cout // 4), out_dtype=jnp.bfloat16)   # (B, 4*Cout, D,H,W)

    # ---- out_conv: EncoderConv(4*out_ch -> out_ch) ----
    w_o, b_o, g_o, be_o = params["out_conv"]
    out = conv3d_gn_relu_block(
        h1, _weights_to_taps(w_o), b_o, g_o, be_o,
        num_groups=cout // 4, out_dtype=jnp.float32)
    return out


# ---------------------------------------------------------------------------
# Parameter construction (PyTorch-like init)
# ---------------------------------------------------------------------------
def make_conv_params(key, in_ch, out_ch, ksize):
    kw_, kb = jax.random.split(key)
    fan_in = in_ch * ksize[0] * ksize[1] * ksize[2]
    scale = 1.0 / jnp.sqrt(jnp.float32(fan_in))
    w = jax.random.uniform(kw_, (out_ch, in_ch) + ksize, jnp.float32,
                           minval=-scale, maxval=scale)
    b = jax.random.uniform(kb, (out_ch,), jnp.float32, minval=-scale, maxval=scale)
    gamma = jnp.ones((out_ch,), jnp.float32)   # PyTorch GroupNorm default
    beta = jnp.zeros((out_ch,), jnp.float32)
    return (w, b, gamma, beta)


def init_dsconv_params(key, in_ch, out_ch):
    assert out_ch % 4 == 0, "GroupNorm(out_ch // 4) requires out_ch % 4 == 0"
    k = jax.random.split(key, 5)
    return {
        "conv":     make_conv_params(k[0], in_ch, out_ch, (3, 3, 3)),
        "ds_x":     make_conv_params(k[1], in_ch, out_ch, (3, 1, 1)),
        "ds_y":     make_conv_params(k[2], in_ch, out_ch, (1, 3, 1)),
        "ds_z":     make_conv_params(k[3], in_ch, out_ch, (1, 1, 3)),
        "out_conv": make_conv_params(k[4], 4 * out_ch, out_ch, (3, 3, 3)),
    }


if __name__ == "__main__":
    B, Cin, Cout = 2, 4, 8
    D = H = W = 8

    key = jax.random.PRNGKey(0)
    k_x, k_p = jax.random.split(key)
    x = jax.random.normal(k_x, (B, Cin, D, H, W), jnp.float32)
    params = init_dsconv_params(k_p, Cin, Cout)

    out = jax.jit(dsconv_forward)(x, params)
    out = jax.block_until_ready(out)

    assert out.shape == (B, Cout, D, H, W), out.shape
    assert bool(jnp.all(jnp.isfinite(out)))
    assert bool(jnp.all(out >= 0.0))     # ends in ReLU
    assert bool(jnp.any(out > 0.0))
    print("KERNEL_OK")
</pallas_src>

<mosaic_0001>
module attributes {stable_mosaic.version = 11 : i64} {
  func.func @_conv_stats_kernel(%arg0: i32, %arg1: i32, %arg2: memref<1x1x4x768xbf16, #tpu.memory_space<vmem>>, %arg3: memref<27x32x4xbf16, #tpu.memory_space<vmem>>, %arg4: memref<32x1xf32, #tpu.memory_space<vmem>>, %arg5: memref<1x512xf32, #tpu.memory_space<vmem>>, %arg6: memref<1x32x512xf32, #tpu.memory_space<vmem>>, %arg7: memref<1x32x1xf32, #tpu.memory_space<vmem>>, %arg8: memref<1x32x1xf32, #tpu.memory_space<vmem>>) attributes {dimension_semantics = [#tpu.dimension_semantics<parallel>, #tpu.dimension_semantics<arbitrary>], iteration_bounds = array<i64: 2, 2>, scalar_prefetch = 0 : i64, scratch_operands = 0 : i64, tpu.core_type = #tpu.core_type<tc>, window_params = [{transform_indices = @transform_0, window_bounds = array<i64: 1, 1, 4, 768>}, {pipeline_mode = #tpu.pipeline_mode<synchronous>, transform_indices = @transform_1, window_bounds = array<i64: 27, 32, 4>}, {pipeline_mode = #tpu.pipeline_mode<synchronous>, transform_indices = @transform_2, window_bounds = array<i64: 32, 1>}, {transform_indices = @transform_3, window_bounds = array<i64: 1, 512>}, {transform_indices = @transform_4, window_bounds = array<i64: 1, 32, 512>}, {transform_indices = @transform_5, window_bounds = array<i64: 1, 32, 1>}, {transform_indices = @transform_6, window_bounds = array<i64: 1, 32, 1>}]} {
    %c0 = arith.constant 0 : index
    %c0_0 = arith.constant 0 : index
    %c0_1 = arith.constant 0 : index
    %0 = vector.load %arg3[%c0, %c0_0, %c0_1] : memref<27x32x4xbf16, #tpu.memory_space<vmem>>, vector<1x32x4xbf16>
    %1 = vector.shape_cast %0 : vector<1x32x4xbf16> to vector<32x4xbf16>
    %c0_2 = arith.constant 0 : index
    %c0_3 = arith.constant 0 : index
    %c0_4 = arith.constant 0 : index
    %c0_5 = arith.constant 0 : index
    %2 = vector.load %arg2[%c0_2, %c0_3, %c0_4, %c0_5] : memref<1x1x4x768xbf16, #tpu.memory_space<vmem>>, vector<1x1x4x512xbf16>
    %3 = vector.shape_cast %2 : vector<1x1x4x512xbf16> to vector<4x512xbf16>
    %cst = arith.constant dense<0.000000e+00> : vector<32x512xf32>
    %4 = tpu.matmul %1, %3, %cst {dimension_numbers = #tpu.dot_dimension_numbers<[1], [0], [0], [1], [0, 0, 1, 1], [], []>} : vector<32x4xbf16>, vector<4x512xbf16>, vector<32x512xf32> -> vector<32x512xf32>
    %c1 = arith.constant 1 : index
    %c0_6 = arith.constant 0 : index
    %c0_7 = arith.constant 0 : index
    %5 = vector.load %arg3[%c1, %c0_6, %c0_7] : memref<27x32x4xbf16, #tpu.memory_space<vmem>>, vector<1x32x4xbf16>
    %6 = vector.shape_cast %5 : vector<1x32x4xbf16> to vector<32x4xbf16>
    %c0_8 = arith.constant 0 : index
    %c0_9 = arith.constant 0 : index
    %c0_10 = arith.constant 0 : index
    %c1_11 = arith.constant 1 : index
    %7 = vector.load %arg2[%c0_8, %c0_9, %c0_10, %c1_11] : memref<1x1x4x768xbf16, #tpu.memory_space<vmem>>, vector<1x1x4x512xbf16>
    %8 = vector.shape_cast %7 : vector<1x1x4x512xbf16> to vector<4x512xbf16>
    %cst_12 = arith.constant dense<0.000000e+00> : vector<32x512xf32>
    %9 = tpu.matmul %6, %8, %cst_12 {dimension_numbers = #tpu.dot_dimension_numbers<[1], [0], [0], [1], [0, 0, 1, 1], [], []>} : vector<32x4xbf16>, vector<4x512xbf16>, vector<32x512xf32> -> vector<32x512xf32>
    %10 = arith.addf %4, %9 : vector<32x512xf32>
    %c2 = arith.constant 2 : index
    %c0_13 = arith.constant 0 : index
    %c0_14 = arith.constant 0 : index
    %11 = vector.load %arg3[%c2, %c0_13, %c0_14] : memref<27x32x4xbf16, #tpu.memory_space<vmem>>, vector<1x32x4xbf16>
    %12 = vector.shape_cast %11 : vector<1x32x4xbf16> to vector<32x4xbf16>
    %c0_15 = arith.constant 0 : index
    %c0_16 = arith.constant 0 : index
    %c0_17 = arith.constant 0 : index
    %c2_18 = arith.constant 2 : index
    %13 = vector.load %arg2[%c0_15, %c0_16, %c0_17, %c2_18] : memref<1x1x4x768xbf16, #tpu.memory_space<vmem>>, vector<1x1x4x512xbf16>
    %14 = vector.shape_cast %13 : vector<1x1x4x512xbf16> to vector<4x512xbf16>
    %cst_19 = arith.constant dense<0.000000e+00> : vector<32x512xf32>
    %15 = tpu.matmul %12, %14, %cst_19 {dimension_numbers = #tpu.dot_dimension_numbers<[1], [0], [0], [1], [0, 0, 1, 1], [], []>} : vector<32x4xbf16>, vector<4x512xbf16>, vector<32x512xf32> -> vector<32x512xf32>
    %16 = arith.addf %10, %15 : vector<32x512xf32>
    %c3 = arith.constant 3 : index
    %c0_20 = arith.constant 0 : index
    %c0_21 = arith.constant 0 : index
    %17 = vector.load %arg3[%c3, %c0_20, %c0_21] : memref<27x32x4xbf16, #tpu.memory_space<vmem>>, vector<1x32x4xbf16>
    %18 = vector.shape_cast %17 : vector<1x32x4xbf16> to vector<32x4xbf16>
    %c0_22 = arith.constant 0 : index
    %c0_23 = arith.constant 0 : index
    %c0_24 = arith.constant 0 : index
    %c10 = arith.constant 10 : index
    %19 = vector.load %arg2[%c0_22, %c0_23, %c0_24, %c10] : memref<1x1x4x768xbf16, #tpu.memory_space<vmem>>, vector<1x1x4x512xbf16>
    %20 = vector.shape_cast %19 : vector<1x1x4x512xbf16> to vector<4x512xbf16>
    %cst_25 = arith.constant dense<0.000000e+00> : vector<32x512xf32>
    %21 = tpu.matmul %18, %20, %cst_25 {dimension_numbers = #tpu.dot_dimension_numbers<[1], [0], [0], [1], [0, 0, 1, 1], [], []>} : vector<32x4xbf16>, vector<4x512xbf16>, vector<32x512xf32> -> vector<32x512xf32>
    %22 = arith.addf %16, %21 : vector<32x512xf32>
    %c4 = arith.constant 4 : index
    %c0_26 = arith.constant 0 : index
    %c0_27 = arith.constant 0 : index
    %23 = vector.load %arg3[%c4, %c0_26, %c0_27] : memref<27x32x4xbf16, #tpu.memory_space<vmem>>, vector<1x32x4xbf16>
    %24 = vector.shape_cast %23 : vector<1x32x4xbf16> to vector<32x4xbf16>
    %c0_28 = arith.constant 0 : index
    %c0_29 = arith.constant 0 : index
    %c0_30 = arith.constant 0 : index
    %c11 = arith.constant 11 : index
    %25 = vector.load %arg2[%c0_28, %c0_29, %c0_30, %c11] : memref<1x1x4x768xbf16, #tpu.memory_space<vmem>>, vector<1x1x4x512xbf16>
    %26 = vector.shape_cast %25 : vector<1x1x4x512xbf16> to vector<4x512xbf16>
    %cst_31 = arith.constant dense<0.000000e+00> : vector<32x512xf32>
    %27 = tpu.matmul %24, %26, %cst_31 {dimension_numbers = #tpu.dot_dimension_numbers<[1], [0], [0], [1], [0, 0, 1, 1], [], []>} : vector<32x4xbf16>, vector<4x512xbf16>, vector<32x512xf32> -> vector<32x512xf32>
    %28 = arith.addf %22, %27 : vector<32x512xf32>
    %c5 = arith.constant 5 : index
    %c0_32 = arith.constant 0 : index
    %c0_33 = arith.constant 0 : index
    %29 = vector.load %arg3[%c5, %c0_32, %c0_33] : memref<27x32x4xbf16, #tpu.memory_space<vmem>>, vector<1x32x4xbf16>
    %30 = vector.shape_cast %29 : vector<1x32x4xbf16> to vector<32x4xbf16>
    %c0_34 = arith.constant 0 : index
    %c0_35 = arith.constant 0 : index
    %c0_36 = arith.constant 0 : index
    %c12 = arith.constant 12 : index
    %31 = vector.load %arg2[%c0_34, %c0_35, %c0_36, %c12] : memref<1x1x4x768xbf16, #tpu.memory_space<vmem>>, vector<1x1x4x512xbf16>
    %32 = vector.shape_cast %31 : vector<1x1x4x512xbf16> to vector<4x512xbf16>
    %cst_37 = arith.constant dense<0.000000e+00> : vector<32x512xf32>
    %33 = tpu.matmul %30, %32, %cst_37 {dimension_numbers = #tpu.dot_dimension_numbers<[1], [0], [0], [1], [0, 0, 1, 1], [], []>} : vector<32x4xbf16>, vector<4x512xbf16>, vector<32x512xf32> -> vector<32x512xf32>
    %34 = arith.addf %28, %33 : vector<32x512xf32>
    %c6 = arith.constant 6 : index
    %c0_38 = arith.constant 0 : index
    %c0_39 = arith.constant 0 : index
    %35 = vector.load %arg3[%c6, %c0_38, %c0_39] : memref<27x32x4xbf16, #tpu.memory_space<vmem>>, vector<1x32x4xbf16>
    %36 = vector.shape_cast %35 : vector<1x32x4xbf16> to vector<32x4xbf16>
    %c0_40 = arith.constant 0 : index
    %c0_41 = arith.constant 0 : index
    %c0_42 = arith.constant 0 : index
    %c20 = arith.constant 20 : index
    %37 = vector.load %arg2[%c0_40, %c0_41, %c0_42, %c20] : memref<1x1x4x768xbf16, #tpu.memory_space<vmem>>, vector<1x1x4x512xbf16>
    %38 = vector.shape_cast %37 : vector<1x1x4x512xbf16> to vector<4x512xbf16>
    %cst_43 = arith.constant dense<0.000000e+00> : vector<32x512xf32>
    %39 = tpu.matmul %36, %38, %cst_43 {dimension_numbers = #tpu.dot_dimension_numbers<[1], [0], [0], [1], [0, 0, 1, 1], [], []>} : vector<32x4xbf16>, vector<4x512xbf16>, vector<32x512xf32> -> vector<32x512xf32>
    %40 = arith.addf %34, %39 : vector<32x512xf32>
    %c7 = arith.constant 7 : index
    %c0_44 = arith.constant 0 : index
    %c0_45 = arith.constant 0 : index
    %41 = vector.load %arg3[%c7, %c0_44, %c0_45] : memref<27x32x4xbf16, #tpu.memory_space<vmem>>, vector<1x32x4xbf16>
    %42 = vector.shape_cast %41 : vector<1x32x4xbf16> to vector<32x4xbf16>
    %c0_46 = arith.constant 0 : index
    %c0_47 = arith.constant 0 : index
    %c0_48 = arith.constant 0 : index
    %c21 = arith.constant 21 : index
    %43 = vector.load %arg2[%c0_46, %c0_47, %c0_48, %c21] : memref<1x1x4x768xbf16, #tpu.memory_space<vmem>>, vector<1x1x4x512xbf16>
    %44 = vector.shape_cast %43 : vector<1x1x4x512xbf16> to vector<4x512xbf16>
    %cst_49 = arith.constant dense<0.000000e+00> : vector<32x512xf32>
    %45 = tpu.matmul %42, %44, %cst_49 {dimension_numbers = #tpu.dot_dimension_numbers<[1], [0], [0], [1], [0, 0, 1, 1], [], []>} : vector<32x4xbf16>, vector<4x512xbf16>, vector<32x512xf32> -> vector<32x512xf32>
    %46 = arith.addf %40, %45 : vector<32x512xf32>
    %c8 = arith.constant 8 : index
    %c0_50 = arith.constant 0 : index
    %c0_51 = arith.constant 0 : index
    %47 = vector.load %arg3[%c8, %c0_50, %c0_51] : memref<27x32x4xbf16, #tpu.memory_space<vmem>>, vector<1x32x4xbf16>
    %48 = vector.shape_cast %47 : vector<1x32x4xbf16> to vector<32x4xbf16>
    %c0_52 = arith.constant 0 : index
    %c0_53 = arith.constant 0 : index
    %c0_54 = arith.constant 0 : index
    %c22 = arith.constant 22 : index
    %49 = vector.load %arg2[%c0_52, %c0_53, %c0_54, %c22] : memref<1x1x4x768xbf16, #tpu.memory_space<vmem>>, vector<1x1x4x512xbf16>
    %50 = vector.shape_cast %49 : vector<1x1x4x512xbf16> to vector<4x512xbf16>
    %cst_55 = arith.constant dense<0.000000e+00> : vector<32x512xf32>
    %51 = tpu.matmul %48, %50, %cst_55 {dimension_numbers = #tpu.dot_dimension_numbers<[1], [0], [0], [1], [0, 0, 1, 1], [], []>} : vector<32x4xbf16>, vector<4x512xbf16>, vector<32x512xf32> -> vector<32x512xf32>
    %52 = arith.addf %46, %51 : vector<32x512xf32>
    %c9 = arith.constant 9 : index
    %c0_56 = arith.constant 0 : index
    %c0_57 = arith.constant 0 : index
    %53 = vector.load %arg3[%c9, %c0_56, %c0_57] : memref<27x32x4xbf16, #tpu.memory_space<vmem>>, vector<1x32x4xbf16>
    %54 = vector.shape_cast %53 : vector<1x32x4xbf16> to vector<32x4xbf16>
    %c0_58 = arith.constant 0 : index
    %c0_59 = arith.constant 0 : index
    %c0_60 = arith.constant 0 : index
    %c100 = arith.constant 100 : index
    %55 = vector.load %arg2[%c0_58, %c0_59, %c0_60, %c100] : memref<1x1x4x768xbf16, #tpu.memory_space<vmem>>, vector<1x1x4x512xbf16>
    %56 = vector.shape_cast %55 : vector<1x1x4x512xbf16> to vector<4x512xbf16>
    %cst_61 = arith.constant dense<0.000000e+00> : vector<32x512xf32>
    %57 = tpu.matmul %54, %56, %cst_61 {dimension_numbers = #tpu.dot_dimension_numbers<[1], [0], [0], [1], [0, 0, 1, 1], [], []>} : vector<32x4xbf16>, vector<4x512xbf16>, vector<32x512xf32> -> vector<32x512xf32>
    %58 = arith.addf %52, %57 : vector<32x512xf32>
    %c10_62 = arith.constant 10 : index
    %c0_63 = arith.constant 0 : index
    %c0_64 = arith.constant 0 : index
    %59 = vector.load %arg3[%c10_62, %c0_63, %c0_64] : memref<27x32x4xbf16, #tpu.memory_space<vmem>>, vector<1x32x4xbf16>
    %60 = vector.shape_cast %59 : vector<1x32x4xbf16> to vector<32x4xbf16>
    %c0_65 = arith.constant 0 : index
    %c0_66 = arith.constant 0 : index
    %c0_67 = arith.constant 0 : index
    %c101 = arith.constant 101 : index
    %61 = vector.load %arg2[%c0_65, %c0_66, %c0_67, %c101] : memref<1x1x4x768xbf16, #tpu.memory_space<vmem>>, vector<1x1x4x512xbf16>
    %62 = vector.shape_cast %61 : vector<1x1x4x512xbf16> to vector<4x512xbf16>
    %cst_68 = arith.constant dense<0.000000e+00> : vector<32x512xf32>
    %63 = tpu.matmul %60, %62, %cst_68 {dimension_numbers = #tpu.dot_dimension_numbers<[1], [0], [0], [1], [0, 0, 1, 1], [], []>} : vector<32x4xbf16>, vector<4x512xbf16>, vector<32x512xf32> -> vector<32x512xf32>
    %64 = arith.addf %58, %63 : vector<32x512xf32>
    %c11_69 = arith.constant 11 : index
    %c0_70 = arith.constant 0 : index
    %c0_71 = arith.constant 0 : index
    %65 = vector.load %arg3[%c11_69, %c0_70, %c0_71] : memref<27x32x4xbf16, #tpu.memory_space<vmem>>, vector<1x32x4xbf16>
    %66 = vector.shape_cast %65 : vector<1x32x4xbf16> to vector<32x4xbf16>
    %c0_72 = arith.constant 0 : index
    %c0_73 = arith.constant 0 : index
    %c0_74 = arith.constant 0 : index
    %c102 = arith.constant 102 : index
    %67 = vector.load %arg2[%c0_72, %c0_73, %c0_74, %c102] : memref<1x1x4x768xbf16, #tpu.memory_space<vmem>>, vector<1x1x4x512xbf16>
    %68 = vector.shape_cast %67 : vector<1x1x4x512xbf16> to vector<4x512xbf16>
    %cst_75 = arith.constant dense<0.000000e+00> : vector<32x512xf32>
    %69 = tpu.matmul %66, %68, %cst_75 {dimension_numbers = #tpu.dot_dimension_numbers<[1], [0], [0], [1], [0, 0, 1, 1], [], []>} : vector<32x4xbf16>, vector<4x512xbf16>, vector<32x512xf32> -> vector<32x512xf32>
    %70 = arith.addf %64, %69 : vector<32x512xf32>
    %c12_76 = arith.constant 12 : index
    %c0_77 = arith.constant 0 : index
    %c0_78 = arith.constant 0 : index
    %71 = vector.load %arg3[%c12_76, %c0_77, %c0_78] : memref<27x32x4xbf16, #tpu.memory_space<vmem>>, vector<1x32x4xbf16>
    %72 = vector.shape_cast %71 : vector<1x32x4xbf16> to vector<32x4xbf16>
    %c0_79 = arith.constant 0 : index
    %c0_80 = arith.constant 0 : index
    %c0_81 = arith.constant 0 : index
    %c110 = arith.constant 110 : index
    %73 = vector.load %arg2[%c0_79, %c0_80, %c0_81, %c110] : memref<1x1x4x768xbf16, #tpu.memory_space<vmem>>, vector<1x1x4x512xbf16>
    %74 = vector.shape_cast %73 : vector<1x1x4x512xbf16> to vector<4x512xbf16>
    %cst_82 = arith.constant dense<0.000000e+00> : vector<32x512xf32>
    %75 = tpu.matmul %72, %74, %cst_82 {dimension_numbers = #tpu.dot_dimension_numbers<[1], [0], [0], [1], [0, 0, 1, 1], [], []>} : vector<32x4xbf16>, vector<4x512xbf16>, vector<32x512xf32> -> vector<32x512xf32>
    %76 = arith.addf %70, %75 : vector<32x512xf32>
    %c13 = arith.constant 13 : index
    %c0_83 = arith.constant 0 : index
    %c0_84 = arith.constant 0 : index
    %77 = vector.load %arg3[%c13, %c0_83, %c0_84] : memref<27x32x4xbf16, #tpu.memory_space<vmem>>, vector<1x32x4xbf16>
    %78 = vector.shape_cast %77 : vector<1x32x4xbf16> to vector<32x4xbf16>
    %c0_85 = arith.constant 0 : index
    %c0_86 = arith.constant 0 : index
    %c0_87 = arith.constant 0 : index
    %c111 = arith.constant 111 : index
    %79 = vector.load %arg2[%c0_85, %c0_86, %c0_87, %c111] : memref<1x1x4x768xbf16, #tpu.memory_space<vmem>>, vector<1x1x4x512xbf16>
    %80 = vector.shape_cast %79 : vector<1x1x4x512xbf16> to vector<4x512xbf16>
    %cst_88 = arith.constant dense<0.000000e+00> : vector<32x512xf32>
    %81 = tpu.matmul %78, %80, %cst_88 {dimension_numbers = #tpu.dot_dimension_numbers<[1], [0], [0], [1], [0, 0, 1, 1], [], []>} : vector<32x4xbf16>, vector<4x512xbf16>, vector<32x512xf32> -> vector<32x512xf32>
    %82 = arith.addf %76, %81 : vector<32x512xf32>
    %c14 = arith.constant 14 : index
    %c0_89 = arith.constant 0 : index
    %c0_90 = arith.constant 0 : index
    %83 = vector.load %arg3[%c14, %c0_89, %c0_90] : memref<27x32x4xbf16, #tpu.memory_space<vmem>>, vector<1x32x4xbf16>
    %84 = vector.shape_cast %83 : vector<1x32x4xbf16> to vector<32x4xbf16>
    %c0_91 = arith.constant 0 : index
    %c0_92 = arith.constant 0 : index
    %c0_93 = arith.constant 0 : index
    %c112 = arith.constant 112 : index
    %85 = vector.load %arg2[%c0_91, %c0_92, %c0_93, %c112] : memref<1x1x4x768xbf16, #tpu.memory_space<vmem>>, vector<1x1x4x512xbf16>
    %86 = vector.shape_cast %85 : vector<1x1x4x512xbf16> to vector<4x512xbf16>
    %cst_94 = arith.constant dense<0.000000e+00> : vector<32x512xf32>
    %87 = tpu.matmul %84, %86, %cst_94 {dimension_numbers = #tpu.dot_dimension_numbers<[1], [0], [0], [1], [0, 0, 1, 1], [], []>} : vector<32x4xbf16>, vector<4x512xbf16>, vector<32x512xf32> -> vector<32x512xf32>
    %88 = arith.addf %82, %87 : vector<32x512xf32>
    %c15 = arith.constant 15 : index
    %c0_95 = arith.constant 0 : index
    %c0_96 = arith.constant 0 : index
    %89 = vector.load %arg3[%c15, %c0_95, %c0_96] : memref<27x32x4xbf16, #tpu.memory_space<vmem>>, vector<1x32x4xbf16>
    %90 = vector.shape_cast %89 : vector<1x32x4xbf16> to vector<32x4xbf16>
    %c0_97 = arith.constant 0 : index
    %c0_98 = arith.constant 0 : index
    %c0_99 = arith.constant 0 : index
    %c120 = arith.constant 120 : index
    %91 = vector.load %arg2[%c0_97, %c0_98, %c0_99, %c120] : memref<1x1x4x768xbf16, #tpu.memory_space<vmem>>, vector<1x1x4x512xbf16>
    %92 = vector.shape_cast %91 : vector<1x1x4x512xbf16> to vector<4x512xbf16>
    %cst_100 = arith.constant dense<0.000000e+00> : vector<32x512xf32>
    %93 = tpu.matmul %90, %92, %cst_100 {dimension_numbers = #tpu.dot_dimension_numbers<[1], [0], [0], [1], [0, 0, 1, 1], [], []>} : vector<32x4xbf16>, vector<4x512xbf16>, vector<32x512xf32> -> vector<32x512xf32>
    %94 = arith.addf %88, %93 : vector<32x512xf32>
    %c16 = arith.constant 16 : index
    %c0_101 = arith.constant 0 : index
    %c0_102 = arith.constant 0 : index
    %95 = vector.load %arg3[%c16, %c0_101, %c0_102] : memref<27x32x4xbf16, #tpu.memory_space<vmem>>, vector<1x32x4xbf16>
    %96 = vector.shape_cast %95 : vector<1x32x4xbf16> to vector<32x4xbf16>
    %c0_103 = arith.constant 0 : index
    %c0_104 = arith.constant 0 : index
    %c0_105 = arith.constant 0 : index
    %c121 = arith.constant 121 : index
    %97 = vector.load %arg2[%c0_103, %c0_104, %c0_105, %c121] : memref<1x1x4x768xbf16, #tpu.memory_space<vmem>>, vector<1x1x4x512xbf16>
    %98 = vector.shape_cast %97 : vector<1x1x4x512xbf16> to vector<4x512xbf16>
    %cst_106 = arith.constant dense<0.000000e+00> : vector<32x512xf32>
    %99 = tpu.matmul %96, %98, %cst_106 {dimension_numbers = #tpu.dot_dimension_numbers<[1], [0], [0], [1], [0, 0, 1, 1], [], []>} : vector<32x4xbf16>, vector<4x512xbf16>, vector<32x512xf32> -> vector<32x512xf32>
    %100 = arith.addf %94, %99 : vector<32x512xf32>
    %c17 = arith.constant 17 : index
    %c0_107 = arith.constant 0 : index
    %c0_108 = arith.constant 0 : index
    %101 = vector.load %arg3[%c17, %c0_107, %c0_108] : memref<27x32x4xbf16, #tpu.memory_space<vmem>>, vector<1x32x4xbf16>
    %102 = vector.shape_cast %101 : vector<1x32x4xbf16> to vector<32x4xbf16>
    %c0_109 = arith.constant 0 : index
    %c0_110 = arith.constant 0 : index
    %c0_111 = arith.constant 0 : index
    %c122 = arith.constant 122 : index
    %103 = vector.load %arg2[%c0_109, %c0_110, %c0_111, %c122] : memref<1x1x4x768xbf16, #tpu.memory_space<vmem>>, vector<1x1x4x512xbf16>
    %104 = vector.shape_cast %103 : vector<1x1x4x512xbf16> to vector<4x512xbf16>
    %cst_112 = arith.constant dense<0.000000e+00> : vector<32x512xf32>
    %105 = tpu.matmul %102, %104, %cst_112 {dimension_numbers = #tpu.dot_dimension_numbers<[1], [0], [0], [1], [0, 0, 1, 1], [], []>} : vector<32x4xbf16>, vector<4x512xbf16>, vector<32x512xf32> -> vector<32x512xf32>
    %106 = arith.addf %100, %105 : vector<32x512xf32>
    %c18 = arith.constant 18 : index
    %c0_113 = arith.constant 0 : index
    %c0_114 = arith.constant 0 : index
    %107 = vector.load %arg3[%c18, %c0_113, %c0_114] : memref<27x32x4xbf16, #tpu.memory_space<vmem>>, vector<1x32x4xbf16>
    %108 = vector.shape_cast %107 : vector<1x32x4xbf16> to vector<32x4xbf16>
    %c0_115 = arith.constant 0 : index
    %c0_116 = arith.constant 0 : index
    %c0_117 = arith.constant 0 : index
    %c200 = arith.constant 200 : index
    %109 = vector.load %arg2[%c0_115, %c0_116, %c0_117, %c200] : memref<1x1x4x768xbf16, #tpu.memory_space<vmem>>, vector<1x1x4x512xbf16>
    %110 = vector.shape_cast %109 : vector<1x1x4x512xbf16> to vector<4x512xbf16>
    %cst_118 = arith.constant dense<0.000000e+00> : vector<32x512xf32>
    %111 = tpu.matmul %108, %110, %cst_118 {dimension_numbers = #tpu.dot_dimension_numbers<[1], [0], [0], [1], [0, 0, 1, 1], [], []>} : vector<32x4xbf16>, vector<4x512xbf16>, vector<32x512xf32> -> vector<32x512xf32>
    %112 = arith.addf %106, %111 : vector<32x512xf32>
    %c19 = arith.constant 19 : index
    %c0_119 = arith.constant 0 : index
    %c0_120 = arith.constant 0 : index
    %113 = vector.load %arg3[%c19, %c0_119, %c0_120] : memref<27x32x4xbf16, #tpu.memory_space<vmem>>, vector<1x32x4xbf16>
    %114 = vector.shape_cast %113 : vector<1x32x4xbf16> to vector<32x4xbf16>
    %c0_121 = arith.constant 0 : index
    %c0_122 = arith.constant 0 : index
    %c0_123 = arith.constant 0 : index
    %c201 = arith.constant 201 : index
    %115 = vector.load %arg2[%c0_121, %c0_122, %c0_123, %c201] : memref<1x1x4x768xbf16, #tpu.memory_space<vmem>>, vector<1x1x4x512xbf16>
    %116 = vector.shape_cast %115 : vector<1x1x4x512xbf16> to vector<4x512xbf16>
    %cst_124 = arith.constant dense<0.000000e+00> : vector<32x512xf32>
    %117 = tpu.matmul %114, %116, %cst_124 {dimension_numbers = #tpu.dot_dimension_numbers<[1], [0], [0], [1], [0, 0, 1, 1], [], []>} : vector<32x4xbf16>, vector<4x512xbf16>, vector<32x512xf32> -> vector<32x512xf32>
    %118 = arith.addf %112, %117 : vector<32x512xf32>
    %c20_125 = arith.constant 20 : index
    %c0_126 = arith.constant 0 : index
    %c0_127 = arith.constant 0 : index
    %119 = vector.load %arg3[%c20_125, %c0_126, %c0_127] : memref<27x32x4xbf16, #tpu.memory_space<vmem>>, vector<1x32x4xbf16>
    %120 = vector.shape_cast %119 : vector<1x32x4xbf16> to vector<32x4xbf16>
    %c0_128 = arith.constant 0 : index
    %c0_129 = arith.constant 0 : index
    %c0_130 = arith.constant 0 : index
    %c202 = arith.constant 202 : index
    %121 = vector.load %arg2[%c0_128, %c0_129, %c0_130, %c202] : memref<1x1x4x768xbf16, #tpu.memory_space<vmem>>, vector<1x1x4x512xbf16>
    %122 = vector.shape_cast %121 : vector<1x1x4x512xbf16> to vector<4x512xbf16>
    %cst_131 = arith.constant dense<0.000000e+00> : vector<32x512xf32>
    %123 = tpu.matmul %120, %122, %cst_131 {dimension_numbers = #tpu.dot_dimension_numbers<[1], [0], [0], [1], [0, 0, 1, 1], [], []>} : vector<32x4xbf16>, vector<4x512xbf16>, vector<32x512xf32> -> vector<32x512xf32>
    %124 = arith.addf %118, %123 : vector<32x512xf32>
    %c21_132 = arith.constant 21 : index
    %c0_133 = arith.constant 0 : index
    %c0_134 = arith.constant 0 : index
    %125 = vector.load %arg3[%c21_132, %c0_133, %c0_134] : memref<27x32x4xbf16, #tpu.memory_space<vmem>>, vector<1x32x4xbf16>
    %126 = vector.shape_cast %125 : vector<1x32x4xbf16> to vector<32x4xbf16>
    %c0_135 = arith.constant 0 : index
    %c0_136 = arith.constant 0 : index
    %c0_137 = arith.constant 0 : index
    %c210 = arith.constant 210 : index
    %127 = vector.load %arg2[%c0_135, %c0_136, %c0_137, %c210] : memref<1x1x4x768xbf16, #tpu.memory_space<vmem>>, vector<1x1x4x512xbf16>
    %128 = vector.shape_cast %127 : vector<1x1x4x512xbf16> to vector<4x512xbf16>
    %cst_138 = arith.constant dense<0.000000e+00> : vector<32x512xf32>
    %129 = tpu.matmul %126, %128, %cst_138 {dimension_numbers = #tpu.dot_dimension_numbers<[1], [0], [0], [1], [0, 0, 1, 1], [], []>} : vector<32x4xbf16>, vector<4x512xbf16>, vector<32x512xf32> -> vector<32x512xf32>
    %130 = arith.addf %124, %129 : vector<32x512xf32>
    %c22_139 = arith.constant 22 : index
    %c0_140 = arith.constant 0 : index
    %c0_141 = arith.constant 0 : index
    %131 = vector.load %arg3[%c22_139, %c0_140, %c0_141] : memref<27x32x4xbf16, #tpu.memory_space<vmem>>, vector<1x32x4xbf16>
    %132 = vector.shape_cast %131 : vector<1x32x4xbf16> to vector<32x4xbf16>
    %c0_142 = arith.constant 0 : index
    %c0_143 = arith.constant 0 : index
    %c0_144 = arith.constant 0 : index
    %c211 = arith.constant 211 : index
    %133 = vector.load %arg2[%c0_142, %c0_143, %c0_144, %c211] : memref<1x1x4x768xbf16, #tpu.memory_space<vmem>>, vector<1x1x4x512xbf16>
    %134 = vector.shape_cast %133 : vector<1x1x4x512xbf16> to vector<4x512xbf16>
    %cst_145 = arith.constant dense<0.000000e+00> : vector<32x512xf32>
    %135 = tpu.matmul %132, %134, %cst_145 {dimension_numbers = #tpu.dot_dimension_numbers<[1], [0], [0], [1], [0, 0, 1, 1], [], []>} : vector<32x4xbf16>, vector<4x512xbf16>, vector<32x512xf32> -> vector<32x512xf32>
    %136 = arith.addf %130, %135 : vector<32x512xf32>
    %c23 = arith.constant 23 : index
    %c0_146 = arith.constant 0 : index
    %c0_147 = arith.constant 0 : index
    %137 = vector.load %arg3[%c23, %c0_146, %c0_147] : memref<27x32x4xbf16, #tpu.memory_space<vmem>>, vector<1x32x4xbf16>
    %138 = vector.shape_cast %137 : vector<1x32x4xbf16> to vector<32x4xbf16>
    %c0_148 = arith.constant 0 : index
    %c0_149 = arith.constant 0 : index
    %c0_150 = arith.constant 0 : index
    %c212 = arith.constant 212 : index
    %139 = vector.load %arg2[%c0_148, %c0_149, %c0_150, %c212] : memref<1x1x4x768xbf16, #tpu.memory_space<vmem>>, vector<1x1x4x512xbf16>
    %140 = vector.shape_cast %139 : vector<1x1x4x512xbf16> to vector<4x512xbf16>
    %cst_151 = arith.constant dense<0.000000e+00> : vector<32x512xf32>
    %141 = tpu.matmul %138, %140, %cst_151 {dimension_numbers = #tpu.dot_dimension_numbers<[1], [0], [0], [1], [0, 0, 1, 1], [], []>} : vector<32x4xbf16>, vector<4x512xbf16>, vector<32x512xf32> -> vector<32x512xf32>
    %142 = arith.addf %136, %141 : vector<32x512xf32>
    %c24 = arith.constant 24 : index
    %c0_152 = arith.constant 0 : index
    %c0_153 = arith.constant 0 : index
    %143 = vector.load %arg3[%c24, %c0_152, %c0_153] : memref<27x32x4xbf16, #tpu.memory_space<vmem>>, vector<1x32x4xbf16>
    %144 = vector.shape_cast %143 : vector<1x32x4xbf16> to vector<32x4xbf16>
    %c0_154 = arith.constant 0 : index
    %c0_155 = arith.constant 0 : index
    %c0_156 = arith.constant 0 : index
    %c220 = arith.constant 220 : index
    %145 = vector.load %arg2[%c0_154, %c0_155, %c0_156, %c220] : memref<1x1x4x768xbf16, #tpu.memory_space<vmem>>, vector<1x1x4x512xbf16>
    %146 = vector.shape_cast %145 : vector<1x1x4x512xbf16> to vector<4x512xbf16>
    %cst_157 = arith.constant dense<0.000000e+00> : vector<32x512xf32>
    %147 = tpu.matmul %144, %146, %cst_157 {dimension_numbers = #tpu.dot_dimension_numbers<[1], [0], [0], [1], [0, 0, 1, 1], [], []>} : vector<32x4xbf16>, vector<4x512xbf16>, vector<32x512xf32> -> vector<32x512xf32>
    %148 = arith.addf %142, %147 : vector<32x512xf32>
    %c25 = arith.constant 25 : index
    %c0_158 = arith.constant 0 : index
    %c0_159 = arith.constant 0 : index
    %149 = vector.load %arg3[%c25, %c0_158, %c0_159] : memref<27x32x4xbf16, #tpu.memory_space<vmem>>, vector<1x32x4xbf16>
    %150 = vector.shape_cast %149 : vector<1x32x4xbf16> to vector<32x4xbf16>
    %c0_160 = arith.constant 0 : index
    %c0_161 = arith.constant 0 : index
    %c0_162 = arith.constant 0 : index
    %c221 = arith.constant 221 : index
    %151 = vector.load %arg2[%c0_160, %c0_161, %c0_162, %c221] : memref<1x1x4x768xbf16, #tpu.memory_space<vmem>>, vector<1x1x4x512xbf16>
    %152 = vector.shape_cast %151 : vector<1x1x4x512xbf16> to vector<4x512xbf16>
    %cst_163 = arith.constant dense<0.000000e+00> : vector<32x512xf32>
    %153 = tpu.matmul %150, %152, %cst_163 {dimension_numbers = #tpu.dot_dimension_numbers<[1], [0], [0], [1], [0, 0, 1, 1], [], []>} : vector<32x4xbf16>, vector<4x512xbf16>, vector<32x512xf32> -> vector<32x512xf32>
    %154 = arith.addf %148, %153 : vector<32x512xf32>
    %c26 = arith.constant 26 : index
    %c0_164 = arith.constant 0 : index
    %c0_165 = arith.constant 0 : index
    %155 = vector.load %arg3[%c26, %c0_164, %c0_165] : memref<27x32x4xbf16, #tpu.memory_space<vmem>>, vector<1x32x4xbf16>
    %156 = vector.shape_cast %155 : vector<1x32x4xbf16> to vector<32x4xbf16>
    %c0_166 = arith.constant 0 : index
    %c0_167 = arith.constant 0 : index
    %c0_168 = arith.constant 0 : index
    %c222 = arith.constant 222 : index
    %157 = vector.load %arg2[%c0_166, %c0_167, %c0_168, %c222] : memref<1x1x4x768xbf16, #tpu.memory_space<vmem>>, vector<1x1x4x512xbf16>
    %158 = vector.shape_cast %157 : vector<1x1x4x512xbf16> to vector<4x512xbf16>
    %cst_169 = arith.constant dense<0.000000e+00> : vector<32x512xf32>
    %159 = tpu.matmul %156, %158, %cst_169 {dimension_numbers = #tpu.dot_dimension_numbers<[1], [0], [0], [1], [0, 0, 1, 1], [], []>} : vector<32x4xbf16>, vector<4x512xbf16>, vector<32x512xf32> -> vector<32x512xf32>
    %160 = arith.addf %154, %159 : vector<32x512xf32>
    %c0_170 = arith.constant 0 : index
    %c0_171 = arith.constant 0 : index
    %161 = vector.load %arg4[%c0_170, %c0_171] : memref<32x1xf32, #tpu.memory_space<vmem>>, vector<32x1xf32>
    %162 = vector.broadcast %161 : vector<32x1xf32> to vector<32x512xf32>
    %163 = arith.addf %160, %162 : vector<32x512xf32>
    %c0_172 = arith.constant 0 : index
    %c0_173 = arith.constant 0 : index
    %c0_174 = arith.constant 0 : index
    %164 = vector.load %arg6[%c0_172, %c0_173, %c0_174] : memref<1x32x512xf32, #tpu.memory_space<vmem>>, vector<1x32x512xf32>
    %165 = vector.shape_cast %164 : vector<1x32x512xf32> to vector<32x512xf32>
    %166 = vector.shape_cast %163 : vector<32x512xf32> to vector<1x32x512xf32>
    tpu.vector_store %arg6[%c0_172, %c0_173, %c0_174], %166 {strides = array<i32>} : memref<1x32x512xf32, #tpu.memory_space<vmem>>, vector<1x32x512xf32>,
    %c0_175 = arith.constant 0 : index
    %c0_176 = arith.constant 0 : index
    %167 = vector.load %arg5[%c0_175, %c0_176] : memref<1x512xf32, #tpu.memory_space<vmem>>, vector<1x512xf32>
    %168 = vector.broadcast %167 : vector<1x512xf32> to vector<32x512xf32>
    %169 = arith.mulf %163, %168 : vector<32x512xf32>
    %cst_177 = arith.constant dense<0.000000e+00> : vector<32xf32>
    %170 = vector.multi_reduction <add>, %169, %cst_177 [1] : vector<32x512xf32> to vector<32xf32>
    %171 = vector.shape_cast %170 : vector<32xf32> to vector<32x1xf32>
    %172 = arith.mulf %169, %169 : vector<32x512xf32>
    %cst_178 = arith.constant dense<0.000000e+00> : vector<32xf32>
    %173 = vector.multi_reduction <add>, %172, %cst_178 [1] : vector<32x512xf32> to vector<32xf32>
    %174 = vector.shape_cast %173 : vector<32xf32> to vector<32x1xf32>
    %c0_i32 = arith.constant 0 : i32
    %175 = arith.cmpi eq, %arg1, %c0_i32 : i32
    %176 = arith.extui %175 : i1 to i32
    %c0_i32_179 = arith.constant 0 : i32
    %177 = arith.cmpi ne, %176, %c0_i32_179 : i32
    scf.if %177 {
      %cst_192 = arith.constant 0.000000e+00 : f32
      %190 = vector.broadcast %cst_192 : f32 to vector<32x1xf32>
      %c0_193 = arith.constant 0 : index
      %c0_194 = arith.constant 0 : index
      %c0_195 = arith.constant 0 : index
      %191 = vector.load %arg7[%c0_193, %c0_194, %c0_195] : memref<1x32x1xf32, #tpu.memory_space<vmem>>, vector<1x32x1xf32>
      %192 = vector.shape_cast %191 : vector<1x32x1xf32> to vector<32x1xf32>
      %193 = vector.shape_cast %190 : vector<32x1xf32> to vector<1x32x1xf32>
      tpu.vector_store %arg7[%c0_193, %c0_194, %c0_195], %193 {strides = array<i32>} : memref<1x32x1xf32, #tpu.memory_space<vmem>>, vector<1x32x1xf32>,
      %cst_196 = arith.constant 0.000000e+00 : f32
      %194 = vector.broadcast %cst_196 : f32 to vector<32x1xf32>
      %c0_197 = arith.constant 0 : index
      %c0_198 = arith.constant 0 : index
      %c0_199 = arith.constant 0 : index
      %195 = vector.load %arg8[%c0_197, %c0_198, %c0_199] : memref<1x32x1xf32, #tpu.memory_space<vmem>>, vector<1x32x1xf32>
      %196 = vector.shape_cast %195 : vector<1x32x1xf32> to vector<32x1xf32>
      %197 = vector.shape_cast %194 : vector<32x1xf32> to vector<1x32x1xf32>
      tpu.vector_store %arg8[%c0_197, %c0_198, %c0_199], %197 {strides = array<i32>} : memref<1x32x1xf32, #tpu.memory_space<vmem>>, vector<1x32x1xf32>,
    } else {
    }
    %c0_180 = arith.constant 0 : index
    %c0_181 = arith.constant 0 : index
    %c0_182 = arith.constant 0 : index
    %178 = vector.load %arg7[%c0_180, %c0_181, %c0_182] : memref<1x32x1xf32, #tpu.memory_space<vmem>>, vector<1x32x1xf32>
    %179 = vector.shape_cast %178 : vector<1x32x1xf32> to vector<32x1xf32>
    %180 = arith.addf %179, %171 : vector<32x1xf32>
    %c0_183 = arith.constant 0 : index
    %c0_184 = arith.constant 0 : index
    %c0_185 = arith.constant 0 : index
    %181 = vector.load %arg7[%c0_183, %c0_184, %c0_185] : memref<1x32x1xf32, #tpu.memory_space<vmem>>, vector<1x32x1xf32>
    %182 = vector.shape_cast %181 : vector<1x32x1xf32> to vector<32x1xf32>
    %183 = vector.shape_cast %180 : vector<32x1xf32> to vector<1x32x1xf32>
    tpu.vector_store %arg7[%c0_183, %c0_184, %c0_185], %183 {strides = array<i32>} : memref<1x32x1xf32, #tpu.memory_space<vmem>>, vector<1x32x1xf32>,
    %c0_186 = arith.constant 0 : index
    %c0_187 = arith.constant 0 : index
    %c0_188 = arith.constant 0 : index
    %184 = vector.load %arg8[%c0_186, %c0_187, %c0_188] : memref<1x32x1xf32, #tpu.memory_space<vmem>>, vector<1x32x1xf32>
    %185 = vector.shape_cast %184 : vector<1x32x1xf32> to vector<32x1xf32>
    %186 = arith.addf %185, %174 : vector<32x1xf32>
    %c0_189 = arith.constant 0 : index
    %c0_190 = arith.constant 0 : index
    %c0_191 = arith.constant 0 : index
    %187 = vector.load %arg8[%c0_189, %c0_190, %c0_191] : memref<1x32x1xf32, #tpu.memory_space<vmem>>, vector<1x32x1xf32>
    %188 = vector.shape_cast %187 : vector<1x32x1xf32> to vector<32x1xf32>
    %189 = vector.shape_cast %186 : vector<32x1xf32> to vector<1x32x1xf32>
    tpu.vector_store %arg8[%c0_189, %c0_190, %c0_191], %189 {strides = array<i32>} : memref<1x32x1xf32, #tpu.memory_space<vmem>>, vector<1x32x1xf32>,
    return
  }
  func.func @transform_0(%arg0: i32, %arg1: i32) -> (i32, i32, i32, i32) {
    %c0_i32 = arith.constant 0 : i32
    %c0_i32_0 = arith.constant 0 : i32
    %c0_i32_1 = arith.constant 0 : i32
    return %arg0, %arg1, %c0_i32, %c0_i32_0 : i32, i32, i32, i32
  }
  func.func @transform_1(%arg0: i32, %arg1: i32) -> (i32, i32, i32) {
    %c0_i32 = arith.constant 0 : i32
    %c0_i32_0 = arith.constant 0 : i32
    %c0_i32_1 = arith.constant 0 : i32
    %c0_i32_2 = arith.constant 0 : i32
    return %c0_i32, %c0_i32_0, %c0_i32_1 : i32, i32, i32
  }
  func.func @transform_2(%arg0: i32, %arg1: i32) -> (i32, i32) {
    %c0_i32 = arith.constant 0 : i32
    %c0_i32_0 = arith.constant 0 : i32
    %c0_i32_1 = arith.constant 0 : i32
    return %c0_i32, %c0_i32_0 : i32, i32
  }
  func.func @transform_3(%arg0: i32, %arg1: i32) -> (i32, i32) {
    %c0_i32 = arith.constant 0 : i32
    %c0_i32_0 = arith.constant 0 : i32
    return %c0_i32, %arg1 : i32, i32
  }
  func.func @transform_4(%arg0: i32, %arg1: i32) -> (i32, i32, i32) {
    %c0_i32 = arith.constant 0 : i32
    %c0_i32_0 = arith.constant 0 : i32
    return %arg0, %c0_i32, %arg1 : i32, i32, i32
  }
  func.func @transform_5(%arg0: i32, %arg1: i32) -> (i32, i32, i32) {
    %c0_i32 = arith.constant 0 : i32
    %c0_i32_0 = arith.constant 0 : i32
    %c0_i32_1 = arith.constant 0 : i32
    return %arg0, %c0_i32, %c0_i32_0 : i32, i32, i32
  }
  func.func @transform_6(%arg0: i32, %arg1: i32) -> (i32, i32, i32) {
    %c0_i32 = arith.constant 0 : i32
    %c0_i32_0 = arith.constant 0 : i32
    %c0_i32_1 = arith.constant 0 : i32
    return %arg0, %c0_i32, %c0_i32_0 : i32, i32, i32
  }
}

module attributes {stable_mosaic.version = 11 : i64} {
  func.func @_gn_relu_kernel(%arg0: i32, %arg1: i32, %arg2: memref<1x32x512xf32, #tpu.memory_space<vmem>>, %arg3: memref<1x32x1xf32, #tpu.memory_space<vmem>>, %arg4: memref<1x32x1xf32, #tpu.memory_space<vmem>>, %arg5: memref<1x32x512xbf16, #tpu.memory_space<vmem>>) attributes {dimension_semantics = [#tpu.dimension_semantics<parallel>, #tpu.dimension_semantics<parallel>], iteration_bounds = array<i64: 2, 2>, scalar_prefetch = 0 : i64, scratch_operands = 0 : i64, tpu.core_type = #tpu.core_type<tc>, window_params = [{transform_indices = @transform_0, window_bounds = array<i64: 1, 32, 512>}, {transform_indices = @transform_1, window_bounds = array<i64: 1, 32, 1>}, {transform_indices = @transform_2, window_bounds = array<i64: 1, 32, 1>}, {transform_indices = @transform_3, window_bounds = array<i64: 1, 32, 512>}]} {
    %c0 = arith.constant 0 : index
    %c0_0 = arith.constant 0 : index
    %c0_1 = arith.constant 0 : index
    %0 = vector.load %arg2[%c0, %c0_0, %c0_1] : memref<1x32x512xf32, #tpu.memory_space<vmem>>, vector<1x32x512xf32>
    %1 = vector.shape_cast %0 : vector<1x32x512xf32> to vector<32x512xf32>
    %c0_2 = arith.constant 0 : index
    %c0_3 = arith.constant 0 : index
    %c0_4 = arith.constant 0 : index
    %2 = vector.load %arg3[%c0_2, %c0_3, %c0_4] : memref<1x32x1xf32, #tpu.memory_space<vmem>>, vector<1x32x1xf32>
    %3 = vector.shape_cast %2 : vector<1x32x1xf32> to vector<32x1xf32>
    %4 = vector.broadcast %3 : vector<32x1xf32> to vector<32x512xf32>
    %5 = arith.mulf %1, %4 : vector<32x512xf32>
    %c0_5 = arith.constant 0 : index
    %c0_6 = arith.constant 0 : index
    %c0_7 = arith.constant 0 : index
    %6 = vector.load %arg4[%c0_5, %c0_6, %c0_7] : memref<1x32x1xf32, #tpu.memory_space<vmem>>, vector<1x32x1xf32>
    %7 = vector.shape_cast %6 : vector<1x32x1xf32> to vector<32x1xf32>
    %8 = vector.broadcast %7 : vector<32x1xf32> to vector<32x512xf32>
    %9 = arith.addf %5, %8 : vector<32x512xf32>
    %cst = arith.constant 0.000000e+00 : f32
    %10 = vector.broadcast %cst : f32 to vector<32x512xf32>
    %11 = arith.maximumf %9, %10 : vector<32x512xf32>
    %12 = arith.truncf %11 : vector<32x512xf32> to vector<32x512xbf16>
    %c0_8 = arith.constant 0 : index
    %c0_9 = arith.constant 0 : index
    %c0_10 = arith.constant 0 : index
    %13 = vector.load %arg5[%c0_8, %c0_9, %c0_10] : memref<1x32x512xbf16, #tpu.memory_space<vmem>>, vector<1x32x512xbf16>
    %14 = vector.shape_cast %13 : vector<1x32x512xbf16> to vector<32x512xbf16>
    %15 = vector.shape_cast %12 : vector<32x512xbf16> to vector<1x32x512xbf16>
    tpu.vector_store %arg5[%c0_8, %c0_9, %c0_10], %15 {strides = array<i32>} : memref<1x32x512xbf16, #tpu.memory_space<vmem>>, vector<1x32x512xbf16>,
    return
  }
  func.func @transform_0(%arg0: i32, %arg1: i32) -> (i32, i32, i32) {
    %c0_i32 = arith.constant 0 : i32
    %c0_i32_0 = arith.constant 0 : i32
    return %arg0, %c0_i32, %arg1 : i32, i32, i32
  }
  func.func @transform_1(%arg0: i32, %arg1: i32) -> (i32, i32, i32) {
    %c0_i32 = arith.constant 0 : i32
    %c0_i32_0 = arith.constant 0 : i32
    %c0_i32_1 = arith.constant 0 : i32
    return %arg0, %c0_i32, %c0_i32_0 : i32, i32, i32
  }
  func.func @transform_2(%arg0: i32, %arg1: i32) -> (i32, i32, i32) {
    %c0_i32 = arith.constant 0 : i32
    %c0_i32_0 = arith.constant 0 : i32
    %c0_i32_1 = arith.constant 0 : i32
    return %arg0, %c0_i32, %c0_i32_0 : i32, i32, i32
  }
  func.func @transform_3(%arg0: i32, %arg1: i32) -> (i32, i32, i32) {
    %c0_i32 = arith.constant 0 : i32
    %c0_i32_0 = arith.constant 0 : i32
    return %arg0, %c0_i32, %arg1 : i32, i32, i32
  }
}

module attributes {stable_mosaic.version = 11 : i64} {
  func.func @_conv_stats_kernel(%arg0: i32, %arg1: i32, %arg2: memref<1x1x32x768xbf16, #tpu.memory_space<vmem>>, %arg3: memref<8x864xbf16, #tpu.memory_space<vmem>>, %arg4: memref<8x1xf32, #tpu.memory_space<vmem>>, %arg5: memref<1x512xf32, #tpu.memory_space<vmem>>, %arg6: memref<1x8x512xf32, #tpu.memory_space<vmem>>, %arg7: memref<1x8x1xf32, #tpu.memory_space<vmem>>, %arg8: memref<1x8x1xf32, #tpu.memory_space<vmem>>, %arg9: memref<864x512xbf16, #tpu.memory_space<vmem>>) attributes {dimension_semantics = [#tpu.dimension_semantics<parallel>, #tpu.dimension_semantics<arbitrary>], iteration_bounds = array<i64: 2, 2>, scalar_prefetch = 0 : i64, scratch_operands = 1 : i64, tpu.core_type = #tpu.core_type<tc>, window_params = [{transform_indices = @transform_0, window_bounds = array<i64: 1, 1, 32, 768>}, {pipeline_mode = #tpu.pipeline_mode<synchronous>, transform_indices = @transform_1, window_bounds = array<i64: 8, 864>}, {pipeline_mode = #tpu.pipeline_mode<synchronous>, transform_indices = @transform_2, window_bounds = array<i64: 8, 1>}, {transform_indices = @transform_3, window_bounds = array<i64: 1, 512>}, {transform_indices = @transform_4, window_bounds = array<i64: 1, 8, 512>}, {transform_indices = @transform_5, window_bounds = array<i64: 1, 8, 1>}, {transform_indices = @transform_6, window_bounds = array<i64: 1, 8, 1>}]} {
    %c0 = arith.constant 0 : index
    %c0_0 = arith.constant 0 : index
    %c0_1 = arith.constant 0 : index
    %c0_2 = arith.constant 0 : index
    %0 = vector.load %arg2[%c0, %c0_0, %c0_1, %c0_2] : memref<1x1x32x768xbf16, #tpu.memory_space<vmem>>, vector<1x1x32x512xbf16>
    %1 = vector.shape_cast %0 : vector<1x1x32x512xbf16> to vector<32x512xbf16>
    %c0_3 = arith.constant 0 : index
    %c0_4 = arith.constant 0 : index
    %2 = vector.load %arg9[%c0_3, %c0_4] : memref<864x512xbf16, #tpu.memory_space<vmem>>, vector<32x512xbf16>
    tpu.vector_store %arg9[%c0_3, %c0_4], %1 {strides = array<i32>} : memref<864x512xbf16, #tpu.memory_space<vmem>>, vector<32x512xbf16>,
    %c0_5 = arith.constant 0 : index
    %c0_6 = arith.constant 0 : index
    %c0_7 = arith.constant 0 : index
    %c1 = arith.constant 1 : index
    %3 = vector.load %arg2[%c0_5, %c0_6, %c0_7, %c1] : memref<1x1x32x768xbf16, #tpu.memory_space<vmem>>, vector<1x1x32x512xbf16>
    %4 = vector.shape_cast %3 : vector<1x1x32x512xbf16> to vector<32x512xbf16>
    %c32 = arith.constant 32 : index
    %c0_8 = arith.constant 0 : index
    %5 = vector.load %arg9[%c32, %c0_8] : memref<864x512xbf16, #tpu.memory_space<vmem>>, vector<32x512xbf16>
    tpu.vector_store %arg9[%c32, %c0_8], %4 {strides = array<i32>} : memref<864x512xbf16, #tpu.memory_space<vmem>>, vector<32x512xbf16>,
    %c0_9 = arith.constant 0 : index
    %c0_10 = arith.constant 0 : index
    %c0_11 = arith.constant 0 : index
    %c2 = arith.constant 2 : index
    %6 = vector.load %arg2[%c0_9, %c0_10, %c0_11, %c2] : memref<1x1x32x768xbf16, #tpu.memory_space<vmem>>, vector<1x1x32x512xbf16>
    %7 = vector.shape_cast %6 : vector<1x1x32x512xbf16> to vector<32x512xbf16>
    %c64 = arith.constant 64 : index
    %c0_12 = arith.constant 0 : index
    %8 = vector.load %arg9[%c64, %c0_12] : memref<864x512xbf16, #tpu.memory_space<vmem>>, vector<32x512xbf16>
    tpu.vector_store %arg9[%c64, %c0_12], %7 {strides = array<i32>} : memref<864x512xbf16, #tpu.memory_space<vmem>>, vector<32x512xbf16>,
    %c0_13 = arith.constant 0 : index
    %c0_14 = arith.constant 0 : index
    %c0_15 = arith.constant 0 : index
    %c10 = arith.constant 10 : index
    %9 = vector.load %arg2[%c0_13, %c0_14, %c0_15, %c10] : memref<1x1x32x768xbf16, #tpu.memory_space<vmem>>, vector<1x1x32x512xbf16>
    %10 = vector.shape_cast %9 : vector<1x1x32x512xbf16> to vector<32x512xbf16>
    %c96 = arith.constant 96 : index
    %c0_16 = arith.constant 0 : index
    %11 = vector.load %arg9[%c96, %c0_16] : memref<864x512xbf16, #tpu.memory_space<vmem>>, vector<32x512xbf16>
    tpu.vector_store %arg9[%c96, %c0_16], %10 {strides = array<i32>} : memref<864x512xbf16, #tpu.memory_space<vmem>>, vector<32x512xbf16>,
    %c0_17 = arith.constant 0 : index
    %c0_18 = arith.constant 0 : index
    %c0_19 = arith.constant 0 : index
    %c11 = arith.constant 11 : index
    %12 = vector.load %arg2[%c0_17, %c0_18, %c0_19, %c11] : memref<1x1x32x768xbf16, #tpu.memory_space<vmem>>, vector<1x1x32x512xbf16>
    %13 = vector.shape_cast %12 : vector<1x1x32x512xbf16> to vector<32x512xbf16>
    %c128 = arith.constant 128 : index
    %c0_20 = arith.constant 0 : index
    %14 = vector.load %arg9[%c128, %c0_20] : memref<864x512xbf16, #tpu.memory_space<vmem>>, vector<32x512xbf16>
    tpu.vector_store %arg9[%c128, %c0_20], %13 {strides = array<i32>} : memref<864x512xbf16, #tpu.memory_space<vmem>>, vector<32x512xbf16>,
    %c0_21 = arith.constant 0 : index
    %c0_22 = arith.constant 0 : index
    %c0_23 = arith.constant 0 : index
    %c12 = arith.constant 12 : index
    %15 = vector.load %arg2[%c0_21, %c0_22, %c0_23, %c12] : memref<1x1x32x768xbf16, #tpu.memory_space<vmem>>, vector<1x1x32x512xbf16>
    %16 = vector.shape_cast %15 : vector<1x1x32x512xbf16> to vector<32x512xbf16>
    %c160 = arith.constant 160 : index
    %c0_24 = arith.constant 0 : index
    %17 = vector.load %arg9[%c160, %c0_24] : memref<864x512xbf16, #tpu.memory_space<vmem>>, vector<32x512xbf16>
    tpu.vector_store %arg9[%c160, %c0_24], %16 {strides = array<i32>} : memref<864x512xbf16, #tpu.memory_space<vmem>>, vector<32x512xbf16>,
    %c0_25 = arith.constant 0 : index
    %c0_26 = arith.constant 0 : index
    %c0_27 = arith.constant 0 : index
    %c20 = arith.constant 20 : index
    %18 = vector.load %arg2[%c0_25, %c0_26, %c0_27, %c20] : memref<1x1x32x768xbf16, #tpu.memory_space<vmem>>, vector<1x1x32x512xbf16>
    %19 = vector.shape_cast %18 : vector<1x1x32x512xbf16> to vector<32x512xbf16>
    %c192 = arith.constant 192 : index
    %c0_28 = arith.constant 0 : index
    %20 = vector.load %arg9[%c192, %c0_28] : memref<864x512xbf16, #tpu.memory_space<vmem>>, vector<32x512xbf16>
    tpu.vector_store %arg9[%c192, %c0_28], %19 {strides = array<i32>} : memref<864x512xbf16, #tpu.memory_space<vmem>>, vector<32x512xbf16>,
    %c0_29 = arith.constant 0 : index
    %c0_30 = arith.constant 0 : index
    %c0_31 = arith.constant 0 : index
    %c21 = arith.constant 21 : index
    %21 = vector.load %arg2[%c0_29, %c0_30, %c0_31, %c21] : memref<1x1x32x768xbf16, #tpu.memory_space<vmem>>, vector<1x1x32x512xbf16>
    %22 = vector.shape_cast %21 : vector<1x1x32x512xbf16> to vector<32x512xbf16>
    %c224 = arith.constant 224 : index
    %c0_32 = arith.constant 0 : index
    %23 = vector.load %arg9[%c224, %c0_32] : memref<864x512xbf16, #tpu.memory_space<vmem>>, vector<32x512xbf16>
    tpu.vector_store %arg9[%c224, %c0_32], %22 {strides = array<i32>} : memref<864x512xbf16, #tpu.memory_space<vmem>>, vector<32x512xbf16>,
    %c0_33 = arith.constant 0 : index
    %c0_34 = arith.constant 0 : index
    %c0_35 = arith.constant 0 : index
    %c22 = arith.constant 22 : index
    %24 = vector.load %arg2[%c0_33, %c0_34, %c0_35, %c22] : memref<1x1x32x768xbf16, #tpu.memory_space<vmem>>, vector<1x1x32x512xbf16>
    %25 = vector.shape_cast %24 : vector<1x1x32x512xbf16> to vector<32x512xbf16>
    %c256 = arith.constant 256 : index
    %c0_36 = arith.constant 0 : index
    %26 = vector.load %arg9[%c256, %c0_36] : memref<864x512xbf16, #tpu.memory_space<vmem>>, vector<32x512xbf16>
    tpu.vector_store %arg9[%c256, %c0_36], %25 {strides = array<i32>} : memref<864x512xbf16, #tpu.memory_space<vmem>>, vector<32x512xbf16>,
    %c0_37 = arith.constant 0 : index
    %c0_38 = arith.constant 0 : index
    %c0_39 = arith.constant 0 : index
    %c100 = arith.constant 100 : index
    %27 = vector.load %arg2[%c0_37, %c0_38, %c0_39, %c100] : memref<1x1x32x768xbf16, #tpu.memory_space<vmem>>, vector<1x1x32x512xbf16>
    %28 = vector.shape_cast %27 : vector<1x1x32x512xbf16> to vector<32x512xbf16>
    %c288 = arith.constant 288 : index
    %c0_40 = arith.constant 0 : index
    %29 = vector.load %arg9[%c288, %c0_40] : memref<864x512xbf16, #tpu.memory_space<vmem>>, vector<32x512xbf16>
    tpu.vector_store %arg9[%c288, %c0_40], %28 {strides = array<i32>} : memref<864x512xbf16, #tpu.memory_space<vmem>>, vector<32x512xbf16>,
    %c0_41 = arith.constant 0 : index
    %c0_42 = arith.constant 0 : index
    %c0_43 = arith.constant 0 : index
    %c101 = arith.constant 101 : index
    %30 = vector.load %arg2[%c0_41, %c0_42, %c0_43, %c101] : memref<1x1x32x768xbf16, #tpu.memory_space<vmem>>, vector<1x1x32x512xbf16>
    %31 = vector.shape_cast %30 : vector<1x1x32x512xbf16> to vector<32x512xbf16>
    %c320 = arith.constant 320 : index
    %c0_44 = arith.constant 0 : index
    %32 = vector.load %arg9[%c320, %c0_44] : memref<864x512xbf16, #tpu.memory_space<vmem>>, vector<32x512xbf16>
    tpu.vector_store %arg9[%c320, %c0_44], %31 {strides = array<i32>} : memref<864x512xbf16, #tpu.memory_space<vmem>>, vector<32x512xbf16>,
    %c0_45 = arith.constant 0 : index
    %c0_46 = arith.constant 0 : index
    %c0_47 = arith.constant 0 : index
    %c102 = arith.constant 102 : index
    %33 = vector.load %arg2[%c0_45, %c0_46, %c0_47, %c102] : memref<1x1x32x768xbf16, #tpu.memory_space<vmem>>, vector<1x1x32x512xbf16>
    %34 = vector.shape_cast %33 : vector<1x1x32x512xbf16> to vector<32x512xbf16>
    %c352 = arith.constant 352 : index
    %c0_48 = arith.constant 0 : index
    %35 = vector.load %arg9[%c352, %c0_48] : memref<864x512xbf16, #tpu.memory_space<vmem>>, vector<32x512xbf16>
    tpu.vector_store %arg9[%c352, %c0_48], %34 {strides = array<i32>} : memref<864x512xbf16, #tpu.memory_space<vmem>>, vector<32x512xbf16>,
    %c0_49 = arith.constant 0 : index
    %c0_50 = arith.constant 0 : index
    %c0_51 = arith.constant 0 : index
    %c110 = arith.constant 110 : index
    %36 = vector.load %arg2[%c0_49, %c0_50, %c0_51, %c110] : memref<1x1x32x768xbf16, #tpu.memory_space<vmem>>, vector<1x1x32x512xbf16>
    %37 = vector.shape_cast %36 : vector<1x1x32x512xbf16> to vector<32x512xbf16>
    %c384 = arith.constant 384 : index
    %c0_52 = arith.constant 0 : index
    %38 = vector.load %arg9[%c384, %c0_52] : memref<864x512xbf16, #tpu.memory_space<vmem>>, vector<32x512xbf16>
    tpu.vector_store %arg9[%c384, %c0_52], %37 {strides = array<i32>} : memref<864x512xbf16, #tpu.memory_space<vmem>>, vector<32x512xbf16>,
    %c0_53 = arith.constant 0 : index
    %c0_54 = arith.constant 0 : index
    %c0_55 = arith.constant 0 : index
    %c111 = arith.constant 111 : index
    %39 = vector.load %arg2[%c0_53, %c0_54, %c0_55, %c111] : memref<1x1x32x768xbf16, #tpu.memory_space<vmem>>, vector<1x1x32x512xbf16>
    %40 = vector.shape_cast %39 : vector<1x1x32x512xbf16> to vector<32x512xbf16>
    %c416 = arith.constant 416 : index
    %c0_56 = arith.constant 0 : index
    %41 = vector.load %arg9[%c416, %c0_56] : memref<864x512xbf16, #tpu.memory_space<vmem>>, vector<32x512xbf16>
    tpu.vector_store %arg9[%c416, %c0_56], %40 {strides = array<i32>} : memref<864x512xbf16, #tpu.memory_space<vmem>>, vector<32x512xbf16>,
    %c0_57 = arith.constant 0 : index
    %c0_58 = arith.constant 0 : index
    %c0_59 = arith.constant 0 : index
    %c112 = arith.constant 112 : index
    %42 = vector.load %arg2[%c0_57, %c0_58, %c0_59, %c112] : memref<1x1x32x768xbf16, #tpu.memory_space<vmem>>, vector<1x1x32x512xbf16>
    %43 = vector.shape_cast %42 : vector<1x1x32x512xbf16> to vector<32x512xbf16>
    %c448 = arith.constant 448 : index
    %c0_60 = arith.constant 0 : index
    %44 = vector.load %arg9[%c448, %c0_60] : memref<864x512xbf16, #tpu.memory_space<vmem>>, vector<32x512xbf16>
    tpu.vector_store %arg9[%c448, %c0_60], %43 {strides = array<i32>} : memref<864x512xbf16, #tpu.memory_space<vmem>>, vector<32x512xbf16>,
    %c0_61 = arith.constant 0 : index
    %c0_62 = arith.constant 0 : index
    %c0_63 = arith.constant 0 : index
    %c120 = arith.constant 120 : index
    %45 = vector.load %arg2[%c0_61, %c0_62, %c0_63, %c120] : memref<1x1x32x768xbf16, #tpu.memory_space<vmem>>, vector<1x1x32x512xbf16>
    %46 = vector.shape_cast %45 : vector<1x1x32x512xbf16> to vector<32x512xbf16>
    %c480 = arith.constant 480 : index
    %c0_64 = arith.constant 0 : index
    %47 = vector.load %arg9[%c480, %c0_64] : memref<864x512xbf16, #tpu.memory_space<vmem>>, vector<32x512xbf16>
    tpu.vector_store %arg9[%c480, %c0_64], %46 {strides = array<i32>} : memref<864x512xbf16, #tpu.memory_space<vmem>>, vector<32x512xbf16>,
    %c0_65 = arith.constant 0 : index
    %c0_66 = arith.constant 0 : index
    %c0_67 = arith.constant 0 : index
    %c121 = arith.constant 121 : index
    %48 = vector.load %arg2[%c0_65, %c0_66, %c0_67, %c121] : memref<1x1x32x768xbf16, #tpu.memory_space<vmem>>, vector<1x1x32x512xbf16>
    %49 = vector.shape_cast %48 : vector<1x1x32x512xbf16> to vector<32x512xbf16>
    %c512 = arith.constant 512 : index
    %c0_68 = arith.constant 0 : index
    %50 = vector.load %arg9[%c512, %c0_68] : memref<864x512xbf16, #tpu.memory_space<vmem>>, vector<32x512xbf16>
    tpu.vector_store %arg9[%c512, %c0_68], %49 {strides = array<i32>} : memref<864x512xbf16, #tpu.memory_space<vmem>>, vector<32x512xbf16>,
    %c0_69 = arith.constant 0 : index
    %c0_70 = arith.constant 0 : index
    %c0_71 = arith.constant 0 : index
    %c122 = arith.constant 122 : index
    %51 = vector.load %arg2[%c0_69, %c0_70, %c0_71, %c122] : memref<1x1x32x768xbf16, #tpu.memory_space<vmem>>, vector<1x1x32x512xbf16>
    %52 = vector.shape_cast %51 : vector<1x1x32x512xbf16> to vector<32x512xbf16>
    %c544 = arith.constant 544 : index
    %c0_72 = arith.constant 0 : index
    %53 = vector.load %arg9[%c544, %c0_72] : memref<864x512xbf16, #tpu.memory_space<vmem>>, vector<32x512xbf16>
    tpu.vector_store %arg9[%c544, %c0_72], %52 {strides = array<i32>} : memref<864x512xbf16, #tpu.memory_space<vmem>>, vector<32x512xbf16>,
    %c0_73 = arith.constant 0 : index
    %c0_74 = arith.constant 0 : index
    %c0_75 = arith.constant 0 : index
    %c200 = arith.constant 200 : index
    %54 = vector.load %arg2[%c0_73, %c0_74, %c0_75, %c200] : memref<1x1x32x768xbf16, #tpu.memory_space<vmem>>, vector<1x1x32x512xbf16>
    %55 = vector.shape_cast %54 : vector<1x1x32x512xbf16> to vector<32x512xbf16>
    %c576 = arith.constant 576 : index
    %c0_76 = arith.constant 0 : index
    %56 = vector.load %arg9[%c576, %c0_76] : memref<864x512xbf16, #tpu.memory_space<vmem>>, vector<32x512xbf16>
    tpu.vector_store %arg9[%c576, %c0_76], %55 {strides = array<i32>} : memref<864x512xbf16, #tpu.memory_space<vmem>>, vector<32x512xbf16>,
    %c0_77 = arith.constant 0 : index
    %c0_78 = arith.constant 0 : index
    %c0_79 = arith.constant 0 : index
    %c201 = arith.constant 201 : index
    %57 = vector.load %arg2[%c0_77, %c0_78, %c0_79, %c201] : memref<1x1x32x768xbf16, #tpu.memory_space<vmem>>, vector<1x1x32x512xbf16>
    %58 = vector.shape_cast %57 : vector<1x1x32x512xbf16> to vector<32x512xbf16>
    %c608 = arith.constant 608 : index
    %c0_80 = arith.constant 0 : index
    %59 = vector.load %arg9[%c608, %c0_80] : memref<864x512xbf16, #tpu.memory_space<vmem>>, vector<32x512xbf16>
    tpu.vector_store %arg9[%c608, %c0_80], %58 {strides = array<i32>} : memref<864x512xbf16, #tpu.memory_space<vmem>>, vector<32x512xbf16>,
    %c0_81 = arith.constant 0 : index
    %c0_82 = arith.constant 0 : index
    %c0_83 = arith.constant 0 : index
    %c202 = arith.constant 202 : index
    %60 = vector.load %arg2[%c0_81, %c0_82, %c0_83, %c202] : memref<1x1x32x768xbf16, #tpu.memory_space<vmem>>, vector<1x1x32x512xbf16>
    %61 = vector.shape_cast %60 : vector<1x1x32x512xbf16> to vector<32x512xbf16>
    %c640 = arith.constant 640 : index
    %c0_84 = arith.constant 0 : index
    %62 = vector.load %arg9[%c640, %c0_84] : memref<864x512xbf16, #tpu.memory_space<vmem>>, vector<32x512xbf16>
    tpu.vector_store %arg9[%c640, %c0_84], %61 {strides = array<i32>} : memref<864x512xbf16, #tpu.memory_space<vmem>>, vector<32x512xbf16>,
    %c0_85 = arith.constant 0 : index
    %c0_86 = arith.constant 0 : index
    %c0_87 = arith.constant 0 : index
    %c210 = arith.constant 210 : index
    %63 = vector.load %arg2[%c0_85, %c0_86, %c0_87, %c210] : memref<1x1x32x768xbf16, #tpu.memory_space<vmem>>, vector<1x1x32x512xbf16>
    %64 = vector.shape_cast %63 : vector<1x1x32x512xbf16> to vector<32x512xbf16>
    %c672 = arith.constant 672 : index
    %c0_88 = arith.constant 0 : index
    %65 = vector.load %arg9[%c672, %c0_88] : memref<864x512xbf16, #tpu.memory_space<vmem>>, vector<32x512xbf16>
    tpu.vector_store %arg9[%c672, %c0_88], %64 {strides = array<i32>} : memref<864x512xbf16, #tpu.memory_space<vmem>>, vector<32x512xbf16>,
    %c0_89 = arith.constant 0 : index
    %c0_90 = arith.constant 0 : index
    %c0_91 = arith.constant 0 : index
    %c211 = arith.constant 211 : index
    %66 = vector.load %arg2[%c0_89, %c0_90, %c0_91, %c211] : memref<1x1x32x768xbf16, #tpu.memory_space<vmem>>, vector<1x1x32x512xbf16>
    %67 = vector.shape_cast %66 : vector<1x1x32x512xbf16> to vector<32x512xbf16>
    %c704 = arith.constant 704 : index
    %c0_92 = arith.constant 0 : index
    %68 = vector.load %arg9[%c704, %c0_92] : memref<864x512xbf16, #tpu.memory_space<vmem>>, vector<32x512xbf16>
    tpu.vector_store %arg9[%c704, %c0_92], %67 {strides = array<i32>} : memref<864x512xbf16, #tpu.memory_space<vmem>>, vector<32x512xbf16>,
    %c0_93 = arith.constant 0 : index
    %c0_94 = arith.constant 0 : index
    %c0_95 = arith.constant 0 : index
    %c212 = arith.constant 212 : index
    %69 = vector.load %arg2[%c0_93, %c0_94, %c0_95, %c212] : memref<1x1x32x768xbf16, #tpu.memory_space<vmem>>, vector<1x1x32x512xbf16>
    %70 = vector.shape_cast %69 : vector<1x1x32x512xbf16> to vector<32x512xbf16>
    %c736 = arith.constant 736 : index
    %c0_96 = arith.constant 0 : index
    %71 = vector.load %arg9[%c736, %c0_96] : memref<864x512xbf16, #tpu.memory_space<vmem>>, vector<32x512xbf16>
    tpu.vector_store %arg9[%c736, %c0_96], %70 {strides = array<i32>} : memref<864x512xbf16, #tpu.memory_space<vmem>>, vector<32x512xbf16>,
    %c0_97 = arith.constant 0 : index
    %c0_98 = arith.constant 0 : index
    %c0_99 = arith.constant 0 : index
    %c220 = arith.constant 220 : index
    %72 = vector.load %arg2[%c0_97, %c0_98, %c0_99, %c220] : memref<1x1x32x768xbf16, #tpu.memory_space<vmem>>, vector<1x1x32x512xbf16>
    %73 = vector.shape_cast %72 : vector<1x1x32x512xbf16> to vector<32x512xbf16>
    %c768 = arith.constant 768 : index
    %c0_100 = arith.constant 0 : index
    %74 = vector.load %arg9[%c768, %c0_100] : memref<864x512xbf16, #tpu.memory_space<vmem>>, vector<32x512xbf16>
    tpu.vector_store %arg9[%c768, %c0_100], %73 {strides = array<i32>} : memref<864x512xbf16, #tpu.memory_space<vmem>>, vector<32x512xbf16>,
    %c0_101 = arith.constant 0 : index
    %c0_102 = arith.constant 0 : index
    %c0_103 = arith.constant 0 : index
    %c221 = arith.constant 221 : index
    %75 = vector.load %arg2[%c0_101, %c0_102, %c0_103, %c221] : memref<1x1x32x768xbf16, #tpu.memory_space<vmem>>, vector<1x1x32x512xbf16>
    %76 = vector.shape_cast %75 : vector<1x1x32x512xbf16> to vector<32x512xbf16>
    %c800 = arith.constant 800 : index
    %c0_104 = arith.constant 0 : index
    %77 = vector.load %arg9[%c800, %c0_104] : memref<864x512xbf16, #tpu.memory_space<vmem>>, vector<32x512xbf16>
    tpu.vector_store %arg9[%c800, %c0_104], %76 {strides = array<i32>} : memref<864x512xbf16, #tpu.memory_space<vmem>>, vector<32x512xbf16>,
    %c0_105 = arith.constant 0 : index
    %c0_106 = arith.constant 0 : index
    %c0_107 = arith.constant 0 : index
    %c222 = arith.constant 222 : index
    %78 = vector.load %arg2[%c0_105, %c0_106, %c0_107, %c222] : memref<1x1x32x768xbf16, #tpu.memory_space<vmem>>, vector<1x1x32x512xbf16>
    %79 = vector.shape_cast %78 : vector<1x1x32x512xbf16> to vector<32x512xbf16>
    %c832 = arith.constant 832 : index
    %c0_108 = arith.constant 0 : index
    %80 = vector.load %arg9[%c832, %c0_108] : memref<864x512xbf16, #tpu.memory_space<vmem>>, vector<32x512xbf16>
    tpu.vector_store %arg9[%c832, %c0_108], %79 {strides = array<i32>} : memref<864x512xbf16, #tpu.memory_space<vmem>>, vector<32x512xbf16>,
    %c0_109 = arith.constant 0 : index
    %c0_110 = arith.constant 0 : index
    %81 = vector.load %arg3[%c0_109, %c0_110] : memref<8x864xbf16, #tpu.memory_space<vmem>>, vector<8x864xbf16>
    %c0_111 = arith.constant 0 : index
    %c0_112 = arith.constant 0 : index
    %82 = vector.load %arg9[%c0_111, %c0_112] : memref<864x512xbf16, #tpu.memory_space<vmem>>, vector<864x512xbf16>
    %cst = arith.constant dense<0.000000e+00> : vector<8x512xf32>
    %83 = tpu.matmul %81, %82, %cst {dimension_numbers = #tpu.dot_dimension_numbers<[1], [0], [0], [1], [0, 0, 1, 1], [], []>} : vector<8x864xbf16>, vector<864x512xbf16>, vector<8x512xf32> -> vector<8x512xf32>
    %c0_113 = arith.constant 0 : index
    %c0_114 = arith.constant 0 : index
    %84 = vector.load %arg4[%c0_113, %c0_114] : memref<8x1xf32, #tpu.memory_space<vmem>>, vector<8x1xf32>
    %85 = vector.broadcast %84 : vector<8x1xf32> to vector<8x512xf32>
    %86 = arith.addf %83, %85 : vector<8x512xf32>
    %c0_115 = arith.constant 0 : index
    %c0_116 = arith.constant 0 : index
    %c0_117 = arith.constant 0 : index
    %87 = vector.load %arg6[%c0_115, %c0_116, %c0_117] : memref<1x8x512xf32, #tpu.memory_space<vmem>>, vector<1x8x512xf32>
    %88 = vector.shape_cast %87 : vector<1x8x512xf32> to vector<8x512xf32>
    %89 = vector.shape_cast %86 : vector<8x512xf32> to vector<1x8x512xf32>
    tpu.vector_store %arg6[%c0_115, %c0_116, %c0_117], %89 {strides = array<i32>} : memref<1x8x512xf32, #tpu.memory_space<vmem>>, vector<1x8x512xf32>,
    %c0_118 = arith.constant 0 : index
    %c0_119 = arith.constant 0 : index
    %90 = vector.load %arg5[%c0_118, %c0_119] : memref<1x512xf32, #tpu.memory_space<vmem>>, vector<1x512xf32>
    %91 = vector.broadcast %90 : vector<1x512xf32> to vector<8x512xf32>
    %92 = arith.mulf %86, %91 : vector<8x512xf32>
    %cst_120 = arith.constant dense<0.000000e+00> : vector<8xf32>
    %93 = vector.multi_reduction <add>, %92, %cst_120 [1] : vector<8x512xf32> to vector<8xf32>
    %94 = vector.shape_cast %93 : vector<8xf32> to vector<8x1xf32>
    %95 = arith.mulf %92, %92 : vector<8x512xf32>
    %cst_121 = arith.constant dense<0.000000e+00> : vector<8xf32>
    %96 = vector.multi_reduction <add>, %95, %cst_121 [1] : vector<8x512xf32> to vector<8xf32>
    %97 = vector.shape_cast %96 : vector<8xf32> to vector<8x1xf32>
    %c0_i32 = arith.constant 0 : i32
    %98 = arith.cmpi eq, %arg1, %c0_i32 : i32
    %99 = arith.extui %98 : i1 to i32
    %c0_i32_122 = arith.constant 0 : i32
    %100 = arith.cmpi ne, %99, %c0_i32_122 : i32
    scf.if %100 {
      %cst_135 = arith.constant 0.000000e+00 : f32
      %113 = vector.broadcast %cst_135 : f32 to vector<8x1xf32>
      %c0_136 = arith.constant 0 : index
      %c0_137 = arith.constant 0 : index
      %c0_138 = arith.constant 0 : index
      %114 = vector.load %arg7[%c0_136, %c0_137, %c0_138] : memref<1x8x1xf32, #tpu.memory_space<vmem>>, vector<1x8x1xf32>
      %115 = vector.shape_cast %114 : vector<1x8x1xf32> to vector<8x1xf32>
      %116 = vector.shape_cast %113 : vector<8x1xf32> to vector<1x8x1xf32>
      tpu.vector_store %arg7[%c0_136, %c0_137, %c0_138], %116 {strides = array<i32>} : memref<1x8x1xf32, #tpu.memory_space<vmem>>, vector<1x8x1xf32>,
      %cst_139 = arith.constant 0.000000e+00 : f32
      %117 = vector.broadcast %cst_139 : f32 to vector<8x1xf32>
      %c0_140 = arith.constant 0 : index
      %c0_141 = arith.constant 0 : index
      %c0_142 = arith.constant 0 : index
      %118 = vector.load %arg8[%c0_140, %c0_141, %c0_142] : memref<1x8x1xf32, #tpu.memory_space<vmem>>, vector<1x8x1xf32>
      %119 = vector.shape_cast %118 : vector<1x8x1xf32> to vector<8x1xf32>
      %120 = vector.shape_cast %117 : vector<8x1xf32> to vector<1x8x1xf32>
      tpu.vector_store %arg8[%c0_140, %c0_141, %c0_142], %120 {strides = array<i32>} : memref<1x8x1xf32, #tpu.memory_space<vmem>>, vector<1x8x1xf32>,
    } else {
    }
    %c0_123 = arith.constant 0 : index
    %c0_124 = arith.constant 0 : index
    %c0_125 = arith.constant 0 : index
    %101 = vector.load %arg7[%c0_123, %c0_124, %c0_125] : memref<1x8x1xf32, #tpu.memory_space<vmem>>, vector<1x8x1xf32>
    %102 = vector.shape_cast %101 : vector<1x8x1xf32> to vector<8x1xf32>
    %103 = arith.addf %102, %94 : vector<8x1xf32>
    %c0_126 = arith.constant 0 : index
    %c0_127 = arith.constant 0 : index
    %c0_128 = arith.constant 0 : index
    %104 = vector.load %arg7[%c0_126, %c0_127, %c0_128] : memref<1x8x1xf32, #tpu.memory_space<vmem>>, vector<1x8x1xf32>
    %105 = vector.shape_cast %104 : vector<1x8x1xf32> to vector<8x1xf32>
    %106 = vector.shape_cast %103 : vector<8x1xf32> to vector<1x8x1xf32>
    tpu.vector_store %arg7[%c0_126, %c0_127, %c0_128], %106 {strides = array<i32>} : memref<1x8x1xf32, #tpu.memory_space<vmem>>, vector<1x8x1xf32>,
    %c0_129 = arith.constant 0 : index
    %c0_130 = arith.constant 0 : index
    %c0_131 = arith.constant 0 : index
    %107 = vector.load %arg8[%c0_129, %c0_130, %c0_131] : memref<1x8x1xf32, #tpu.memory_space<vmem>>, vector<1x8x1xf32>
    %108 = vector.shape_cast %107 : vector<1x8x1xf32> to vector<8x1xf32>
    %109 = arith.addf %108, %97 : vector<8x1xf32>
    %c0_132 = arith.constant 0 : index
    %c0_133 = arith.constant 0 : index
    %c0_134 = arith.constant 0 : index
    %110 = vector.load %arg8[%c0_132, %c0_133, %c0_134] : memref<1x8x1xf32, #tpu.memory_space<vmem>>, vector<1x8x1xf32>
    %111 = vector.shape_cast %110 : vector<1x8x1xf32> to vector<8x1xf32>
    %112 = vector.shape_cast %109 : vector<8x1xf32> to vector<1x8x1xf32>
    tpu.vector_store %arg8[%c0_132, %c0_133, %c0_134], %112 {strides = array<i32>} : memref<1x8x1xf32, #tpu.memory_space<vmem>>, vector<1x8x1xf32>,
    return
  }
  func.func @transform_0(%arg0: i32, %arg1: i32) -> (i32, i32, i32, i32) {
    %c0_i32 = arith.constant 0 : i32
    %c0_i32_0 = arith.constant 0 : i32
    %c0_i32_1 = arith.constant 0 : i32
    return %arg0, %arg1, %c0_i32, %c0_i32_0 : i32, i32, i32, i32
  }
  func.func @transform_1(%arg0: i32, %arg1: i32) -> (i32, i32) {
    %c0_i32 = arith.constant 0 : i32
    %c0_i32_0 = arith.constant 0 : i32
    %c0_i32_1 = arith.constant 0 : i32
    return %c0_i32, %c0_i32_0 : i32, i32
  }
  func.func @transform_2(%arg0: i32, %arg1: i32) -> (i32, i32) {
    %c0_i32 = arith.constant 0 : i32
    %c0_i32_0 = arith.constant 0 : i32
    %c0_i32_1 = arith.constant 0 : i32
    return %c0_i32, %c0_i32_0 : i32, i32
  }
  func.func @transform_3(%arg0: i32, %arg1: i32) -> (i32, i32) {
    %c0_i32 = arith.constant 0 : i32
    %c0_i32_0 = arith.constant 0 : i32
    return %c0_i32, %arg1 : i32, i32
  }
  func.func @transform_4(%arg0: i32, %arg1: i32) -> (i32, i32, i32) {
    %c0_i32 = arith.constant 0 : i32
    %c0_i32_0 = arith.constant 0 : i32
    return %arg0, %c0_i32, %arg1 : i32, i32, i32
  }
  func.func @transform_5(%arg0: i32, %arg1: i32) -> (i32, i32, i32) {
    %c0_i32 = arith.constant 0 : i32
    %c0_i32_0 = arith.constant 0 : i32
    %c0_i32_1 = arith.constant 0 : i32
    return %arg0, %c0_i32, %c0_i32_0 : i32, i32, i32
  }
  func.func @transform_6(%arg0: i32, %arg1: i32) -> (i32, i32, i32) {
    %c0_i32 = arith.constant 0 : i32
    %c0_i32_0 = arith.constant 0 : i32
    %c0_i32_1 = arith.constant 0 : i32
    return %arg0, %c0_i32, %c0_i32_0 : i32, i32, i32
  }
}

module attributes {stable_mosaic.version = 11 : i64} {
  func.func @_gn_relu_kernel(%arg0: i32, %arg1: i32, %arg2: memref<1x8x512xf32, #tpu.memory_space<vmem>>, %arg3: memref<1x8x1xf32, #tpu.memory_space<vmem>>, %arg4: memref<1x8x1xf32, #tpu.memory_space<vmem>>, %arg5: memref<1x8x512xf32, #tpu.memory_space<vmem>>) attributes {dimension_semantics = [#tpu.dimension_semantics<parallel>, #tpu.dimension_semantics<parallel>], iteration_bounds = array<i64: 2, 2>, scalar_prefetch = 0 : i64, scratch_operands = 0 : i64, tpu.core_type = #tpu.core_type<tc>, window_params = [{transform_indices = @transform_0, window_bounds = array<i64: 1, 8, 512>}, {transform_indices = @transform_1, window_bounds = array<i64: 1, 8, 1>}, {transform_indices = @transform_2, window_bounds = array<i64: 1, 8, 1>}, {transform_indices = @transform_3, window_bounds = array<i64: 1, 8, 512>}]} {
    %c0 = arith.constant 0 : index
    %c0_0 = arith.constant 0 : index
    %c0_1 = arith.constant 0 : index
    %0 = vector.load %arg2[%c0, %c0_0, %c0_1] : memref<1x8x512xf32, #tpu.memory_space<vmem>>, vector<1x8x512xf32>
    %1 = vector.shape_cast %0 : vector<1x8x512xf32> to vector<8x512xf32>
    %c0_2 = arith.constant 0 : index
    %c0_3 = arith.constant 0 : index
    %c0_4 = arith.constant 0 : index
    %2 = vector.load %arg3[%c0_2, %c0_3, %c0_4] : memref<1x8x1xf32, #tpu.memory_space<vmem>>, vector<1x8x1xf32>
    %3 = vector.shape_cast %2 : vector<1x8x1xf32> to vector<8x1xf32>
    %4 = vector.broadcast %3 : vector<8x1xf32> to vector<8x512xf32>
    %5 = arith.mulf %1, %4 : vector<8x512xf32>
    %c0_5 = arith.constant 0 : index
    %c0_6 = arith.constant 0 : index
    %c0_7 = arith.constant 0 : index
    %6 = vector.load %arg4[%c0_5, %c0_6, %c0_7] : memref<1x8x1xf32, #tpu.memory_space<vmem>>, vector<1x8x1xf32>
    %7 = vector.shape_cast %6 : vector<1x8x1xf32> to vector<8x1xf32>
    %8 = vector.broadcast %7 : vector<8x1xf32> to vector<8x512xf32>
    %9 = arith.addf %5, %8 : vector<8x512xf32>
    %cst = arith.constant 0.000000e+00 : f32
    %10 = vector.broadcast %cst : f32 to vector<8x512xf32>
    %11 = arith.maximumf %9, %10 : vector<8x512xf32>
    %c0_8 = arith.constant 0 : index
    %c0_9 = arith.constant 0 : index
    %c0_10 = arith.constant 0 : index
    %12 = vector.load %arg5[%c0_8, %c0_9, %c0_10] : memref<1x8x512xf32, #tpu.memory_space<vmem>>, vector<1x8x512xf32>
    %13 = vector.shape_cast %12 : vector<1x8x512xf32> to vector<8x512xf32>
    %14 = vector.shape_cast %11 : vector<8x512xf32> to vector<1x8x512xf32>
    tpu.vector_store %arg5[%c0_8, %c0_9, %c0_10], %14 {strides = array<i32>} : memref<1x8x512xf32, #tpu.memory_space<vmem>>, vector<1x8x512xf32>,
    return
  }
  func.func @transform_0(%arg0: i32, %arg1: i32) -> (i32, i32, i32) {
    %c0_i32 = arith.constant 0 : i32
    %c0_i32_0 = arith.constant 0 : i32
    return %arg0, %c0_i32, %arg1 : i32, i32, i32
  }
  func.func @transform_1(%arg0: i32, %arg1: i32) -> (i32, i32, i32) {
    %c0_i32 = arith.constant 0 : i32
    %c0_i32_0 = arith.constant 0 : i32
    %c0_i32_1 = arith.constant 0 : i32
    return %arg0, %c0_i32, %c0_i32_0 : i32, i32, i32
  }
  func.func @transform_2(%arg0: i32, %arg1: i32) -> (i32, i32, i32) {
    %c0_i32 = arith.constant 0 : i32
    %c0_i32_0 = arith.constant 0 : i32
    %c0_i32_1 = arith.constant 0 : i32
    return %arg0, %c0_i32, %c0_i32_0 : i32, i32, i32
  }
  func.func @transform_3(%arg0: i32, %arg1: i32) -> (i32, i32, i32) {
    %c0_i32 = arith.constant 0 : i32
    %c0_i32_0 = arith.constant 0 : i32
    return %arg0, %c0_i32, %arg1 : i32, i32, i32
  }
}

</mosaic_0001>

<llo_original>
// kernel: squeeze.4
$region0: #{squeeze.4}
  %s0 = inlined_call_operand.vmem [shape: f32[2,32], index: 0, kind: input, shape index: {}]
  %s1 = inlined_call_operand.vmem [shape: f32[2,8,4], index: 1, kind: output, shape index: {}]
  $region1: #{squeeze.4} parent=0
    #allocation0 [shape = 'u8[4096]{0}', space=vmem, size = 0x1000, scoped, tag = 'scoped mem for input reshape']
    %s3 = ssub.s32 4, 1
    %v4 = vld [vmem:[%s0] sm:%s3]
    %5 = vst [vmem:[#allocation0] sm:%s3] %v4
    %v6 = vld [vmem:[#allocation0] sm:$0x3]
    %vm7 = vcmask 31744
    %8 = vst.msk [vmem:[%s1] ss:$8 sm:$0x3] %vm7, %v6
    %v9 = vld [vmem:[#allocation0] sm:$0x3]
    %10 = vrot.lane.b32.xlu0 %v9, 124
    %v11 = vpop.permute.xlu0 %10
    %vm12 = vcmask 31744
    %s13 = scalar_lea.vmem %s1, 1
    %14 = vst.msk [vmem:[%s13] ss:$8 sm:$0x3] %vm12, %v11
    %v15 = vld [vmem:[#allocation0] sm:$0x3]
    %16 = vrot.lane.b32.xlu0 %v15, 120
    %v17 = vpop.permute.xlu0 %16
    %vm18 = vcmask 31744
    %s19 = scalar_lea.vmem %s1, 2
    %20 = vst.msk [vmem:[%s19] ss:$8 sm:$0x3] %vm18, %v17
    %v21 = vld [vmem:[#allocation0] sm:$0x3]
    %22 = vrot.lane.b32.xlu0 %v21, 116
    %v23 = vpop.permute.xlu0 %22
    %vm24 = vcmask 31744
    %s25 = scalar_lea.vmem %s1, 3
    %26 = vst.msk [vmem:[%s25] ss:$8 sm:$0x3] %vm24, %v23
    %v27 = vld [vmem:[#allocation0] sm:$0x3]
    %28 = vrot.lane.b32.xlu0 %v27, 112
    %v29 = vpop.permute.xlu0 %28
    %vm30 = vcmask 31744
    %s31 = scalar_lea.vmem %s1, 4
    %32 = vst.msk [vmem:[%s31] ss:$8 sm:$0x3] %vm30, %v29
    %v33 = vld [vmem:[#allocation0] sm:$0x3]
    %34 = vrot.lane.b32.xlu0 %v33, 108
    %v35 = vpop.permute.xlu0 %34
    %vm36 = vcmask 31744
    %s37 = scalar_lea.vmem %s1, 5
    %38 = vst.msk [vmem:[%s37] ss:$8 sm:$0x3] %vm36, %v35
    %v39 = vld [vmem:[#allocation0] sm:$0x3]
    %40 = vrot.lane.b32.xlu0 %v39, 104
    %v41 = vpop.permute.xlu0 %40
    %vm42 = vcmask 31744
    %s43 = scalar_lea.vmem %s1, 6
    %44 = vst.msk [vmem:[%s43] ss:$8 sm:$0x3] %vm42, %v41
    %v45 = vld [vmem:[#allocation0] sm:$0x3]
    %46 = vrot.lane.b32.xlu0 %v45, 100
    %v47 = vpop.permute.xlu0 %46
    %vm48 = vcmask 31744
    %s49 = scalar_lea.vmem %s1, 7
    %50 = vst.msk [vmem:[%s49] ss:$8 sm:$0x3] %vm48, %v47

// kernel: dsconv_forward.5
$region0: #{dsconv_forward.5}
  #allocation0 [shape = 'u32[]', space=smem, size = 0x4, offset = 0x4, fixed_abs, tag = 'smem constant byte address 0x4 - core index']
  #allocation1 [shape = 'u32[72,128]{1,0:T(1,128)}', space=vmem, size = 0x9000, scoped, tag = 'internal scratch']
  %s0 = inlined_call_operand.vmem [shape: f32[2,32,1024], index: 0, kind: input, shape index: {}]
  %s1 = inlined_call_operand.vmem [shape: f32[2,32,1], index: 1, kind: input, shape index: {}]
  %s2 = inlined_call_operand.vmem [shape: f32[2,32,1], index: 2, kind: input, shape index: {}]
  %s3 = inlined_call_operand.vmem [shape: bf16[2,32,1024], index: 3, kind: output, shape index: {}]
  %s4 = sld [smem:[#allocation0]]
  $region87: #{dsconv_forward.5} parent=0
    _
  %s6 = ssub.s32 1, %s4
  %s7 = scalar_select 0, %s6, %s4
  $region1: #{dsconv_forward.5} parent=0
    #allocation2 [shape = 'u8[131072]{0}', space=vmem, size = 0x20000, scoped, tag = 'input window, operand 0']
    #allocation3 [shape = 'u8[65536]{0}', space=vmem, size = 0x10000, scoped, tag = 'output window, operand 0']
    loop: start=0, step=1, limit=6
    $region2: #{dsconv_forward.5} parent=1 // loop_pre_header
      _
    $region3: #{dsconv_forward.5} parent=1 // loop_header
      %s9 = sphi 0, %s13
      %p10 = scmp.ge.s32.totalorder %s9, 6
      %s16 = sphi 0, %s28
      %s17 = sphi 0, %s24
      %s18 = sphi 0, %s16
      %s19 = sphi 0, %s17
      %s20 = sphi 0, %s18
      %s21 = sphi 0, %s19
      %s33 = sphi 0, %s35
      %s36 = sphi 0, %s33
      %s37 = sphi 0, %s36
      %s53 = sphi 0, %s37
      %s59 = sphi 0, %s61
      %s62 = sphi 0, %s59
      %s63 = sphi 0, %s62
      %s79 = sphi 0, %s63
      %s85 = sphi 0, %s87
      %s88 = sphi 0, %s85
      %s89 = sphi 0, %s88
      %s105 = sphi 0, %s89
      %s113 = sphi 0, %s115
      %s116 = sphi 0, %s113
      %s117 = sphi 0, %s116
      %s133 = sphi 0, %s117
    $region4: #{dsconv_forward.5} parent=1 // loop_header_branch
      %12 = sbr.rel (%p10) target = $region8
    $region5: #{dsconv_forward.5} parent=1 // loop_body
      %s14 = ssub.s32 %s9, 1
      %s15 = ssub.s32 %s9, 2
      %s22 = sadd.s32 1, %s17
      %p23 = scmp.ge.s32.totalorder %s22, 2
      %s24 = scalar_select %p23, 0, %s22
      %s25 = sadd.s32 1, %s16
      %s26 = scalar_select %p23, %s25, %s16
      %p27 = scmp.ge.s32.totalorder %s26, 2
      %s28 = scalar_select %p27, 0, %s26
      %s29 = ssub.s32 %s16, %s28
      %s30 = ssub.s32 %s17, %s24
      %s31 = sor.u32 %s29, %s30
      %p32 = scmp.eq.s32.totalorder %s31, 0
      %s34 = sadd.s32 %s33, 1
      %s35 = scalar_select %p32, %s33, %s34
      %p38 = pneg %p32
      %p39 = scmp.eq.s32.totalorder %s9, 3
      %p40 = por %p38, %p39
      %p41 = scmp.ne.s32.totalorder %s33, %s36
      %p42 = scmp.eq.s32.totalorder %s9, 0
      %p43 = por %p41, %p42
      %p44 = scmp.ne.s32.totalorder %s33, %s36
      %p45 = scmp.eq.s32.totalorder %s14, 3
      %p46 = por %p44, %p45
      %p47 = scmp.ne.s32.totalorder %s36, %s37
      %p48 = scmp.eq.s32.totalorder %s14, 0
      %p49 = por %p47, %p48
      %p50 = scmp.ne.s32.totalorder %s36, %s37
      %p51 = scmp.eq.s32.totalorder %s15, 3
      %p52 = por %p50, %p51
      %p54 = scmp.ne.s32.totalorder %s37, %s53
      %p55 = scmp.eq.s32.totalorder %s15, 0
      %p56 = por %p54, %p55
      %s57 = ssub.s32 %s16, %s28
      %p58 = scmp.eq.s32.totalorder %s57, 0
      %s60 = sadd.s32 %s59, 1
      %s61 = scalar_select %p58, %s59, %s60
      %p64 = pneg %p58
      %p65 = scmp.eq.s32.totalorder %s9, 3
      %p66 = por %p64, %p65
      %p67 = scmp.ne.s32.totalorder %s59, %s62
      %p68 = scmp.eq.s32.totalorder %s9, 0
      %p69 = por %p67, %p68
      %p70 = scmp.ne.s32.totalorder %s59, %s62
      %p71 = scmp.eq.s32.totalorder %s14, 3
      %p72 = por %p70, %p71
      %p73 = scmp.ne.s32.totalorder %s62, %s63
      %p74 = scmp.eq.s32.totalorder %s14, 0
      %p75 = por %p73, %p74
      %p76 = scmp.ne.s32.totalorder %s62, %s63
      %p77 = scmp.eq.s32.totalorder %s15, 3
      %p78 = por %p76, %p77
      %p80 = scmp.ne.s32.totalorder %s63, %s79
      %p81 = scmp.eq.s32.totalorder %s15, 0
      %p82 = por %p80, %p81
      %s83 = ssub.s32 %s16, %s28
      %p84 = scmp.eq.s32.totalorder %s83, 0
      %s86 = sadd.s32 %s85, 1
      %s87 = scalar_select %p84, %s85, %s86
      %p90 = pneg %p84
      %p91 = scmp.eq.s32.totalorder %s9, 3
      %p92 = por %p90, %p91
      %p93 = scmp.ne.s32.totalorder %s85, %s88
      %p94 = scmp.eq.s32.totalorder %s9, 0
      %p95 = por %p93, %p94
      %p96 = scmp.ne.s32.totalorder %s85, %s88
      %p97 = scmp.eq.s32.totalorder %s14, 3
      %p98 = por %p96, %p97
      %p99 = scmp.ne.s32.totalorder %s88, %s89
      %p100 = scmp.eq.s32.totalorder %s14, 0
      %p101 = por %p99, %p100
      %p102 = scmp.ne.s32.totalorder %s88, %s89
      %p103 = scmp.eq.s32.totalorder %s15, 3
      %p104 = por %p102, %p103
      %p106 = scmp.ne.s32.totalorder %s89, %s105
      %p107 = scmp.eq.s32.totalorder %s15, 0
      %p108 = por %p106, %p107
      %s109 = ssub.s32 %s16, %s28
      %s110 = ssub.s32 %s17, %s24
      %s111 = sor.u32 %s109, %s110
      %p112 = scmp.eq.s32.totalorder %s111, 0
      %s114 = sadd.s32 %s113, 1
      %s115 = scalar_select %p112, %s113, %s114
      %p118 = pneg %p112
      %p119 = scmp.eq.s32.totalorder %s9, 3
      %p120 = por %p118, %p119
      %p121 = scmp.ne.s32.totalorder %s113, %s116
      %p122 = scmp.eq.s32.totalorder %s9, 0
      %p123 = por %p121, %p122
      %p124 = scmp.ne.s32.totalorder %s113, %s116
      %p125 = scmp.eq.s32.totalorder %s14, 3
      %p126 = por %p124, %p125
      %p127 = scmp.ne.s32.totalorder %s116, %s117
      %p128 = scmp.eq.s32.totalorder %s14, 0
      %p129 = por %p127, %p128
      %p130 = scmp.ne.s32.totalorder %s116, %s117
      %p131 = scmp.eq.s32.totalorder %s15, 3
      %p132 = por %p130, %p131
      %p134 = scmp.ne.s32.totalorder %s117, %s133
      %p135 = scmp.eq.s32.totalorder %s15, 0
      %p136 = por %p134, %p135
      %p137 = scmp.le.s32.totalorder 1, %s9
      %p138 = scmp.lt.s32.totalorder %s9, 5
      %p139 = pnand %p137, %p138
      %p140 = pneg %p139
      // Predicated region
      $region9: #{dsconv_forward.5} parent=5 // pred_check
        _
      $region10: #{dsconv_forward.5} parent=5 // pred_check_branch
        %142 = sbr.rel (%p139) target = $region12
      $region11: #{dsconv_forward.5} parent=5 // pred_region
        %s143 = ssub.s32 %s9, 1
      $region12: #{dsconv_forward.5} parent=5 // pred_fallthru
        _
      %p144 = scmp.lt.s32.totalorder %s9, 4
      // Predicated region
      $region13: #{dsconv_forward.5} parent=5 // pred_check
        %p145 = pneg %p144
      $region14: #{dsconv_forward.5} parent=5 // pred_check_branch
        %147 = sbr.rel (%p145) target = $region16
      $region15: #{dsconv_forward.5} parent=5 // pred_region
        // Predicated region
        $region17: #{dsconv_forward.5} parent=15 // pred_check
          %p148 = pneg %p43
        $region18: #{dsconv_forward.5} parent=15 // pred_check_branch
          %150 = sbr.rel (%p148) target = $region20
        $region19: #{dsconv_forward.5} parent=15 // pred_region
          %s151 = sand.u32 %s33, 1
          %s152 = sand.u32 %s33, 1
          %s153 = smul.addr %s152, 128
          %s154 = scalar_lea.vmem [#allocation2], %s153
          %s155 = smul.u32 4, %s17
          %s156 = smul.addr %s16, 32
          %s157 = sadd.s32 %s155, %s156
          %s158 = smul.addr %s157, 8
          %s159 = scalar_lea.vmem %s0, %s158
          // Predicated region
          $region21: #{dsconv_forward.5} parent=19 // pred_check
            _
          $region22: #{dsconv_forward.5} parent=19 // pred_check_branch
            %161 = sbr.rel (0) target = $region24
          $region23: #{dsconv_forward.5} parent=19 // pred_region
            // Predicated region
            $region25: #{dsconv_forward.5} parent=23 // pred_check
              _
            $region26: #{dsconv_forward.5} parent=23 // pred_check_branch
              %163 = sbr.rel (0) target = $region28
            $region27: #{dsconv_forward.5} parent=23 // pred_region
              loop: start=0, step=1, limit=1
              $region29: #{dsconv_forward.5} parent=27 // loop_pre_header
                _
              $region30: #{dsconv_forward.5} parent=27 // loop_header
                %s165 = sphi 0, %s169
                %p166 = scmp.ge.s32.totalorder %s165, 1
                %s170 = sphi %s159, %s159
                %s171 = sphi %s154, %s154
              $region31: #{dsconv_forward.5} parent=27 // loop_header_branch
                %168 = sbr.rel (%p166) target = $region35
              $region32: #{dsconv_forward.5} parent=27 // loop_body
                %v172 = vld [vmem:[%s170] sm:$0xff]
                %173 = vst [vmem:[%s171] sm:$0xff] %v172
                %v174 = vld [vmem:[%s170 + $0x8] sm:$0xff]
                %175 = vst [vmem:[%s171 + $0x8] sm:$0xff] %v174
                %v176 = vld [vmem:[%s170 + $0x10] sm:$0xff]
                %177 = vst [vmem:[%s171 + $0x10] sm:$0xff] %v176
                %v178 = vld [vmem:[%s170 + $0x18] sm:$0xff]
                %179 = vst [vmem:[%s171 + $0x18] sm:$0xff] %v178
                %v180 = vld [vmem:[%s170 + $0x40] sm:$0xff]
                %181 = vst [vmem:[%s171 + $0x20] sm:$0xff] %v180
                %v182 = vld [vmem:[%s170 + $0x48] sm:$0xff]
                %183 = vst [vmem:[%s171 + $0x28] sm:$0xff] %v182
                %v184 = vld [vmem:[%s170 + $0x50] sm:$0xff]
                %185 = vst [vmem:[%s171 + $0x30] sm:$0xff] %v184
                %v186 = vld [vmem:[%s170 + $0x58] sm:$0xff]
                %187 = vst [vmem:[%s171 + $0x38] sm:$0xff] %v186
                %v188 = vld [vmem:[%s170 + $0x80] sm:$0xff]
                %189 = vst [vmem:[%s171 + $0x40] sm:$0xff] %v188
                %v190 = vld [vmem:[%s170 + $0x88] sm:$0xff]
                %191 = vst [vmem:[%s171 + $0x48] sm:$0xff] %v190
                %v192 = vld [vmem:[%s170 + $0x90] sm:$0xff]
                %193 = vst [vmem:[%s171 + $0x50] sm:$0xff] %v192
                %v194 = vld [vmem:[%s170 + $0x98] sm:$0xff]
                %195 = vst [vmem:[%s171 + $0x58] sm:$0xff] %v194
                %v196 = vld [vmem:[%s170 + $0xc0] sm:$0xff]
                %197 = vst [vmem:[%s171 + $0x60] sm:$0xff] %v196
                %v198 = vld [vmem:[%s170 + $0xc8] sm:$0xff]
                %199 = vst [vmem:[%s171 + $0x68] sm:$0xff] %v198
                %v200 = vld [vmem:[%s170 + $0xd0] sm:$0xff]
                %201 = vst [vmem:[%s171 + $0x70] sm:$0xff] %v200
                %v202 = vld [vmem:[%s170 + $0xd8] sm:$0xff]
                %203 = vst [vmem:[%s171 + $0x78] sm:$0xff] %v202
              $region33: #{dsconv_forward.5} parent=27 // loop_footer
                %s169 = sadd.s32 1, %s165
              $region34: #{dsconv_forward.5} parent=27 // loop_footer_branch
                %164 = sbr.rel target = $region30
              $region35: #{dsconv_forward.5} parent=27 // loop_exit
                _
            $region28: #{dsconv_forward.5} parent=23 // pred_fallthru
              _
            // Predicated region
            $region36: #{dsconv_forward.5} parent=23 // pred_check
              _
            $region37: #{dsconv_forward.5} parent=23 // pred_check_branch
              %205 = sbr.rel target = $region39
            $region38: #{dsconv_forward.5} parent=23 // pred_region
              _
            $region39: #{dsconv_forward.5} parent=23 // pred_fallthru
              _
          $region24: #{dsconv_forward.5} parent=19 // pred_fallthru
            _
          %206 = vnop
        $region20: #{dsconv_forward.5} parent=15 // pred_fallthru
          _
        // Predicated region
        $region40: #{dsconv_forward.5} parent=15 // pred_check
          %p207 = pneg %p69
        $region41: #{dsconv_forward.5} parent=15 // pred_check_branch
          %209 = sbr.rel (%p207) target = $region43
        $region42: #{dsconv_forward.5} parent=15 // pred_region
          %p210 = scmp.lt.s32.totalorder %s16, 1
          %s211 = scalar_select %p210, %s16, 1
          %s212 = smul.addr %s211, 4
          %s213 = smul.addr %s212, 8
          %s214 = scalar_lea.vmem %s1, %s213
        $region43: #{dsconv_forward.5} parent=15 // pred_fallthru
          _
        // Predicated region
        $region44: #{dsconv_forward.5} parent=15 // pred_check
          %p215 = pneg %p95
        $region45: #{dsconv_forward.5} parent=15 // pred_check_branch
          %217 = sbr.rel (%p215) target = $region47
        $region46: #{dsconv_forward.5} parent=15 // pred_region
          %p218 = scmp.lt.s32.totalorder %s16, 1
          %s219 = scalar_select %p218, %s16, 1
          %s220 = smul.addr %s219, 4
          %s221 = smul.addr %s220, 8
          %s222 = scalar_lea.vmem %s2, %s221
        $region47: #{dsconv_forward.5} parent=15 // pred_fallthru
          _
      $region16: #{dsconv_forward.5} parent=5 // pred_fallthru
        _
      %p223 = scmp.le.s32.totalorder 1, %s9
      %p224 = scmp.lt.s32.totalorder %s9, 5
      %p225 = pnand %p223, %p224
      %p226 = pneg %p225
      // Predicated region
      $region48: #{dsconv_forward.5} parent=5 // pred_check
        _
      $region49: #{dsconv_forward.5} parent=5 // pred_check_branch
        %228 = sbr.rel (%p225) target = $region51
      $region50: #{dsconv_forward.5} parent=5 // pred_region
        %s229 = ssub.s32 %s9, 1
        %s230 = sand.u32 %s36, 1
        %s231 = sand.u32 %s36, 1
        %s232 = smul.addr %s231, 128
        %s233 = scalar_lea.vmem [#allocation2], %s232
        // Predicated region
        $region52: #{dsconv_forward.5} parent=50 // pred_check
          %p234 = pneg %p49
        $region53: #{dsconv_forward.5} parent=50 // pred_check_branch
          %236 = sbr.rel (%p234) target = $region55
        $region54: #{dsconv_forward.5} parent=50 // pred_region
          _
        $region55: #{dsconv_forward.5} parent=50 // pred_fallthru
          _
        %s237 = sand.u32 %s36, 1
        %s238 = sand.u32 %s36, 1
        %s239 = smul.addr %s238, 128
        %s240 = scalar_lea.vmem [#allocation2], %s239
        %p241 = pneg %p49
        %p242 = pneg %p46
        %p243 = scmp.lt.s32.totalorder %s18, 1
        %s244 = scalar_select %p243, %s18, 1
        %s245 = smul.addr %s244, 4
        %s246 = smul.addr %s245, 8
        %s247 = scalar_lea.vmem %s1, %s246
        %p248 = pneg %p75
        %p249 = pneg %p72
        %p250 = scmp.lt.s32.totalorder %s18, 1
        %s251 = scalar_select %p250, %s18, 1
        %s252 = smul.addr %s251, 4
        %s253 = smul.addr %s252, 8
        %s254 = scalar_lea.vmem %s2, %s253
        %p255 = pneg %p101
        %p256 = pneg %p98
        %p257 = pneg %p129
        %p258 = pneg %p126
        %s259 = sand.u32 %s116, 1
        %s260 = sand.u32 %s116, 1
        %s261 = smul.addr %s260, 64
        %s262 = scalar_lea.vmem [#allocation3], %s261
        %s263 = smul.u32 4, %s19
        %p264 = scmp.lt.s32.totalorder %s18, 1
        %s265 = scalar_select %p264, %s18, 1
        %s266 = smul.addr %s265, 4
        %s267 = smul.addr %s266, 8
        %s268 = scalar_lea.vmem %s1, %s267
        %p269 = scmp.lt.s32.totalorder %s18, 1
        %s270 = scalar_select %p269, %s18, 1
        %s271 = smul.addr %s270, 4
        %s272 = smul.addr %s271, 8
        %s273 = scalar_lea.vmem %s2, %s272
        %s274 = smul.u32 4, %s19
        %v275 = vld [vmem:[%s233] sm:$0xff]
        %v276 = vld [vmem:[%s233 + $0x8] sm:$0xff]
        %v277 = vld [vmem:[%s233 + $0x10] sm:$0xff]
        %v278 = vld [vmem:[%s233 + $0x18] sm:$0xff]
        %v279 = vld [vmem:[%s233 + $0x20] sm:$0xff]
        %v280 = vld [vmem:[%s233 + $0x28] sm:$0xff]
        %v281 = vld [vmem:[%s233 + $0x30] sm:$0xff]
        %v282 = vld [vmem:[%s233 + $0x38] sm:$0xff]
        %v283 = vld [vmem:[%s233 + $0x40] sm:$0xff]
        %v284 = vld [vmem:[%s233 + $0x48] sm:$0xff]
        %v285 = vld [vmem:[%s233 + $0x50] sm:$0xff]
        %v286 = vld [vmem:[%s233 + $0x58] sm:$0xff]
        %v287 = vld [vmem:[%s233 + $0x60] sm:$0xff]
        %v288 = vld [vmem:[%s233 + $0x68] sm:$0xff]
        %v289 = vld [vmem:[%s233 + $0x70] sm:$0xff]
        %v290 = vld [vmem:[%s233 + $0x78] sm:$0xff]
        %v291 = vld [vmem:[%s268] sm:$0xff]
        %v292 = vld [vmem:[%s268 + $0x8] sm:$0xff]
        %v293 = vld [vmem:[%s268 + $0x10] sm:$0xff]
        %v294 = vld [vmem:[%s268 + $0x18] sm:$0xff]
        %296 = vset.pattern.permute.xlu0 0
        %297 = vperm.xlu0 %296, %v291
        %v298 = vpop.permute.xlu0 %297
        %301 = vset.pattern.permute.xlu0 0
        %302 = vperm.xlu0 %301, %v292
        %v303 = vpop.permute.xlu0 %302
        %306 = vset.pattern.permute.xlu0 0
        %307 = vperm.xlu0 %306, %v293
        %v308 = vpop.permute.xlu0 %307
        %311 = vset.pattern.permute.xlu0 0
        %312 = vperm.xlu0 %311, %v294
        %v313 = vpop.permute.xlu0 %312
        %v315 = vmul.f32 %v275, %v298
        %v316 = vmul.f32 %v276, %v298
        %v317 = vmul.f32 %v277, %v298
        %v318 = vmul.f32 %v278, %v298
        %v319 = vmul.f32 %v279, %v303
        %v320 = vmul.f32 %v280, %v303
        %v321 = vmul.f32 %v281, %v303
        %v322 = vmul.f32 %v282, %v303
        %v323 = vmul.f32 %v283, %v308
        %v324 = vmul.f32 %v284, %v308
        %v325 = vmul.f32 %v285, %v308
        %v326 = vmul.f32 %v286, %v308
        %v327 = vmul.f32 %v287, %v313
        %v328 = vmul.f32 %v288, %v313
        %v329 = vmul.f32 %v289, %v313
        %v330 = vmul.f32 %v290, %v313
        %v331 = vld [vmem:[%s273] sm:$0xff]
        %v332 = vld [vmem:[%s273 + $0x8] sm:$0xff]
        %v333 = vld [vmem:[%s273 + $0x10] sm:$0xff]
        %v334 = vld [vmem:[%s273 + $0x18] sm:$0xff]
        %336 = vset.pattern.permute.xlu0 0
        %337 = vperm.xlu0 %336, %v331
        %v338 = vpop.permute.xlu0 %337
        %341 = vset.pattern.permute.xlu0 0
        %342 = vperm.xlu0 %341, %v332
        %v343 = vpop.permute.xlu0 %342
        %346 = vset.pattern.permute.xlu0 0
        %347 = vperm.xlu0 %346, %v333
        %v348 = vpop.permute.xlu0 %347
        %351 = vset.pattern.permute.xlu0 0
        %352 = vperm.xlu0 %351, %v334
        %v353 = vpop.permute.xlu0 %352
        %v355 = vadd.f32 %v315, %v338
        %v356 = vadd.f32 %v316, %v338
        %v357 = vadd.f32 %v317, %v338
        %v358 = vadd.f32 %v318, %v338
        %v359 = vadd.f32 %v319, %v343
        %v360 = vadd.f32 %v320, %v343
        %v361 = vadd.f32 %v321, %v343
        %v362 = vadd.f32 %v322, %v343
        %v363 = vadd.f32 %v323, %v348
        %v364 = vadd.f32 %v324, %v348
        %v365 = vadd.f32 %v325, %v348
        %v366 = vadd.f32 %v326, %v348
        %v367 = vadd.f32 %v327, %v353
        %v368 = vadd.f32 %v328, %v353
        %v369 = vadd.f32 %v329, %v353
        %v370 = vadd.f32 %v330, %v353
        %v371 = vmax.f32 %v355, 0.0
        %v372 = vmax.f32 %v356, 0.0
        %v373 = vmax.f32 %v357, 0.0
        %v374 = vmax.f32 %v358, 0.0
        %v375 = vmax.f32 %v359, 0.0
        %v376 = vmax.f32 %v360, 0.0
        %v377 = vmax.f32 %v361, 0.0
        %v378 = vmax.f32 %v362, 0.0
        %v379 = vmax.f32 %v363, 0.0
        %v380 = vmax.f32 %v364, 0.0
        %v381 = vmax.f32 %v365, 0.0
        %v382 = vmax.f32 %v366, 0.0
        %v383 = vmax.f32 %v367, 0.0
        %v384 = vmax.f32 %v368, 0.0
        %v385 = vmax.f32 %v369, 0.0
        %v386 = vmax.f32 %v370, 0.0
        %v387 = vpack.c.bf16 %v372, %v371
        %v388 = vpack.c.bf16 %v374, %v373
        %v389 = vpack.c.bf16 %v376, %v375
        %v390 = vpack.c.bf16 %v378, %v377
        %v391 = vpack.c.bf16 %v380, %v379
        %v392 = vpack.c.bf16 %v382, %v381
        %v393 = vpack.c.bf16 %v384, %v383
        %v394 = vpack.c.bf16 %v386, %v385
        %395 = vst [vmem:[%s262] sm:$0xff] %v387
        %396 = vst [vmem:[%s262 + $0x8] sm:$0xff] %v388
        %397 = vst [vmem:[%s262 + $0x10] sm:$0xff] %v389
        %398 = vst [vmem:[%s262 + $0x18] sm:$0xff] %v390
        %399 = vst [vmem:[%s262 + $0x20] sm:$0xff] %v391
        %400 = vst [vmem:[%s262 + $0x28] sm:$0xff] %v392
        %401 = vst [vmem:[%s262 + $0x30] sm:$0xff] %v393
        %402 = vst [vmem:[%s262 + $0x38] sm:$0xff] %v394
        %s403 = sand.u32 %s116, 1
        %s404 = sand.u32 %s116, 1
        %s405 = smul.addr %s404, 64
        %s406 = scalar_lea.vmem [#allocation3], %s405
        // Predicated region
        $region56: #{dsconv_forward.5} parent=50 // pred_check
          %p407 = pneg %p126
        $region57: #{dsconv_forward.5} parent=50 // pred_check_branch
          %409 = sbr.rel (%p407) target = $region59
        $region58: #{dsconv_forward.5} parent=50 // pred_region
          %s410 = smul.u32 4, %s19
          %s411 = smul.addr %s18, 32
          %s412 = sadd.s32 %s410, %s411
          %s413 = smul.addr %s412, 4
          %s414 = scalar_lea.vmem %s3, %s413
          // Predicated region
          $region60: #{dsconv_forward.5} parent=58 // pred_check
            _
          $region61: #{dsconv_forward.5} parent=58 // pred_check_branch
            %416 = sbr.rel (0) target = $region63
          $region62: #{dsconv_forward.5} parent=58 // pred_region
            // Predicated region
            $region64: #{dsconv_forward.5} parent=62 // pred_check
              _
            $region65: #{dsconv_forward.5} parent=62 // pred_check_branch
              %418 = sbr.rel (0) target = $region67
            $region66: #{dsconv_forward.5} parent=62 // pred_region
              loop: start=0, step=1, limit=1
              $region68: #{dsconv_forward.5} parent=66 // loop_pre_header
                _
              $region69: #{dsconv_forward.5} parent=66 // loop_header
                %s420 = sphi 0, %s424
                %p421 = scmp.ge.s32.totalorder %s420, 1
                %s425 = sphi %s406, %s406
                %s426 = sphi %s414, %s414
              $region70: #{dsconv_forward.5} parent=66 // loop_header_branch
                %423 = sbr.rel (%p421) target = $region74
              $region71: #{dsconv_forward.5} parent=66 // loop_body
                %v427 = vld [vmem:[%s425] sm:$0xff]
                %428 = vst [vmem:[%s426] sm:$0xff] %v427
                %v429 = vld [vmem:[%s425 + $0x8] sm:$0xff]
                %430 = vst [vmem:[%s426 + $0x8] sm:$0xff] %v429
                %v431 = vld [vmem:[%s425 + $0x10] sm:$0xff]
                %432 = vst [vmem:[%s426 + $0x20] sm:$0xff] %v431
                %v433 = vld [vmem:[%s425 + $0x18] sm:$0xff]
                %434 = vst [vmem:[%s426 + $0x28] sm:$0xff] %v433
                %v435 = vld [vmem:[%s425 + $0x20] sm:$0xff]
                %436 = vst [vmem:[%s426 + $0x40] sm:$0xff] %v435
                %v437 = vld [vmem:[%s425 + $0x28] sm:$0xff]
                %438 = vst [vmem:[%s426 + $0x48] sm:$0xff] %v437
                %v439 = vld [vmem:[%s425 + $0x30] sm:$0xff]
                %440 = vst [vmem:[%s426 + $0x60] sm:$0xff] %v439
                %v441 = vld [vmem:[%s425 + $0x38] sm:$0xff]
                %442 = vst [vmem:[%s426 + $0x68] sm:$0xff] %v441
              $region72: #{dsconv_forward.5} parent=66 // loop_footer
                %s424 = sadd.s32 1, %s420
              $region73: #{dsconv_forward.5} parent=66 // loop_footer_branch
                %419 = sbr.rel target = $region69
              $region74: #{dsconv_forward.5} parent=66 // loop_exit
                _
            $region67: #{dsconv_forward.5} parent=62 // pred_fallthru
              _
            // Predicated region
            $region75: #{dsconv_forward.5} parent=62 // pred_check
              _
            $region76: #{dsconv_forward.5} parent=62 // pred_check_branch
              %444 = sbr.rel target = $region78
            $region77: #{dsconv_forward.5} parent=62 // pred_region
              _
            $region78: #{dsconv_forward.5} parent=62 // pred_fallthru
              _
          $region63: #{dsconv_forward.5} parent=58 // pred_fallthru
            _
          %445 = vnop
        $region59: #{dsconv_forward.5} parent=50 // pred_fallthru
          _
      $region51: #{dsconv_forward.5} parent=5 // pred_fallthru
        _
      %p446 = scmp.le.s32.totalorder 2, %s9
      // Predicated region
      $region79: #{dsconv_forward.5} parent=5 // pred_check
        %p447 = pneg %p446
      $region80: #{dsconv_forward.5} parent=5 // pred_check_branch
        %449 = sbr.rel (%p447) target = $region82
      $region81: #{dsconv_forward.5} parent=5 // pred_region
        %s450 = ssub.s32 %s9, 2
        // Predicated region
        $region83: #{dsconv_forward.5} parent=81 // pred_check
          %p451 = pneg %p132
        $region84: #{dsconv_forward.5} parent=81 // pred_check_branch
          %453 = sbr.rel (%p451) target = $region86
        $region85: #{dsconv_forward.5} parent=81 // pred_region
          %s454 = sand.u32 %s117, 1
          %s455 = sand.u32 %s117, 1
          %s456 = smul.addr %s455, 64
          %s457 = scalar_lea.vmem [#allocation3], %s456
        $region86: #{dsconv_forward.5} parent=81 // pred_fallthru
          _
      $region82: #{dsconv_forward.5} parent=5 // pred_fallthru
        _
    $region6: #{dsconv_forward.5} parent=1 // loop_footer
      %s13 = sadd.s32 1, %s9
    $region7: #{dsconv_forward.5} parent=1 // loop_footer_branch
      %8 = sbr.rel target = $region3
    $region8: #{dsconv_forward.5} parent=1 // loop_exit
      _

// kernel: squeeze.6
$region0: #{squeeze.6}
  %s0 = inlined_call_operand.vmem [shape: f32[2,8], index: 0, kind: input, shape index: {}]
  %s1 = inlined_call_operand.vmem [shape: f32[2,2,4], index: 1, kind: output, shape index: {}]
  $region1: #{squeeze.6} parent=0
    #allocation0 [shape = 'u8[8192]{0}', space=vmem, size = 0x2000, scoped, tag = 'scoped mem for output reshape']
    #allocation1 [shape = 'u8[4096]{0}', space=vmem, size = 0x1000, scoped, tag = 'scoped mem for input reshape']
    %s3 = ssub.s32 4, 1
    %v4 = vld [vmem:[%s0] sm:%s3]
    %5 = vst [vmem:[#allocation1] sm:%s3] %v4
    %v6 = vld [vmem:[#allocation1] sm:$0x3]
    %vm7 = vcmask 31744
    %8 = vst.msk [vmem:[#allocation0] ss:$8 sm:$0x3] %vm7, %v6
    %v9 = vld [vmem:[#allocation1] sm:$0x3]
    %10 = vrot.lane.b32.xlu0 %v9, 124
    %v11 = vpop.permute.xlu0 %10
    %vm12 = vcmask 31744
    %s13 = scalar_lea.vmem [#allocation0], 1
    %14 = vst.msk [vmem:[%s13] ss:$8 sm:$0x3] %vm12, %v11
    %s16 = ssub.s32 4, 1
    %v17 = vld [vmem:[#allocation0] sm:%s16]
    %s19 = ssub.s32 4, 1
    %20 = vst [vmem:[%s1] sm:%s19] %v17
    %s21 = scalar_lea.vmem [#allocation0], 8
    %v22 = vld [vmem:[%s21] sm:%s16]
    %s24 = ssub.s32 4, 1
    %s25 = scalar_lea.vmem %s1, 2
    %26 = vst [vmem:[%s25] sm:%s24] %v22

// kernel: dsconv_forward.4
$region0: #{dsconv_forward.4}
  #allocation0 [shape = 'u32[]', space=smem, size = 0x4, offset = 0x4, fixed_abs, tag = 'smem constant byte address 0x4 - core index']
  #allocation1 [shape = 'u32[72,128]{1,0:T(1,128)}', space=vmem, size = 0x9000, scoped, tag = 'internal scratch']
  %s0 = inlined_call_operand.vmem [shape: bf16[2,2,4,768], index: 0, kind: input, shape index: {}]
  %s1 = inlined_call_operand.vmem [shape: bf16[27,32,4], index: 1, kind: input, shape index: {}]
  %s2 = inlined_call_operand.vmem [shape: f32[32,1], index: 2, kind: input, shape index: {}]
  %s3 = inlined_call_operand.vmem [shape: f32[1,1024], index: 3, kind: input, shape index: {}]
  %s4 = inlined_call_operand.vmem [shape: f32[2,32,1024], index: 4, kind: output, shape index: {0}]
  %s5 = inlined_call_operand.vmem [shape: f32[2,32,1], index: 5, kind: output, shape index: {1}]
  %s6 = inlined_call_operand.vmem [shape: f32[2,32,1], index: 6, kind: output, shape index: {2}]
  %7 = xla_tuple %s4, %s5, %s6
  %s8 = sld [smem:[#allocation0]]
  $region88: #{dsconv_forward.4} parent=0
    _
  %s10 = ssub.s32 1, %s8
  %s11 = scalar_select 0, %s10, %s8
  $region1: #{dsconv_forward.4} parent=0
    #allocation2 [shape = 'u8[131072]{0}', space=vmem, size = 0x20000, scoped, tag = 'output window, operand 0']
    loop: start=0, step=1, limit=6
    $region2: #{dsconv_forward.4} parent=1 // loop_pre_header
      _
    $region3: #{dsconv_forward.4} parent=1 // loop_header
      %s13 = sphi 0, %s17
      %p14 = scmp.ge.s32.totalorder %s13, 6
      %s20 = sphi 0, %s32
      %s21 = sphi 0, %s28
      %s22 = sphi 0, %s20
      %s23 = sphi 0, %s21
      %s24 = sphi 0, %s22
      %s25 = sphi 0, %s23
      %s37 = sphi 0, %s39
      %s40 = sphi 0, %s37
      %s41 = sphi 0, %s40
      %s57 = sphi 0, %s41
      %s61 = sphi 0, %s61
      %s63 = sphi 0, %s61
      %s64 = sphi 0, %s63
      %s78 = sphi 0, %s64
      %s82 = sphi 0, %s82
      %s84 = sphi 0, %s82
      %s85 = sphi 0, %s84
      %s99 = sphi 0, %s85
      %s105 = sphi 0, %s107
      %s108 = sphi 0, %s105
      %s109 = sphi 0, %s108
      %s125 = sphi 0, %s109
      %s133 = sphi 0, %s135
      %s136 = sphi 0, %s133
      %s137 = sphi 0, %s136
      %s153 = sphi 0, %s137
      %s159 = sphi 0, %s161
      %s162 = sphi 0, %s159
      %s163 = sphi 0, %s162
      %s179 = sphi 0, %s163
      %s185 = sphi 0, %s187
      %s188 = sphi 0, %s185
      %s189 = sphi 0, %s188
      %s205 = sphi 0, %s189
    $region4: #{dsconv_forward.4} parent=1 // loop_header_branch
      %16 = sbr.rel (%p14) target = $region8
    $region5: #{dsconv_forward.4} parent=1 // loop_body
      %s18 = ssub.s32 %s13, 1
      %s19 = ssub.s32 %s13, 2
      %s26 = sadd.s32 1, %s21
      %p27 = scmp.ge.s32.totalorder %s26, 2
      %s28 = scalar_select %p27, 0, %s26
      %s29 = sadd.s32 1, %s20
      %s30 = scalar_select %p27, %s29, %s20
      %p31 = scmp.ge.s32.totalorder %s30, 2
      %s32 = scalar_select %p31, 0, %s30
      %s33 = ssub.s32 %s20, %s32
      %s34 = ssub.s32 %s21, %s28
      %s35 = sor.u32 %s33, %s34
      %p36 = scmp.eq.s32.totalorder %s35, 0
      %s38 = sadd.s32 %s37, 1
      %s39 = scalar_select %p36, %s37, %s38
      %p42 = pneg %p36
      %p43 = scmp.eq.s32.totalorder %s13, 3
      %p44 = por %p42, %p43
      %p45 = scmp.ne.s32.totalorder %s37, %s40
      %p46 = scmp.eq.s32.totalorder %s13, 0
      %p47 = por %p45, %p46
      %p48 = scmp.ne.s32.totalorder %s37, %s40
      %p49 = scmp.eq.s32.totalorder %s18, 3
      %p50 = por %p48, %p49
      %p51 = scmp.ne.s32.totalorder %s40, %s41
      %p52 = scmp.eq.s32.totalorder %s18, 0
      %p53 = por %p51, %p52
      %p54 = scmp.ne.s32.totalorder %s40, %s41
      %p55 = scmp.eq.s32.totalorder %s19, 3
      %p56 = por %p54, %p55
      %p58 = scmp.ne.s32.totalorder %s41, %s57
      %p59 = scmp.eq.s32.totalorder %s19, 0
      %p60 = por %p58, %p59
      %s62 = sadd.s32 %s61, 1
      %p65 = scmp.eq.s32.totalorder %s13, 3
      %p66 = scmp.ne.s32.totalorder %s61, %s63
      %p67 = scmp.eq.s32.totalorder %s13, 0
      %p68 = por %p66, %p67
      %p69 = scmp.ne.s32.totalorder %s61, %s63
      %p70 = scmp.eq.s32.totalorder %s18, 3
      %p71 = por %p69, %p70
      %p72 = scmp.ne.s32.totalorder %s63, %s64
      %p73 = scmp.eq.s32.totalorder %s18, 0
      %p74 = por %p72, %p73
      %p75 = scmp.ne.s32.totalorder %s63, %s64
      %p76 = scmp.eq.s32.totalorder %s19, 3
      %p77 = por %p75, %p76
      %p79 = scmp.ne.s32.totalorder %s64, %s78
      %p80 = scmp.eq.s32.totalorder %s19, 0
      %p81 = por %p79, %p80
      %s83 = sadd.s32 %s82, 1
      %p86 = scmp.eq.s32.totalorder %s13, 3
      %p87 = scmp.ne.s32.totalorder %s82, %s84
      %p88 = scmp.eq.s32.totalorder %s13, 0
      %p89 = por %p87, %p88
      %p90 = scmp.ne.s32.totalorder %s82, %s84
      %p91 = scmp.eq.s32.totalorder %s18, 3
      %p92 = por %p90, %p91
      %p93 = scmp.ne.s32.totalorder %s84, %s85
      %p94 = scmp.eq.s32.totalorder %s18, 0
      %p95 = por %p93, %p94
      %p96 = scmp.ne.s32.totalorder %s84, %s85
      %p97 = scmp.eq.s32.totalorder %s19, 3
      %p98 = por %p96, %p97
      %p100 = scmp.ne.s32.totalorder %s85, %s99
      %p101 = scmp.eq.s32.totalorder %s19, 0
      %p102 = por %p100, %p101
      %s103 = ssub.s32 %s21, %s28
      %p104 = scmp.eq.s32.totalorder %s103, 0
      %s106 = sadd.s32 %s105, 1
      %s107 = scalar_select %p104, %s105, %s106
      %p110 = pneg %p104
      %p111 = scmp.eq.s32.totalorder %s13, 3
      %p112 = por %p110, %p111
      %p113 = scmp.ne.s32.totalorder %s105, %s108
      %p114 = scmp.eq.s32.totalorder %s13, 0
      %p115 = por %p113, %p114
      %p116 = scmp.ne.s32.totalorder %s105, %s108
      %p117 = scmp.eq.s32.totalorder %s18, 3
      %p118 = por %p116, %p117
      %p119 = scmp.ne.s32.totalorder %s108, %s109
      %p120 = scmp.eq.s32.totalorder %s18, 0
      %p121 = por %p119, %p120
      %p122 = scmp.ne.s32.totalorder %s108, %s109
      %p123 = scmp.eq.s32.totalorder %s19, 3
      %p124 = por %p122, %p123
      %p126 = scmp.ne.s32.totalorder %s109, %s125
      %p127 = scmp.eq.s32.totalorder %s19, 0
      %p128 = por %p126, %p127
      %s129 = ssub.s32 %s20, %s32
      %s130 = ssub.s32 %s21, %s28
      %s131 = sor.u32 %s129, %s130
      %p132 = scmp.eq.s32.totalorder %s131, 0
      %s134 = sadd.s32 %s133, 1
      %s135 = scalar_select %p132, %s133, %s134
      %p138 = pneg %p132
      %p139 = scmp.eq.s32.totalorder %s13, 3
      %p140 = por %p138, %p139
      %p141 = scmp.ne.s32.totalorder %s133, %s136
      %p142 = scmp.eq.s32.totalorder %s13, 0
      %p143 = por %p141, %p142
      %p144 = scmp.ne.s32.totalorder %s133, %s136
      %p145 = scmp.eq.s32.totalorder %s18, 3
      %p146 = por %p144, %p145
      %p147 = scmp.ne.s32.totalorder %s136, %s137
      %p148 = scmp.eq.s32.totalorder %s18, 0
      %p149 = por %p147, %p148
      %p150 = scmp.ne.s32.totalorder %s136, %s137
      %p151 = scmp.eq.s32.totalorder %s19, 3
      %p152 = por %p150, %p151
      %p154 = scmp.ne.s32.totalorder %s137, %s153
      %p155 = scmp.eq.s32.totalorder %s19, 0
      %p156 = por %p154, %p155
      %s157 = ssub.s32 %s20, %s32
      %p158 = scmp.eq.s32.totalorder %s157, 0
      %s160 = sadd.s32 %s159, 1
      %s161 = scalar_select %p158, %s159, %s160
      %p164 = pneg %p158
      %p165 = scmp.eq.s32.totalorder %s13, 3
      %p166 = por %p164, %p165
      %p167 = scmp.ne.s32.totalorder %s159, %s162
      %p168 = scmp.eq.s32.totalorder %s13, 0
      %p169 = por %p167, %p168
      %p170 = scmp.ne.s32.totalorder %s159, %s162
      %p171 = scmp.eq.s32.totalorder %s18, 3
      %p172 = por %p170, %p171
      %p173 = scmp.ne.s32.totalorder %s162, %s163
      %p174 = scmp.eq.s32.totalorder %s18, 0
      %p175 = por %p173, %p174
      %p176 = scmp.ne.s32.totalorder %s162, %s163
      %p177 = scmp.eq.s32.totalorder %s19, 3
      %p178 = por %p176, %p177
      %p180 = scmp.ne.s32.totalorder %s163, %s179
      %p181 = scmp.eq.s32.totalorder %s19, 0
      %p182 = por %p180, %p181
      %s183 = ssub.s32 %s20, %s32
      %p184 = scmp.eq.s32.totalorder %s183, 0
      %s186 = sadd.s32 %s185, 1
      %s187 = scalar_select %p184, %s185, %s186
      %p190 = pneg %p184
      %p191 = scmp.eq.s32.totalorder %s13, 3
      %p192 = por %p190, %p191
      %p193 = scmp.ne.s32.totalorder %s185, %s188
      %p194 = scmp.eq.s32.totalorder %s13, 0
      %p195 = por %p193, %p194
      %p196 = scmp.ne.s32.totalorder %s185, %s188
      %p197 = scmp.eq.s32.totalorder %s18, 3
      %p198 = por %p196, %p197
      %p199 = scmp.ne.s32.totalorder %s188, %s189
      %p200 = scmp.eq.s32.totalorder %s18, 0
      %p201 = por %p199, %p200
      %p202 = scmp.ne.s32.totalorder %s188, %s189
      %p203 = scmp.eq.s32.totalorder %s19, 3
      %p204 = por %p202, %p203
      %p206 = scmp.ne.s32.totalorder %s189, %s205
      %p207 = scmp.eq.s32.totalorder %s19, 0
      %p208 = por %p206, %p207
      %p209 = scmp.le.s32.totalorder 1, %s13
      %p210 = scmp.lt.s32.totalorder %s13, 5
      %p211 = pnand %p209, %p210
      %p212 = pneg %p211
      // Predicated region
      $region9: #{dsconv_forward.4} parent=5 // pred_check
        _
      $region10: #{dsconv_forward.4} parent=5 // pred_check_branch
        %214 = sbr.rel (%p211) target = $region12
      $region11: #{dsconv_forward.4} parent=5 // pred_region
        %s215 = ssub.s32 %s13, 1
        // Predicated region
        $region13: #{dsconv_forward.4} parent=11 // pred_check
          %p216 = pneg %p74
        $region14: #{dsconv_forward.4} parent=11 // pred_check_branch
          %218 = sbr.rel (%p216) target = $region16
        $region15: #{dsconv_forward.4} parent=11 // pred_region
          _
        $region16: #{dsconv_forward.4} parent=11 // pred_fallthru
          _
        // Predicated region
        $region17: #{dsconv_forward.4} parent=11 // pred_check
          %p219 = pneg %p95
        $region18: #{dsconv_forward.4} parent=11 // pred_check_branch
          %221 = sbr.rel (%p219) target = $region20
        $region19: #{dsconv_forward.4} parent=11 // pred_region
          _
        $region20: #{dsconv_forward.4} parent=11 // pred_fallthru
          _
      $region12: #{dsconv_forward.4} parent=5 // pred_fallthru
        _
      %p222 = scmp.lt.s32.totalorder %s13, 4
      // Predicated region
      $region21: #{dsconv_forward.4} parent=5 // pred_check
        %p223 = pneg %p222
      $region22: #{dsconv_forward.4} parent=5 // pred_check_branch
        %225 = sbr.rel (%p223) target = $region24
      $region23: #{dsconv_forward.4} parent=5 // pred_region
        // Predicated region
        $region25: #{dsconv_forward.4} parent=23 // pred_check
          %p226 = pneg %p47
        $region26: #{dsconv_forward.4} parent=23 // pred_check_branch
          %228 = sbr.rel (%p226) target = $region28
        $region27: #{dsconv_forward.4} parent=23 // pred_region
          %p229 = scmp.lt.s32.totalorder %s20, 1
          %s230 = scalar_select %p229, %s20, 1
          %p231 = scmp.lt.s32.totalorder %s21, 1
          %s232 = scalar_select %p231, %s21, 1
          %s233 = smul.addr %s232, 6
          %s234 = smul.addr %s230, 12
          %s235 = sadd.s32 %s233, %s234
          %s236 = smul.addr %s235, 2
          %s237 = scalar_lea.vmem %s0, %s236
        $region28: #{dsconv_forward.4} parent=23 // pred_fallthru
          _
        // Predicated region
        $region29: #{dsconv_forward.4} parent=23 // pred_check
          %p238 = pneg %p115
        $region30: #{dsconv_forward.4} parent=23 // pred_check_branch
          %240 = sbr.rel (%p238) target = $region32
        $region31: #{dsconv_forward.4} parent=23 // pred_region
          %s241 = smul.u32 4, %s21
          %p242 = scmp.lt.s32.totalorder %s241, 7
          %s243 = scalar_select %p242, %s241, 7
          %s244 = scalar_lea.vmem %s3, %s243
          %s245 = smul.u32 4, %s21
        $region32: #{dsconv_forward.4} parent=23 // pred_fallthru
          _
      $region24: #{dsconv_forward.4} parent=5 // pred_fallthru
        _
      %p246 = scmp.le.s32.totalorder 1, %s13
      %p247 = scmp.lt.s32.totalorder %s13, 5
      %p248 = pnand %p246, %p247
      %p249 = pneg %p248
      // Predicated region
      $region33: #{dsconv_forward.4} parent=5 // pred_check
        _
      $region34: #{dsconv_forward.4} parent=5 // pred_check_branch
        %251 = sbr.rel (%p248) target = $region36
      $region35: #{dsconv_forward.4} parent=5 // pred_region
        %s252 = ssub.s32 %s13, 1
        %p253 = scmp.lt.s32.totalorder %s22, 1
        %s254 = scalar_select %p253, %s22, 1
        %p255 = scmp.lt.s32.totalorder %s23, 1
        %s256 = scalar_select %p255, %s23, 1
        %s257 = smul.addr %s256, 6
        %s258 = smul.addr %s254, 12
        %s259 = sadd.s32 %s257, %s258
        %s260 = smul.addr %s259, 2
        %s261 = scalar_lea.vmem %s0, %s260
        %p262 = pneg %p53
        %p263 = pneg %p50
        %p264 = pneg %p74
        %p265 = pneg %p71
        %p266 = pneg %p95
        %p267 = pneg %p92
        %s268 = smul.u32 4, %s23
        %p269 = scmp.lt.s32.totalorder %s268, 7
        %s270 = scalar_select %p269, %s268, 7
        %s271 = scalar_lea.vmem %s3, %s270
        %p272 = pneg %p121
        %p273 = pneg %p118
        %p274 = pneg %p149
        %p275 = pneg %p146
        %s276 = sand.u32 %s136, 1
        %s277 = sand.u32 %s136, 1
        %s278 = smul.addr %s277, 128
        %s279 = scalar_lea.vmem [#allocation2], %s278
        %p280 = pneg %p175
        %p281 = pneg %p172
        %p282 = scmp.lt.s32.totalorder %s22, 1
        %s283 = scalar_select %p282, %s22, 1
        %s284 = smul.addr %s283, 4
        %s285 = smul.addr %s284, 8
        %s286 = scalar_lea.vmem %s5, %s285
        %p287 = pneg %p201
        %p288 = pneg %p198
        %p289 = scmp.lt.s32.totalorder %s22, 1
        %s290 = scalar_select %p289, %s22, 1
        %s291 = smul.addr %s290, 4
        %s292 = smul.addr %s291, 8
        %s293 = scalar_lea.vmem %s6, %s292
        %p294 = scmp.lt.s32.totalorder %s22, 1
        %s295 = scalar_select %p294, %s22, 1
        %p296 = scmp.lt.s32.totalorder %s23, 1
        %s297 = scalar_select %p296, %s23, 1
        %s298 = smul.addr %s297, 6
        %s299 = smul.addr %s295, 12
        %s300 = sadd.s32 %s298, %s299
        %s301 = smul.addr %s300, 2
        %s302 = scalar_lea.vmem %s0, %s301
        %s303 = smul.u32 4, %s23
        %p304 = scmp.lt.s32.totalorder %s303, 7
        %s305 = scalar_select %p304, %s303, 7
        %s306 = scalar_lea.vmem %s3, %s305
        %s307 = smul.u32 4, %s23
        %s308 = smul.u32 4, %s23
        %p309 = scmp.lt.s32.totalorder %s22, 1
        %s310 = scalar_select %p309, %s22, 1
        %s311 = smul.addr %s310, 4
        %s312 = smul.addr %s311, 8
        %s313 = scalar_lea.vmem %s5, %s312
        %p314 = scmp.lt.s32.totalorder %s22, 1
        %s315 = scalar_select %p314, %s22, 1
        %s316 = smul.addr %s315, 4
        %s317 = smul.addr %s316, 8
        %s318 = scalar_lea.vmem %s6, %s317
        %v320 = vld [vmem:[%s1] sm:$0xf]
        %v321 = vld [vmem:[%s1 + $0x4] sm:$0xf]
        %v322 = vld [vmem:[%s1 + $0x8] sm:$0xf]
        %v323 = vld [vmem:[%s1 + $0xc] sm:$0xf]
        %v324 = vld [vmem:[%s302] sm:$0xff]
        %s325 = scalar_lea.vmem %s1, 16
        %v326 = vld [vmem:[%s325] sm:$0xf]
        %v327 = vld [vmem:[%s325 + $0x4] sm:$0xf]
        %v328 = vld [vmem:[%s325 + $0x8] sm:$0xf]
        %v329 = vld [vmem:[%s325 + $0xc] sm:$0xf]
        %v330 = vld [vmem:[%s302 + $0x8] sm:$0x3]
        %v335 = vunpack.c.l.b16 %v326
        %v336 = vunpack.c.l.b16 %v327
        %v337 = vunpack.c.l.b16 %v328
        %v338 = vunpack.c.l.b16 %v329
        %v339 = vpack.c.b16 %v336, %v335
        %v340 = vpack.c.b16 %v338, %v337
        %342 = vst [vmem:[#allocation1] ss:$4 sm:$0xff] %v324
        %s344 = scalar_lea.vmem [#allocation1], 32
        %345 = vst [vmem:[%s344] ss:$4 sm:$0xff] %v330
        %v346 = vld.sshfl [vmem:[#allocation1] sm:$0xff pattern:$0x73625140]
        %v348 = vld.sshfl [vmem:[#allocation1 + $0x8] sm:$0xff pattern:$0x73625140]
        %v350 = vld.sshfl [vmem:[#allocation1 + $0x10] sm:$0xff pattern:$0x73625140]
        %v352 = vld.sshfl [vmem:[#allocation1 + $0x18] sm:$0xff pattern:$0x73625140]
        %v354 = vld.sshfl [vmem:[#allocation1 + $0x20] sm:$0xff pattern:$0x73625140]
        %356 = vrot.lane.b32.xlu0 %v346, 127
        %v357 = vpop.permute.xlu0 %356
        %358 = vrot.lane.b32.xlu0 %v348, 127
        %v359 = vpop.permute.xlu0 %358
        %360 = vrot.lane.b32.xlu0 %v350, 127
        %v361 = vpop.permute.xlu0 %360
        %362 = vrot.lane.b32.xlu0 %v352, 127
        %v363 = vpop.permute.xlu0 %362
        %364 = vrot.lane.b32.xlu0 %v354, 127
        %v365 = vpop.permute.xlu0 %364
        %vm366 = vcmask 1039360
        %v367 = vsel %vm366, %v357, %v359
        %v368 = vsel %vm366, %v359, %v361
        %v369 = vsel %vm366, %v361, %v363
        %v370 = vsel %vm366, %v363, %v365
        %vm371 = vcmask 31744
        %v373 = vsel %vm371, %v339, 0
        %v376 = vsel %vm371, %v340, 0
        %vm378 = vcmask 1041408
        %v380 = vsel %vm378, %v367, 0
        %v383 = vsel %vm378, %v368, 0
        %v386 = vsel %vm378, %v369, 0
        %v389 = vsel %vm378, %v370, 0
        %391 = vmatpush.bf16.msra.mxu0 0
        %392 = vmatpush.bf16.msra.mxu0 0
        %393 = vmatpush.bf16.msra.mxu0 0
        %394 = vmatpush.bf16.msra.mxu0 0
        %395 = vmatpush.bf16.msra.mxu0 0
        %396 = vmatpush.bf16.msra.mxu0 0
        %397 = vmatpush.bf16.msra.mxu0 0
        %398 = vmatpush.bf16.msra.mxu0 %v380
        %399 = vmatmul.bf16.gmra.mxu0 %v373
        %v400 = vpop.f32.mrf.mxu0
        %v401 = vadd.f32 0.0, %v400
        %v402 = vpop.f32.mrf.mxu0
        %v403 = vadd.f32 0.0, %v402
        %404 = vmatmul.bf16.gmra.mxu0 %v376
        %v405 = vpop.f32.mrf.mxu0
        %v406 = vadd.f32 0.0, %v405
        %v407 = vpop.f32.mrf.mxu0
        %v408 = vadd.f32 0.0, %v407
        %409 = vdwg.mxu0
        %410 = vmatpush.bf16.msra.mxu0 0
        %411 = vmatpush.bf16.msra.mxu0 0
        %412 = vmatpush.bf16.msra.mxu0 0
        %413 = vmatpush.bf16.msra.mxu0 0
        %414 = vmatpush.bf16.msra.mxu0 0
        %415 = vmatpush.bf16.msra.mxu0 0
        %416 = vmatpush.bf16.msra.mxu0 0
        %417 = vmatpush.bf16.msra.mxu0 %v383
        %418 = vmatmul.bf16.gmra.mxu0 %v373
        %v419 = vpop.f32.mrf.mxu0
        %v420 = vadd.f32 0.0, %v419
        %v421 = vpop.f32.mrf.mxu0
        %v422 = vadd.f32 0.0, %v421
        %423 = vmatmul.bf16.gmra.mxu0 %v376
        %v424 = vpop.f32.mrf.mxu0
        %v425 = vadd.f32 0.0, %v424
        %v426 = vpop.f32.mrf.mxu0
        %v427 = vadd.f32 0.0, %v426
        %428 = vdwg.mxu0
        %429 = vmatpush.bf16.msra.mxu0 0
        %430 = vmatpush.bf16.msra.mxu0 0
        %431 = vmatpush.bf16.msra.mxu0 0
        %432 = vmatpush.bf16.msra.mxu0 0
        %433 = vmatpush.bf16.msra.mxu0 0
        %434 = vmatpush.bf16.msra.mxu0 0
        %435 = vmatpush.bf16.msra.mxu0 0
        %436 = vmatpush.bf16.msra.mxu0 %v386
        %437 = vmatmul.bf16.gmra.mxu0 %v373
        %v438 = vpop.f32.mrf.mxu0
        %v439 = vadd.f32 0.0, %v438
        %v440 = vpop.f32.mrf.mxu0
        %v441 = vadd.f32 0.0, %v440
        %442 = vmatmul.bf16.gmra.mxu0 %v376
        %v443 = vpop.f32.mrf.mxu0
        %v444 = vadd.f32 0.0, %v443
        %v445 = vpop.f32.mrf.mxu0
        %v446 = vadd.f32 0.0, %v445
        %447 = vdwg.mxu0
        %448 = vmatpush.bf16.msra.mxu0 0
        %449 = vmatpush.bf16.msra.mxu0 0
        %450 = vmatpush.bf16.msra.mxu0 0
        %451 = vmatpush.bf16.msra.mxu0 0
        %452 = vmatpush.bf16.msra.mxu0 0
        %453 = vmatpush.bf16.msra.mxu0 0
        %454 = vmatpush.bf16.msra.mxu0 0
        %455 = vmatpush.bf16.msra.mxu0 %v389
        %456 = vmatmul.bf16.gmra.mxu0 %v373
        %v457 = vpop.f32.mrf.mxu0
        %v458 = vadd.f32 0.0, %v457
        %v459 = vpop.f32.mrf.mxu0
        %v460 = vadd.f32 0.0, %v459
        %461 = vmatmul.bf16.gmra.mxu0 %v376
        %v462 = vpop.f32.mrf.mxu0
        %v463 = vadd.f32 0.0, %v462
        %v464 = vpop.f32.mrf.mxu0
        %v465 = vadd.f32 0.0, %v464
        %466 = vdwg.mxu0
        %v471 = vunpack.c.l.b16 %v320
        %v472 = vunpack.c.l.b16 %v321
        %v473 = vunpack.c.l.b16 %v322
        %v474 = vunpack.c.l.b16 %v323
        %v475 = vpack.c.b16 %v472, %v471
        %v476 = vpack.c.b16 %v474, %v473
        %477 = vst [vmem:[#allocation1] ss:$4 sm:$0xff] %v324
        %v478 = vld.sshfl [vmem:[#allocation1] sm:$0xff pattern:$0x73625140]
        %v479 = vld.sshfl [vmem:[#allocation1 + $0x8] sm:$0xff pattern:$0x73625140]
        %v480 = vld.sshfl [vmem:[#allocation1 + $0x10] sm:$0xff pattern:$0x73625140]
        %v481 = vld.sshfl [vmem:[#allocation1 + $0x18] sm:$0xff pattern:$0x73625140]
        %v483 = vsel %vm371, %v475, 0
        %v486 = vsel %vm371, %v476, 0
        %v488 = vsel %vm378, %v478, 0
        %v490 = vsel %vm378, %v479, 0
        %v492 = vsel %vm378, %v480, 0
        %v494 = vsel %vm378, %v481, 0
        %496 = vmatpush.bf16.msra.mxu0 0
        %497 = vmatpush.bf16.msra.mxu0 0
        %498 = vmatpush.bf16.msra.mxu0 0
        %499 = vmatpush.bf16.msra.mxu0 0
        %500 = vmatpush.bf16.msra.mxu0 0
        %501 = vmatpush.bf16.msra.mxu0 0
        %502 = vmatpush.bf16.msra.mxu0 0
        %503 = vmatpush.bf16.msra.mxu0 %v488
        %504 = vmatmul.bf16.gmra.mxu0 %v483
        %v505 = vpop.f32.mrf.mxu0
        %v506 = vadd.f32 %v401, %v505
        %v507 = vpop.f32.mrf.mxu0
        %v508 = vadd.f32 %v403, %v507
        %509 = vmatmul.bf16.gmra.mxu0 %v486
        %v510 = vpop.f32.mrf.mxu0
        %v511 = vadd.f32 %v406, %v510
        %v512 = vpop.f32.mrf.mxu0
        %v513 = vadd.f32 %v408, %v512
        %514 = vdwg.mxu0
        %515 = vmatpush.bf16.msra.mxu0 0
        %516 = vmatpush.bf16.msra.mxu0 0
        %517 = vmatpush.bf16.msra.mxu0 0
        %518 = vmatpush.bf16.msra.mxu0 0
        %519 = vmatpush.bf16.msra.mxu0 0
        %520 = vmatpush.bf16.msra.mxu0 0
        %521 = vmatpush.bf16.msra.mxu0 0
        %522 = vmatpush.bf16.msra.mxu0 %v490
        %523 = vmatmul.bf16.gmra.mxu0 %v483
        %v524 = vpop.f32.mrf.mxu0
        %v525 = vadd.f32 %v420, %v524
        %v526 = vpop.f32.mrf.mxu0
        %v527 = vadd.f32 %v422, %v526
        %528 = vmatmul.bf16.gmra.mxu0 %v486
        %v529 = vpop.f32.mrf.mxu0
        %v530 = vadd.f32 %v425, %v529
        %v531 = vpop.f32.mrf.mxu0
        %v532 = vadd.f32 %v427, %v531
        %533 = vdwg.mxu0
        %534 = vmatpush.bf16.msra.mxu0 0
        %535 = vmatpush.bf16.msra.mxu0 0
        %536 = vmatpush.bf16.msra.mxu0 0
        %537 = vmatpush.bf16.msra.mxu0 0
        %538 = vmatpush.bf16.msra.mxu0 0
        %539 = vmatpush.bf16.msra.mxu0 0
        %540 = vmatpush.bf16.msra.mxu0 0
        %541 = vmatpush.bf16.msra.mxu0 %v492
        %542 = vmatmul.bf16.gmra.mxu0 %v483
        %v543 = vpop.f32.mrf.mxu0
        %v544 = vadd.f32 %v439, %v543
        %v545 = vpop.f32.mrf.mxu0
        %v546 = vadd.f32 %v441, %v545
        %547 = vmatmul.bf16.gmra.mxu0 %v486
        %v548 = vpop.f32.mrf.mxu0
        %v549 = vadd.f32 %v444, %v548
        %v550 = vpop.f32.mrf.mxu0
        %v551 = vadd.f32 %v446, %v550
        %552 = vdwg.mxu0
        %553 = vmatpush.bf16.msra.mxu0 0
        %554 = vmatpush.bf16.msra.mxu0 0
        %555 = vmatpush.bf16.msra.mxu0 0
        %556 = vmatpush.bf16.msra.mxu0 0
        %557 = vmatpush.bf16.msra.mxu0 0
        %558 = vmatpush.bf16.msra.mxu0 0
        %559 = vmatpush.bf16.msra.mxu0 0
        %560 = vmatpush.bf16.msra.mxu0 %v494
        %561 = vmatmul.bf16.gmra.mxu0 %v483
        %v562 = vpop.f32.mrf.mxu0
        %v563 = vadd.f32 %v458, %v562
        %v564 = vpop.f32.mrf.mxu0
        %v565 = vadd.f32 %v460, %v564
        %566 = vmatmul.bf16.gmra.mxu0 %v486
        %v567 = vpop.f32.mrf.mxu0
        %v568 = vadd.f32 %v463, %v567
        %v569 = vpop.f32.mrf.mxu0
        %v570 = vadd.f32 %v465, %v569
        %571 = vdwg.mxu0
        %s572 = scalar_lea.vmem %s1, 32
        %v573 = vld [vmem:[%s572] sm:$0xf]
        %v574 = vld [vmem:[%s572 + $0x4] sm:$0xf]
        %v575 = vld [vmem:[%s572 + $0x8] sm:$0xf]
        %v576 = vld [vmem:[%s572 + $0xc] sm:$0xf]
        %v577 = vld [vmem:[%s302] sm:$0xff]
        %v578 = vld [vmem:[%s302 + $0x8] sm:$0x3]
        %v583 = vunpack.c.l.b16 %v573
        %v584 = vunpack.c.l.b16 %v574
        %v585 = vunpack.c.l.b16 %v575
        %v586 = vunpack.c.l.b16 %v576
        %v587 = vpack.c.b16 %v584, %v583
        %v588 = vpack.c.b16 %v586, %v585
        %590 = vst [vmem:[#allocation1] ss:$4 sm:$0xff] %v577
        %s592 = scalar_lea.vmem [#allocation1], 32
        %593 = vst [vmem:[%s592] ss:$4 sm:$0xff] %v578
        %v594 = vld.sshfl [vmem:[#allocation1] sm:$0xff pattern:$0x73625140]
        %v596 = vld.sshfl [vmem:[#allocation1 + $0x8] sm:$0xff pattern:$0x73625140]
        %v598 = vld.sshfl [vmem:[#allocation1 + $0x10] sm:$0xff pattern:$0x73625140]
        %v600 = vld.sshfl [vmem:[#allocation1 + $0x18] sm:$0xff pattern:$0x73625140]
        %v602 = vld.sshfl [vmem:[#allocation1 + $0x20] sm:$0xff pattern:$0x73625140]
        %604 = vrot.lane.b32.xlu0 %v594, 126
        %v605 = vpop.permute.xlu0 %604
        %606 = vrot.lane.b32.xlu0 %v596, 126
        %v607 = vpop.permute.xlu0 %606
        %608 = vrot.lane.b32.xlu0 %v598, 126
        %v609 = vpop.permute.xlu0 %608
        %610 = vrot.lane.b32.xlu0 %v600, 126
        %v611 = vpop.permute.xlu0 %610
        %612 = vrot.lane.b32.xlu0 %v602, 126
        %v613 = vpop.permute.xlu0 %612
        %vm614 = vcmask 1031168
        %v615 = vsel %vm614, %v605, %v607
        %v616 = vsel %vm614, %v607, %v609
        %v617 = vsel %vm614, %v609, %v611
        %v618 = vsel %vm614, %v611, %v613
        %v620 = vsel %vm371, %v587, 0
        %v623 = vsel %vm371, %v588, 0
        %v626 = vsel %vm378, %v615, 0
        %v629 = vsel %vm378, %v616, 0
        %v632 = vsel %vm378, %v617, 0
        %v635 = vsel %vm378, %v618, 0
        %637 = vmatpush.bf16.msra.mxu0 0
        %638 = vmatpush.bf16.msra.mxu0 0
        %639 = vmatpush.bf16.msra.mxu0 0
        %640 = vmatpush.bf16.msra.mxu0 0
        %641 = vmatpush.bf16.msra.mxu0 0
        %642 = vmatpush.bf16.msra.mxu0 0
        %643 = vmatpush.bf16.msra.mxu0 0
        %644 = vmatpush.bf16.msra.mxu0 %v626
        %645 = vmatmul.bf16.gmra.mxu0 %v620
        %v646 = vpop.f32.mrf.mxu0
        %v647 = vadd.f32 0.0, %v646
        %v648 = vpop.f32.mrf.mxu0
        %v649 = vadd.f32 0.0, %v648
        %650 = vmatmul.bf16.gmra.mxu0 %v623
        %v651 = vpop.f32.mrf.mxu0
        %v652 = vadd.f32 0.0, %v651
        %v653 = vpop.f32.mrf.mxu0
        %v654 = vadd.f32 0.0, %v653
        %655 = vdwg.mxu0
        %656 = vmatpush.bf16.msra.mxu0 0
        %657 = vmatpush.bf16.msra.mxu0 0
        %658 = vmatpush.bf16.msra.mxu0 0
        %659 = vmatpush.bf16.msra.mxu0 0
        %660 = vmatpush.bf16.msra.mxu0 0
        %661 = vmatpush.bf16.msra.mxu0 0
        %662 = vmatpush.bf16.msra.mxu0 0
        %663 = vmatpush.bf16.msra.mxu0 %v629
        %664 = vmatmul.bf16.gmra.mxu0 %v620
        %v665 = vpop.f32.mrf.mxu0
        %v666 = vadd.f32 0.0, %v665
        %v667 = vpop.f32.mrf.mxu0
        %v668 = vadd.f32 0.0, %v667
        %669 = vmatmul.bf16.gmra.mxu0 %v623
        %v670 = vpop.f32.mrf.mxu0
        %v671 = vadd.f32 0.0, %v670
        %v672 = vpop.f32.mrf.mxu0
        %v673 = vadd.f32 0.0, %v672
        %674 = vdwg.mxu0
        %675 = vmatpush.bf16.msra.mxu0 0
        %676 = vmatpush.bf16.msra.mxu0 0
        %677 = vmatpush.bf16.msra.mxu0 0
        %678 = vmatpush.bf16.msra.mxu0 0
        %679 = vmatpush.bf16.msra.mxu0 0
        %680 = vmatpush.bf16.msra.mxu0 0
        %681 = vmatpush.bf16.msra.mxu0 0
        %682 = vmatpush.bf16.msra.mxu0 %v632
        %683 = vmatmul.bf16.gmra.mxu0 %v620
        %v684 = vpop.f32.mrf.mxu0
        %v685 = vadd.f32 0.0, %v684
        %v686 = vpop.f32.mrf.mxu0
        %v687 = vadd.f32 0.0, %v686
        %688 = vmatmul.bf16.gmra.mxu0 %v623
        %v689 = vpop.f32.mrf.mxu0
        %v690 = vadd.f32 0.0, %v689
        %v691 = vpop.f32.mrf.mxu0
        %v692 = vadd.f32 0.0, %v691
        %693 = vdwg.mxu0
        %694 = vmatpush.bf16.msra.mxu0 0
        %695 = vmatpush.bf16.msra.mxu0 0
        %696 = vmatpush.bf16.msra.mxu0 0
        %697 = vmatpush.bf16.msra.mxu0 0
        %698 = vmatpush.bf16.msra.mxu0 0
        %699 = vmatpush.bf16.msra.mxu0 0
        %700 = vmatpush.bf16.msra.mxu0 0
        %701 = vmatpush.bf16.msra.mxu0 %v635
        %702 = vmatmul.bf16.gmra.mxu0 %v620
        %v703 = vpop.f32.mrf.mxu0
        %v704 = vadd.f32 0.0, %v703
        %v705 = vpop.f32.mrf.mxu0
        %v706 = vadd.f32 0.0, %v705
        %707 = vmatmul.bf16.gmra.mxu0 %v623
        %v708 = vpop.f32.mrf.mxu0
        %v709 = vadd.f32 0.0, %v708
        %v710 = vpop.f32.mrf.mxu0
        %v711 = vadd.f32 0.0, %v710
        %712 = vdwg.mxu0
        %v713 = vadd.f32 %v506, %v647
        %v714 = vadd.f32 %v525, %v666
        %v715 = vadd.f32 %v544, %v685
        %v716 = vadd.f32 %v563, %v704
        %v717 = vadd.f32 %v508, %v649
        %v718 = vadd.f32 %v527, %v668
        %v719 = vadd.f32 %v546, %v687
        %v720 = vadd.f32 %v565, %v706
        %v721 = vadd.f32 %v511, %v652
        %v722 = vadd.f32 %v530, %v671
        %v723 = vadd.f32 %v549, %v690
        %v724 = vadd.f32 %v568, %v709
        %v725 = vadd.f32 %v513, %v654
        %v726 = vadd.f32 %v532, %v673
        %v727 = vadd.f32 %v551, %v692
        %v728 = vadd.f32 %v570, %v711
        %s729 = scalar_lea.vmem %s1, 48
        %v730 = vld [vmem:[%s729] sm:$0xf]
        %v731 = vld [vmem:[%s729 + $0x4] sm:$0xf]
        %v732 = vld [vmem:[%s729 + $0x8] sm:$0xf]
        %v733 = vld [vmem:[%s729 + $0xc] sm:$0xf]
        %v734 = vld [vmem:[%s302] sm:$0xff]
        %v735 = vld [vmem:[%s302 + $0x8] sm:$0x3]
        %v740 = vunpack.c.l.b16 %v730
        %v741 = vunpack.c.l.b16 %v731
        %v742 = vunpack.c.l.b16 %v732
        %v743 = vunpack.c.l.b16 %v733
        %v744 = vpack.c.b16 %v741, %v740
        %v745 = vpack.c.b16 %v743, %v742
        %747 = vst [vmem:[#allocation1] ss:$4 sm:$0xff] %v734
        %s749 = scalar_lea.vmem [#allocation1], 32
        %750 = vst [vmem:[%s749] ss:$4 sm:$0xff] %v735
        %v751 = vld.sshfl [vmem:[#allocation1] sm:$0xff pattern:$0x73625140]
        %v753 = vld.sshfl [vmem:[#allocation1 + $0x8] sm:$0xff pattern:$0x73625140]
        %v755 = vld.sshfl [vmem:[#allocation1 + $0x10] sm:$0xff pattern:$0x73625140]
        %v757 = vld.sshfl [vmem:[#allocation1 + $0x18] sm:$0xff pattern:$0x73625140]
        %v759 = vld.sshfl [vmem:[#allocation1 + $0x20] sm:$0xff pattern:$0x73625140]
        %761 = vrot.lane.b32.xlu0 %v751, 118
        %v762 = vpop.permute.xlu0 %761
        %763 = vrot.lane.b32.xlu0 %v753, 118
        %v764 = vpop.permute.xlu0 %763
        %765 = vrot.lane.b32.xlu0 %v755, 118
        %v766 = vpop.permute.xlu0 %765
        %767 = vrot.lane.b32.xlu0 %v757, 118
        %v768 = vpop.permute.xlu0 %767
        %769 = vrot.lane.b32.xlu0 %v759, 118
        %v770 = vpop.permute.xlu0 %769
        %vm771 = vcmask 965632
        %v772 = vsel %vm771, %v762, %v764
        %v773 = vsel %vm771, %v764, %v766
        %v774 = vsel %vm771, %v766, %v768
        %v775 = vsel %vm771, %v768, %v770
        %v777 = vsel %vm371, %v744, 0
        %v780 = vsel %vm371, %v745, 0
        %v783 = vsel %vm378, %v772, 0
        %v786 = vsel %vm378, %v773, 0
        %v789 = vsel %vm378, %v774, 0
        %v792 = vsel %vm378, %v775, 0
        %794 = vmatpush.bf16.msra.mxu0 0
        %795 = vmatpush.bf16.msra.mxu0 0
        %796 = vmatpush.bf16.msra.mxu0 0
        %797 = vmatpush.bf16.msra.mxu0 0
        %798 = vmatpush.bf16.msra.mxu0 0
        %799 = vmatpush.bf16.msra.mxu0 0
        %800 = vmatpush.bf16.msra.mxu0 0
        %801 = vmatpush.bf16.msra.mxu0 %v783
        %802 = vmatmul.bf16.gmra.mxu0 %v777
        %v803 = vpop.f32.mrf.mxu0
        %v804 = vadd.f32 0.0, %v803
        %v805 = vpop.f32.mrf.mxu0
        %v806 = vadd.f32 0.0, %v805
        %807 = vmatmul.bf16.gmra.mxu0 %v780
        %v808 = vpop.f32.mrf.mxu0
        %v809 = vadd.f32 0.0, %v808
        %v810 = vpop.f32.mrf.mxu0
        %v811 = vadd.f32 0.0, %v810
        %812 = vdwg.mxu0
        %813 = vmatpush.bf16.msra.mxu0 0
        %814 = vmatpush.bf16.msra.mxu0 0
        %815 = vmatpush.bf16.msra.mxu0 0
        %816 = vmatpush.bf16.msra.mxu0 0
        %817 = vmatpush.bf16.msra.mxu0 0
        %818 = vmatpush.bf16.msra.mxu0 0
        %819 = vmatpush.bf16.msra.mxu0 0
        %820 = vmatpush.bf16.msra.mxu0 %v786
        %821 = vmatmul.bf16.gmra.mxu0 %v777
        %v822 = vpop.f32.mrf.mxu0
        %v823 = vadd.f32 0.0, %v822
        %v824 = vpop.f32.mrf.mxu0
        %v825 = vadd.f32 0.0, %v824
        %826 = vmatmul.bf16.gmra.mxu0 %v780
        %v827 = vpop.f32.mrf.mxu0
        %v828 = vadd.f32 0.0, %v827
        %v829 = vpop.f32.mrf.mxu0
        %v830 = vadd.f32 0.0, %v829
        %831 = vdwg.mxu0
        %832 = vmatpush.bf16.msra.mxu0 0
        %833 = vmatpush.bf16.msra.mxu0 0
        %834 = vmatpush.bf16.msra.mxu0 0
        %835 = vmatpush.bf16.msra.mxu0 0
        %836 = vmatpush.bf16.msra.mxu0 0
        %837 = vmatpush.bf16.msra.mxu0 0
        %838 = vmatpush.bf16.msra.mxu0 0
        %839 = vmatpush.bf16.msra.mxu0 %v789
        %840 = vmatmul.bf16.gmra.mxu0 %v777
        %v841 = vpop.f32.mrf.mxu0
        %v842 = vadd.f32 0.0, %v841
        %v843 = vpop.f32.mrf.mxu0
        %v844 = vadd.f32 0.0, %v843
        %845 = vmatmul.bf16.gmra.mxu0 %v780
        %v846 = vpop.f32.mrf.mxu0
        %v847 = vadd.f32 0.0, %v846
        %v848 = vpop.f32.mrf.mxu0
        %v849 = vadd.f32 0.0, %v848
        %850 = vdwg.mxu0
        %851 = vmatpush.bf16.msra.mxu0 0
        %852 = vmatpush.bf16.msra.mxu0 0
        %853 = vmatpush.bf16.msra.mxu0 0
        %854 = vmatpush.bf16.msra.mxu0 0
        %855 = vmatpush.bf16.msra.mxu0 0
        %856 = vmatpush.bf16.msra.mxu0 0
        %857 = vmatpush.bf16.msra.mxu0 0
        %858 = vmatpush.bf16.msra.mxu0 %v792
        %859 = vmatmul.bf16.gmra.mxu0 %v777
        %v860 = vpop.f32.mrf.mxu0
        %v861 = vadd.f32 0.0, %v860
        %v862 = vpop.f32.mrf.mxu0
        %v863 = vadd.f32 0.0, %v862
        %864 = vmatmul.bf16.gmra.mxu0 %v780
        %v865 = vpop.f32.mrf.mxu0
        %v866 = vadd.f32 0.0, %v865
        %v867 = vpop.f32.mrf.mxu0
        %v868 = vadd.f32 0.0, %v867
        %869 = vdwg.mxu0
        %v870 = vadd.f32 %v713, %v804
        %v871 = vadd.f32 %v714, %v823
        %v872 = vadd.f32 %v715, %v842
        %v873 = vadd.f32 %v716, %v861
        %v874 = vadd.f32 %v717, %v806
        %v875 = vadd.f32 %v718, %v825
        %v876 = vadd.f32 %v719, %v844
        %v877 = vadd.f32 %v720, %v863
        %v878 = vadd.f32 %v721, %v809
        %v879 = vadd.f32 %v722, %v828
        %v880 = vadd.f32 %v723, %v847
        %v881 = vadd.f32 %v724, %v866
        %v882 = vadd.f32 %v725, %v811
        %v883 = vadd.f32 %v726, %v830
        %v884 = vadd.f32 %v727, %v849
        %v885 = vadd.f32 %v728, %v868
        %s886 = scalar_lea.vmem %s1, 64
        %v887 = vld [vmem:[%s886] sm:$0xf]
        %v888 = vld [vmem:[%s886 + $0x4] sm:$0xf]
        %v889 = vld [vmem:[%s886 + $0x8] sm:$0xf]
        %v890 = vld [vmem:[%s886 + $0xc] sm:$0xf]
        %v891 = vld [vmem:[%s302] sm:$0xff]
        %v892 = vld [vmem:[%s302 + $0x8] sm:$0x3]
        %v897 = vunpack.c.l.b16 %v887
        %v898 = vunpack.c.l.b16 %v888
        %v899 = vunpack.c.l.b16 %v889
        %v900 = vunpack.c.l.b16 %v890
        %v901 = vpack.c.b16 %v898, %v897
        %v902 = vpack.c.b16 %v900, %v899
        %904 = vst [vmem:[#allocation1] ss:$4 sm:$0xff] %v891
        %s906 = scalar_lea.vmem [#allocation1], 32
        %907 = vst [vmem:[%s906] ss:$4 sm:$0xff] %v892
        %v908 = vld.sshfl [vmem:[#allocation1] sm:$0xff pattern:$0x73625140]
        %v910 = vld.sshfl [vmem:[#allocation1 + $0x8] sm:$0xff pattern:$0x73625140]
        %v912 = vld.sshfl [vmem:[#allocation1 + $0x10] sm:$0xff pattern:$0x73625140]
        %v914 = vld.sshfl [vmem:[#allocation1 + $0x18] sm:$0xff pattern:$0x73625140]
        %v916 = vld.sshfl [vmem:[#allocation1 + $0x20] sm:$0xff pattern:$0x73625140]
        %918 = vrot.lane.b32.xlu0 %v908, 117
        %v919 = vpop.permute.xlu0 %918
        %920 = vrot.lane.b32.xlu0 %v910, 117
        %v921 = vpop.permute.xlu0 %920
        %922 = vrot.lane.b32.xlu0 %v912, 117
        %v923 = vpop.permute.xlu0 %922
        %924 = vrot.lane.b32.xlu0 %v914, 117
        %v925 = vpop.permute.xlu0 %924
        %926 = vrot.lane.b32.xlu0 %v916, 117
        %v927 = vpop.permute.xlu0 %926
        %vm928 = vcmask 957440
        %v929 = vsel %vm928, %v919, %v921
        %v930 = vsel %vm928, %v921, %v923
        %v931 = vsel %vm928, %v923, %v925
        %v932 = vsel %vm928, %v925, %v927
        %v934 = vsel %vm371, %v901, 0
        %v937 = vsel %vm371, %v902, 0
        %v940 = vsel %vm378, %v929, 0
        %v943 = vsel %vm378, %v930, 0
        %v946 = vsel %vm378, %v931, 0
        %v949 = vsel %vm378, %v932, 0
        %951 = vmatpush.bf16.msra.mxu0 0
        %952 = vmatpush.bf16.msra.mxu0 0
        %953 = vmatpush.bf16.msra.mxu0 0
        %954 = vmatpush.bf16.msra.mxu0 0
        %955 = vmatpush.bf16.msra.mxu0 0
        %956 = vmatpush.bf16.msra.mxu0 0
        %957 = vmatpush.bf16.msra.mxu0 0
        %958 = vmatpush.bf16.msra.mxu0 %v940
        %959 = vmatmul.bf16.gmra.mxu0 %v934
        %v960 = vpop.f32.mrf.mxu0
        %v961 = vadd.f32 0.0, %v960
        %v962 = vpop.f32.mrf.mxu0
        %v963 = vadd.f32 0.0, %v962
        %964 = vmatmul.bf16.gmra.mxu0 %v937
        %v965 = vpop.f32.mrf.mxu0
        %v966 = vadd.f32 0.0, %v965
        %v967 = vpop.f32.mrf.mxu0
        %v968 = vadd.f32 0.0, %v967
        %969 = vdwg.mxu0
        %970 = vmatpush.bf16.msra.mxu0 0
        %971 = vmatpush.bf16.msra.mxu0 0
        %972 = vmatpush.bf16.msra.mxu0 0
        %973 = vmatpush.bf16.msra.mxu0 0
        %974 = vmatpush.bf16.msra.mxu0 0
        %975 = vmatpush.bf16.msra.mxu0 0
        %976 = vmatpush.bf16.msra.mxu0 0
        %977 = vmatpush.bf16.msra.mxu0 %v943
        %978 = vmatmul.bf16.gmra.mxu0 %v934
        %v979 = vpop.f32.mrf.mxu0
        %v980 = vadd.f32 0.0, %v979
        %v981 = vpop.f32.mrf.mxu0
        %v982 = vadd.f32 0.0, %v981
        %983 = vmatmul.bf16.gmra.mxu0 %v937
        %v984 = vpop.f32.mrf.mxu0
        %v985 = vadd.f32 0.0, %v984
        %v986 = vpop.f32.mrf.mxu0
        %v987 = vadd.f32 0.0, %v986
        %988 = vdwg.mxu0
        %989 = vmatpush.bf16.msra.mxu0 0
        %990 = vmatpush.bf16.msra.mxu0 0
        %991 = vmatpush.bf16.msra.mxu0 0
        %992 = vmatpush.bf16.msra.mxu0 0
        %993 = vmatpush.bf16.msra.mxu0 0
        %994 = vmatpush.bf16.msra.mxu0 0
        %995 = vmatpush.bf16.msra.mxu0 0
        %996 = vmatpush.bf16.msra.mxu0 %v946
        %997 = vmatmul.bf16.gmra.mxu0 %v934
        %v998 = vpop.f32.mrf.mxu0
        %v999 = vadd.f32 0.0, %v998
        %v1000 = vpop.f32.mrf.mxu0
        %v1001 = vadd.f32 0.0, %v1000
        %1002 = vmatmul.bf16.gmra.mxu0 %v937
        %v1003 = vpop.f32.mrf.mxu0
        %v1004 = vadd.f32 0.0, %v1003
        %v1005 = vpop.f32.mrf.mxu0
        %v1006 = vadd.f32 0.0, %v1005
        %1007 = vdwg.mxu0
        %1008 = vmatpush.bf16.msra.mxu0 0
        %1009 = vmatpush.bf16.msra.mxu0 0
        %1010 = vmatpush.bf16.msra.mxu0 0
        %1011 = vmatpush.bf16.msra.mxu0 0
        %1012 = vmatpush.bf16.msra.mxu0 0
        %1013 = vmatpush.bf16.msra.mxu0 0
        %1014 = vmatpush.bf16.msra.mxu0 0
        %1015 = vmatpush.bf16.msra.mxu0 %v949
        %1016 = vmatmul.bf16.gmra.mxu0 %v934
        %v1017 = vpop.f32.mrf.mxu0
        %v1018 = vadd.f32 0.0, %v1017
        %v1019 = vpop.f32.mrf.mxu0
        %v1020 = vadd.f32 0.0, %v1019
        %1021 = vmatmul.bf16.gmra.mxu0 %v937
        %v1022 = vpop.f32.mrf.mxu0
        %v1023 = vadd.f32 0.0, %v1022
        %v1024 = vpop.f32.mrf.mxu0
        %v1025 = vadd.f32 0.0, %v1024
        %1026 = vdwg.mxu0
        %v1027 = vadd.f32 %v870, %v961
        %v1028 = vadd.f32 %v871, %v980
        %v1029 = vadd.f32 %v872, %v999
        %v1030 = vadd.f32 %v873, %v1018
        %v1031 = vadd.f32 %v874, %v963
        %v1032 = vadd.f32 %v875, %v982
        %v1033 = vadd.f32 %v876, %v1001
        %v1034 = vadd.f32 %v877, %v1020
        %v1035 = vadd.f32 %v878, %v966
        %v1036 = vadd.f32 %v879, %v985
        %v1037 = vadd.f32 %v880, %v1004
        %v1038 = vadd.f32 %v881, %v1023
        %v1039 = vadd.f32 %v882, %v968
        %v1040 = vadd.f32 %v883, %v987
        %v1041 = vadd.f32 %v884, %v1006
        %v1042 = vadd.f32 %v885, %v1025
        %s1043 = scalar_lea.vmem %s1, 80
        %v1044 = vld [vmem:[%s1043] sm:$0xf]
        %v1045 = vld [vmem:[%s1043 + $0x4] sm:$0xf]
        %v1046 = vld [vmem:[%s1043 + $0x8] sm:$0xf]
        %v1047 = vld [vmem:[%s1043 + $0xc] sm:$0xf]
        %v1048 = vld [vmem:[%s302] sm:$0xff]
        %v1049 = vld [vmem:[%s302 + $0x8] sm:$0x3]
        %v1054 = vunpack.c.l.b16 %v1044
        %v1055 = vunpack.c.l.b16 %v1045
        %v1056 = vunpack.c.l.b16 %v1046
        %v1057 = vunpack.c.l.b16 %v1047
        %v1058 = vpack.c.b16 %v1055, %v1054
        %v1059 = vpack.c.b16 %v1057, %v1056
        %1061 = vst [vmem:[#allocation1] ss:$4 sm:$0xff] %v1048
        %s1063 = scalar_lea.vmem [#allocation1], 32
        %1064 = vst [vmem:[%s1063] ss:$4 sm:$0xff] %v1049
        %v1065 = vld.sshfl [vmem:[#allocation1] sm:$0xff pattern:$0x73625140]
        %v1067 = vld.sshfl [vmem:[#allocation1 + $0x8] sm:$0xff pattern:$0x73625140]
        %v1069 = vld.sshfl [vmem:[#allocation1 + $0x10] sm:$0xff pattern:$0x73625140]
        %v1071 = vld.sshfl [vmem:[#allocation1 + $0x18] sm:$0xff pattern:$0x73625140]
        %v1073 = vld.sshfl [vmem:[#allocation1 + $0x20] sm:$0xff pattern:$0x73625140]
        %1075 = vrot.lane.b32.xlu0 %v1065, 116
        %v1076 = vpop.permute.xlu0 %1075
        %1077 = vrot.lane.b32.xlu0 %v1067, 116
        %v1078 = vpop.permute.xlu0 %1077
        %1079 = vrot.lane.b32.xlu0 %v1069, 116
        %v1080 = vpop.permute.xlu0 %1079
        %1081 = vrot.lane.b32.xlu0 %v1071, 116
        %v1082 = vpop.permute.xlu0 %1081
        %1083 = vrot.lane.b32.xlu0 %v1073, 116
        %v1084 = vpop.permute.xlu0 %1083
        %vm1085 = vcmask 949248
        %v1086 = vsel %vm1085, %v1076, %v1078
        %v1087 = vsel %vm1085, %v1078, %v1080
        %v1088 = vsel %vm1085, %v1080, %v1082
        %v1089 = vsel %vm1085, %v1082, %v1084
        %v1091 = vsel %vm371, %v1058, 0
        %v1094 = vsel %vm371, %v1059, 0
        %v1097 = vsel %vm378, %v1086, 0
        %v1100 = vsel %vm378, %v1087, 0
        %v1103 = vsel %vm378, %v1088, 0
        %v1106 = vsel %vm378, %v1089, 0
        %1108 = vmatpush.bf16.msra.mxu0 0
        %1109 = vmatpush.bf16.msra.mxu0 0
        %1110 = vmatpush.bf16.msra.mxu0 0
        %1111 = vmatpush.bf16.msra.mxu0 0
        %1112 = vmatpush.bf16.msra.mxu0 0
        %1113 = vmatpush.bf16.msra.mxu0 0
        %1114 = vmatpush.bf16.msra.mxu0 0
        %1115 = vmatpush.bf16.msra.mxu0 %v1097
        %1116 = vmatmul.bf16.gmra.mxu0 %v1091
        %v1117 = vpop.f32.mrf.mxu0
        %v1118 = vadd.f32 0.0, %v1117
        %v1119 = vpop.f32.mrf.mxu0
        %v1120 = vadd.f32 0.0, %v1119
        %1121 = vmatmul.bf16.gmra.mxu0 %v1094
        %v1122 = vpop.f32.mrf.mxu0
        %v1123 = vadd.f32 0.0, %v1122
        %v1124 = vpop.f32.mrf.mxu0
        %v1125 = vadd.f32 0.0, %v1124
        %1126 = vdwg.mxu0
        %1127 = vmatpush.bf16.msra.mxu0 0
        %1128 = vmatpush.bf16.msra.mxu0 0
        %1129 = vmatpush.bf16.msra.mxu0 0
        %1130 = vmatpush.bf16.msra.mxu0 0
        %1131 = vmatpush.bf16.msra.mxu0 0
        %1132 = vmatpush.bf16.msra.mxu0 0
        %1133 = vmatpush.bf16.msra.mxu0 0
        %1134 = vmatpush.bf16.msra.mxu0 %v1100
        %1135 = vmatmul.bf16.gmra.mxu0 %v1091
        %v1136 = vpop.f32.mrf.mxu0
        %v1137 = vadd.f32 0.0, %v1136
        %v1138 = vpop.f32.mrf.mxu0
        %v1139 = vadd.f32 0.0, %v1138
        %1140 = vmatmul.bf16.gmra.mxu0 %v1094
        %v1141 = vpop.f32.mrf.mxu0
        %v1142 = vadd.f32 0.0, %v1141
        %v1143 = vpop.f32.mrf.mxu0
        %v1144 = vadd.f32 0.0, %v1143
        %1145 = vdwg.mxu0
        %1146 = vmatpush.bf16.msra.mxu0 0
        %1147 = vmatpush.bf16.msra.mxu0 0
        %1148 = vmatpush.bf16.msra.mxu0 0
        %1149 = vmatpush.bf16.msra.mxu0 0
        %1150 = vmatpush.bf16.msra.mxu0 0
        %1151 = vmatpush.bf16.msra.mxu0 0
        %1152 = vmatpush.bf16.msra.mxu0 0
        %1153 = vmatpush.bf16.msra.mxu0 %v1103
        %1154 = vmatmul.bf16.gmra.mxu0 %v1091
        %v1155 = vpop.f32.mrf.mxu0
        %v1156 = vadd.f32 0.0, %v1155
        %v1157 = vpop.f32.mrf.mxu0
        %v1158 = vadd.f32 0.0, %v1157
        %1159 = vmatmul.bf16.gmra.mxu0 %v1094
        %v1160 = vpop.f32.mrf.mxu0
        %v1161 = vadd.f32 0.0, %v1160
        %v1162 = vpop.f32.mrf.mxu0
        %v1163 = vadd.f32 0.0, %v1162
        %1164 = vdwg.mxu0
        %1165 = vmatpush.bf16.msra.mxu0 0
        %1166 = vmatpush.bf16.msra.mxu0 0
        %1167 = vmatpush.bf16.msra.mxu0 0
        %1168 = vmatpush.bf16.msra.mxu0 0
        %1169 = vmatpush.bf16.msra.mxu0 0
        %1170 = vmatpush.bf16.msra.mxu0 0
        %1171 = vmatpush.bf16.msra.mxu0 0
        %1172 = vmatpush.bf16.msra.mxu0 %v1106
        %1173 = vmatmul.bf16.gmra.mxu0 %v1091
        %v1174 = vpop.f32.mrf.mxu0
        %v1175 = vadd.f32 0.0, %v1174
        %v1176 = vpop.f32.mrf.mxu0
        %v1177 = vadd.f32 0.0, %v1176
        %1178 = vmatmul.bf16.gmra.mxu0 %v1094
        %v1179 = vpop.f32.mrf.mxu0
        %v1180 = vadd.f32 0.0, %v1179
        %v1181 = vpop.f32.mrf.mxu0
        %v1182 = vadd.f32 0.0, %v1181
        %1183 = vdwg.mxu0
        %v1184 = vadd.f32 %v1027, %v1118
        %v1185 = vadd.f32 %v1028, %v1137
        %v1186 = vadd.f32 %v1029, %v1156
        %v1187 = vadd.f32 %v1030, %v1175
        %v1188 = vadd.f32 %v1031, %v1120
        %v1189 = vadd.f32 %v1032, %v1139
        %v1190 = vadd.f32 %v1033, %v1158
        %v1191 = vadd.f32 %v1034, %v1177
        %v1192 = vadd.f32 %v1035, %v1123
        %v1193 = vadd.f32 %v1036, %v1142
        %v1194 = vadd.f32 %v1037, %v1161
        %v1195 = vadd.f32 %v1038, %v1180
        %v1196 = vadd.f32 %v1039, %v1125
        %v1197 = vadd.f32 %v1040, %v1144
        %v1198 = vadd.f32 %v1041, %v1163
        %v1199 = vadd.f32 %v1042, %v1182
        %s1200 = scalar_lea.vmem %s1, 96
        %v1201 = vld [vmem:[%s1200] sm:$0xf]
        %v1202 = vld [vmem:[%s1200 + $0x4] sm:$0xf]
        %v1203 = vld [vmem:[%s1200 + $0x8] sm:$0xf]
        %v1204 = vld [vmem:[%s1200 + $0xc] sm:$0xf]
        %v1205 = vld [vmem:[%s302] sm:$0xff]
        %v1206 = vld [vmem:[%s302 + $0x8] sm:$0x3]
        %v1211 = vunpack.c.l.b16 %v1201
        %v1212 = vunpack.c.l.b16 %v1202
        %v1213 = vunpack.c.l.b16 %v1203
        %v1214 = vunpack.c.l.b16 %v1204
        %v1215 = vpack.c.b16 %v1212, %v1211
        %v1216 = vpack.c.b16 %v1214, %v1213
        %1218 = vst [vmem:[#allocation1] ss:$4 sm:$0xff] %v1205
        %s1220 = scalar_lea.vmem [#allocation1], 32
        %1221 = vst [vmem:[%s1220] ss:$4 sm:$0xff] %v1206
        %v1222 = vld.sshfl [vmem:[#allocation1] sm:$0xff pattern:$0x73625140]
        %v1224 = vld.sshfl [vmem:[#allocation1 + $0x8] sm:$0xff pattern:$0x73625140]
        %v1226 = vld.sshfl [vmem:[#allocation1 + $0x10] sm:$0xff pattern:$0x73625140]
        %v1228 = vld.sshfl [vmem:[#allocation1 + $0x18] sm:$0xff pattern:$0x73625140]
        %v1230 = vld.sshfl [vmem:[#allocation1 + $0x20] sm:$0xff pattern:$0x73625140]
        %1232 = vrot.lane.b32.xlu0 %v1222, 108
        %v1233 = vpop.permute.xlu0 %1232
        %1234 = vrot.lane.b32.xlu0 %v1224, 108
        %v1235 = vpop.permute.xlu0 %1234
        %1236 = vrot.lane.b32.xlu0 %v1226, 108
        %v1237 = vpop.permute.xlu0 %1236
        %1238 = vrot.lane.b32.xlu0 %v1228, 108
        %v1239 = vpop.permute.xlu0 %1238
        %1240 = vrot.lane.b32.xlu0 %v1230, 108
        %v1241 = vpop.permute.xlu0 %1240
        %vm1242 = vcmask 883712
        %v1243 = vsel %vm1242, %v1233, %v1235
        %v1244 = vsel %vm1242, %v1235, %v1237
        %v1245 = vsel %vm1242, %v1237, %v1239
        %v1246 = vsel %vm1242, %v1239, %v1241
        %v1248 = vsel %vm371, %v1215, 0
        %v1251 = vsel %vm371, %v1216, 0
        %v1254 = vsel %vm378, %v1243, 0
        %v1257 = vsel %vm378, %v1244, 0
        %v1260 = vsel %vm378, %v1245, 0
        %v1263 = vsel %vm378, %v1246, 0
        %1265 = vmatpush.bf16.msra.mxu0 0
        %1266 = vmatpush.bf16.msra.mxu0 0
        %1267 = vmatpush.bf16.msra.mxu0 0
        %1268 = vmatpush.bf16.msra.mxu0 0
        %1269 = vmatpush.bf16.msra.mxu0 0
        %1270 = vmatpush.bf16.msra.mxu0 0
        %1271 = vmatpush.bf16.msra.mxu0 0
        %1272 = vmatpush.bf16.msra.mxu0 %v1254
        %1273 = vmatmul.bf16.gmra.mxu0 %v1248
        %v1274 = vpop.f32.mrf.mxu0
        %v1275 = vadd.f32 0.0, %v1274
        %v1276 = vpop.f32.mrf.mxu0
        %v1277 = vadd.f32 0.0, %v1276
        %1278 = vmatmul.bf16.gmra.mxu0 %v1251
        %v1279 = vpop.f32.mrf.mxu0
        %v1280 = vadd.f32 0.0, %v1279
        %v1281 = vpop.f32.mrf.mxu0
        %v1282 = vadd.f32 0.0, %v1281
        %1283 = vdwg.mxu0
        %1284 = vmatpush.bf16.msra.mxu0 0
        %1285 = vmatpush.bf16.msra.mxu0 0
        %1286 = vmatpush.bf16.msra.mxu0 0
        %1287 = vmatpush.bf16.msra.mxu0 0
        %1288 = vmatpush.bf16.msra.mxu0 0
        %1289 = vmatpush.bf16.msra.mxu0 0
        %1290 = vmatpush.bf16.msra.mxu0 0
        %1291 = vmatpush.bf16.msra.mxu0 %v1257
        %1292 = vmatmul.bf16.gmra.mxu0 %v1248
        %v1293 = vpop.f32.mrf.mxu0
        %v1294 = vadd.f32 0.0, %v1293
        %v1295 = vpop.f32.mrf.mxu0
        %v1296 = vadd.f32 0.0, %v1295
        %1297 = vmatmul.bf16.gmra.mxu0 %v1251
        %v1298 = vpop.f32.mrf.mxu0
        %v1299 = vadd.f32 0.0, %v1298
        %v1300 = vpop.f32.mrf.mxu0
        %v1301 = vadd.f32 0.0, %v1300
        %1302 = vdwg.mxu0
        %1303 = vmatpush.bf16.msra.mxu0 0
        %1304 = vmatpush.bf16.msra.mxu0 0
        %1305 = vmatpush.bf16.msra.mxu0 0
        %1306 = vmatpush.bf16.msra.mxu0 0
        %1307 = vmatpush.bf16.msra.mxu0 0
        %1308 = vmatpush.bf16.msra.mxu0 0
        %1309 = vmatpush.bf16.msra.mxu0 0
        %1310 = vmatpush.bf16.msra.mxu0 %v1260
        %1311 = vmatmul.bf16.gmra.mxu0 %v1248
        %v1312 = vpop.f32.mrf.mxu0
        %v1313 = vadd.f32 0.0, %v1312
        %v1314 = vpop.f32.mrf.mxu0
        %v1315 = vadd.f32 0.0, %v1314
        %1316 = vmatmul.bf16.gmra.mxu0 %v1251
        %v1317 = vpop.f32.mrf.mxu0
        %v1318 = vadd.f32 0.0, %v1317
        %v1319 = vpop.f32.mrf.mxu0
        %v1320 = vadd.f32 0.0, %v1319
        %1321 = vdwg.mxu0
        %1322 = vmatpush.bf16.msra.mxu0 0
        %1323 = vmatpush.bf16.msra.mxu0 0
        %1324 = vmatpush.bf16.msra.mxu0 0
        %1325 = vmatpush.bf16.msra.mxu0 0
        %1326 = vmatpush.bf16.msra.mxu0 0
        %1327 = vmatpush.bf16.msra.mxu0 0
        %1328 = vmatpush.bf16.msra.mxu0 0
        %1329 = vmatpush.bf16.msra.mxu0 %v1263
        %1330 = vmatmul.bf16.gmra.mxu0 %v1248
        %v1331 = vpop.f32.mrf.mxu0
        %v1332 = vadd.f32 0.0, %v1331
        %v1333 = vpop.f32.mrf.mxu0
        %v1334 = vadd.f32 0.0, %v1333
        %1335 = vmatmul.bf16.gmra.mxu0 %v1251
        %v1336 = vpop.f32.mrf.mxu0
        %v1337 = vadd.f32 0.0, %v1336
        %v1338 = vpop.f32.mrf.mxu0
        %v1339 = vadd.f32 0.0, %v1338
        %1340 = vdwg.mxu0
        %v1341 = vadd.f32 %v1184, %v1275
        %v1342 = vadd.f32 %v1185, %v1294
        %v1343 = vadd.f32 %v1186, %v1313
        %v1344 = vadd.f32 %v1187, %v1332
        %v1345 = vadd.f32 %v1188, %v1277
        %v1346 = vadd.f32 %v1189, %v1296
        %v1347 = vadd.f32 %v1190, %v1315
        %v1348 = vadd.f32 %v1191, %v1334
        %v1349 = vadd.f32 %v1192, %v1280
        %v1350 = vadd.f32 %v1193, %v1299
        %v1351 = vadd.f32 %v1194, %v1318
        %v1352 = vadd.f32 %v1195, %v1337
        %v1353 = vadd.f32 %v1196, %v1282
        %v1354 = vadd.f32 %v1197, %v1301
        %v1355 = vadd.f32 %v1198, %v1320
        %v1356 = vadd.f32 %v1199, %v1339
        %s1357 = scalar_lea.vmem %s1, 112
        %v1358 = vld [vmem:[%s1357] sm:$0xf]
        %v1359 = vld [vmem:[%s1357 + $0x4] sm:$0xf]
        %v1360 = vld [vmem:[%s1357 + $0x8] sm:$0xf]
        %v1361 = vld [vmem:[%s1357 + $0xc] sm:$0xf]
        %v1362 = vld [vmem:[%s302] sm:$0xff]
        %v1363 = vld [vmem:[%s302 + $0x8] sm:$0x3]
        %v1368 = vunpack.c.l.b16 %v1358
        %v1369 = vunpack.c.l.b16 %v1359
        %v1370 = vunpack.c.l.b16 %v1360
        %v1371 = vunpack.c.l.b16 %v1361
        %v1372 = vpack.c.b16 %v1369, %v1368
        %v1373 = vpack.c.b16 %v1371, %v1370
        %1375 = vst [vmem:[#allocation1] ss:$4 sm:$0xff] %v1362
        %s1377 = scalar_lea.vmem [#allocation1], 32
        %1378 = vst [vmem:[%s1377] ss:$4 sm:$0xff] %v1363
        %v1379 = vld.sshfl [vmem:[#allocation1] sm:$0xff pattern:$0x73625140]
        %v1381 = vld.sshfl [vmem:[#allocation1 + $0x8] sm:$0xff pattern:$0x73625140]
        %v1383 = vld.sshfl [vmem:[#allocation1 + $0x10] sm:$0xff pattern:$0x73625140]
        %v1385 = vld.sshfl [vmem:[#allocation1 + $0x18] sm:$0xff pattern:$0x73625140]
        %v1387 = vld.sshfl [vmem:[#allocation1 + $0x20] sm:$0xff pattern:$0x73625140]
        %1389 = vrot.lane.b32.xlu0 %v1379, 107
        %v1390 = vpop.permute.xlu0 %1389
        %1391 = vrot.lane.b32.xlu0 %v1381, 107
        %v1392 = vpop.permute.xlu0 %1391
        %1393 = vrot.lane.b32.xlu0 %v1383, 107
        %v1394 = vpop.permute.xlu0 %1393
        %1395 = vrot.lane.b32.xlu0 %v1385, 107
        %v1396 = vpop.permute.xlu0 %1395
        %1397 = vrot.lane.b32.xlu0 %v1387, 107
        %v1398 = vpop.permute.xlu0 %1397
        %vm1399 = vcmask 875520
        %v1400 = vsel %vm1399, %v1390, %v1392
        %v1401 = vsel %vm1399, %v1392, %v1394
        %v1402 = vsel %vm1399, %v1394, %v1396
        %v1403 = vsel %vm1399, %v1396, %v1398
        %v1405 = vsel %vm371, %v1372, 0
        %v1408 = vsel %vm371, %v1373, 0
        %v1411 = vsel %vm378, %v1400, 0
        %v1414 = vsel %vm378, %v1401, 0
        %v1417 = vsel %vm378, %v1402, 0
        %v1420 = vsel %vm378, %v1403, 0
        %1422 = vmatpush.bf16.msra.mxu0 0
        %1423 = vmatpush.bf16.msra.mxu0 0
        %1424 = vmatpush.bf16.msra.mxu0 0
        %1425 = vmatpush.bf16.msra.mxu0 0
        %1426 = vmatpush.bf16.msra.mxu0 0
        %1427 = vmatpush.bf16.msra.mxu0 0
        %1428 = vmatpush.bf16.msra.mxu0 0
        %1429 = vmatpush.bf16.msra.mxu0 %v1411
        %1430 = vmatmul.bf16.gmra.mxu0 %v1405
        %v1431 = vpop.f32.mrf.mxu0
        %v1432 = vadd.f32 0.0, %v1431
        %v1433 = vpop.f32.mrf.mxu0
        %v1434 = vadd.f32 0.0, %v1433
        %1435 = vmatmul.bf16.gmra.mxu0 %v1408
        %v1436 = vpop.f32.mrf.mxu0
        %v1437 = vadd.f32 0.0, %v1436
        %v1438 = vpop.f32.mrf.mxu0
        %v1439 = vadd.f32 0.0, %v1438
        %1440 = vdwg.mxu0
        %1441 = vmatpush.bf16.msra.mxu0 0
        %1442 = vmatpush.bf16.msra.mxu0 0
        %1443 = vmatpush.bf16.msra.mxu0 0
        %1444 = vmatpush.bf16.msra.mxu0 0
        %1445 = vmatpush.bf16.msra.mxu0 0
        %1446 = vmatpush.bf16.msra.mxu0 0
        %1447 = vmatpush.bf16.msra.mxu0 0
        %1448 = vmatpush.bf16.msra.mxu0 %v1414
        %1449 = vmatmul.bf16.gmra.mxu0 %v1405
        %v1450 = vpop.f32.mrf.mxu0
        %v1451 = vadd.f32 0.0, %v1450
        %v1452 = vpop.f32.mrf.mxu0
        %v1453 = vadd.f32 0.0, %v1452
        %1454 = vmatmul.bf16.gmra.mxu0 %v1408
        %v1455 = vpop.f32.mrf.mxu0
        %v1456 = vadd.f32 0.0, %v1455
        %v1457 = vpop.f32.mrf.mxu0
        %v1458 = vadd.f32 0.0, %v1457
        %1459 = vdwg.mxu0
        %1460 = vmatpush.bf16.msra.mxu0 0
        %1461 = vmatpush.bf16.msra.mxu0 0
        %1462 = vmatpush.bf16.msra.mxu0 0
        %1463 = vmatpush.bf16.msra.mxu0 0
        %1464 = vmatpush.bf16.msra.mxu0 0
        %1465 = vmatpush.bf16.msra.mxu0 0
        %1466 = vmatpush.bf16.msra.mxu0 0
        %1467 = vmatpush.bf16.msra.mxu0 %v1417
        %1468 = vmatmul.bf16.gmra.mxu0 %v1405
        %v1469 = vpop.f32.mrf.mxu0
        %v1470 = vadd.f32 0.0, %v1469
        %v1471 = vpop.f32.mrf.mxu0
        %v1472 = vadd.f32 0.0, %v1471
        %1473 = vmatmul.bf16.gmra.mxu0 %v1408
        %v1474 = vpop.f32.mrf.mxu0
        %v1475 = vadd.f32 0.0, %v1474
        %v1476 = vpop.f32.mrf.mxu0
        %v1477 = vadd.f32 0.0, %v1476
        %1478 = vdwg.mxu0
        %1479 = vmatpush.bf16.msra.mxu0 0
        %1480 = vmatpush.bf16.msra.mxu0 0
        %1481 = vmatpush.bf16.msra.mxu0 0
        %1482 = vmatpush.bf16.msra.mxu0 0
        %1483 = vmatpush.bf16.msra.mxu0 0
        %1484 = vmatpush.bf16.msra.mxu0 0
        %1485 = vmatpush.bf16.msra.mxu0 0
        %1486 = vmatpush.bf16.msra.mxu0 %v1420
        %1487 = vmatmul.bf16.gmra.mxu0 %v1405
        %v1488 = vpop.f32.mrf.mxu0
        %v1489 = vadd.f32 0.0, %v1488
        %v1490 = vpop.f32.mrf.mxu0
        %v1491 = vadd.f32 0.0, %v1490
        %1492 = vmatmul.bf16.gmra.mxu0 %v1408
        %v1493 = vpop.f32.mrf.mxu0
        %v1494 = vadd.f32 0.0, %v1493
        %v1495 = vpop.f32.mrf.mxu0
        %v1496 = vadd.f32 0.0, %v1495
        %1497 = vdwg.mxu0
        %v1498 = vadd.f32 %v1341, %v1432
        %v1499 = vadd.f32 %v1342, %v1451
        %v1500 = vadd.f32 %v1343, %v1470
        %v1501 = vadd.f32 %v1344, %v1489
        %v1502 = vadd.f32 %v1345, %v1434
        %v1503 = vadd.f32 %v1346, %v1453
        %v1504 = vadd.f32 %v1347, %v1472
        %v1505 = vadd.f32 %v1348, %v1491
        %v1506 = vadd.f32 %v1349, %v1437
        %v1507 = vadd.f32 %v1350, %v1456
        %v1508 = vadd.f32 %v1351, %v1475
        %v1509 = vadd.f32 %v1352, %v1494
        %v1510 = vadd.f32 %v1353, %v1439
        %v1511 = vadd.f32 %v1354, %v1458
        %v1512 = vadd.f32 %v1355, %v1477
        %v1513 = vadd.f32 %v1356, %v1496
        %s1514 = scalar_lea.vmem %s1, 128
        %v1515 = vld [vmem:[%s1514] sm:$0xf]
        %v1516 = vld [vmem:[%s1514 + $0x4] sm:$0xf]
        %v1517 = vld [vmem:[%s1514 + $0x8] sm:$0xf]
        %v1518 = vld [vmem:[%s1514 + $0xc] sm:$0xf]
        %v1519 = vld [vmem:[%s302] sm:$0xff]
        %v1520 = vld [vmem:[%s302 + $0x8] sm:$0x3]
        %v1525 = vunpack.c.l.b16 %v1515
        %v1526 = vunpack.c.l.b16 %v1516
        %v1527 = vunpack.c.l.b16 %v1517
        %v1528 = vunpack.c.l.b16 %v1518
        %v1529 = vpack.c.b16 %v1526, %v1525
        %v1530 = vpack.c.b16 %v1528, %v1527
        %1532 = vst [vmem:[#allocation1] ss:$4 sm:$0xff] %v1519
        %s1534 = scalar_lea.vmem [#allocation1], 32
        %1535 = vst [vmem:[%s1534] ss:$4 sm:$0xff] %v1520
        %v1536 = vld.sshfl [vmem:[#allocation1] sm:$0xff pattern:$0x73625140]
        %v1538 = vld.sshfl [vmem:[#allocation1 + $0x8] sm:$0xff pattern:$0x73625140]
        %v1540 = vld.sshfl [vmem:[#allocation1 + $0x10] sm:$0xff pattern:$0x73625140]
        %v1542 = vld.sshfl [vmem:[#allocation1 + $0x18] sm:$0xff pattern:$0x73625140]
        %v1544 = vld.sshfl [vmem:[#allocation1 + $0x20] sm:$0xff pattern:$0x73625140]
        %1546 = vrot.lane.b32.xlu0 %v1536, 106
        %v1547 = vpop.permute.xlu0 %1546
        %1548 = vrot.lane.b32.xlu0 %v1538, 106
        %v1549 = vpop.permute.xlu0 %1548
        %1550 = vrot.lane.b32.xlu0 %v1540, 106
        %v1551 = vpop.permute.xlu0 %1550
        %1552 = vrot.lane.b32.xlu0 %v1542, 106
        %v1553 = vpop.permute.xlu0 %1552
        %1554 = vrot.lane.b32.xlu0 %v1544, 106
        %v1555 = vpop.permute.xlu0 %1554
        %vm1556 = vcmask 867328
        %v1557 = vsel %vm1556, %v1547, %v1549
        %v1558 = vsel %vm1556, %v1549, %v1551
        %v1559 = vsel %vm1556, %v1551, %v1553
        %v1560 = vsel %vm1556, %v1553, %v1555
        %v1562 = vsel %vm371, %v1529, 0
        %v1565 = vsel %vm371, %v1530, 0
        %v1568 = vsel %vm378, %v1557, 0
        %v1571 = vsel %vm378, %v1558, 0
        %v1574 = vsel %vm378, %v1559, 0
        %v1577 = vsel %vm378, %v1560, 0
        %1579 = vmatpush.bf16.msra.mxu0 0
        %1580 = vmatpush.bf16.msra.mxu0 0
        %1581 = vmatpush.bf16.msra.mxu0 0
        %1582 = vmatpush.bf16.msra.mxu0 0
        %1583 = vmatpush.bf16.msra.mxu0 0
        %1584 = vmatpush.bf16.msra.mxu0 0
        %1585 = vmatpush.bf16.msra.mxu0 0
        %1586 = vmatpush.bf16.msra.mxu0 %v1568
        %1587 = vmatmul.bf16.gmra.mxu0 %v1562
        %v1588 = vpop.f32.mrf.mxu0
        %v1589 = vadd.f32 0.0, %v1588
        %v1590 = vpop.f32.mrf.mxu0
        %v1591 = vadd.f32 0.0, %v1590
        %1592 = vmatmul.bf16.gmra.mxu0 %v1565
        %v1593 = vpop.f32.mrf.mxu0
        %v1594 = vadd.f32 0.0, %v1593
        %v1595 = vpop.f32.mrf.mxu0
        %v1596 = vadd.f32 0.0, %v1595
        %1597 = vdwg.mxu0
        %1598 = vmatpush.bf16.msra.mxu0 0
        %1599 = vmatpush.bf16.msra.mxu0 0
        %1600 = vmatpush.bf16.msra.mxu0 0
        %1601 = vmatpush.bf16.msra.mxu0 0
        %1602 = vmatpush.bf16.msra.mxu0 0
        %1603 = vmatpush.bf16.msra.mxu0 0
        %1604 = vmatpush.bf16.msra.mxu0 0
        %1605 = vmatpush.bf16.msra.mxu0 %v1571
        %1606 = vmatmul.bf16.gmra.mxu0 %v1562
        %v1607 = vpop.f32.mrf.mxu0
        %v1608 = vadd.f32 0.0, %v1607
        %v1609 = vpop.f32.mrf.mxu0
        %v1610 = vadd.f32 0.0, %v1609
        %1611 = vmatmul.bf16.gmra.mxu0 %v1565
        %v1612 = vpop.f32.mrf.mxu0
        %v1613 = vadd.f32 0.0, %v1612
        %v1614 = vpop.f32.mrf.mxu0
        %v1615 = vadd.f32 0.0, %v1614
        %1616 = vdwg.mxu0
        %1617 = vmatpush.bf16.msra.mxu0 0
        %1618 = vmatpush.bf16.msra.mxu0 0
        %1619 = vmatpush.bf16.msra.mxu0 0
        %1620 = vmatpush.bf16.msra.mxu0 0
        %1621 = vmatpush.bf16.msra.mxu0 0
        %1622 = vmatpush.bf16.msra.mxu0 0
        %1623 = vmatpush.bf16.msra.mxu0 0
        %1624 = vmatpush.bf16.msra.mxu0 %v1574
        %1625 = vmatmul.bf16.gmra.mxu0 %v1562
        %v1626 = vpop.f32.mrf.mxu0
        %v1627 = vadd.f32 0.0, %v1626
        %v1628 = vpop.f32.mrf.mxu0
        %v1629 = vadd.f32 0.0, %v1628
        %1630 = vmatmul.bf16.gmra.mxu0 %v1565
        %v1631 = vpop.f32.mrf.mxu0
        %v1632 = vadd.f32 0.0, %v1631
        %v1633 = vpop.f32.mrf.mxu0
        %v1634 = vadd.f32 0.0, %v1633
        %1635 = vdwg.mxu0
        %1636 = vmatpush.bf16.msra.mxu0 0
        %1637 = vmatpush.bf16.msra.mxu0 0
        %1638 = vmatpush.bf16.msra.mxu0 0
        %1639 = vmatpush.bf16.msra.mxu0 0
        %1640 = vmatpush.bf16.msra.mxu0 0
        %1641 = vmatpush.bf16.msra.mxu0 0
        %1642 = vmatpush.bf16.msra.mxu0 0
        %1643 = vmatpush.bf16.msra.mxu0 %v1577
        %1644 = vmatmul.bf16.gmra.mxu0 %v1562
        %v1645 = vpop.f32.mrf.mxu0
        %v1646 = vadd.f32 0.0, %v1645
        %v1647 = vpop.f32.mrf.mxu0
        %v1648 = vadd.f32 0.0, %v1647
        %1649 = vmatmul.bf16.gmra.mxu0 %v1565
        %v1650 = vpop.f32.mrf.mxu0
        %v1651 = vadd.f32 0.0, %v1650
        %v1652 = vpop.f32.mrf.mxu0
        %v1653 = vadd.f32 0.0, %v1652
        %1654 = vdwg.mxu0
        %v1655 = vadd.f32 %v1498, %v1589
        %v1656 = vadd.f32 %v1499, %v1608
        %v1657 = vadd.f32 %v1500, %v1627
        %v1658 = vadd.f32 %v1501, %v1646
        %v1659 = vadd.f32 %v1502, %v1591
        %v1660 = vadd.f32 %v1503, %v1610
        %v1661 = vadd.f32 %v1504, %v1629
        %v1662 = vadd.f32 %v1505, %v1648
        %v1663 = vadd.f32 %v1506, %v1594
        %v1664 = vadd.f32 %v1507, %v1613
        %v1665 = vadd.f32 %v1508, %v1632
        %v1666 = vadd.f32 %v1509, %v1651
        %v1667 = vadd.f32 %v1510, %v1596
        %v1668 = vadd.f32 %v1511, %v1615
        %v1669 = vadd.f32 %v1512, %v1634
        %v1670 = vadd.f32 %v1513, %v1653
        %s1671 = scalar_lea.vmem %s1, 144
        %v1672 = vld [vmem:[%s1671] sm:$0xf]
        %v1673 = vld [vmem:[%s1671 + $0x4] sm:$0xf]
        %v1674 = vld [vmem:[%s1671 + $0x8] sm:$0xf]
        %v1675 = vld [vmem:[%s1671 + $0xc] sm:$0xf]
        %v1676 = vld [vmem:[%s302] sm:$0xff]
        %v1677 = vld [vmem:[%s302 + $0x8] sm:$0x3]
        %v1682 = vunpack.c.l.b16 %v1672
        %v1683 = vunpack.c.l.b16 %v1673
        %v1684 = vunpack.c.l.b16 %v1674
        %v1685 = vunpack.c.l.b16 %v1675
        %v1686 = vpack.c.b16 %v1683, %v1682
        %v1687 = vpack.c.b16 %v1685, %v1684
        %1689 = vst [vmem:[#allocation1] ss:$4 sm:$0xff] %v1676
        %s1691 = scalar_lea.vmem [#allocation1], 32
        %1692 = vst [vmem:[%s1691] ss:$4 sm:$0xff] %v1677
        %v1693 = vld.sshfl [vmem:[#allocation1] sm:$0xff pattern:$0x73625140]
        %v1695 = vld.sshfl [vmem:[#allocation1 + $0x8] sm:$0xff pattern:$0x73625140]
        %v1697 = vld.sshfl [vmem:[#allocation1 + $0x10] sm:$0xff pattern:$0x73625140]
        %v1699 = vld.sshfl [vmem:[#allocation1 + $0x18] sm:$0xff pattern:$0x73625140]
        %v1701 = vld.sshfl [vmem:[#allocation1 + $0x20] sm:$0xff pattern:$0x73625140]
        %1703 = vrot.lane.b32.xlu0 %v1693, 28
        %v1704 = vpop.permute.xlu0 %1703
        %1705 = vrot.lane.b32.xlu0 %v1695, 28
        %v1706 = vpop.permute.xlu0 %1705
        %1707 = vrot.lane.b32.xlu0 %v1697, 28
        %v1708 = vpop.permute.xlu0 %1707
        %1709 = vrot.lane.b32.xlu0 %v1699, 28
        %v1710 = vpop.permute.xlu0 %1709
        %1711 = vrot.lane.b32.xlu0 %v1701, 28
        %v1712 = vpop.permute.xlu0 %1711
        %vm1713 = vcmask 228352
        %v1714 = vsel %vm1713, %v1704, %v1706
        %v1715 = vsel %vm1713, %v1706, %v1708
        %v1716 = vsel %vm1713, %v1708, %v1710
        %v1717 = vsel %vm1713, %v1710, %v1712
        %v1719 = vsel %vm371, %v1686, 0
        %v1722 = vsel %vm371, %v1687, 0
        %v1725 = vsel %vm378, %v1714, 0
        %v1728 = vsel %vm378, %v1715, 0
        %v1731 = vsel %vm378, %v1716, 0
        %v1734 = vsel %vm378, %v1717, 0
        %1736 = vmatpush.bf16.msra.mxu0 0
        %1737 = vmatpush.bf16.msra.mxu0 0
        %1738 = vmatpush.bf16.msra.mxu0 0
        %1739 = vmatpush.bf16.msra.mxu0 0
        %1740 = vmatpush.bf16.msra.mxu0 0
        %1741 = vmatpush.bf16.msra.mxu0 0
        %1742 = vmatpush.bf16.msra.mxu0 0
        %1743 = vmatpush.bf16.msra.mxu0 %v1725
        %1744 = vmatmul.bf16.gmra.mxu0 %v1719
        %v1745 = vpop.f32.mrf.mxu0
        %v1746 = vadd.f32 0.0, %v1745
        %v1747 = vpop.f32.mrf.mxu0
        %v1748 = vadd.f32 0.0, %v1747
        %1749 = vmatmul.bf16.gmra.mxu0 %v1722
        %v1750 = vpop.f32.mrf.mxu0
        %v1751 = vadd.f32 0.0, %v1750
        %v1752 = vpop.f32.mrf.mxu0
        %v1753 = vadd.f32 0.0, %v1752
        %1754 = vdwg.mxu0
        %1755 = vmatpush.bf16.msra.mxu0 0
        %1756 = vmatpush.bf16.msra.mxu0 0
        %1757 = vmatpush.bf16.msra.mxu0 0
        %1758 = vmatpush.bf16.msra.mxu0 0
        %1759 = vmatpush.bf16.msra.mxu0 0
        %1760 = vmatpush.bf16.msra.mxu0 0
        %1761 = vmatpush.bf16.msra.mxu0 0
        %1762 = vmatpush.bf16.msra.mxu0 %v1728
        %1763 = vmatmul.bf16.gmra.mxu0 %v1719
        %v1764 = vpop.f32.mrf.mxu0
        %v1765 = vadd.f32 0.0, %v1764
        %v1766 = vpop.f32.mrf.mxu0
        %v1767 = vadd.f32 0.0, %v1766
        %1768 = vmatmul.bf16.gmra.mxu0 %v1722
        %v1769 = vpop.f32.mrf.mxu0
        %v1770 = vadd.f32 0.0, %v1769
        %v1771 = vpop.f32.mrf.mxu0
        %v1772 = vadd.f32 0.0, %v1771
        %1773 = vdwg.mxu0
        %1774 = vmatpush.bf16.msra.mxu0 0
        %1775 = vmatpush.bf16.msra.mxu0 0
        %1776 = vmatpush.bf16.msra.mxu0 0
        %1777 = vmatpush.bf16.msra.mxu0 0
        %1778 = vmatpush.bf16.msra.mxu0 0
        %1779 = vmatpush.bf16.msra.mxu0 0
        %1780 = vmatpush.bf16.msra.mxu0 0
        %1781 = vmatpush.bf16.msra.mxu0 %v1731
        %1782 = vmatmul.bf16.gmra.mxu0 %v1719
        %v1783 = vpop.f32.mrf.mxu0
        %v1784 = vadd.f32 0.0, %v1783
        %v1785 = vpop.f32.mrf.mxu0
        %v1786 = vadd.f32 0.0, %v1785
        %1787 = vmatmul.bf16.gmra.mxu0 %v1722
        %v1788 = vpop.f32.mrf.mxu0
        %v1789 = vadd.f32 0.0, %v1788
        %v1790 = vpop.f32.mrf.mxu0
        %v1791 = vadd.f32 0.0, %v1790
        %1792 = vdwg.mxu0
        %1793 = vmatpush.bf16.msra.mxu0 0
        %1794 = vmatpush.bf16.msra.mxu0 0
        %1795 = vmatpush.bf16.msra.mxu0 0
        %1796 = vmatpush.bf16.msra.mxu0 0
        %1797 = vmatpush.bf16.msra.mxu0 0
        %1798 = vmatpush.bf16.msra.mxu0 0
        %1799 = vmatpush.bf16.msra.mxu0 0
        %1800 = vmatpush.bf16.msra.mxu0 %v1734
        %1801 = vmatmul.bf16.gmra.mxu0 %v1719
        %v1802 = vpop.f32.mrf.mxu0
        %v1803 = vadd.f32 0.0, %v1802
        %v1804 = vpop.f32.mrf.mxu0
        %v1805 = vadd.f32 0.0, %v1804
        %1806 = vmatmul.bf16.gmra.mxu0 %v1722
        %v1807 = vpop.f32.mrf.mxu0
        %v1808 = vadd.f32 0.0, %v1807
        %v1809 = vpop.f32.mrf.mxu0
        %v1810 = vadd.f32 0.0, %v1809
        %1811 = vdwg.mxu0
        %v1812 = vadd.f32 %v1655, %v1746
        %v1813 = vadd.f32 %v1656, %v1765
        %v1814 = vadd.f32 %v1657, %v1784
        %v1815 = vadd.f32 %v1658, %v1803
        %v1816 = vadd.f32 %v1659, %v1748
        %v1817 = vadd.f32 %v1660, %v1767
        %v1818 = vadd.f32 %v1661, %v1786
        %v1819 = vadd.f32 %v1662, %v1805
        %v1820 = vadd.f32 %v1663, %v1751
        %v1821 = vadd.f32 %v1664, %v1770
        %v1822 = vadd.f32 %v1665, %v1789
        %v1823 = vadd.f32 %v1666, %v1808
        %v1824 = vadd.f32 %v1667, %v1753
        %v1825 = vadd.f32 %v1668, %v1772
        %v1826 = vadd.f32 %v1669, %v1791
        %v1827 = vadd.f32 %v1670, %v1810
        %s1828 = scalar_lea.vmem %s1, 160
        %v1829 = vld [vmem:[%s1828] sm:$0xf]
        %v1830 = vld [vmem:[%s1828 + $0x4] sm:$0xf]
        %v1831 = vld [vmem:[%s1828 + $0x8] sm:$0xf]
        %v1832 = vld [vmem:[%s1828 + $0xc] sm:$0xf]
        %v1833 = vld [vmem:[%s302] sm:$0xff]
        %v1834 = vld [vmem:[%s302 + $0x8] sm:$0x3]
        %v1839 = vunpack.c.l.b16 %v1829
        %v1840 = vunpack.c.l.b16 %v1830
        %v1841 = vunpack.c.l.b16 %v1831
        %v1842 = vunpack.c.l.b16 %v1832
        %v1843 = vpack.c.b16 %v1840, %v1839
        %v1844 = vpack.c.b16 %v1842, %v1841
        %1846 = vst [vmem:[#allocation1] ss:$4 sm:$0xff] %v1833
        %s1848 = scalar_lea.vmem [#allocation1], 32
        %1849 = vst [vmem:[%s1848] ss:$4 sm:$0xff] %v1834
        %v1850 = vld.sshfl [vmem:[#allocation1] sm:$0xff pattern:$0x73625140]
        %v1852 = vld.sshfl [vmem:[#allocation1 + $0x8] sm:$0xff pattern:$0x73625140]
        %v1854 = vld.sshfl [vmem:[#allocation1 + $0x10] sm:$0xff pattern:$0x73625140]
        %v1856 = vld.sshfl [vmem:[#allocation1 + $0x18] sm:$0xff pattern:$0x73625140]
        %v1858 = vld.sshfl [vmem:[#allocation1 + $0x20] sm:$0xff pattern:$0x73625140]
        %1860 = vrot.lane.b32.xlu0 %v1850, 27
        %v1861 = vpop.permute.xlu0 %1860
        %1862 = vrot.lane.b32.xlu0 %v1852, 27
        %v1863 = vpop.permute.xlu0 %1862
        %1864 = vrot.lane.b32.xlu0 %v1854, 27
        %v1865 = vpop.permute.xlu0 %1864
        %1866 = vrot.lane.b32.xlu0 %v1856, 27
        %v1867 = vpop.permute.xlu0 %1866
        %1868 = vrot.lane.b32.xlu0 %v1858, 27
        %v1869 = vpop.permute.xlu0 %1868
        %vm1870 = vcmask 220160
        %v1871 = vsel %vm1870, %v1861, %v1863
        %v1872 = vsel %vm1870, %v1863, %v1865
        %v1873 = vsel %vm1870, %v1865, %v1867
        %v1874 = vsel %vm1870, %v1867, %v1869
        %v1876 = vsel %vm371, %v1843, 0
        %v1879 = vsel %vm371, %v1844, 0
        %v1882 = vsel %vm378, %v1871, 0
        %v1885 = vsel %vm378, %v1872, 0
        %v1888 = vsel %vm378, %v1873, 0
        %v1891 = vsel %vm378, %v1874, 0
        %1893 = vmatpush.bf16.msra.mxu0 0
        %1894 = vmatpush.bf16.msra.mxu0 0
        %1895 = vmatpush.bf16.msra.mxu0 0
        %1896 = vmatpush.bf16.msra.mxu0 0
        %1897 = vmatpush.bf16.msra.mxu0 0
        %1898 = vmatpush.bf16.msra.mxu0 0
        %1899 = vmatpush.bf16.msra.mxu0 0
        %1900 = vmatpush.bf16.msra.mxu0 %v1882
        %1901 = vmatmul.bf16.gmra.mxu0 %v1876
        %v1902 = vpop.f32.mrf.mxu0
        %v1903 = vadd.f32 0.0, %v1902
        %v1904 = vpop.f32.mrf.mxu0
        %v1905 = vadd.f32 0.0, %v1904
        %1906 = vmatmul.bf16.gmra.mxu0 %v1879
        %v1907 = vpop.f32.mrf.mxu0
        %v1908 = vadd.f32 0.0, %v1907
        %v1909 = vpop.f32.mrf.mxu0
        %v1910 = vadd.f32 0.0, %v1909
        %1911 = vdwg.mxu0
        %1912 = vmatpush.bf16.msra.mxu0 0
        %1913 = vmatpush.bf16.msra.mxu0 0
        %1914 = vmatpush.bf16.msra.mxu0 0
        %1915 = vmatpush.bf16.msra.mxu0 0
        %1916 = vmatpush.bf16.msra.mxu0 0
        %1917 = vmatpush.bf16.msra.mxu0 0
        %1918 = vmatpush.bf16.msra.mxu0 0
        %1919 = vmatpush.bf16.msra.mxu0 %v1885
        %1920 = vmatmul.bf16.gmra.mxu0 %v1876
        %v1921 = vpop.f32.mrf.mxu0
        %v1922 = vadd.f32 0.0, %v1921
        %v1923 = vpop.f32.mrf.mxu0
        %v1924 = vadd.f32 0.0, %v1923
        %1925 = vmatmul.bf16.gmra.mxu0 %v1879
        %v1926 = vpop.f32.mrf.mxu0
        %v1927 = vadd.f32 0.0, %v1926
        %v1928 = vpop.f32.mrf.mxu0
        %v1929 = vadd.f32 0.0, %v1928
        %1930 = vdwg.mxu0
        %1931 = vmatpush.bf16.msra.mxu0 0
        %1932 = vmatpush.bf16.msra.mxu0 0
        %1933 = vmatpush.bf16.msra.mxu0 0
        %1934 = vmatpush.bf16.msra.mxu0 0
        %1935 = vmatpush.bf16.msra.mxu0 0
        %1936 = vmatpush.bf16.msra.mxu0 0
        %1937 = vmatpush.bf16.msra.mxu0 0
        %1938 = vmatpush.bf16.msra.mxu0 %v1888
        %1939 = vmatmul.bf16.gmra.mxu0 %v1876
        %v1940 = vpop.f32.mrf.mxu0
        %v1941 = vadd.f32 0.0, %v1940
        %v1942 = vpop.f32.mrf.mxu0
        %v1943 = vadd.f32 0.0, %v1942
        %1944 = vmatmul.bf16.gmra.mxu0 %v1879
        %v1945 = vpop.f32.mrf.mxu0
        %v1946 = vadd.f32 0.0, %v1945
        %v1947 = vpop.f32.mrf.mxu0
        %v1948 = vadd.f32 0.0, %v1947
        %1949 = vdwg.mxu0
        %1950 = vmatpush.bf16.msra.mxu0 0
        %1951 = vmatpush.bf16.msra.mxu0 0
        %1952 = vmatpush.bf16.msra.mxu0 0
        %1953 = vmatpush.bf16.msra.mxu0 0
        %1954 = vmatpush.bf16.msra.mxu0 0
        %1955 = vmatpush.bf16.msra.mxu0 0
        %1956 = vmatpush.bf16.msra.mxu0 0
        %1957 = vmatpush.bf16.msra.mxu0 %v1891
        %1958 = vmatmul.bf16.gmra.mxu0 %v1876
        %v1959 = vpop.f32.mrf.mxu0
        %v1960 = vadd.f32 0.0, %v1959
        %v1961 = vpop.f32.mrf.mxu0
        %v1962 = vadd.f32 0.0, %v1961
        %1963 = vmatmul.bf16.gmra.mxu0 %v1879
        %v1964 = vpop.f32.mrf.mxu0
        %v1965 = vadd.f32 0.0, %v1964
        %v1966 = vpop.f32.mrf.mxu0
        %v1967 = vadd.f32 0.0, %v1966
        %1968 = vdwg.mxu0
        %v1969 = vadd.f32 %v1812, %v1903
        %v1970 = vadd.f32 %v1813, %v1922
        %v1971 = vadd.f32 %v1814, %v1941
        %v1972 = vadd.f32 %v1815, %v1960
        %v1973 = vadd.f32 %v1816, %v1905
        %v1974 = vadd.f32 %v1817, %v1924
        %v1975 = vadd.f32 %v1818, %v1943
        %v1976 = vadd.f32 %v1819, %v1962
        %v1977 = vadd.f32 %v1820, %v1908
        %v1978 = vadd.f32 %v1821, %v1927
        %v1979 = vadd.f32 %v1822, %v1946
        %v1980 = vadd.f32 %v1823, %v1965
        %v1981 = vadd.f32 %v1824, %v1910
        %v1982 = vadd.f32 %v1825, %v1929
        %v1983 = vadd.f32 %v1826, %v1948
        %v1984 = vadd.f32 %v1827, %v1967
        %s1985 = scalar_lea.vmem %s1, 176
        %v1986 = vld [vmem:[%s1985] sm:$0xf]
        %v1987 = vld [vmem:[%s1985 + $0x4] sm:$0xf]
        %v1988 = vld [vmem:[%s1985 + $0x8] sm:$0xf]
        %v1989 = vld [vmem:[%s1985 + $0xc] sm:$0xf]
        %v1990 = vld [vmem:[%s302] sm:$0xff]
        %v1991 = vld [vmem:[%s302 + $0x8] sm:$0x3]
        %v1996 = vunpack.c.l.b16 %v1986
        %v1997 = vunpack.c.l.b16 %v1987
        %v1998 = vunpack.c.l.b16 %v1988
        %v1999 = vunpack.c.l.b16 %v1989
        %v2000 = vpack.c.b16 %v1997, %v1996
        %v2001 = vpack.c.b16 %v1999, %v1998
        %2003 = vst [vmem:[#allocation1] ss:$4 sm:$0xff] %v1990
        %s2005 = scalar_lea.vmem [#allocation1], 32
        %2006 = vst [vmem:[%s2005] ss:$4 sm:$0xff] %v1991
        %v2007 = vld.sshfl [vmem:[#allocation1] sm:$0xff pattern:$0x73625140]
        %v2009 = vld.sshfl [vmem:[#allocation1 + $0x8] sm:$0xff pattern:$0x73625140]
        %v2011 = vld.sshfl [vmem:[#allocation1 + $0x10] sm:$0xff pattern:$0x73625140]
        %v2013 = vld.sshfl [vmem:[#allocation1 + $0x18] sm:$0xff pattern:$0x73625140]
        %v2015 = vld.sshfl [vmem:[#allocation1 + $0x20] sm:$0xff pattern:$0x73625140]
        %2017 = vrot.lane.b32.xlu0 %v2007, 26
        %v2018 = vpop.permute.xlu0 %2017
        %2019 = vrot.lane.b32.xlu0 %v2009, 26
        %v2020 = vpop.permute.xlu0 %2019
        %2021 = vrot.lane.b32.xlu0 %v2011, 26
        %v2022 = vpop.permute.xlu0 %2021
        %2023 = vrot.lane.b32.xlu0 %v2013, 26
        %v2024 = vpop.permute.xlu0 %2023
        %2025 = vrot.lane.b32.xlu0 %v2015, 26
        %v2026 = vpop.permute.xlu0 %2025
        %vm2027 = vcmask 211968
        %v2028 = vsel %vm2027, %v2018, %v2020
        %v2029 = vsel %vm2027, %v2020, %v2022
        %v2030 = vsel %vm2027, %v2022, %v2024
        %v2031 = vsel %vm2027, %v2024, %v2026
        %v2033 = vsel %vm371, %v2000, 0
        %v2036 = vsel %vm371, %v2001, 0
        %v2039 = vsel %vm378, %v2028, 0
        %v2042 = vsel %vm378, %v2029, 0
        %v2045 = vsel %vm378, %v2030, 0
        %v2048 = vsel %vm378, %v2031, 0
        %2050 = vmatpush.bf16.msra.mxu0 0
        %2051 = vmatpush.bf16.msra.mxu0 0
        %2052 = vmatpush.bf16.msra.mxu0 0
        %2053 = vmatpush.bf16.msra.mxu0 0
        %2054 = vmatpush.bf16.msra.mxu0 0
        %2055 = vmatpush.bf16.msra.mxu0 0
        %2056 = vmatpush.bf16.msra.mxu0 0
        %2057 = vmatpush.bf16.msra.mxu0 %v2039
        %2058 = vmatmul.bf16.gmra.mxu0 %v2033
        %v2059 = vpop.f32.mrf.mxu0
        %v2060 = vadd.f32 0.0, %v2059
        %v2061 = vpop.f32.mrf.mxu0
        %v2062 = vadd.f32 0.0, %v2061
        %2063 = vmatmul.bf16.gmra.mxu0 %v2036
        %v2064 = vpop.f32.mrf.mxu0
        %v2065 = vadd.f32 0.0, %v2064
        %v2066 = vpop.f32.mrf.mxu0
        %v2067 = vadd.f32 0.0, %v2066
        %2068 = vdwg.mxu0
        %2069 = vmatpush.bf16.msra.mxu0 0
        %2070 = vmatpush.bf16.msra.mxu0 0
        %2071 = vmatpush.bf16.msra.mxu0 0
        %2072 = vmatpush.bf16.msra.mxu0 0
        %2073 = vmatpush.bf16.msra.mxu0 0
        %2074 = vmatpush.bf16.msra.mxu0 0
        %2075 = vmatpush.bf16.msra.mxu0 0
        %2076 = vmatpush.bf16.msra.mxu0 %v2042
        %2077 = vmatmul.bf16.gmra.mxu0 %v2033
        %v2078 = vpop.f32.mrf.mxu0
        %v2079 = vadd.f32 0.0, %v2078
        %v2080 = vpop.f32.mrf.mxu0
        %v2081 = vadd.f32 0.0, %v2080
        %2082 = vmatmul.bf16.gmra.mxu0 %v2036
        %v2083 = vpop.f32.mrf.mxu0
        %v2084 = vadd.f32 0.0, %v2083
        %v2085 = vpop.f32.mrf.mxu0
        %v2086 = vadd.f32 0.0, %v2085
        %2087 = vdwg.mxu0
        %2088 = vmatpush.bf16.msra.mxu0 0
        %2089 = vmatpush.bf16.msra.mxu0 0
        %2090 = vmatpush.bf16.msra.mxu0 0
        %2091 = vmatpush.bf16.msra.mxu0 0
        %2092 = vmatpush.bf16.msra.mxu0 0
        %2093 = vmatpush.bf16.msra.mxu0 0
        %2094 = vmatpush.bf16.msra.mxu0 0
        %2095 = vmatpush.bf16.msra.mxu0 %v2045
        %2096 = vmatmul.bf16.gmra.mxu0 %v2033
        %v2097 = vpop.f32.mrf.mxu0
        %v2098 = vadd.f32 0.0, %v2097
        %v2099 = vpop.f32.mrf.mxu0
        %v2100 = vadd.f32 0.0, %v2099
        %2101 = vmatmul.bf16.gmra.mxu0 %v2036
        %v2102 = vpop.f32.mrf.mxu0
        %v2103 = vadd.f32 0.0, %v2102
        %v2104 = vpop.f32.mrf.mxu0
        %v2105 = vadd.f32 0.0, %v2104
        %2106 = vdwg.mxu0
        %2107 = vmatpush.bf16.msra.mxu0 0
        %2108 = vmatpush.bf16.msra.mxu0 0
        %2109 = vmatpush.bf16.msra.mxu0 0
        %2110 = vmatpush.bf16.msra.mxu0 0
        %2111 = vmatpush.bf16.msra.mxu0 0
        %2112 = vmatpush.bf16.msra.mxu0 0
        %2113 = vmatpush.bf16.msra.mxu0 0
        %2114 = vmatpush.bf16.msra.mxu0 %v2048
        %2115 = vmatmul.bf16.gmra.mxu0 %v2033
        %v2116 = vpop.f32.mrf.mxu0
        %v2117 = vadd.f32 0.0, %v2116
        %v2118 = vpop.f32.mrf.mxu0
        %v2119 = vadd.f32 0.0, %v2118
        %2120 = vmatmul.bf16.gmra.mxu0 %v2036
        %v2121 = vpop.f32.mrf.mxu0
        %v2122 = vadd.f32 0.0, %v2121
        %v2123 = vpop.f32.mrf.mxu0
        %v2124 = vadd.f32 0.0, %v2123
        %2125 = vdwg.mxu0
        %v2126 = vadd.f32 %v1969, %v2060
        %v2127 = vadd.f32 %v1970, %v2079
        %v2128 = vadd.f32 %v1971, %v2098
        %v2129 = vadd.f32 %v1972, %v2117
        %v2130 = vadd.f32 %v1973, %v2062
        %v2131 = vadd.f32 %v1974, %v2081
        %v2132 = vadd.f32 %v1975, %v2100
        %v2133 = vadd.f32 %v1976, %v2119
        %v2134 = vadd.f32 %v1977, %v2065
        %v2135 = vadd.f32 %v1978, %v2084
        %v2136 = vadd.f32 %v1979, %v2103
        %v2137 = vadd.f32 %v1980, %v2122
        %v2138 = vadd.f32 %v1981, %v2067
        %v2139 = vadd.f32 %v1982, %v2086
        %v2140 = vadd.f32 %v1983, %v2105
        %v2141 = vadd.f32 %v1984, %v2124
        %s2142 = scalar_lea.vmem %s1, 192
        %v2143 = vld [vmem:[%s2142] sm:$0xf]
        %v2144 = vld [vmem:[%s2142 + $0x4] sm:$0xf]
        %v2145 = vld [vmem:[%s2142 + $0x8] sm:$0xf]
        %v2146 = vld [vmem:[%s2142 + $0xc] sm:$0xf]
        %v2147 = vld [vmem:[%s302] sm:$0xff]
        %v2148 = vld [vmem:[%s302 + $0x8] sm:$0x3]
        %v2153 = vunpack.c.l.b16 %v2143
        %v2154 = vunpack.c.l.b16 %v2144
        %v2155 = vunpack.c.l.b16 %v2145
        %v2156 = vunpack.c.l.b16 %v2146
        %v2157 = vpack.c.b16 %v2154, %v2153
        %v2158 = vpack.c.b16 %v2156, %v2155
        %2160 = vst [vmem:[#allocation1] ss:$4 sm:$0xff] %v2147
        %s2162 = scalar_lea.vmem [#allocation1], 32
        %2163 = vst [vmem:[%s2162] ss:$4 sm:$0xff] %v2148
        %v2164 = vld.sshfl [vmem:[#allocation1] sm:$0xff pattern:$0x73625140]
        %v2166 = vld.sshfl [vmem:[#allocation1 + $0x8] sm:$0xff pattern:$0x73625140]
        %v2168 = vld.sshfl [vmem:[#allocation1 + $0x10] sm:$0xff pattern:$0x73625140]
        %v2170 = vld.sshfl [vmem:[#allocation1 + $0x18] sm:$0xff pattern:$0x73625140]
        %v2172 = vld.sshfl [vmem:[#allocation1 + $0x20] sm:$0xff pattern:$0x73625140]
        %2174 = vrot.lane.b32.xlu0 %v2164, 18
        %v2175 = vpop.permute.xlu0 %2174
        %2176 = vrot.lane.b32.xlu0 %v2166, 18
        %v2177 = vpop.permute.xlu0 %2176
        %2178 = vrot.lane.b32.xlu0 %v2168, 18
        %v2179 = vpop.permute.xlu0 %2178
        %2180 = vrot.lane.b32.xlu0 %v2170, 18
        %v2181 = vpop.permute.xlu0 %2180
        %2182 = vrot.lane.b32.xlu0 %v2172, 18
        %v2183 = vpop.permute.xlu0 %2182
        %vm2184 = vcmask 146432
        %v2185 = vsel %vm2184, %v2175, %v2177
        %v2186 = vsel %vm2184, %v2177, %v2179
        %v2187 = vsel %vm2184, %v2179, %v2181
        %v2188 = vsel %vm2184, %v2181, %v2183
        %v2190 = vsel %vm371, %v2157, 0
        %v2193 = vsel %vm371, %v2158, 0
        %v2196 = vsel %vm378, %v2185, 0
        %v2199 = vsel %vm378, %v2186, 0
        %v2202 = vsel %vm378, %v2187, 0
        %v2205 = vsel %vm378, %v2188, 0
        %2207 = vmatpush.bf16.msra.mxu0 0
        %2208 = vmatpush.bf16.msra.mxu0 0
        %2209 = vmatpush.bf16.msra.mxu0 0
        %2210 = vmatpush.bf16.msra.mxu0 0
        %2211 = vmatpush.bf16.msra.mxu0 0
        %2212 = vmatpush.bf16.msra.mxu0 0
        %2213 = vmatpush.bf16.msra.mxu0 0
        %2214 = vmatpush.bf16.msra.mxu0 %v2196
        %2215 = vmatmul.bf16.gmra.mxu0 %v2190
        %v2216 = vpop.f32.mrf.mxu0
        %v2217 = vadd.f32 0.0, %v2216
        %v2218 = vpop.f32.mrf.mxu0
        %v2219 = vadd.f32 0.0, %v2218
        %2220 = vmatmul.bf16.gmra.mxu0 %v2193
        %v2221 = vpop.f32.mrf.mxu0
        %v2222 = vadd.f32 0.0, %v2221
        %v2223 = vpop.f32.mrf.mxu0
        %v2224 = vadd.f32 0.0, %v2223
        %2225 = vdwg.mxu0
        %2226 = vmatpush.bf16.msra.mxu0 0
        %2227 = vmatpush.bf16.msra.mxu0 0
        %2228 = vmatpush.bf16.msra.mxu0 0
        %2229 = vmatpush.bf16.msra.mxu0 0
        %2230 = vmatpush.bf16.msra.mxu0 0
        %2231 = vmatpush.bf16.msra.mxu0 0
        %2232 = vmatpush.bf16.msra.mxu0 0
        %2233 = vmatpush.bf16.msra.mxu0 %v2199
        %2234 = vmatmul.bf16.gmra.mxu0 %v2190
        %v2235 = vpop.f32.mrf.mxu0
        %v2236 = vadd.f32 0.0, %v2235
        %v2237 = vpop.f32.mrf.mxu0
        %v2238 = vadd.f32 0.0, %v2237
        %2239 = vmatmul.bf16.gmra.mxu0 %v2193
        %v2240 = vpop.f32.mrf.mxu0
        %v2241 = vadd.f32 0.0, %v2240
        %v2242 = vpop.f32.mrf.mxu0
        %v2243 = vadd.f32 0.0, %v2242
        %2244 = vdwg.mxu0
        %2245 = vmatpush.bf16.msra.mxu0 0
        %2246 = vmatpush.bf16.msra.mxu0 0
        %2247 = vmatpush.bf16.msra.mxu0 0
        %2248 = vmatpush.bf16.msra.mxu0 0
        %2249 = vmatpush.bf16.msra.mxu0 0
        %2250 = vmatpush.bf16.msra.mxu0 0
        %2251 = vmatpush.bf16.msra.mxu0 0
        %2252 = vmatpush.bf16.msra.mxu0 %v2202
        %2253 = vmatmul.bf16.gmra.mxu0 %v2190
        %v2254 = vpop.f32.mrf.mxu0
        %v2255 = vadd.f32 0.0, %v2254
        %v2256 = vpop.f32.mrf.mxu0
        %v2257 = vadd.f32 0.0, %v2256
        %2258 = vmatmul.bf16.gmra.mxu0 %v2193
        %v2259 = vpop.f32.mrf.mxu0
        %v2260 = vadd.f32 0.0, %v2259
        %v2261 = vpop.f32.mrf.mxu0
        %v2262 = vadd.f32 0.0, %v2261
        %2263 = vdwg.mxu0
        %2264 = vmatpush.bf16.msra.mxu0 0
        %2265 = vmatpush.bf16.msra.mxu0 0
        %2266 = vmatpush.bf16.msra.mxu0 0
        %2267 = vmatpush.bf16.msra.mxu0 0
        %2268 = vmatpush.bf16.msra.mxu0 0
        %2269 = vmatpush.bf16.msra.mxu0 0
        %2270 = vmatpush.bf16.msra.mxu0 0
        %2271 = vmatpush.bf16.msra.mxu0 %v2205
        %2272 = vmatmul.bf16.gmra.mxu0 %v2190
        %v2273 = vpop.f32.mrf.mxu0
        %v2274 = vadd.f32 0.0, %v2273
        %v2275 = vpop.f32.mrf.mxu0
        %v2276 = vadd.f32 0.0, %v2275
        %2277 = vmatmul.bf16.gmra.mxu0 %v2193
        %v2278 = vpop.f32.mrf.mxu0
        %v2279 = vadd.f32 0.0, %v2278
        %v2280 = vpop.f32.mrf.mxu0
        %v2281 = vadd.f32 0.0, %v2280
        %2282 = vdwg.mxu0
        %v2283 = vadd.f32 %v2126, %v2217
        %v2284 = vadd.f32 %v2127, %v2236
        %v2285 = vadd.f32 %v2128, %v2255
        %v2286 = vadd.f32 %v2129, %v2274
        %v2287 = vadd.f32 %v2130, %v2219
        %v2288 = vadd.f32 %v2131, %v2238
        %v2289 = vadd.f32 %v2132, %v2257
        %v2290 = vadd.f32 %v2133, %v2276
        %v2291 = vadd.f32 %v2134, %v2222
        %v2292 = vadd.f32 %v2135, %v2241
        %v2293 = vadd.f32 %v2136, %v2260
        %v2294 = vadd.f32 %v2137, %v2279
        %v2295 = vadd.f32 %v2138, %v2224
        %v2296 = vadd.f32 %v2139, %v2243
        %v2297 = vadd.f32 %v2140, %v2262
        %v2298 = vadd.f32 %v2141, %v2281
        %s2299 = scalar_lea.vmem %s1, 208
        %v2300 = vld [vmem:[%s2299] sm:$0xf]
        %v2301 = vld [vmem:[%s2299 + $0x4] sm:$0xf]
        %v2302 = vld [vmem:[%s2299 + $0x8] sm:$0xf]
        %v2303 = vld [vmem:[%s2299 + $0xc] sm:$0xf]
        %v2304 = vld [vmem:[%s302] sm:$0xff]
        %v2305 = vld [vmem:[%s302 + $0x8] sm:$0x3]
        %v2310 = vunpack.c.l.b16 %v2300
        %v2311 = vunpack.c.l.b16 %v2301
        %v2312 = vunpack.c.l.b16 %v2302
        %v2313 = vunpack.c.l.b16 %v2303
        %v2314 = vpack.c.b16 %v2311, %v2310
        %v2315 = vpack.c.b16 %v2313, %v2312
        %2317 = vst [vmem:[#allocation1] ss:$4 sm:$0xff] %v2304
        %s2319 = scalar_lea.vmem [#allocation1], 32
        %2320 = vst [vmem:[%s2319] ss:$4 sm:$0xff] %v2305
        %v2321 = vld.sshfl [vmem:[#allocation1] sm:$0xff pattern:$0x73625140]
        %v2323 = vld.sshfl [vmem:[#allocation1 + $0x8] sm:$0xff pattern:$0x73625140]
        %v2325 = vld.sshfl [vmem:[#allocation1 + $0x10] sm:$0xff pattern:$0x73625140]
        %v2327 = vld.sshfl [vmem:[#allocation1 + $0x18] sm:$0xff pattern:$0x73625140]
        %v2329 = vld.sshfl [vmem:[#allocation1 + $0x20] sm:$0xff pattern:$0x73625140]
        %2331 = vrot.lane.b32.xlu0 %v2321, 17
        %v2332 = vpop.permute.xlu0 %2331
        %2333 = vrot.lane.b32.xlu0 %v2323, 17
        %v2334 = vpop.permute.xlu0 %2333
        %2335 = vrot.lane.b32.xlu0 %v2325, 17
        %v2336 = vpop.permute.xlu0 %2335
        %2337 = vrot.lane.b32.xlu0 %v2327, 17
        %v2338 = vpop.permute.xlu0 %2337
        %2339 = vrot.lane.b32.xlu0 %v2329, 17
        %v2340 = vpop.permute.xlu0 %2339
        %vm2341 = vcmask 138240
        %v2342 = vsel %vm2341, %v2332, %v2334
        %v2343 = vsel %vm2341, %v2334, %v2336
        %v2344 = vsel %vm2341, %v2336, %v2338
        %v2345 = vsel %vm2341, %v2338, %v2340
        %v2347 = vsel %vm371, %v2314, 0
        %v2350 = vsel %vm371, %v2315, 0
        %v2353 = vsel %vm378, %v2342, 0
        %v2356 = vsel %vm378, %v2343, 0
        %v2359 = vsel %vm378, %v2344, 0
        %v2362 = vsel %vm378, %v2345, 0
        %2364 = vmatpush.bf16.msra.mxu0 0
        %2365 = vmatpush.bf16.msra.mxu0 0
        %2366 = vmatpush.bf16.msra.mxu0 0
        %2367 = vmatpush.bf16.msra.mxu0 0
        %2368 = vmatpush.bf16.msra.mxu0 0
        %2369 = vmatpush.bf16.msra.mxu0 0
        %2370 = vmatpush.bf16.msra.mxu0 0
        %2371 = vmatpush.bf16.msra.mxu0 %v2353
        %2372 = vmatmul.bf16.gmra.mxu0 %v2347
        %v2373 = vpop.f32.mrf.mxu0
        %v2374 = vadd.f32 0.0, %v2373
        %v2375 = vpop.f32.mrf.mxu0
        %v2376 = vadd.f32 0.0, %v2375
        %2377 = vmatmul.bf16.gmra.mxu0 %v2350
        %v2378 = vpop.f32.mrf.mxu0
        %v2379 = vadd.f32 0.0, %v2378
        %v2380 = vpop.f32.mrf.mxu0
        %v2381 = vadd.f32 0.0, %v2380
        %2382 = vdwg.mxu0
        %2383 = vmatpush.bf16.msra.mxu0 0
        %2384 = vmatpush.bf16.msra.mxu0 0
        %2385 = vmatpush.bf16.msra.mxu0 0
        %2386 = vmatpush.bf16.msra.mxu0 0
        %2387 = vmatpush.bf16.msra.mxu0 0
        %2388 = vmatpush.bf16.msra.mxu0 0
        %2389 = vmatpush.bf16.msra.mxu0 0
        %2390 = vmatpush.bf16.msra.mxu0 %v2356
        %2391 = vmatmul.bf16.gmra.mxu0 %v2347
        %v2392 = vpop.f32.mrf.mxu0
        %v2393 = vadd.f32 0.0, %v2392
        %v2394 = vpop.f32.mrf.mxu0
        %v2395 = vadd.f32 0.0, %v2394
        %2396 = vmatmul.bf16.gmra.mxu0 %v2350
        %v2397 = vpop.f32.mrf.mxu0
        %v2398 = vadd.f32 0.0, %v2397
        %v2399 = vpop.f32.mrf.mxu0
        %v2400 = vadd.f32 0.0, %v2399
        %2401 = vdwg.mxu0
        %2402 = vmatpush.bf16.msra.mxu0 0
        %2403 = vmatpush.bf16.msra.mxu0 0
        %2404 = vmatpush.bf16.msra.mxu0 0
        %2405 = vmatpush.bf16.msra.mxu0 0
        %2406 = vmatpush.bf16.msra.mxu0 0
        %2407 = vmatpush.bf16.msra.mxu0 0
        %2408 = vmatpush.bf16.msra.mxu0 0
        %2409 = vmatpush.bf16.msra.mxu0 %v2359
        %2410 = vmatmul.bf16.gmra.mxu0 %v2347
        %v2411 = vpop.f32.mrf.mxu0
        %v2412 = vadd.f32 0.0, %v2411
        %v2413 = vpop.f32.mrf.mxu0
        %v2414 = vadd.f32 0.0, %v2413
        %2415 = vmatmul.bf16.gmra.mxu0 %v2350
        %v2416 = vpop.f32.mrf.mxu0
        %v2417 = vadd.f32 0.0, %v2416
        %v2418 = vpop.f32.mrf.mxu0
        %v2419 = vadd.f32 0.0, %v2418
        %2420 = vdwg.mxu0
        %2421 = vmatpush.bf16.msra.mxu0 0
        %2422 = vmatpush.bf16.msra.mxu0 0
        %2423 = vmatpush.bf16.msra.mxu0 0
        %2424 = vmatpush.bf16.msra.mxu0 0
        %2425 = vmatpush.bf16.msra.mxu0 0
        %2426 = vmatpush.bf16.msra.mxu0 0
        %2427 = vmatpush.bf16.msra.mxu0 0
        %2428 = vmatpush.bf16.msra.mxu0 %v2362
        %2429 = vmatmul.bf16.gmra.mxu0 %v2347
        %v2430 = vpop.f32.mrf.mxu0
        %v2431 = vadd.f32 0.0, %v2430
        %v2432 = vpop.f32.mrf.mxu0
        %v2433 = vadd.f32 0.0, %v2432
        %2434 = vmatmul.bf16.gmra.mxu0 %v2350
        %v2435 = vpop.f32.mrf.mxu0
        %v2436 = vadd.f32 0.0, %v2435
        %v2437 = vpop.f32.mrf.mxu0
        %v2438 = vadd.f32 0.0, %v2437
        %2439 = vdwg.mxu0
        %v2440 = vadd.f32 %v2283, %v2374
        %v2441 = vadd.f32 %v2284, %v2393
        %v2442 = vadd.f32 %v2285, %v2412
        %v2443 = vadd.f32 %v2286, %v2431
        %v2444 = vadd.f32 %v2287, %v2376
        %v2445 = vadd.f32 %v2288, %v2395
        %v2446 = vadd.f32 %v2289, %v2414
        %v2447 = vadd.f32 %v2290, %v2433
        %v2448 = vadd.f32 %v2291, %v2379
        %v2449 = vadd.f32 %v2292, %v2398
        %v2450 = vadd.f32 %v2293, %v2417
        %v2451 = vadd.f32 %v2294, %v2436
        %v2452 = vadd.f32 %v2295, %v2381
        %v2453 = vadd.f32 %v2296, %v2400
        %v2454 = vadd.f32 %v2297, %v2419
        %v2455 = vadd.f32 %v2298, %v2438
        %s2456 = scalar_lea.vmem %s1, 224
        %v2457 = vld [vmem:[%s2456] sm:$0xf]
        %v2458 = vld [vmem:[%s2456 + $0x4] sm:$0xf]
        %v2459 = vld [vmem:[%s2456 + $0x8] sm:$0xf]
        %v2460 = vld [vmem:[%s2456 + $0xc] sm:$0xf]
        %v2461 = vld [vmem:[%s302] sm:$0xff]
        %v2462 = vld [vmem:[%s302 + $0x8] sm:$0x3]
        %v2467 = vunpack.c.l.b16 %v2457
        %v2468 = vunpack.c.l.b16 %v2458
        %v2469 = vunpack.c.l.b16 %v2459
        %v2470 = vunpack.c.l.b16 %v2460
        %v2471 = vpack.c.b16 %v2468, %v2467
        %v2472 = vpack.c.b16 %v2470, %v2469
        %2474 = vst [vmem:[#allocation1] ss:$4 sm:$0xff] %v2461
        %s2476 = scalar_lea.vmem [#allocation1], 32
        %2477 = vst [vmem:[%s2476] ss:$4 sm:$0xff] %v2462
        %v2478 = vld.sshfl [vmem:[#allocation1] sm:$0xff pattern:$0x73625140]
        %v2480 = vld.sshfl [vmem:[#allocation1 + $0x8] sm:$0xff pattern:$0x73625140]
        %v2482 = vld.sshfl [vmem:[#allocation1 + $0x10] sm:$0xff pattern:$0x73625140]
        %v2484 = vld.sshfl [vmem:[#allocation1 + $0x18] sm:$0xff pattern:$0x73625140]
        %v2486 = vld.sshfl [vmem:[#allocation1 + $0x20] sm:$0xff pattern:$0x73625140]
        %2488 = vrot.lane.b32.xlu0 %v2478, 16
        %v2489 = vpop.permute.xlu0 %2488
        %2490 = vrot.lane.b32.xlu0 %v2480, 16
        %v2491 = vpop.permute.xlu0 %2490
        %2492 = vrot.lane.b32.xlu0 %v2482, 16
        %v2493 = vpop.permute.xlu0 %2492
        %2494 = vrot.lane.b32.xlu0 %v2484, 16
        %v2495 = vpop.permute.xlu0 %2494
        %2496 = vrot.lane.b32.xlu0 %v2486, 16
        %v2497 = vpop.permute.xlu0 %2496
        %vm2498 = vcmask 130048
        %v2499 = vsel %vm2498, %v2489, %v2491
        %v2500 = vsel %vm2498, %v2491, %v2493
        %v2501 = vsel %vm2498, %v2493, %v2495
        %v2502 = vsel %vm2498, %v2495, %v2497
        %v2504 = vsel %vm371, %v2471, 0
        %v2507 = vsel %vm371, %v2472, 0
        %v2510 = vsel %vm378, %v2499, 0
        %v2513 = vsel %vm378, %v2500, 0
        %v2516 = vsel %vm378, %v2501, 0
        %v2519 = vsel %vm378, %v2502, 0
        %2521 = vmatpush.bf16.msra.mxu0 0
        %2522 = vmatpush.bf16.msra.mxu0 0
        %2523 = vmatpush.bf16.msra.mxu0 0
        %2524 = vmatpush.bf16.msra.mxu0 0
        %2525 = vmatpush.bf16.msra.mxu0 0
        %2526 = vmatpush.bf16.msra.mxu0 0
        %2527 = vmatpush.bf16.msra.mxu0 0
        %2528 = vmatpush.bf16.msra.mxu0 %v2510
        %2529 = vmatmul.bf16.gmra.mxu0 %v2504
        %v2530 = vpop.f32.mrf.mxu0
        %v2531 = vadd.f32 0.0, %v2530
        %v2532 = vpop.f32.mrf.mxu0
        %v2533 = vadd.f32 0.0, %v2532
        %2534 = vmatmul.bf16.gmra.mxu0 %v2507
        %v2535 = vpop.f32.mrf.mxu0
        %v2536 = vadd.f32 0.0, %v2535
        %v2537 = vpop.f32.mrf.mxu0
        %v2538 = vadd.f32 0.0, %v2537
        %2539 = vdwg.mxu0
        %2540 = vmatpush.bf16.msra.mxu0 0
        %2541 = vmatpush.bf16.msra.mxu0 0
        %2542 = vmatpush.bf16.msra.mxu0 0
        %2543 = vmatpush.bf16.msra.mxu0 0
        %2544 = vmatpush.bf16.msra.mxu0 0
        %2545 = vmatpush.bf16.msra.mxu0 0
        %2546 = vmatpush.bf16.msra.mxu0 0
        %2547 = vmatpush.bf16.msra.mxu0 %v2513
        %2548 = vmatmul.bf16.gmra.mxu0 %v2504
        %v2549 = vpop.f32.mrf.mxu0
        %v2550 = vadd.f32 0.0, %v2549
        %v2551 = vpop.f32.mrf.mxu0
        %v2552 = vadd.f32 0.0, %v2551
        %2553 = vmatmul.bf16.gmra.mxu0 %v2507
        %v2554 = vpop.f32.mrf.mxu0
        %v2555 = vadd.f32 0.0, %v2554
        %v2556 = vpop.f32.mrf.mxu0
        %v2557 = vadd.f32 0.0, %v2556
        %2558 = vdwg.mxu0
        %2559 = vmatpush.bf16.msra.mxu0 0
        %2560 = vmatpush.bf16.msra.mxu0 0
        %2561 = vmatpush.bf16.msra.mxu0 0
        %2562 = vmatpush.bf16.msra.mxu0 0
        %2563 = vmatpush.bf16.msra.mxu0 0
        %2564 = vmatpush.bf16.msra.mxu0 0
        %2565 = vmatpush.bf16.msra.mxu0 0
        %2566 = vmatpush.bf16.msra.mxu0 %v2516
        %2567 = vmatmul.bf16.gmra.mxu0 %v2504
        %v2568 = vpop.f32.mrf.mxu0
        %v2569 = vadd.f32 0.0, %v2568
        %v2570 = vpop.f32.mrf.mxu0
        %v2571 = vadd.f32 0.0, %v2570
        %2572 = vmatmul.bf16.gmra.mxu0 %v2507
        %v2573 = vpop.f32.mrf.mxu0
        %v2574 = vadd.f32 0.0, %v2573
        %v2575 = vpop.f32.mrf.mxu0
        %v2576 = vadd.f32 0.0, %v2575
        %2577 = vdwg.mxu0
        %2578 = vmatpush.bf16.msra.mxu0 0
        %2579 = vmatpush.bf16.msra.mxu0 0
        %2580 = vmatpush.bf16.msra.mxu0 0
        %2581 = vmatpush.bf16.msra.mxu0 0
        %2582 = vmatpush.bf16.msra.mxu0 0
        %2583 = vmatpush.bf16.msra.mxu0 0
        %2584 = vmatpush.bf16.msra.mxu0 0
        %2585 = vmatpush.bf16.msra.mxu0 %v2519
        %2586 = vmatmul.bf16.gmra.mxu0 %v2504
        %v2587 = vpop.f32.mrf.mxu0
        %v2588 = vadd.f32 0.0, %v2587
        %v2589 = vpop.f32.mrf.mxu0
        %v2590 = vadd.f32 0.0, %v2589
        %2591 = vmatmul.bf16.gmra.mxu0 %v2507
        %v2592 = vpop.f32.mrf.mxu0
        %v2593 = vadd.f32 0.0, %v2592
        %v2594 = vpop.f32.mrf.mxu0
        %v2595 = vadd.f32 0.0, %v2594
        %2596 = vdwg.mxu0
        %v2597 = vadd.f32 %v2440, %v2531
        %v2598 = vadd.f32 %v2441, %v2550
        %v2599 = vadd.f32 %v2442, %v2569
        %v2600 = vadd.f32 %v2443, %v2588
        %v2601 = vadd.f32 %v2444, %v2533
        %v2602 = vadd.f32 %v2445, %v2552
        %v2603 = vadd.f32 %v2446, %v2571
        %v2604 = vadd.f32 %v2447, %v2590
        %v2605 = vadd.f32 %v2448, %v2536
        %v2606 = vadd.f32 %v2449, %v2555
        %v2607 = vadd.f32 %v2450, %v2574
        %v2608 = vadd.f32 %v2451, %v2593
        %v2609 = vadd.f32 %v2452, %v2538
        %v2610 = vadd.f32 %v2453, %v2557
        %v2611 = vadd.f32 %v2454, %v2576
        %v2612 = vadd.f32 %v2455, %v2595
        %s2613 = scalar_lea.vmem %s1, 240
        %v2614 = vld [vmem:[%s2613] sm:$0xf]
        %v2615 = vld [vmem:[%s2613 + $0x4] sm:$0xf]
        %v2616 = vld [vmem:[%s2613 + $0x8] sm:$0xf]
        %v2617 = vld [vmem:[%s2613 + $0xc] sm:$0xf]
        %v2618 = vld [vmem:[%s302] sm:$0xff]
        %v2619 = vld [vmem:[%s302 + $0x8] sm:$0x3]
        %v2624 = vunpack.c.l.b16 %v2614
        %v2625 = vunpack.c.l.b16 %v2615
        %v2626 = vunpack.c.l.b16 %v2616
        %v2627 = vunpack.c.l.b16 %v2617
        %v2628 = vpack.c.b16 %v2625, %v2624
        %v2629 = vpack.c.b16 %v2627, %v2626
        %2631 = vst [vmem:[#allocation1] ss:$4 sm:$0xff] %v2618
        %s2633 = scalar_lea.vmem [#allocation1], 32
        %2634 = vst [vmem:[%s2633] ss:$4 sm:$0xff] %v2619
        %v2635 = vld.sshfl [vmem:[#allocation1] sm:$0xff pattern:$0x73625140]
        %v2637 = vld.sshfl [vmem:[#allocation1 + $0x8] sm:$0xff pattern:$0x73625140]
        %v2639 = vld.sshfl [vmem:[#allocation1 + $0x10] sm:$0xff pattern:$0x73625140]
        %v2641 = vld.sshfl [vmem:[#allocation1 + $0x18] sm:$0xff pattern:$0x73625140]
        %v2643 = vld.sshfl [vmem:[#allocation1 + $0x20] sm:$0xff pattern:$0x73625140]
        %2645 = vrot.lane.b32.xlu0 %v2635, 8
        %v2646 = vpop.permute.xlu0 %2645
        %2647 = vrot.lane.b32.xlu0 %v2637, 8
        %v2648 = vpop.permute.xlu0 %2647
        %2649 = vrot.lane.b32.xlu0 %v2639, 8
        %v2650 = vpop.permute.xlu0 %2649
        %2651 = vrot.lane.b32.xlu0 %v2641, 8
        %v2652 = vpop.permute.xlu0 %2651
        %2653 = vrot.lane.b32.xlu0 %v2643, 8
        %v2654 = vpop.permute.xlu0 %2653
        %vm2655 = vcmask 64512
        %v2656 = vsel %vm2655, %v2646, %v2648
        %v2657 = vsel %vm2655, %v2648, %v2650
        %v2658 = vsel %vm2655, %v2650, %v2652
        %v2659 = vsel %vm2655, %v2652, %v2654
        %v2661 = vsel %vm371, %v2628, 0
        %v2664 = vsel %vm371, %v2629, 0
        %v2667 = vsel %vm378, %v2656, 0
        %v2670 = vsel %vm378, %v2657, 0
        %v2673 = vsel %vm378, %v2658, 0
        %v2676 = vsel %vm378, %v2659, 0
        %2678 = vmatpush.bf16.msra.mxu0 0
        %2679 = vmatpush.bf16.msra.mxu0 0
        %2680 = vmatpush.bf16.msra.mxu0 0
        %2681 = vmatpush.bf16.msra.mxu0 0
        %2682 = vmatpush.bf16.msra.mxu0 0
        %2683 = vmatpush.bf16.msra.mxu0 0
        %2684 = vmatpush.bf16.msra.mxu0 0
        %2685 = vmatpush.bf16.msra.mxu0 %v2667
        %2686 = vmatmul.bf16.gmra.mxu0 %v2661
        %v2687 = vpop.f32.mrf.mxu0
        %v2688 = vadd.f32 0.0, %v2687
        %v2689 = vpop.f32.mrf.mxu0
        %v2690 = vadd.f32 0.0, %v2689
        %2691 = vmatmul.bf16.gmra.mxu0 %v2664
        %v2692 = vpop.f32.mrf.mxu0
        %v2693 = vadd.f32 0.0, %v2692
        %v2694 = vpop.f32.mrf.mxu0
        %v2695 = vadd.f32 0.0, %v2694
        %2696 = vdwg.mxu0
        %2697 = vmatpush.bf16.msra.mxu0 0
        %2698 = vmatpush.bf16.msra.mxu0 0
        %2699 = vmatpush.bf16.msra.mxu0 0
        %2700 = vmatpush.bf16.msra.mxu0 0
        %2701 = vmatpush.bf16.msra.mxu0 0
        %2702 = vmatpush.bf16.msra.mxu0 0
        %2703 = vmatpush.bf16.msra.mxu0 0
        %2704 = vmatpush.bf16.msra.mxu0 %v2670
        %2705 = vmatmul.bf16.gmra.mxu0 %v2661
        %v2706 = vpop.f32.mrf.mxu0
        %v2707 = vadd.f32 0.0, %v2706
        %v2708 = vpop.f32.mrf.mxu0
        %v2709 = vadd.f32 0.0, %v2708
        %2710 = vmatmul.bf16.gmra.mxu0 %v2664
        %v2711 = vpop.f32.mrf.mxu0
        %v2712 = vadd.f32 0.0, %v2711
        %v2713 = vpop.f32.mrf.mxu0
        %v2714 = vadd.f32 0.0, %v2713
        %2715 = vdwg.mxu0
        %2716 = vmatpush.bf16.msra.mxu0 0
        %2717 = vmatpush.bf16.msra.mxu0 0
        %2718 = vmatpush.bf16.msra.mxu0 0
        %2719 = vmatpush.bf16.msra.mxu0 0
        %2720 = vmatpush.bf16.msra.mxu0 0
        %2721 = vmatpush.bf16.msra.mxu0 0
        %2722 = vmatpush.bf16.msra.mxu0 0
        %2723 = vmatpush.bf16.msra.mxu0 %v2673
        %2724 = vmatmul.bf16.gmra.mxu0 %v2661
        %v2725 = vpop.f32.mrf.mxu0
        %v2726 = vadd.f32 0.0, %v2725
        %v2727 = vpop.f32.mrf.mxu0
        %v2728 = vadd.f32 0.0, %v2727
        %2729 = vmatmul.bf16.gmra.mxu0 %v2664
        %v2730 = vpop.f32.mrf.mxu0
        %v2731 = vadd.f32 0.0, %v2730
        %v2732 = vpop.f32.mrf.mxu0
        %v2733 = vadd.f32 0.0, %v2732
        %2734 = vdwg.mxu0
        %2735 = vmatpush.bf16.msra.mxu0 0
        %2736 = vmatpush.bf16.msra.mxu0 0
        %2737 = vmatpush.bf16.msra.mxu0 0
        %2738 = vmatpush.bf16.msra.mxu0 0
        %2739 = vmatpush.bf16.msra.mxu0 0
        %2740 = vmatpush.bf16.msra.mxu0 0
        %2741 = vmatpush.bf16.msra.mxu0 0
        %2742 = vmatpush.bf16.msra.mxu0 %v2676
        %2743 = vmatmul.bf16.gmra.mxu0 %v2661
        %v2744 = vpop.f32.mrf.mxu0
        %v2745 = vadd.f32 0.0, %v2744
        %v2746 = vpop.f32.mrf.mxu0
        %v2747 = vadd.f32 0.0, %v2746
        %2748 = vmatmul.bf16.gmra.mxu0 %v2664
        %v2749 = vpop.f32.mrf.mxu0
        %v2750 = vadd.f32 0.0, %v2749
        %v2751 = vpop.f32.mrf.mxu0
        %v2752 = vadd.f32 0.0, %v2751
        %2753 = vdwg.mxu0
        %v2754 = vadd.f32 %v2597, %v2688
        %v2755 = vadd.f32 %v2598, %v2707
        %v2756 = vadd.f32 %v2599, %v2726
        %v2757 = vadd.f32 %v2600, %v2745
        %v2758 = vadd.f32 %v2601, %v2690
        %v2759 = vadd.f32 %v2602, %v2709
        %v2760 = vadd.f32 %v2603, %v2728
        %v2761 = vadd.f32 %v2604, %v2747
        %v2762 = vadd.f32 %v2605, %v2693
        %v2763 = vadd.f32 %v2606, %v2712
        %v2764 = vadd.f32 %v2607, %v2731
        %v2765 = vadd.f32 %v2608, %v2750
        %v2766 = vadd.f32 %v2609, %v2695
        %v2767 = vadd.f32 %v2610, %v2714
        %v2768 = vadd.f32 %v2611, %v2733
        %v2769 = vadd.f32 %v2612, %v2752
        %s2770 = scalar_lea.vmem %s1, 256
        %v2771 = vld [vmem:[%s2770] sm:$0xf]
        %v2772 = vld [vmem:[%s2770 + $0x4] sm:$0xf]
        %v2773 = vld [vmem:[%s2770 + $0x8] sm:$0xf]
        %v2774 = vld [vmem:[%s2770 + $0xc] sm:$0xf]
        %v2775 = vld [vmem:[%s302] sm:$0xff]
        %v2776 = vld [vmem:[%s302 + $0x8] sm:$0x3]
        %v2781 = vunpack.c.l.b16 %v2771
        %v2782 = vunpack.c.l.b16 %v2772
        %v2783 = vunpack.c.l.b16 %v2773
        %v2784 = vunpack.c.l.b16 %v2774
        %v2785 = vpack.c.b16 %v2782, %v2781
        %v2786 = vpack.c.b16 %v2784, %v2783
        %2788 = vst [vmem:[#allocation1] ss:$4 sm:$0xff] %v2775
        %s2790 = scalar_lea.vmem [#allocation1], 32
        %2791 = vst [vmem:[%s2790] ss:$4 sm:$0xff] %v2776
        %v2792 = vld.sshfl [vmem:[#allocation1] sm:$0xff pattern:$0x73625140]
        %v2794 = vld.sshfl [vmem:[#allocation1 + $0x8] sm:$0xff pattern:$0x73625140]
        %v2796 = vld.sshfl [vmem:[#allocation1 + $0x10] sm:$0xff pattern:$0x73625140]
        %v2798 = vld.sshfl [vmem:[#allocation1 + $0x18] sm:$0xff pattern:$0x73625140]
        %v2800 = vld.sshfl [vmem:[#allocation1 + $0x20] sm:$0xff pattern:$0x73625140]
        %2802 = vrot.lane.b32.xlu0 %v2792, 7
        %v2803 = vpop.permute.xlu0 %2802
        %2804 = vrot.lane.b32.xlu0 %v2794, 7
        %v2805 = vpop.permute.xlu0 %2804
        %2806 = vrot.lane.b32.xlu0 %v2796, 7
        %v2807 = vpop.permute.xlu0 %2806
        %2808 = vrot.lane.b32.xlu0 %v2798, 7
        %v2809 = vpop.permute.xlu0 %2808
        %2810 = vrot.lane.b32.xlu0 %v2800, 7
        %v2811 = vpop.permute.xlu0 %2810
        %vm2812 = vcmask 56320
        %v2813 = vsel %vm2812, %v2803, %v2805
        %v2814 = vsel %vm2812, %v2805, %v2807
        %v2815 = vsel %vm2812, %v2807, %v2809
        %v2816 = vsel %vm2812, %v2809, %v2811
        %v2818 = vsel %vm371, %v2785, 0
        %v2821 = vsel %vm371, %v2786, 0
        %v2824 = vsel %vm378, %v2813, 0
        %v2827 = vsel %vm378, %v2814, 0
        %v2830 = vsel %vm378, %v2815, 0
        %v2833 = vsel %vm378, %v2816, 0
        %2835 = vmatpush.bf16.msra.mxu0 0
        %2836 = vmatpush.bf16.msra.mxu0 0
        %2837 = vmatpush.bf16.msra.mxu0 0
        %2838 = vmatpush.bf16.msra.mxu0 0
        %2839 = vmatpush.bf16.msra.mxu0 0
        %2840 = vmatpush.bf16.msra.mxu0 0
        %2841 = vmatpush.bf16.msra.mxu0 0
        %2842 = vmatpush.bf16.msra.mxu0 %v2824
        %2843 = vmatmul.bf16.gmra.mxu0 %v2818
        %v2844 = vpop.f32.mrf.mxu0
        %v2845 = vadd.f32 0.0, %v2844
        %v2846 = vpop.f32.mrf.mxu0
        %v2847 = vadd.f32 0.0, %v2846
        %2848 = vmatmul.bf16.gmra.mxu0 %v2821
        %v2849 = vpop.f32.mrf.mxu0
        %v2850 = vadd.f32 0.0, %v2849
        %v2851 = vpop.f32.mrf.mxu0
        %v2852 = vadd.f32 0.0, %v2851
        %2853 = vdwg.mxu0
        %2854 = vmatpush.bf16.msra.mxu0 0
        %2855 = vmatpush.bf16.msra.mxu0 0
        %2856 = vmatpush.bf16.msra.mxu0 0
        %2857 = vmatpush.bf16.msra.mxu0 0
        %2858 = vmatpush.bf16.msra.mxu0 0
        %2859 = vmatpush.bf16.msra.mxu0 0
        %2860 = vmatpush.bf16.msra.mxu0 0
        %2861 = vmatpush.bf16.msra.mxu0 %v2827
        %2862 = vmatmul.bf16.gmra.mxu0 %v2818
        %v2863 = vpop.f32.mrf.mxu0
        %v2864 = vadd.f32 0.0, %v2863
        %v2865 = vpop.f32.mrf.mxu0
        %v2866 = vadd.f32 0.0, %v2865
        %2867 = vmatmul.bf16.gmra.mxu0 %v2821
        %v2868 = vpop.f32.mrf.mxu0
        %v2869 = vadd.f32 0.0, %v2868
        %v2870 = vpop.f32.mrf.mxu0
        %v2871 = vadd.f32 0.0, %v2870
        %2872 = vdwg.mxu0
        %2873 = vmatpush.bf16.msra.mxu0 0
        %2874 = vmatpush.bf16.msra.mxu0 0
        %2875 = vmatpush.bf16.msra.mxu0 0
        %2876 = vmatpush.bf16.msra.mxu0 0
        %2877 = vmatpush.bf16.msra.mxu0 0
        %2878 = vmatpush.bf16.msra.mxu0 0
        %2879 = vmatpush.bf16.msra.mxu0 0
        %2880 = vmatpush.bf16.msra.mxu0 %v2830
        %2881 = vmatmul.bf16.gmra.mxu0 %v2818
        %v2882 = vpop.f32.mrf.mxu0
        %v2883 = vadd.f32 0.0, %v2882
        %v2884 = vpop.f32.mrf.mxu0
        %v2885 = vadd.f32 0.0, %v2884
        %2886 = vmatmul.bf16.gmra.mxu0 %v2821
        %v2887 = vpop.f32.mrf.mxu0
        %v2888 = vadd.f32 0.0, %v2887
        %v2889 = vpop.f32.mrf.mxu0
        %v2890 = vadd.f32 0.0, %v2889
        %2891 = vdwg.mxu0
        %2892 = vmatpush.bf16.msra.mxu0 0
        %2893 = vmatpush.bf16.msra.mxu0 0
        %2894 = vmatpush.bf16.msra.mxu0 0
        %2895 = vmatpush.bf16.msra.mxu0 0
        %2896 = vmatpush.bf16.msra.mxu0 0
        %2897 = vmatpush.bf16.msra.mxu0 0
        %2898 = vmatpush.bf16.msra.mxu0 0
        %2899 = vmatpush.bf16.msra.mxu0 %v2833
        %2900 = vmatmul.bf16.gmra.mxu0 %v2818
        %v2901 = vpop.f32.mrf.mxu0
        %v2902 = vadd.f32 0.0, %v2901
        %v2903 = vpop.f32.mrf.mxu0
        %v2904 = vadd.f32 0.0, %v2903
        %2905 = vmatmul.bf16.gmra.mxu0 %v2821
        %v2906 = vpop.f32.mrf.mxu0
        %v2907 = vadd.f32 0.0, %v2906
        %v2908 = vpop.f32.mrf.mxu0
        %v2909 = vadd.f32 0.0, %v2908
        %2910 = vdwg.mxu0
        %v2911 = vadd.f32 %v2754, %v2845
        %v2912 = vadd.f32 %v2755, %v2864
        %v2913 = vadd.f32 %v2756, %v2883
        %v2914 = vadd.f32 %v2757, %v2902
        %v2915 = vadd.f32 %v2758, %v2847
        %v2916 = vadd.f32 %v2759, %v2866
        %v2917 = vadd.f32 %v2760, %v2885
        %v2918 = vadd.f32 %v2761, %v2904
        %v2919 = vadd.f32 %v2762, %v2850
        %v2920 = vadd.f32 %v2763, %v2869
        %v2921 = vadd.f32 %v2764, %v2888
        %v2922 = vadd.f32 %v2765, %v2907
        %v2923 = vadd.f32 %v2766, %v2852
        %v2924 = vadd.f32 %v2767, %v2871
        %v2925 = vadd.f32 %v2768, %v2890
        %v2926 = vadd.f32 %v2769, %v2909
        %s2927 = scalar_lea.vmem %s1, 272
        %v2928 = vld [vmem:[%s2927] sm:$0xf]
        %v2929 = vld [vmem:[%s2927 + $0x4] sm:$0xf]
        %v2930 = vld [vmem:[%s2927 + $0x8] sm:$0xf]
        %v2931 = vld [vmem:[%s2927 + $0xc] sm:$0xf]
        %v2932 = vld [vmem:[%s302] sm:$0xff]
        %v2933 = vld [vmem:[%s302 + $0x8] sm:$0x3]
        %v2938 = vunpack.c.l.b16 %v2928
        %v2939 = vunpack.c.l.b16 %v2929
        %v2940 = vunpack.c.l.b16 %v2930
        %v2941 = vunpack.c.l.b16 %v2931
        %v2942 = vpack.c.b16 %v2939, %v2938
        %v2943 = vpack.c.b16 %v2941, %v2940
        %2945 = vst [vmem:[#allocation1] ss:$4 sm:$0xff] %v2932
        %s2947 = scalar_lea.vmem [#allocation1], 32
        %2948 = vst [vmem:[%s2947] ss:$4 sm:$0xff] %v2933
        %v2949 = vld.sshfl [vmem:[#allocation1] sm:$0xff pattern:$0x73625140]
        %v2951 = vld.sshfl [vmem:[#allocation1 + $0x8] sm:$0xff pattern:$0x73625140]
        %v2953 = vld.sshfl [vmem:[#allocation1 + $0x10] sm:$0xff pattern:$0x73625140]
        %v2955 = vld.sshfl [vmem:[#allocation1 + $0x18] sm:$0xff pattern:$0x73625140]
        %v2957 = vld.sshfl [vmem:[#allocation1 + $0x20] sm:$0xff pattern:$0x73625140]
        %2959 = vrot.lane.b32.xlu0 %v2949, 6
        %v2960 = vpop.permute.xlu0 %2959
        %2961 = vrot.lane.b32.xlu0 %v2951, 6
        %v2962 = vpop.permute.xlu0 %2961
        %2963 = vrot.lane.b32.xlu0 %v2953, 6
        %v2964 = vpop.permute.xlu0 %2963
        %2965 = vrot.lane.b32.xlu0 %v2955, 6
        %v2966 = vpop.permute.xlu0 %2965
        %2967 = vrot.lane.b32.xlu0 %v2957, 6
        %v2968 = vpop.permute.xlu0 %2967
        %vm2969 = vcmask 48128
        %v2970 = vsel %vm2969, %v2960, %v2962
        %v2971 = vsel %vm2969, %v2962, %v2964
        %v2972 = vsel %vm2969, %v2964, %v2966
        %v2973 = vsel %vm2969, %v2966, %v2968
        %v2975 = vsel %vm371, %v2942, 0
        %v2978 = vsel %vm371, %v2943, 0
        %v2981 = vsel %vm378, %v2970, 0
        %v2984 = vsel %vm378, %v2971, 0
        %v2987 = vsel %vm378, %v2972, 0
        %v2990 = vsel %vm378, %v2973, 0
        %2992 = vmatpush.bf16.msra.mxu0 0
        %2993 = vmatpush.bf16.msra.mxu0 0
        %2994 = vmatpush.bf16.msra.mxu0 0
        %2995 = vmatpush.bf16.msra.mxu0 0
        %2996 = vmatpush.bf16.msra.mxu0 0
        %2997 = vmatpush.bf16.msra.mxu0 0
        %2998 = vmatpush.bf16.msra.mxu0 0
        %2999 = vmatpush.bf16.msra.mxu0 %v2981
        %3000 = vmatmul.bf16.gmra.mxu0 %v2975
        %v3001 = vpop.f32.mrf.mxu0
        %v3002 = vadd.f32 0.0, %v3001
        %v3003 = vpop.f32.mrf.mxu0
        %v3004 = vadd.f32 0.0, %v3003
        %3005 = vmatmul.bf16.gmra.mxu0 %v2978
        %v3006 = vpop.f32.mrf.mxu0
        %v3007 = vadd.f32 0.0, %v3006
        %v3008 = vpop.f32.mrf.mxu0
        %v3009 = vadd.f32 0.0, %v3008
        %3010 = vdwg.mxu0
        %3011 = vmatpush.bf16.msra.mxu0 0
        %3012 = vmatpush.bf16.msra.mxu0 0
        %3013 = vmatpush.bf16.msra.mxu0 0
        %3014 = vmatpush.bf16.msra.mxu0 0
        %3015 = vmatpush.bf16.msra.mxu0 0
        %3016 = vmatpush.bf16.msra.mxu0 0
        %3017 = vmatpush.bf16.msra.mxu0 0
        %3018 = vmatpush.bf16.msra.mxu0 %v2984
        %3019 = vmatmul.bf16.gmra.mxu0 %v2975
        %v3020 = vpop.f32.mrf.mxu0
        %v3021 = vadd.f32 0.0, %v3020
        %v3022 = vpop.f32.mrf.mxu0
        %v3023 = vadd.f32 0.0, %v3022
        %3024 = vmatmul.bf16.gmra.mxu0 %v2978
        %v3025 = vpop.f32.mrf.mxu0
        %v3026 = vadd.f32 0.0, %v3025
        %v3027 = vpop.f32.mrf.mxu0
        %v3028 = vadd.f32 0.0, %v3027
        %3029 = vdwg.mxu0
        %3030 = vmatpush.bf16.msra.mxu0 0
        %3031 = vmatpush.bf16.msra.mxu0 0
        %3032 = vmatpush.bf16.msra.mxu0 0
        %3033 = vmatpush.bf16.msra.mxu0 0
        %3034 = vmatpush.bf16.msra.mxu0 0
        %3035 = vmatpush.bf16.msra.mxu0 0
        %3036 = vmatpush.bf16.msra.mxu0 0
        %3037 = vmatpush.bf16.msra.mxu0 %v2987
        %3038 = vmatmul.bf16.gmra.mxu0 %v2975
        %v3039 = vpop.f32.mrf.mxu0
        %v3040 = vadd.f32 0.0, %v3039
        %v3041 = vpop.f32.mrf.mxu0
        %v3042 = vadd.f32 0.0, %v3041
        %3043 = vmatmul.bf16.gmra.mxu0 %v2978
        %v3044 = vpop.f32.mrf.mxu0
        %v3045 = vadd.f32 0.0, %v3044
        %v3046 = vpop.f32.mrf.mxu0
        %v3047 = vadd.f32 0.0, %v3046
        %3048 = vdwg.mxu0
        %3049 = vmatpush.bf16.msra.mxu0 0
        %3050 = vmatpush.bf16.msra.mxu0 0
        %3051 = vmatpush.bf16.msra.mxu0 0
        %3052 = vmatpush.bf16.msra.mxu0 0
        %3053 = vmatpush.bf16.msra.mxu0 0
        %3054 = vmatpush.bf16.msra.mxu0 0
        %3055 = vmatpush.bf16.msra.mxu0 0
        %3056 = vmatpush.bf16.msra.mxu0 %v2990
        %3057 = vmatmul.bf16.gmra.mxu0 %v2975
        %v3058 = vpop.f32.mrf.mxu0
        %v3059 = vadd.f32 0.0, %v3058
        %v3060 = vpop.f32.mrf.mxu0
        %v3061 = vadd.f32 0.0, %v3060
        %3062 = vmatmul.bf16.gmra.mxu0 %v2978
        %v3063 = vpop.f32.mrf.mxu0
        %v3064 = vadd.f32 0.0, %v3063
        %v3065 = vpop.f32.mrf.mxu0
        %v3066 = vadd.f32 0.0, %v3065
        %3067 = vdwg.mxu0
        %v3068 = vadd.f32 %v2911, %v3002
        %v3069 = vadd.f32 %v2912, %v3021
        %v3070 = vadd.f32 %v2913, %v3040
        %v3071 = vadd.f32 %v2914, %v3059
        %v3072 = vadd.f32 %v2915, %v3004
        %v3073 = vadd.f32 %v2916, %v3023
        %v3074 = vadd.f32 %v2917, %v3042
        %v3075 = vadd.f32 %v2918, %v3061
        %v3076 = vadd.f32 %v2919, %v3007
        %v3077 = vadd.f32 %v2920, %v3026
        %v3078 = vadd.f32 %v2921, %v3045
        %v3079 = vadd.f32 %v2922, %v3064
        %v3080 = vadd.f32 %v2923, %v3009
        %v3081 = vadd.f32 %v2924, %v3028
        %v3082 = vadd.f32 %v2925, %v3047
        %v3083 = vadd.f32 %v2926, %v3066
        %s3084 = scalar_lea.vmem %s1, 288
        %v3085 = vld [vmem:[%s3084] sm:$0xf]
        %v3086 = vld [vmem:[%s3084 + $0x4] sm:$0xf]
        %v3087 = vld [vmem:[%s3084 + $0x8] sm:$0xf]
        %v3088 = vld [vmem:[%s3084 + $0xc] sm:$0xf]
        %v3089 = vld [vmem:[%s302 + $0x2] sm:$0xff]
        %v3090 = vld [vmem:[%s302 + $0xa] sm:$0x3]
        %v3095 = vunpack.c.l.b16 %v3085
        %v3096 = vunpack.c.l.b16 %v3086
        %v3097 = vunpack.c.l.b16 %v3087
        %v3098 = vunpack.c.l.b16 %v3088
        %v3099 = vpack.c.b16 %v3096, %v3095
        %v3100 = vpack.c.b16 %v3098, %v3097
        %3102 = vst [vmem:[#allocation1] ss:$4 sm:$0xff] %v3089
        %s3104 = scalar_lea.vmem [#allocation1], 32
        %3105 = vst [vmem:[%s3104] ss:$4 sm:$0xff] %v3090
        %v3106 = vld.sshfl [vmem:[#allocation1] sm:$0xff pattern:$0x73625140]
        %v3108 = vld.sshfl [vmem:[#allocation1 + $0x8] sm:$0xff pattern:$0x73625140]
        %v3110 = vld.sshfl [vmem:[#allocation1 + $0x10] sm:$0xff pattern:$0x73625140]
        %v3112 = vld.sshfl [vmem:[#allocation1 + $0x18] sm:$0xff pattern:$0x73625140]
        %v3114 = vld.sshfl [vmem:[#allocation1 + $0x20] sm:$0xff pattern:$0x73625140]
        %3116 = vrot.lane.b32.xlu0 %v3106, 56
        %v3117 = vpop.permute.xlu0 %3116
        %3118 = vrot.lane.b32.xlu0 %v3108, 56
        %v3119 = vpop.permute.xlu0 %3118
        %3120 = vrot.lane.b32.xlu0 %v3110, 56
        %v3121 = vpop.permute.xlu0 %3120
        %3122 = vrot.lane.b32.xlu0 %v3112, 56
        %v3123 = vpop.permute.xlu0 %3122
        %3124 = vrot.lane.b32.xlu0 %v3114, 56
        %v3125 = vpop.permute.xlu0 %3124
        %vm3126 = vcmask 457728
        %v3127 = vsel %vm3126, %v3117, %v3119
        %v3128 = vsel %vm3126, %v3119, %v3121
        %v3129 = vsel %vm3126, %v3121, %v3123
        %v3130 = vsel %vm3126, %v3123, %v3125
        %v3132 = vsel %vm371, %v3099, 0
        %v3135 = vsel %vm371, %v3100, 0
        %v3138 = vsel %vm378, %v3127, 0
        %v3141 = vsel %vm378, %v3128, 0
        %v3144 = vsel %vm378, %v3129, 0
        %v3147 = vsel %vm378, %v3130, 0
        %3149 = vmatpush.bf16.msra.mxu0 0
        %3150 = vmatpush.bf16.msra.mxu0 0
        %3151 = vmatpush.bf16.msra.mxu0 0
        %3152 = vmatpush.bf16.msra.mxu0 0
        %3153 = vmatpush.bf16.msra.mxu0 0
        %3154 = vmatpush.bf16.msra.mxu0 0
        %3155 = vmatpush.bf16.msra.mxu0 0
        %3156 = vmatpush.bf16.msra.mxu0 %v3138
        %3157 = vmatmul.bf16.gmra.mxu0 %v3132
        %v3158 = vpop.f32.mrf.mxu0
        %v3159 = vadd.f32 0.0, %v3158
        %v3160 = vpop.f32.mrf.mxu0
        %v3161 = vadd.f32 0.0, %v3160
        %3162 = vmatmul.bf16.gmra.mxu0 %v3135
        %v3163 = vpop.f32.mrf.mxu0
        %v3164 = vadd.f32 0.0, %v3163
        %v3165 = vpop.f32.mrf.mxu0
        %v3166 = vadd.f32 0.0, %v3165
        %3167 = vdwg.mxu0
        %3168 = vmatpush.bf16.msra.mxu0 0
        %3169 = vmatpush.bf16.msra.mxu0 0
        %3170 = vmatpush.bf16.msra.mxu0 0
        %3171 = vmatpush.bf16.msra.mxu0 0
        %3172 = vmatpush.bf16.msra.mxu0 0
        %3173 = vmatpush.bf16.msra.mxu0 0
        %3174 = vmatpush.bf16.msra.mxu0 0
        %3175 = vmatpush.bf16.msra.mxu0 %v3141
        %3176 = vmatmul.bf16.gmra.mxu0 %v3132
        %v3177 = vpop.f32.mrf.mxu0
        %v3178 = vadd.f32 0.0, %v3177
        %v3179 = vpop.f32.mrf.mxu0
        %v3180 = vadd.f32 0.0, %v3179
        %3181 = vmatmul.bf16.gmra.mxu0 %v3135
        %v3182 = vpop.f32.mrf.mxu0
        %v3183 = vadd.f32 0.0, %v3182
        %v3184 = vpop.f32.mrf.mxu0
        %v3185 = vadd.f32 0.0, %v3184
        %3186 = vdwg.mxu0
        %3187 = vmatpush.bf16.msra.mxu0 0
        %3188 = vmatpush.bf16.msra.mxu0 0
        %3189 = vmatpush.bf16.msra.mxu0 0
        %3190 = vmatpush.bf16.msra.mxu0 0
        %3191 = vmatpush.bf16.msra.mxu0 0
        %3192 = vmatpush.bf16.msra.mxu0 0
        %3193 = vmatpush.bf16.msra.mxu0 0
        %3194 = vmatpush.bf16.msra.mxu0 %v3144
        %3195 = vmatmul.bf16.gmra.mxu0 %v3132
        %v3196 = vpop.f32.mrf.mxu0
        %v3197 = vadd.f32 0.0, %v3196
        %v3198 = vpop.f32.mrf.mxu0
        %v3199 = vadd.f32 0.0, %v3198
        %3200 = vmatmul.bf16.gmra.mxu0 %v3135
        %v3201 = vpop.f32.mrf.mxu0
        %v3202 = vadd.f32 0.0, %v3201
        %v3203 = vpop.f32.mrf.mxu0
        %v3204 = vadd.f32 0.0, %v3203
        %3205 = vdwg.mxu0
        %3206 = vmatpush.bf16.msra.mxu0 0
        %3207 = vmatpush.bf16.msra.mxu0 0
        %3208 = vmatpush.bf16.msra.mxu0 0
        %3209 = vmatpush.bf16.msra.mxu0 0
        %3210 = vmatpush.bf16.msra.mxu0 0
        %3211 = vmatpush.bf16.msra.mxu0 0
        %3212 = vmatpush.bf16.msra.mxu0 0
        %3213 = vmatpush.bf16.msra.mxu0 %v3147
        %3214 = vmatmul.bf16.gmra.mxu0 %v3132
        %v3215 = vpop.f32.mrf.mxu0
        %v3216 = vadd.f32 0.0, %v3215
        %v3217 = vpop.f32.mrf.mxu0
        %v3218 = vadd.f32 0.0, %v3217
        %3219 = vmatmul.bf16.gmra.mxu0 %v3135
        %v3220 = vpop.f32.mrf.mxu0
        %v3221 = vadd.f32 0.0, %v3220
        %v3222 = vpop.f32.mrf.mxu0
        %v3223 = vadd.f32 0.0, %v3222
        %3224 = vdwg.mxu0
        %v3225 = vadd.f32 %v3068, %v3159
        %v3226 = vadd.f32 %v3069, %v3178
        %v3227 = vadd.f32 %v3070, %v3197
        %v3228 = vadd.f32 %v3071, %v3216
        %v3229 = vadd.f32 %v3072, %v3161
        %v3230 = vadd.f32 %v3073, %v3180
        %v3231 = vadd.f32 %v3074, %v3199
        %v3232 = vadd.f32 %v3075, %v3218
        %v3233 = vadd.f32 %v3076, %v3164
        %v3234 = vadd.f32 %v3077, %v3183
        %v3235 = vadd.f32 %v3078, %v3202
        %v3236 = vadd.f32 %v3079, %v3221
        %v3237 = vadd.f32 %v3080, %v3166
        %v3238 = vadd.f32 %v3081, %v3185
        %v3239 = vadd.f32 %v3082, %v3204
        %v3240 = vadd.f32 %v3083, %v3223
        %s3241 = scalar_lea.vmem %s1, 304
        %v3242 = vld [vmem:[%s3241] sm:$0xf]
        %v3243 = vld [vmem:[%s3241 + $0x4] sm:$0xf]
        %v3244 = vld [vmem:[%s3241 + $0x8] sm:$0xf]
        %v3245 = vld [vmem:[%s3241 + $0xc] sm:$0xf]
        %v3246 = vld [vmem:[%s302 + $0x2] sm:$0xff]
        %v3247 = vld [vmem:[%s302 + $0xa] sm:$0x3]
        %v3252 = vunpack.c.l.b16 %v3242
        %v3253 = vunpack.c.l.b16 %v3243
        %v3254 = vunpack.c.l.b16 %v3244
        %v3255 = vunpack.c.l.b16 %v3245
        %v3256 = vpack.c.b16 %v3253, %v3252
        %v3257 = vpack.c.b16 %v3255, %v3254
        %3259 = vst [vmem:[#allocation1] ss:$4 sm:$0xff] %v3246
        %s3261 = scalar_lea.vmem [#allocation1], 32
        %3262 = vst [vmem:[%s3261] ss:$4 sm:$0xff] %v3247
        %v3263 = vld.sshfl [vmem:[#allocation1] sm:$0xff pattern:$0x73625140]
        %v3265 = vld.sshfl [vmem:[#allocation1 + $0x8] sm:$0xff pattern:$0x73625140]
        %v3267 = vld.sshfl [vmem:[#allocation1 + $0x10] sm:$0xff pattern:$0x73625140]
        %v3269 = vld.sshfl [vmem:[#allocation1 + $0x18] sm:$0xff pattern:$0x73625140]
        %v3271 = vld.sshfl [vmem:[#allocation1 + $0x20] sm:$0xff pattern:$0x73625140]
        %3273 = vrot.lane.b32.xlu0 %v3263, 55
        %v3274 = vpop.permute.xlu0 %3273
        %3275 = vrot.lane.b32.xlu0 %v3265, 55
        %v3276 = vpop.permute.xlu0 %3275
        %3277 = vrot.lane.b32.xlu0 %v3267, 55
        %v3278 = vpop.permute.xlu0 %3277
        %3279 = vrot.lane.b32.xlu0 %v3269, 55
        %v3280 = vpop.permute.xlu0 %3279
        %3281 = vrot.lane.b32.xlu0 %v3271, 55
        %v3282 = vpop.permute.xlu0 %3281
        %vm3283 = vcmask 449536
        %v3284 = vsel %vm3283, %v3274, %v3276
        %v3285 = vsel %vm3283, %v3276, %v3278
        %v3286 = vsel %vm3283, %v3278, %v3280
        %v3287 = vsel %vm3283, %v3280, %v3282
        %v3289 = vsel %vm371, %v3256, 0
        %v3292 = vsel %vm371, %v3257, 0
        %v3295 = vsel %vm378, %v3284, 0
        %v3298 = vsel %vm378, %v3285, 0
        %v3301 = vsel %vm378, %v3286, 0
        %v3304 = vsel %vm378, %v3287, 0
        %3306 = vmatpush.bf16.msra.mxu0 0
        %3307 = vmatpush.bf16.msra.mxu0 0
        %3308 = vmatpush.bf16.msra.mxu0 0
        %3309 = vmatpush.bf16.msra.mxu0 0
        %3310 = vmatpush.bf16.msra.mxu0 0
        %3311 = vmatpush.bf16.msra.mxu0 0
        %3312 = vmatpush.bf16.msra.mxu0 0
        %3313 = vmatpush.bf16.msra.mxu0 %v3295
        %3314 = vmatmul.bf16.gmra.mxu0 %v3289
        %v3315 = vpop.f32.mrf.mxu0
        %v3316 = vadd.f32 0.0, %v3315
        %v3317 = vpop.f32.mrf.mxu0
        %v3318 = vadd.f32 0.0, %v3317
        %3319 = vmatmul.bf16.gmra.mxu0 %v3292
        %v3320 = vpop.f32.mrf.mxu0
        %v3321 = vadd.f32 0.0, %v3320
        %v3322 = vpop.f32.mrf.mxu0
        %v3323 = vadd.f32 0.0, %v3322
        %3324 = vdwg.mxu0
        %3325 = vmatpush.bf16.msra.mxu0 0
        %3326 = vmatpush.bf16.msra.mxu0 0
        %3327 = vmatpush.bf16.msra.mxu0 0
        %3328 = vmatpush.bf16.msra.mxu0 0
        %3329 = vmatpush.bf16.msra.mxu0 0
        %3330 = vmatpush.bf16.msra.mxu0 0
        %3331 = vmatpush.bf16.msra.mxu0 0
        %3332 = vmatpush.bf16.msra.mxu0 %v3298
        %3333 = vmatmul.bf16.gmra.mxu0 %v3289
        %v3334 = vpop.f32.mrf.mxu0
        %v3335 = vadd.f32 0.0, %v3334
        %v3336 = vpop.f32.mrf.mxu0
        %v3337 = vadd.f32 0.0, %v3336
        %3338 = vmatmul.bf16.gmra.mxu0 %v3292
        %v3339 = vpop.f32.mrf.mxu0
        %v3340 = vadd.f32 0.0, %v3339
        %v3341 = vpop.f32.mrf.mxu0
        %v3342 = vadd.f32 0.0, %v3341
        %3343 = vdwg.mxu0
        %3344 = vmatpush.bf16.msra.mxu0 0
        %3345 = vmatpush.bf16.msra.mxu0 0
        %3346 = vmatpush.bf16.msra.mxu0 0
        %3347 = vmatpush.bf16.msra.mxu0 0
        %3348 = vmatpush.bf16.msra.mxu0 0
        %3349 = vmatpush.bf16.msra.mxu0 0
        %3350 = vmatpush.bf16.msra.mxu0 0
        %3351 = vmatpush.bf16.msra.mxu0 %v3301
        %3352 = vmatmul.bf16.gmra.mxu0 %v3289
        %v3353 = vpop.f32.mrf.mxu0
        %v3354 = vadd.f32 0.0, %v3353
        %v3355 = vpop.f32.mrf.mxu0
        %v3356 = vadd.f32 0.0, %v3355
        %3357 = vmatmul.bf16.gmra.mxu0 %v3292
        %v3358 = vpop.f32.mrf.mxu0
        %v3359 = vadd.f32 0.0, %v3358
        %v3360 = vpop.f32.mrf.mxu0
        %v3361 = vadd.f32 0.0, %v3360
        %3362 = vdwg.mxu0
        %3363 = vmatpush.bf16.msra.mxu0 0
        %3364 = vmatpush.bf16.msra.mxu0 0
        %3365 = vmatpush.bf16.msra.mxu0 0
        %3366 = vmatpush.bf16.msra.mxu0 0
        %3367 = vmatpush.bf16.msra.mxu0 0
        %3368 = vmatpush.bf16.msra.mxu0 0
        %3369 = vmatpush.bf16.msra.mxu0 0
        %3370 = vmatpush.bf16.msra.mxu0 %v3304
        %3371 = vmatmul.bf16.gmra.mxu0 %v3289
        %v3372 = vpop.f32.mrf.mxu0
        %v3373 = vadd.f32 0.0, %v3372
        %v3374 = vpop.f32.mrf.mxu0
        %v3375 = vadd.f32 0.0, %v3374
        %3376 = vmatmul.bf16.gmra.mxu0 %v3292
        %v3377 = vpop.f32.mrf.mxu0
        %v3378 = vadd.f32 0.0, %v3377
        %v3379 = vpop.f32.mrf.mxu0
        %v3380 = vadd.f32 0.0, %v3379
        %3381 = vdwg.mxu0
        %v3382 = vadd.f32 %v3225, %v3316
        %v3383 = vadd.f32 %v3226, %v3335
        %v3384 = vadd.f32 %v3227, %v3354
        %v3385 = vadd.f32 %v3228, %v3373
        %v3386 = vadd.f32 %v3229, %v3318
        %v3387 = vadd.f32 %v3230, %v3337
        %v3388 = vadd.f32 %v3231, %v3356
        %v3389 = vadd.f32 %v3232, %v3375
        %v3390 = vadd.f32 %v3233, %v3321
        %v3391 = vadd.f32 %v3234, %v3340
        %v3392 = vadd.f32 %v3235, %v3359
        %v3393 = vadd.f32 %v3236, %v3378
        %v3394 = vadd.f32 %v3237, %v3323
        %v3395 = vadd.f32 %v3238, %v3342
        %v3396 = vadd.f32 %v3239, %v3361
        %v3397 = vadd.f32 %v3240, %v3380
        %s3398 = scalar_lea.vmem %s1, 320
        %v3399 = vld [vmem:[%s3398] sm:$0xf]
        %v3400 = vld [vmem:[%s3398 + $0x4] sm:$0xf]
        %v3401 = vld [vmem:[%s3398 + $0x8] sm:$0xf]
        %v3402 = vld [vmem:[%s3398 + $0xc] sm:$0xf]
        %v3403 = vld [vmem:[%s302 + $0x2] sm:$0xff]
        %v3404 = vld [vmem:[%s302 + $0xa] sm:$0x3]
        %v3409 = vunpack.c.l.b16 %v3399
        %v3410 = vunpack.c.l.b16 %v3400
        %v3411 = vunpack.c.l.b16 %v3401
        %v3412 = vunpack.c.l.b16 %v3402
        %v3413 = vpack.c.b16 %v3410, %v3409
        %v3414 = vpack.c.b16 %v3412, %v3411
        %3416 = vst [vmem:[#allocation1] ss:$4 sm:$0xff] %v3403
        %s3418 = scalar_lea.vmem [#allocation1], 32
        %3419 = vst [vmem:[%s3418] ss:$4 sm:$0xff] %v3404
        %v3420 = vld.sshfl [vmem:[#allocation1] sm:$0xff pattern:$0x73625140]
        %v3422 = vld.sshfl [vmem:[#allocation1 + $0x8] sm:$0xff pattern:$0x73625140]
        %v3424 = vld.sshfl [vmem:[#allocation1 + $0x10] sm:$0xff pattern:$0x73625140]
        %v3426 = vld.sshfl [vmem:[#allocation1 + $0x18] sm:$0xff pattern:$0x73625140]
        %v3428 = vld.sshfl [vmem:[#allocation1 + $0x20] sm:$0xff pattern:$0x73625140]
        %3430 = vrot.lane.b32.xlu0 %v3420, 54
        %v3431 = vpop.permute.xlu0 %3430
        %3432 = vrot.lane.b32.xlu0 %v3422, 54
        %v3433 = vpop.permute.xlu0 %3432
        %3434 = vrot.lane.b32.xlu0 %v3424, 54
        %v3435 = vpop.permute.xlu0 %3434
        %3436 = vrot.lane.b32.xlu0 %v3426, 54
        %v3437 = vpop.permute.xlu0 %3436
        %3438 = vrot.lane.b32.xlu0 %v3428, 54
        %v3439 = vpop.permute.xlu0 %3438
        %vm3440 = vcmask 441344
        %v3441 = vsel %vm3440, %v3431, %v3433
        %v3442 = vsel %vm3440, %v3433, %v3435
        %v3443 = vsel %vm3440, %v3435, %v3437
        %v3444 = vsel %vm3440, %v3437, %v3439
        %v3446 = vsel %vm371, %v3413, 0
        %v3449 = vsel %vm371, %v3414, 0
        %v3452 = vsel %vm378, %v3441, 0
        %v3455 = vsel %vm378, %v3442, 0
        %v3458 = vsel %vm378, %v3443, 0
        %v3461 = vsel %vm378, %v3444, 0
        %3463 = vmatpush.bf16.msra.mxu0 0
        %3464 = vmatpush.bf16.msra.mxu0 0
        %3465 = vmatpush.bf16.msra.mxu0 0
        %3466 = vmatpush.bf16.msra.mxu0 0
        %3467 = vmatpush.bf16.msra.mxu0 0
        %3468 = vmatpush.bf16.msra.mxu0 0
        %3469 = vmatpush.bf16.msra.mxu0 0
        %3470 = vmatpush.bf16.msra.mxu0 %v3452
        %3471 = vmatmul.bf16.gmra.mxu0 %v3446
        %v3472 = vpop.f32.mrf.mxu0
        %v3473 = vadd.f32 0.0, %v3472
        %v3474 = vpop.f32.mrf.mxu0
        %v3475 = vadd.f32 0.0, %v3474
        %3476 = vmatmul.bf16.gmra.mxu0 %v3449
        %v3477 = vpop.f32.mrf.mxu0
        %v3478 = vadd.f32 0.0, %v3477
        %v3479 = vpop.f32.mrf.mxu0
        %v3480 = vadd.f32 0.0, %v3479
        %3481 = vdwg.mxu0
        %3482 = vmatpush.bf16.msra.mxu0 0
        %3483 = vmatpush.bf16.msra.mxu0 0
        %3484 = vmatpush.bf16.msra.mxu0 0
        %3485 = vmatpush.bf16.msra.mxu0 0
        %3486 = vmatpush.bf16.msra.mxu0 0
        %3487 = vmatpush.bf16.msra.mxu0 0
        %3488 = vmatpush.bf16.msra.mxu0 0
        %3489 = vmatpush.bf16.msra.mxu0 %v3455
        %3490 = vmatmul.bf16.gmra.mxu0 %v3446
        %v3491 = vpop.f32.mrf.mxu0
        %v3492 = vadd.f32 0.0, %v3491
        %v3493 = vpop.f32.mrf.mxu0
        %v3494 = vadd.f32 0.0, %v3493
        %3495 = vmatmul.bf16.gmra.mxu0 %v3449
        %v3496 = vpop.f32.mrf.mxu0
        %v3497 = vadd.f32 0.0, %v3496
        %v3498 = vpop.f32.mrf.mxu0
        %v3499 = vadd.f32 0.0, %v3498
        %3500 = vdwg.mxu0
        %3501 = vmatpush.bf16.msra.mxu0 0
        %3502 = vmatpush.bf16.msra.mxu0 0
        %3503 = vmatpush.bf16.msra.mxu0 0
        %3504 = vmatpush.bf16.msra.mxu0 0
        %3505 = vmatpush.bf16.msra.mxu0 0
        %3506 = vmatpush.bf16.msra.mxu0 0
        %3507 = vmatpush.bf16.msra.mxu0 0
        %3508 = vmatpush.bf16.msra.mxu0 %v3458
        %3509 = vmatmul.bf16.gmra.mxu0 %v3446
        %v3510 = vpop.f32.mrf.mxu0
        %v3511 = vadd.f32 0.0, %v3510
        %v3512 = vpop.f32.mrf.mxu0
        %v3513 = vadd.f32 0.0, %v3512
        %3514 = vmatmul.bf16.gmra.mxu0 %v3449
        %v3515 = vpop.f32.mrf.mxu0
        %v3516 = vadd.f32 0.0, %v3515
        %v3517 = vpop.f32.mrf.mxu0
        %v3518 = vadd.f32 0.0, %v3517
        %3519 = vdwg.mxu0
        %3520 = vmatpush.bf16.msra.mxu0 0
        %3521 = vmatpush.bf16.msra.mxu0 0
        %3522 = vmatpush.bf16.msra.mxu0 0
        %3523 = vmatpush.bf16.msra.mxu0 0
        %3524 = vmatpush.bf16.msra.mxu0 0
        %3525 = vmatpush.bf16.msra.mxu0 0
        %3526 = vmatpush.bf16.msra.mxu0 0
        %3527 = vmatpush.bf16.msra.mxu0 %v3461
        %3528 = vmatmul.bf16.gmra.mxu0 %v3446
        %v3529 = vpop.f32.mrf.mxu0
        %v3530 = vadd.f32 0.0, %v3529
        %v3531 = vpop.f32.mrf.mxu0
        %v3532 = vadd.f32 0.0, %v3531
        %3533 = vmatmul.bf16.gmra.mxu0 %v3449
        %v3534 = vpop.f32.mrf.mxu0
        %v3535 = vadd.f32 0.0, %v3534
        %v3536 = vpop.f32.mrf.mxu0
        %v3537 = vadd.f32 0.0, %v3536
        %3538 = vdwg.mxu0
        %v3539 = vadd.f32 %v3382, %v3473
        %v3540 = vadd.f32 %v3383, %v3492
        %v3541 = vadd.f32 %v3384, %v3511
        %v3542 = vadd.f32 %v3385, %v3530
        %v3543 = vadd.f32 %v3386, %v3475
        %v3544 = vadd.f32 %v3387, %v3494
        %v3545 = vadd.f32 %v3388, %v3513
        %v3546 = vadd.f32 %v3389, %v3532
        %v3547 = vadd.f32 %v3390, %v3478
        %v3548 = vadd.f32 %v3391, %v3497
        %v3549 = vadd.f32 %v3392, %v3516
        %v3550 = vadd.f32 %v3393, %v3535
        %v3551 = vadd.f32 %v3394, %v3480
        %v3552 = vadd.f32 %v3395, %v3499
        %v3553 = vadd.f32 %v3396, %v3518
        %v3554 = vadd.f32 %v3397, %v3537
        %s3555 = scalar_lea.vmem %s1, 336
        %v3556 = vld [vmem:[%s3555] sm:$0xf]
        %v3557 = vld [vmem:[%s3555 + $0x4] sm:$0xf]
        %v3558 = vld [vmem:[%s3555 + $0x8] sm:$0xf]
        %v3559 = vld [vmem:[%s3555 + $0xc] sm:$0xf]
        %v3560 = vld [vmem:[%s302 + $0x2] sm:$0xff]
        %v3561 = vld [vmem:[%s302 + $0xa] sm:$0x3]
        %v3566 = vunpack.c.l.b16 %v3556
        %v3567 = vunpack.c.l.b16 %v3557
        %v3568 = vunpack.c.l.b16 %v3558
        %v3569 = vunpack.c.l.b16 %v3559
        %v3570 = vpack.c.b16 %v3567, %v3566
        %v3571 = vpack.c.b16 %v3569, %v3568
        %3573 = vst [vmem:[#allocation1] ss:$4 sm:$0xff] %v3560
        %s3575 = scalar_lea.vmem [#allocation1], 32
        %3576 = vst [vmem:[%s3575] ss:$4 sm:$0xff] %v3561
        %v3577 = vld.sshfl [vmem:[#allocation1] sm:$0xff pattern:$0x73625140]
        %v3579 = vld.sshfl [vmem:[#allocation1 + $0x8] sm:$0xff pattern:$0x73625140]
        %v3581 = vld.sshfl [vmem:[#allocation1 + $0x10] sm:$0xff pattern:$0x73625140]
        %v3583 = vld.sshfl [vmem:[#allocation1 + $0x18] sm:$0xff pattern:$0x73625140]
        %v3585 = vld.sshfl [vmem:[#allocation1 + $0x20] sm:$0xff pattern:$0x73625140]
        %3587 = vrot.lane.b32.xlu0 %v3577, 46
        %v3588 = vpop.permute.xlu0 %3587
        %3589 = vrot.lane.b32.xlu0 %v3579, 46
        %v3590 = vpop.permute.xlu0 %3589
        %3591 = vrot.lane.b32.xlu0 %v3581, 46
        %v3592 = vpop.permute.xlu0 %3591
        %3593 = vrot.lane.b32.xlu0 %v3583, 46
        %v3594 = vpop.permute.xlu0 %3593
        %3595 = vrot.lane.b32.xlu0 %v3585, 46
        %v3596 = vpop.permute.xlu0 %3595
        %vm3597 = vcmask 375808
        %v3598 = vsel %vm3597, %v3588, %v3590
        %v3599 = vsel %vm3597, %v3590, %v3592
        %v3600 = vsel %vm3597, %v3592, %v3594
        %v3601 = vsel %vm3597, %v3594, %v3596
        %v3603 = vsel %vm371, %v3570, 0
        %v3606 = vsel %vm371, %v3571, 0
        %v3609 = vsel %vm378, %v3598, 0
        %v3612 = vsel %vm378, %v3599, 0
        %v3615 = vsel %vm378, %v3600, 0
        %v3618 = vsel %vm378, %v3601, 0
        %3620 = vmatpush.bf16.msra.mxu0 0
        %3621 = vmatpush.bf16.msra.mxu0 0
        %3622 = vmatpush.bf16.msra.mxu0 0
        %3623 = vmatpush.bf16.msra.mxu0 0
        %3624 = vmatpush.bf16.msra.mxu0 0
        %3625 = vmatpush.bf16.msra.mxu0 0
        %3626 = vmatpush.bf16.msra.mxu0 0
        %3627 = vmatpush.bf16.msra.mxu0 %v3609
        %3628 = vmatmul.bf16.gmra.mxu0 %v3603
        %v3629 = vpop.f32.mrf.mxu0
        %v3630 = vadd.f32 0.0, %v3629
        %v3631 = vpop.f32.mrf.mxu0
        %v3632 = vadd.f32 0.0, %v3631
        %3633 = vmatmul.bf16.gmra.mxu0 %v3606
        %v3634 = vpop.f32.mrf.mxu0
        %v3635 = vadd.f32 0.0, %v3634
        %v3636 = vpop.f32.mrf.mxu0
        %v3637 = vadd.f32 0.0, %v3636
        %3638 = vdwg.mxu0
        %3639 = vmatpush.bf16.msra.mxu0 0
        %3640 = vmatpush.bf16.msra.mxu0 0
        %3641 = vmatpush.bf16.msra.mxu0 0
        %3642 = vmatpush.bf16.msra.mxu0 0
        %3643 = vmatpush.bf16.msra.mxu0 0
        %3644 = vmatpush.bf16.msra.mxu0 0
        %3645 = vmatpush.bf16.msra.mxu0 0
        %3646 = vmatpush.bf16.msra.mxu0 %v3612
        %3647 = vmatmul.bf16.gmra.mxu0 %v3603
        %v3648 = vpop.f32.mrf.mxu0
        %v3649 = vadd.f32 0.0, %v3648
        %v3650 = vpop.f32.mrf.mxu0
        %v3651 = vadd.f32 0.0, %v3650
        %3652 = vmatmul.bf16.gmra.mxu0 %v3606
        %v3653 = vpop.f32.mrf.mxu0
        %v3654 = vadd.f32 0.0, %v3653
        %v3655 = vpop.f32.mrf.mxu0
        %v3656 = vadd.f32 0.0, %v3655
        %3657 = vdwg.mxu0
        %3658 = vmatpush.bf16.msra.mxu0 0
        %3659 = vmatpush.bf16.msra.mxu0 0
        %3660 = vmatpush.bf16.msra.mxu0 0
        %3661 = vmatpush.bf16.msra.mxu0 0
        %3662 = vmatpush.bf16.msra.mxu0 0
        %3663 = vmatpush.bf16.msra.mxu0 0
        %3664 = vmatpush.bf16.msra.mxu0 0
        %3665 = vmatpush.bf16.msra.mxu0 %v3615
        %3666 = vmatmul.bf16.gmra.mxu0 %v3603
        %v3667 = vpop.f32.mrf.mxu0
        %v3668 = vadd.f32 0.0, %v3667
        %v3669 = vpop.f32.mrf.mxu0
        %v3670 = vadd.f32 0.0, %v3669
        %3671 = vmatmul.bf16.gmra.mxu0 %v3606
        %v3672 = vpop.f32.mrf.mxu0
        %v3673 = vadd.f32 0.0, %v3672
        %v3674 = vpop.f32.mrf.mxu0
        %v3675 = vadd.f32 0.0, %v3674
        %3676 = vdwg.mxu0
        %3677 = vmatpush.bf16.msra.mxu0 0
        %3678 = vmatpush.bf16.msra.mxu0 0
        %3679 = vmatpush.bf16.msra.mxu0 0
        %3680 = vmatpush.bf16.msra.mxu0 0
        %3681 = vmatpush.bf16.msra.mxu0 0
        %3682 = vmatpush.bf16.msra.mxu0 0
        %3683 = vmatpush.bf16.msra.mxu0 0
        %3684 = vmatpush.bf16.msra.mxu0 %v3618
        %3685 = vmatmul.bf16.gmra.mxu0 %v3603
        %v3686 = vpop.f32.mrf.mxu0
        %v3687 = vadd.f32 0.0, %v3686
        %v3688 = vpop.f32.mrf.mxu0
        %v3689 = vadd.f32 0.0, %v3688
        %3690 = vmatmul.bf16.gmra.mxu0 %v3606
        %v3691 = vpop.f32.mrf.mxu0
        %v3692 = vadd.f32 0.0, %v3691
        %v3693 = vpop.f32.mrf.mxu0
        %v3694 = vadd.f32 0.0, %v3693
        %3695 = vdwg.mxu0
        %v3696 = vadd.f32 %v3539, %v3630
        %v3697 = vadd.f32 %v3540, %v3649
        %v3698 = vadd.f32 %v3541, %v3668
        %v3699 = vadd.f32 %v3542, %v3687
        %v3700 = vadd.f32 %v3543, %v3632
        %v3701 = vadd.f32 %v3544, %v3651
        %v3702 = vadd.f32 %v3545, %v3670
        %v3703 = vadd.f32 %v3546, %v3689
        %v3704 = vadd.f32 %v3547, %v3635
        %v3705 = vadd.f32 %v3548, %v3654
        %v3706 = vadd.f32 %v3549, %v3673
        %v3707 = vadd.f32 %v3550, %v3692
        %v3708 = vadd.f32 %v3551, %v3637
        %v3709 = vadd.f32 %v3552, %v3656
        %v3710 = vadd.f32 %v3553, %v3675
        %v3711 = vadd.f32 %v3554, %v3694
        %s3712 = scalar_lea.vmem %s1, 352
        %v3713 = vld [vmem:[%s3712] sm:$0xf]
        %v3714 = vld [vmem:[%s3712 + $0x4] sm:$0xf]
        %v3715 = vld [vmem:[%s3712 + $0x8] sm:$0xf]
        %v3716 = vld [vmem:[%s3712 + $0xc] sm:$0xf]
        %v3717 = vld [vmem:[%s302 + $0x2] sm:$0xff]
        %v3718 = vld [vmem:[%s302 + $0xa] sm:$0x3]
        %v3723 = vunpack.c.l.b16 %v3713
        %v3724 = vunpack.c.l.b16 %v3714
        %v3725 = vunpack.c.l.b16 %v3715
        %v3726 = vunpack.c.l.b16 %v3716
        %v3727 = vpack.c.b16 %v3724, %v3723
        %v3728 = vpack.c.b16 %v3726, %v3725
        %3730 = vst [vmem:[#allocation1] ss:$4 sm:$0xff] %v3717
        %s3732 = scalar_lea.vmem [#allocation1], 32
        %3733 = vst [vmem:[%s3732] ss:$4 sm:$0xff] %v3718
        %v3734 = vld.sshfl [vmem:[#allocation1] sm:$0xff pattern:$0x73625140]
        %v3736 = vld.sshfl [vmem:[#allocation1 + $0x8] sm:$0xff pattern:$0x73625140]
        %v3738 = vld.sshfl [vmem:[#allocation1 + $0x10] sm:$0xff pattern:$0x73625140]
        %v3740 = vld.sshfl [vmem:[#allocation1 + $0x18] sm:$0xff pattern:$0x73625140]
        %v3742 = vld.sshfl [vmem:[#allocation1 + $0x20] sm:$0xff pattern:$0x73625140]
        %3744 = vrot.lane.b32.xlu0 %v3734, 45
        %v3745 = vpop.permute.xlu0 %3744
        %3746 = vrot.lane.b32.xlu0 %v3736, 45
        %v3747 = vpop.permute.xlu0 %3746
        %3748 = vrot.lane.b32.xlu0 %v3738, 45
        %v3749 = vpop.permute.xlu0 %3748
        %3750 = vrot.lane.b32.xlu0 %v3740, 45
        %v3751 = vpop.permute.xlu0 %3750
        %3752 = vrot.lane.b32.xlu0 %v3742, 45
        %v3753 = vpop.permute.xlu0 %3752
        %vm3754 = vcmask 367616
        %v3755 = vsel %vm3754, %v3745, %v3747
        %v3756 = vsel %vm3754, %v3747, %v3749
        %v3757 = vsel %vm3754, %v3749, %v3751
        %v3758 = vsel %vm3754, %v3751, %v3753
        %v3760 = vsel %vm371, %v3727, 0
        %v3763 = vsel %vm371, %v3728, 0
        %v3766 = vsel %vm378, %v3755, 0
        %v3769 = vsel %vm378, %v3756, 0
        %v3772 = vsel %vm378, %v3757, 0
        %v3775 = vsel %vm378, %v3758, 0
        %3777 = vmatpush.bf16.msra.mxu0 0
        %3778 = vmatpush.bf16.msra.mxu0 0
        %3779 = vmatpush.bf16.msra.mxu0 0
        %3780 = vmatpush.bf16.msra.mxu0 0
        %3781 = vmatpush.bf16.msra.mxu0 0
        %3782 = vmatpush.bf16.msra.mxu0 0
        %3783 = vmatpush.bf16.msra.mxu0 0
        %3784 = vmatpush.bf16.msra.mxu0 %v3766
        %3785 = vmatmul.bf16.gmra.mxu0 %v3760
        %v3786 = vpop.f32.mrf.mxu0
        %v3787 = vadd.f32 0.0, %v3786
        %v3788 = vpop.f32.mrf.mxu0
        %v3789 = vadd.f32 0.0, %v3788
        %3790 = vmatmul.bf16.gmra.mxu0 %v3763
        %v3791 = vpop.f32.mrf.mxu0
        %v3792 = vadd.f32 0.0, %v3791
        %v3793 = vpop.f32.mrf.mxu0
        %v3794 = vadd.f32 0.0, %v3793
        %3795 = vdwg.mxu0
        %3796 = vmatpush.bf16.msra.mxu0 0
        %3797 = vmatpush.bf16.msra.mxu0 0
        %3798 = vmatpush.bf16.msra.mxu0 0
        %3799 = vmatpush.bf16.msra.mxu0 0
        %3800 = vmatpush.bf16.msra.mxu0 0
        %3801 = vmatpush.bf16.msra.mxu0 0
        %3802 = vmatpush.bf16.msra.mxu0 0
        %3803 = vmatpush.bf16.msra.mxu0 %v3769
        %3804 = vmatmul.bf16.gmra.mxu0 %v3760
        %v3805 = vpop.f32.mrf.mxu0
        %v3806 = vadd.f32 0.0, %v3805
        %v3807 = vpop.f32.mrf.mxu0
        %v3808 = vadd.f32 0.0, %v3807
        %3809 = vmatmul.bf16.gmra.mxu0 %v3763
        %v3810 = vpop.f32.mrf.mxu0
        %v3811 = vadd.f32 0.0, %v3810
        %v3812 = vpop.f32.mrf.mxu0
        %v3813 = vadd.f32 0.0, %v3812
        %3814 = vdwg.mxu0
        %3815 = vmatpush.bf16.msra.mxu0 0
        %3816 = vmatpush.bf16.msra.mxu0 0
        %3817 = vmatpush.bf16.msra.mxu0 0
        %3818 = vmatpush.bf16.msra.mxu0 0
        %3819 = vmatpush.bf16.msra.mxu0 0
        %3820 = vmatpush.bf16.msra.mxu0 0
        %3821 = vmatpush.bf16.msra.mxu0 0
        %3822 = vmatpush.bf16.msra.mxu0 %v3772
        %3823 = vmatmul.bf16.gmra.mxu0 %v3760
        %v3824 = vpop.f32.mrf.mxu0
        %v3825 = vadd.f32 0.0, %v3824
        %v3826 = vpop.f32.mrf.mxu0
        %v3827 = vadd.f32 0.0, %v3826
        %3828 = vmatmul.bf16.gmra.mxu0 %v3763
        %v3829 = vpop.f32.mrf.mxu0
        %v3830 = vadd.f32 0.0, %v3829
        %v3831 = vpop.f32.mrf.mxu0
        %v3832 = vadd.f32 0.0, %v3831
        %3833 = vdwg.mxu0
        %3834 = vmatpush.bf16.msra.mxu0 0
        %3835 = vmatpush.bf16.msra.mxu0 0
        %3836 = vmatpush.bf16.msra.mxu0 0
        %3837 = vmatpush.bf16.msra.mxu0 0
        %3838 = vmatpush.bf16.msra.mxu0 0
        %3839 = vmatpush.bf16.msra.mxu0 0
        %3840 = vmatpush.bf16.msra.mxu0 0
        %3841 = vmatpush.bf16.msra.mxu0 %v3775
        %3842 = vmatmul.bf16.gmra.mxu0 %v3760
        %v3843 = vpop.f32.mrf.mxu0
        %v3844 = vadd.f32 0.0, %v3843
        %v3845 = vpop.f32.mrf.mxu0
        %v3846 = vadd.f32 0.0, %v3845
        %3847 = vmatmul.bf16.gmra.mxu0 %v3763
        %v3848 = vpop.f32.mrf.mxu0
        %v3849 = vadd.f32 0.0, %v3848
        %v3850 = vpop.f32.mrf.mxu0
        %v3851 = vadd.f32 0.0, %v3850
        %3852 = vdwg.mxu0
        %v3853 = vadd.f32 %v3696, %v3787
        %v3854 = vadd.f32 %v3697, %v3806
        %v3855 = vadd.f32 %v3698, %v3825
        %v3856 = vadd.f32 %v3699, %v3844
        %v3857 = vadd.f32 %v3700, %v3789
        %v3858 = vadd.f32 %v3701, %v3808
        %v3859 = vadd.f32 %v3702, %v3827
        %v3860 = vadd.f32 %v3703, %v3846
        %v3861 = vadd.f32 %v3704, %v3792
        %v3862 = vadd.f32 %v3705, %v3811
        %v3863 = vadd.f32 %v3706, %v3830
        %v3864 = vadd.f32 %v3707, %v3849
        %v3865 = vadd.f32 %v3708, %v3794
        %v3866 = vadd.f32 %v3709, %v3813
        %v3867 = vadd.f32 %v3710, %v3832
        %v3868 = vadd.f32 %v3711, %v3851
        %s3869 = scalar_lea.vmem %s1, 368
        %v3870 = vld [vmem:[%s3869] sm:$0xf]
        %v3871 = vld [vmem:[%s3869 + $0x4] sm:$0xf]
        %v3872 = vld [vmem:[%s3869 + $0x8] sm:$0xf]
        %v3873 = vld [vmem:[%s3869 + $0xc] sm:$0xf]
        %v3874 = vld [vmem:[%s302 + $0x2] sm:$0xff]
        %v3875 = vld [vmem:[%s302 + $0xa] sm:$0x3]
        %v3880 = vunpack.c.l.b16 %v3870
        %v3881 = vunpack.c.l.b16 %v3871
        %v3882 = vunpack.c.l.b16 %v3872
        %v3883 = vunpack.c.l.b16 %v3873
        %v3884 = vpack.c.b16 %v3881, %v3880
        %v3885 = vpack.c.b16 %v3883, %v3882
        %3887 = vst [vmem:[#allocation1] ss:$4 sm:$0xff] %v3874
        %s3889 = scalar_lea.vmem [#allocation1], 32
        %3890 = vst [vmem:[%s3889] ss:$4 sm:$0xff] %v3875
        %v3891 = vld.sshfl [vmem:[#allocation1] sm:$0xff pattern:$0x73625140]
        %v3893 = vld.sshfl [vmem:[#allocation1 + $0x8] sm:$0xff pattern:$0x73625140]
        %v3895 = vld.sshfl [vmem:[#allocation1 + $0x10] sm:$0xff pattern:$0x73625140]
        %v3897 = vld.sshfl [vmem:[#allocation1 + $0x18] sm:$0xff pattern:$0x73625140]
        %v3899 = vld.sshfl [vmem:[#allocation1 + $0x20] sm:$0xff pattern:$0x73625140]
        %3901 = vrot.lane.b32.xlu0 %v3891, 44
        %v3902 = vpop.permute.xlu0 %3901
        %3903 = vrot.lane.b32.xlu0 %v3893, 44
        %v3904 = vpop.permute.xlu0 %3903
        %3905 = vrot.lane.b32.xlu0 %v3895, 44
        %v3906 = vpop.permute.xlu0 %3905
        %3907 = vrot.lane.b32.xlu0 %v3897, 44
        %v3908 = vpop.permute.xlu0 %3907
        %3909 = vrot.lane.b32.xlu0 %v3899, 44
        %v3910 = vpop.permute.xlu0 %3909
        %vm3911 = vcmask 359424
        %v3912 = vsel %vm3911, %v3902, %v3904
        %v3913 = vsel %vm3911, %v3904, %v3906
        %v3914 = vsel %vm3911, %v3906, %v3908
        %v3915 = vsel %vm3911, %v3908, %v3910
        %v3917 = vsel %vm371, %v3884, 0
        %v3920 = vsel %vm371, %v3885, 0
        %v3923 = vsel %vm378, %v3912, 0
        %v3926 = vsel %vm378, %v3913, 0
        %v3929 = vsel %vm378, %v3914, 0
        %v3932 = vsel %vm378, %v3915, 0
        %3934 = vmatpush.bf16.msra.mxu0 0
        %3935 = vmatpush.bf16.msra.mxu0 0
        %3936 = vmatpush.bf16.msra.mxu0 0
        %3937 = vmatpush.bf16.msra.mxu0 0
        %3938 = vmatpush.bf16.msra.mxu0 0
        %3939 = vmatpush.bf16.msra.mxu0 0
        %3940 = vmatpush.bf16.msra.mxu0 0
        %3941 = vmatpush.bf16.msra.mxu0 %v3923
        %3942 = vmatmul.bf16.gmra.mxu0 %v3917
        %v3943 = vpop.f32.mrf.mxu0
        %v3944 = vadd.f32 0.0, %v3943
        %v3945 = vpop.f32.mrf.mxu0
        %v3946 = vadd.f32 0.0, %v3945
        %3947 = vmatmul.bf16.gmra.mxu0 %v3920
        %v3948 = vpop.f32.mrf.mxu0
        %v3949 = vadd.f32 0.0, %v3948
        %v3950 = vpop.f32.mrf.mxu0
        %v3951 = vadd.f32 0.0, %v3950
        %3952 = vdwg.mxu0
        %3953 = vmatpush.bf16.msra.mxu0 0
        %3954 = vmatpush.bf16.msra.mxu0 0
        %3955 = vmatpush.bf16.msra.mxu0 0
        %3956 = vmatpush.bf16.msra.mxu0 0
        %3957 = vmatpush.bf16.msra.mxu0 0
        %3958 = vmatpush.bf16.msra.mxu0 0
        %3959 = vmatpush.bf16.msra.mxu0 0
        %3960 = vmatpush.bf16.msra.mxu0 %v3926
        %3961 = vmatmul.bf16.gmra.mxu0 %v3917
        %v3962 = vpop.f32.mrf.mxu0
        %v3963 = vadd.f32 0.0, %v3962
        %v3964 = vpop.f32.mrf.mxu0
        %v3965 = vadd.f32 0.0, %v3964
        %3966 = vmatmul.bf16.gmra.mxu0 %v3920
        %v3967 = vpop.f32.mrf.mxu0
        %v3968 = vadd.f32 0.0, %v3967
        %v3969 = vpop.f32.mrf.mxu0
        %v3970 = vadd.f32 0.0, %v3969
        %3971 = vdwg.mxu0
        %3972 = vmatpush.bf16.msra.mxu0 0
        %3973 = vmatpush.bf16.msra.mxu0 0
        %3974 = vmatpush.bf16.msra.mxu0 0
        %3975 = vmatpush.bf16.msra.mxu0 0
        %3976 = vmatpush.bf16.msra.mxu0 0
        %3977 = vmatpush.bf16.msra.mxu0 0
        %3978 = vmatpush.bf16.msra.mxu0 0
        %3979 = vmatpush.bf16.msra.mxu0 %v3929
        %3980 = vmatmul.bf16.gmra.mxu0 %v3917
        %v3981 = vpop.f32.mrf.mxu0
        %v3982 = vadd.f32 0.0, %v3981
        %v3983 = vpop.f32.mrf.mxu0
        %v3984 = vadd.f32 0.0, %v3983
        %3985 = vmatmul.bf16.gmra.mxu0 %v3920
        %v3986 = vpop.f32.mrf.mxu0
        %v3987 = vadd.f32 0.0, %v3986
        %v3988 = vpop.f32.mrf.mxu0
        %v3989 = vadd.f32 0.0, %v3988
        %3990 = vdwg.mxu0
        %3991 = vmatpush.bf16.msra.mxu0 0
        %3992 = vmatpush.bf16.msra.mxu0 0
        %3993 = vmatpush.bf16.msra.mxu0 0
        %3994 = vmatpush.bf16.msra.mxu0 0
        %3995 = vmatpush.bf16.msra.mxu0 0
        %3996 = vmatpush.bf16.msra.mxu0 0
        %3997 = vmatpush.bf16.msra.mxu0 0
        %3998 = vmatpush.bf16.msra.mxu0 %v3932
        %3999 = vmatmul.bf16.gmra.mxu0 %v3917
        %v4000 = vpop.f32.mrf.mxu0
        %v4001 = vadd.f32 0.0, %v4000
        %v4002 = vpop.f32.mrf.mxu0
        %v4003 = vadd.f32 0.0, %v4002
        %4004 = vmatmul.bf16.gmra.mxu0 %v3920
        %v4005 = vpop.f32.mrf.mxu0
        %v4006 = vadd.f32 0.0, %v4005
        %v4007 = vpop.f32.mrf.mxu0
        %v4008 = vadd.f32 0.0, %v4007
        %4009 = vdwg.mxu0
        %v4010 = vadd.f32 %v3853, %v3944
        %v4011 = vadd.f32 %v3854, %v3963
        %v4012 = vadd.f32 %v3855, %v3982
        %v4013 = vadd.f32 %v3856, %v4001
        %v4014 = vadd.f32 %v3857, %v3946
        %v4015 = vadd.f32 %v3858, %v3965
        %v4016 = vadd.f32 %v3859, %v3984
        %v4017 = vadd.f32 %v3860, %v4003
        %v4018 = vadd.f32 %v3861, %v3949
        %v4019 = vadd.f32 %v3862, %v3968
        %v4020 = vadd.f32 %v3863, %v3987
        %v4021 = vadd.f32 %v3864, %v4006
        %v4022 = vadd.f32 %v3865, %v3951
        %v4023 = vadd.f32 %v3866, %v3970
        %v4024 = vadd.f32 %v3867, %v3989
        %v4025 = vadd.f32 %v3868, %v4008
        %s4026 = scalar_lea.vmem %s1, 384
        %v4027 = vld [vmem:[%s4026] sm:$0xf]
        %v4028 = vld [vmem:[%s4026 + $0x4] sm:$0xf]
        %v4029 = vld [vmem:[%s4026 + $0x8] sm:$0xf]
        %v4030 = vld [vmem:[%s4026 + $0xc] sm:$0xf]
        %v4031 = vld [vmem:[%s302 + $0x2] sm:$0xff]
        %v4032 = vld [vmem:[%s302 + $0xa] sm:$0x3]
        %v4037 = vunpack.c.l.b16 %v4027
        %v4038 = vunpack.c.l.b16 %v4028
        %v4039 = vunpack.c.l.b16 %v4029
        %v4040 = vunpack.c.l.b16 %v4030
        %v4041 = vpack.c.b16 %v4038, %v4037
        %v4042 = vpack.c.b16 %v4040, %v4039
        %4044 = vst [vmem:[#allocation1] ss:$4 sm:$0xff] %v4031
        %s4046 = scalar_lea.vmem [#allocation1], 32
        %4047 = vst [vmem:[%s4046] ss:$4 sm:$0xff] %v4032
        %v4048 = vld.sshfl [vmem:[#allocation1] sm:$0xff pattern:$0x73625140]
        %v4050 = vld.sshfl [vmem:[#allocation1 + $0x8] sm:$0xff pattern:$0x73625140]
        %v4052 = vld.sshfl [vmem:[#allocation1 + $0x10] sm:$0xff pattern:$0x73625140]
        %v4054 = vld.sshfl [vmem:[#allocation1 + $0x18] sm:$0xff pattern:$0x73625140]
        %v4056 = vld.sshfl [vmem:[#allocation1 + $0x20] sm:$0xff pattern:$0x73625140]
        %4058 = vrot.lane.b32.xlu0 %v4048, 36
        %v4059 = vpop.permute.xlu0 %4058
        %4060 = vrot.lane.b32.xlu0 %v4050, 36
        %v4061 = vpop.permute.xlu0 %4060
        %4062 = vrot.lane.b32.xlu0 %v4052, 36
        %v4063 = vpop.permute.xlu0 %4062
        %4064 = vrot.lane.b32.xlu0 %v4054, 36
        %v4065 = vpop.permute.xlu0 %4064
        %4066 = vrot.lane.b32.xlu0 %v4056, 36
        %v4067 = vpop.permute.xlu0 %4066
        %vm4068 = vcmask 293888
        %v4069 = vsel %vm4068, %v4059, %v4061
        %v4070 = vsel %vm4068, %v4061, %v4063
        %v4071 = vsel %vm4068, %v4063, %v4065
        %v4072 = vsel %vm4068, %v4065, %v4067
        %v4074 = vsel %vm371, %v4041, 0
        %v4077 = vsel %vm371, %v4042, 0
        %v4080 = vsel %vm378, %v4069, 0
        %v4083 = vsel %vm378, %v4070, 0
        %v4086 = vsel %vm378, %v4071, 0
        %v4089 = vsel %vm378, %v4072, 0
        %4091 = vmatpush.bf16.msra.mxu0 0
        %4092 = vmatpush.bf16.msra.mxu0 0
        %4093 = vmatpush.bf16.msra.mxu0 0
        %4094 = vmatpush.bf16.msra.mxu0 0
        %4095 = vmatpush.bf16.msra.mxu0 0
        %4096 = vmatpush.bf16.msra.mxu0 0
        %4097 = vmatpush.bf16.msra.mxu0 0
        %4098 = vmatpush.bf16.msra.mxu0 %v4080
        %4099 = vmatmul.bf16.gmra.mxu0 %v4074
        %v4100 = vpop.f32.mrf.mxu0
        %v4101 = vadd.f32 0.0, %v4100
        %v4102 = vpop.f32.mrf.mxu0
        %v4103 = vadd.f32 0.0, %v4102
        %4104 = vmatmul.bf16.gmra.mxu0 %v4077
        %v4105 = vpop.f32.mrf.mxu0
        %v4106 = vadd.f32 0.0, %v4105
        %v4107 = vpop.f32.mrf.mxu0
        %v4108 = vadd.f32 0.0, %v4107
        %4109 = vdwg.mxu0
        %4110 = vmatpush.bf16.msra.mxu0 0
        %4111 = vmatpush.bf16.msra.mxu0 0
        %4112 = vmatpush.bf16.msra.mxu0 0
        %4113 = vmatpush.bf16.msra.mxu0 0
        %4114 = vmatpush.bf16.msra.mxu0 0
        %4115 = vmatpush.bf16.msra.mxu0 0
        %4116 = vmatpush.bf16.msra.mxu0 0
        %4117 = vmatpush.bf16.msra.mxu0 %v4083
        %4118 = vmatmul.bf16.gmra.mxu0 %v4074
        %v4119 = vpop.f32.mrf.mxu0
        %v4120 = vadd.f32 0.0, %v4119
        %v4121 = vpop.f32.mrf.mxu0
        %v4122 = vadd.f32 0.0, %v4121
        %4123 = vmatmul.bf16.gmra.mxu0 %v4077
        %v4124 = vpop.f32.mrf.mxu0
        %v4125 = vadd.f32 0.0, %v4124
        %v4126 = vpop.f32.mrf.mxu0
        %v4127 = vadd.f32 0.0, %v4126
        %4128 = vdwg.mxu0
        %4129 = vmatpush.bf16.msra.mxu0 0
        %4130 = vmatpush.bf16.msra.mxu0 0
        %4131 = vmatpush.bf16.msra.mxu0 0
        %4132 = vmatpush.bf16.msra.mxu0 0
        %4133 = vmatpush.bf16.msra.mxu0 0
        %4134 = vmatpush.bf16.msra.mxu0 0
        %4135 = vmatpush.bf16.msra.mxu0 0
        %4136 = vmatpush.bf16.msra.mxu0 %v4086
        %4137 = vmatmul.bf16.gmra.mxu0 %v4074
        %v4138 = vpop.f32.mrf.mxu0
        %v4139 = vadd.f32 0.0, %v4138
        %v4140 = vpop.f32.mrf.mxu0
        %v4141 = vadd.f32 0.0, %v4140
        %4142 = vmatmul.bf16.gmra.mxu0 %v4077
        %v4143 = vpop.f32.mrf.mxu0
        %v4144 = vadd.f32 0.0, %v4143
        %v4145 = vpop.f32.mrf.mxu0
        %v4146 = vadd.f32 0.0, %v4145
        %4147 = vdwg.mxu0
        %4148 = vmatpush.bf16.msra.mxu0 0
        %4149 = vmatpush.bf16.msra.mxu0 0
        %4150 = vmatpush.bf16.msra.mxu0 0
        %4151 = vmatpush.bf16.msra.mxu0 0
        %4152 = vmatpush.bf16.msra.mxu0 0
        %4153 = vmatpush.bf16.msra.mxu0 0
        %4154 = vmatpush.bf16.msra.mxu0 0
        %4155 = vmatpush.bf16.msra.mxu0 %v4089
        %4156 = vmatmul.bf16.gmra.mxu0 %v4074
        %v4157 = vpop.f32.mrf.mxu0
        %v4158 = vadd.f32 0.0, %v4157
        %v4159 = vpop.f32.mrf.mxu0
        %v4160 = vadd.f32 0.0, %v4159
        %4161 = vmatmul.bf16.gmra.mxu0 %v4077
        %v4162 = vpop.f32.mrf.mxu0
        %v4163 = vadd.f32 0.0, %v4162
        %v4164 = vpop.f32.mrf.mxu0
        %v4165 = vadd.f32 0.0, %v4164
        %4166 = vdwg.mxu0
        %v4167 = vadd.f32 %v4010, %v4101
        %v4168 = vadd.f32 %v4011, %v4120
        %v4169 = vadd.f32 %v4012, %v4139
        %v4170 = vadd.f32 %v4013, %v4158
        %v4171 = vadd.f32 %v4014, %v4103
        %v4172 = vadd.f32 %v4015, %v4122
        %v4173 = vadd.f32 %v4016, %v4141
        %v4174 = vadd.f32 %v4017, %v4160
        %v4175 = vadd.f32 %v4018, %v4106
        %v4176 = vadd.f32 %v4019, %v4125
        %v4177 = vadd.f32 %v4020, %v4144
        %v4178 = vadd.f32 %v4021, %v4163
        %v4179 = vadd.f32 %v4022, %v4108
        %v4180 = vadd.f32 %v4023, %v4127
        %v4181 = vadd.f32 %v4024, %v4146
        %v4182 = vadd.f32 %v4025, %v4165
        %s4183 = scalar_lea.vmem %s1, 400
        %v4184 = vld [vmem:[%s4183] sm:$0xf]
        %v4185 = vld [vmem:[%s4183 + $0x4] sm:$0xf]
        %v4186 = vld [vmem:[%s4183 + $0x8] sm:$0xf]
        %v4187 = vld [vmem:[%s4183 + $0xc] sm:$0xf]
        %v4188 = vld [vmem:[%s302 + $0x2] sm:$0xff]
        %v4189 = vld [vmem:[%s302 + $0xa] sm:$0x3]
        %v4194 = vunpack.c.l.b16 %v4184
        %v4195 = vunpack.c.l.b16 %v4185
        %v4196 = vunpack.c.l.b16 %v4186
        %v4197 = vunpack.c.l.b16 %v4187
        %v4198 = vpack.c.b16 %v4195, %v4194
        %v4199 = vpack.c.b16 %v4197, %v4196
        %4201 = vst [vmem:[#allocation1] ss:$4 sm:$0xff] %v4188
        %s4203 = scalar_lea.vmem [#allocation1], 32
        %4204 = vst [vmem:[%s4203] ss:$4 sm:$0xff] %v4189
        %v4205 = vld.sshfl [vmem:[#allocation1] sm:$0xff pattern:$0x73625140]
        %v4207 = vld.sshfl [vmem:[#allocation1 + $0x8] sm:$0xff pattern:$0x73625140]
        %v4209 = vld.sshfl [vmem:[#allocation1 + $0x10] sm:$0xff pattern:$0x73625140]
        %v4211 = vld.sshfl [vmem:[#allocation1 + $0x18] sm:$0xff pattern:$0x73625140]
        %v4213 = vld.sshfl [vmem:[#allocation1 + $0x20] sm:$0xff pattern:$0x73625140]
        %4215 = vrot.lane.b32.xlu0 %v4205, 35
        %v4216 = vpop.permute.xlu0 %4215
        %4217 = vrot.lane.b32.xlu0 %v4207, 35
        %v4218 = vpop.permute.xlu0 %4217
        %4219 = vrot.lane.b32.xlu0 %v4209, 35
        %v4220 = vpop.permute.xlu0 %4219
        %4221 = vrot.lane.b32.xlu0 %v4211, 35
        %v4222 = vpop.permute.xlu0 %4221
        %4223 = vrot.lane.b32.xlu0 %v4213, 35
        %v4224 = vpop.permute.xlu0 %4223
        %vm4225 = vcmask 285696
        %v4226 = vsel %vm4225, %v4216, %v4218
        %v4227 = vsel %vm4225, %v4218, %v4220
        %v4228 = vsel %vm4225, %v4220, %v4222
        %v4229 = vsel %vm4225, %v4222, %v4224
        %v4231 = vsel %vm371, %v4198, 0
        %v4234 = vsel %vm371, %v4199, 0
        %v4237 = vsel %vm378, %v4226, 0
        %v4240 = vsel %vm378, %v4227, 0
        %v4243 = vsel %vm378, %v4228, 0
        %v4246 = vsel %vm378, %v4229, 0
        %4248 = vmatpush.bf16.msra.mxu0 0
        %4249 = vmatpush.bf16.msra.mxu0 0
        %4250 = vmatpush.bf16.msra.mxu0 0
        %4251 = vmatpush.bf16.msra.mxu0 0
        %4252 = vmatpush.bf16.msra.mxu0 0
        %4253 = vmatpush.bf16.msra.mxu0 0
        %4254 = vmatpush.bf16.msra.mxu0 0
        %4255 = vmatpush.bf16.msra.mxu0 %v4237
        %4256 = vmatmul.bf16.gmra.mxu0 %v4231
        %v4257 = vpop.f32.mrf.mxu0
        %v4258 = vadd.f32 0.0, %v4257
        %v4259 = vpop.f32.mrf.mxu0
        %v4260 = vadd.f32 0.0, %v4259
        %4261 = vmatmul.bf16.gmra.mxu0 %v4234
        %v4262 = vpop.f32.mrf.mxu0
        %v4263 = vadd.f32 0.0, %v4262
        %v4264 = vpop.f32.mrf.mxu0
        %v4265 = vadd.f32 0.0, %v4264
        %4266 = vdwg.mxu0
        %4267 = vmatpush.bf16.msra.mxu0 0
        %4268 = vmatpush.bf16.msra.mxu0 0
        %4269 = vmatpush.bf16.msra.mxu0 0
        %4270 = vmatpush.bf16.msra.mxu0 0
        %4271 = vmatpush.bf16.msra.mxu0 0
        %4272 = vmatpush.bf16.msra.mxu0 0
        %4273 = vmatpush.bf16.msra.mxu0 0
        %4274 = vmatpush.bf16.msra.mxu0 %v4240
        %4275 = vmatmul.bf16.gmra.mxu0 %v4231
        %v4276 = vpop.f32.mrf.mxu0
        %v4277 = vadd.f32 0.0, %v4276
        %v4278 = vpop.f32.mrf.mxu0
        %v4279 = vadd.f32 0.0, %v4278
        %4280 = vmatmul.bf16.gmra.mxu0 %v4234
        %v4281 = vpop.f32.mrf.mxu0
        %v4282 = vadd.f32 0.0, %v4281
        %v4283 = vpop.f32.mrf.mxu0
        %v4284 = vadd.f32 0.0, %v4283
        %4285 = vdwg.mxu0
        %4286 = vmatpush.bf16.msra.mxu0 0
        %4287 = vmatpush.bf16.msra.mxu0 0
        %4288 = vmatpush.bf16.msra.mxu0 0
        %4289 = vmatpush.bf16.msra.mxu0 0
        %4290 = vmatpush.bf16.msra.mxu0 0
        %4291 = vmatpush.bf16.msra.mxu0 0
        %4292 = vmatpush.bf16.msra.mxu0 0
        %4293 = vmatpush.bf16.msra.mxu0 %v4243
        %4294 = vmatmul.bf16.gmra.mxu0 %v4231
        %v4295 = vpop.f32.mrf.mxu0
        %v4296 = vadd.f32 0.0, %v4295
        %v4297 = vpop.f32.mrf.mxu0
        %v4298 = vadd.f32 0.0, %v4297
        %4299 = vmatmul.bf16.gmra.mxu0 %v4234
        %v4300 = vpop.f32.mrf.mxu0
        %v4301 = vadd.f32 0.0, %v4300
        %v4302 = vpop.f32.mrf.mxu0
        %v4303 = vadd.f32 0.0, %v4302
        %4304 = vdwg.mxu0
        %4305 = vmatpush.bf16.msra.mxu0 0
        %4306 = vmatpush.bf16.msra.mxu0 0
        %4307 = vmatpush.bf16.msra.mxu0 0
        %4308 = vmatpush.bf16.msra.mxu0 0
        %4309 = vmatpush.bf16.msra.mxu0 0
        %4310 = vmatpush.bf16.msra.mxu0 0
        %4311 = vmatpush.bf16.msra.mxu0 0
        %4312 = vmatpush.bf16.msra.mxu0 %v4246
        %4313 = vmatmul.bf16.gmra.mxu0 %v4231
        %v4314 = vpop.f32.mrf.mxu0
        %v4315 = vadd.f32 0.0, %v4314
        %v4316 = vpop.f32.mrf.mxu0
        %v4317 = vadd.f32 0.0, %v4316
        %4318 = vmatmul.bf16.gmra.mxu0 %v4234
        %v4319 = vpop.f32.mrf.mxu0
        %v4320 = vadd.f32 0.0, %v4319
        %v4321 = vpop.f32.mrf.mxu0
        %v4322 = vadd.f32 0.0, %v4321
        %4323 = vdwg.mxu0
        %v4324 = vadd.f32 %v4167, %v4258
        %v4325 = vadd.f32 %v4168, %v4277
        %v4326 = vadd.f32 %v4169, %v4296
        %v4327 = vadd.f32 %v4170, %v4315
        %v4328 = vadd.f32 %v4171, %v4260
        %v4329 = vadd.f32 %v4172, %v4279
        %v4330 = vadd.f32 %v4173, %v4298
        %v4331 = vadd.f32 %v4174, %v4317
        %v4332 = vadd.f32 %v4175, %v4263
        %v4333 = vadd.f32 %v4176, %v4282
        %v4334 = vadd.f32 %v4177, %v4301
        %v4335 = vadd.f32 %v4178, %v4320
        %v4336 = vadd.f32 %v4179, %v4265
        %v4337 = vadd.f32 %v4180, %v4284
        %v4338 = vadd.f32 %v4181, %v4303
        %v4339 = vadd.f32 %v4182, %v4322
        %s4340 = scalar_lea.vmem %s1, 416
        %v4341 = vld [vmem:[%s4340] sm:$0xf]
        %v4342 = vld [vmem:[%s4340 + $0x4] sm:$0xf]
        %v4343 = vld [vmem:[%s4340 + $0x8] sm:$0xf]
        %v4344 = vld [vmem:[%s4340 + $0xc] sm:$0xf]
        %v4345 = vld [vmem:[%s302 + $0x2] sm:$0xff]
        %v4346 = vld [vmem:[%s302 + $0xa] sm:$0x3]
        %v4351 = vunpack.c.l.b16 %v4341
        %v4352 = vunpack.c.l.b16 %v4342
        %v4353 = vunpack.c.l.b16 %v4343
        %v4354 = vunpack.c.l.b16 %v4344
        %v4355 = vpack.c.b16 %v4352, %v4351
        %v4356 = vpack.c.b16 %v4354, %v4353
        %4358 = vst [vmem:[#allocation1] ss:$4 sm:$0xff] %v4345
        %s4360 = scalar_lea.vmem [#allocation1], 32
        %4361 = vst [vmem:[%s4360] ss:$4 sm:$0xff] %v4346
        %v4362 = vld.sshfl [vmem:[#allocation1] sm:$0xff pattern:$0x73625140]
        %v4364 = vld.sshfl [vmem:[#allocation1 + $0x8] sm:$0xff pattern:$0x73625140]
        %v4366 = vld.sshfl [vmem:[#allocation1 + $0x10] sm:$0xff pattern:$0x73625140]
        %v4368 = vld.sshfl [vmem:[#allocation1 + $0x18] sm:$0xff pattern:$0x73625140]
        %v4370 = vld.sshfl [vmem:[#allocation1 + $0x20] sm:$0xff pattern:$0x73625140]
        %4372 = vrot.lane.b32.xlu0 %v4362, 34
        %v4373 = vpop.permute.xlu0 %4372
        %4374 = vrot.lane.b32.xlu0 %v4364, 34
        %v4375 = vpop.permute.xlu0 %4374
        %4376 = vrot.lane.b32.xlu0 %v4366, 34
        %v4377 = vpop.permute.xlu0 %4376
        %4378 = vrot.lane.b32.xlu0 %v4368, 34
        %v4379 = vpop.permute.xlu0 %4378
        %4380 = vrot.lane.b32.xlu0 %v4370, 34
        %v4381 = vpop.permute.xlu0 %4380
        %vm4382 = vcmask 277504
        %v4383 = vsel %vm4382, %v4373, %v4375
        %v4384 = vsel %vm4382, %v4375, %v4377
        %v4385 = vsel %vm4382, %v4377, %v4379
        %v4386 = vsel %vm4382, %v4379, %v4381
        %v4388 = vsel %vm371, %v4355, 0
        %v4391 = vsel %vm371, %v4356, 0
        %v4394 = vsel %vm378, %v4383, 0
        %v4397 = vsel %vm378, %v4384, 0
        %v4400 = vsel %vm378, %v4385, 0
        %v4403 = vsel %vm378, %v4386, 0
        %4405 = vmatpush.bf16.msra.mxu0 0
        %4406 = vmatpush.bf16.msra.mxu0 0
        %4407 = vmatpush.bf16.msra.mxu0 0
        %4408 = vmatpush.bf16.msra.mxu0 0
        %4409 = vmatpush.bf16.msra.mxu0 0
        %4410 = vmatpush.bf16.msra.mxu0 0
        %4411 = vmatpush.bf16.msra.mxu0 0
        %4412 = vmatpush.bf16.msra.mxu0 %v4394
        %4413 = vmatmul.bf16.gmra.mxu0 %v4388
        %v4414 = vpop.f32.mrf.mxu0
        %v4415 = vadd.f32 0.0, %v4414
        %v4416 = vpop.f32.mrf.mxu0
        %v4417 = vadd.f32 0.0, %v4416
        %4418 = vmatmul.bf16.gmra.mxu0 %v4391
        %v4419 = vpop.f32.mrf.mxu0
        %v4420 = vadd.f32 0.0, %v4419
        %v4421 = vpop.f32.mrf.mxu0
        %v4422 = vadd.f32 0.0, %v4421
        %4423 = vdwg.mxu0
        %4424 = vmatpush.bf16.msra.mxu0 0
        %4425 = vmatpush.bf16.msra.mxu0 0
        %4426 = vmatpush.bf16.msra.mxu0 0
        %4427 = vmatpush.bf16.msra.mxu0 0
        %4428 = vmatpush.bf16.msra.mxu0 0
        %4429 = vmatpush.bf16.msra.mxu0 0
        %4430 = vmatpush.bf16.msra.mxu0 0
        %4431 = vmatpush.bf16.msra.mxu0 %v4397
        %4432 = vmatmul.bf16.gmra.mxu0 %v4388
        %v4433 = vpop.f32.mrf.mxu0
        %v4434 = vadd.f32 0.0, %v4433
        %v4435 = vpop.f32.mrf.mxu0
        %v4436 = vadd.f32 0.0, %v4435
        %4437 = vmatmul.bf16.gmra.mxu0 %v4391
        %v4438 = vpop.f32.mrf.mxu0
        %v4439 = vadd.f32 0.0, %v4438
        %v4440 = vpop.f32.mrf.mxu0
        %v4441 = vadd.f32 0.0, %v4440
        %4442 = vdwg.mxu0
        %4443 = vmatpush.bf16.msra.mxu0 0
        %4444 = vmatpush.bf16.msra.mxu0 0
        %4445 = vmatpush.bf16.msra.mxu0 0
        %4446 = vmatpush.bf16.msra.mxu0 0
        %4447 = vmatpush.bf16.msra.mxu0 0
        %4448 = vmatpush.bf16.msra.mxu0 0
        %4449 = vmatpush.bf16.msra.mxu0 0
        %4450 = vmatpush.bf16.msra.mxu0 %v4400
        %4451 = vmatmul.bf16.gmra.mxu0 %v4388
        %v4452 = vpop.f32.mrf.mxu0
        %v4453 = vadd.f32 0.0, %v4452
        %v4454 = vpop.f32.mrf.mxu0
        %v4455 = vadd.f32 0.0, %v4454
        %4456 = vmatmul.bf16.gmra.mxu0 %v4391
        %v4457 = vpop.f32.mrf.mxu0
        %v4458 = vadd.f32 0.0, %v4457
        %v4459 = vpop.f32.mrf.mxu0
        %v4460 = vadd.f32 0.0, %v4459
        %4461 = vdwg.mxu0
        %4462 = vmatpush.bf16.msra.mxu0 0
        %4463 = vmatpush.bf16.msra.mxu0 0
        %4464 = vmatpush.bf16.msra.mxu0 0
        %4465 = vmatpush.bf16.msra.mxu0 0
        %4466 = vmatpush.bf16.msra.mxu0 0
        %4467 = vmatpush.bf16.msra.mxu0 0
        %4468 = vmatpush.bf16.msra.mxu0 0
        %4469 = vmatpush.bf16.msra.mxu0 %v4403
        %4470 = vmatmul.bf16.gmra.mxu0 %v4388
        %v4471 = vpop.f32.mrf.mxu0
        %v4472 = vadd.f32 0.0, %v4471
        %v4473 = vpop.f32.mrf.mxu0
        %v4474 = vadd.f32 0.0, %v4473
        %4475 = vmatmul.bf16.gmra.mxu0 %v4391
        %v4476 = vpop.f32.mrf.mxu0
        %v4477 = vadd.f32 0.0, %v4476
        %v4478 = vpop.f32.mrf.mxu0
        %v4479 = vadd.f32 0.0, %v4478
        %4480 = vdwg.mxu0
        %v4481 = vadd.f32 %v4324, %v4415
        %v4482 = vadd.f32 %v4325, %v4434
        %v4483 = vadd.f32 %v4326, %v4453
        %v4484 = vadd.f32 %v4327, %v4472
        %v4485 = vadd.f32 %v4328, %v4417
        %v4486 = vadd.f32 %v4329, %v4436
        %v4487 = vadd.f32 %v4330, %v4455
        %v4488 = vadd.f32 %v4331, %v4474
        %v4489 = vadd.f32 %v4332, %v4420
        %v4490 = vadd.f32 %v4333, %v4439
        %v4491 = vadd.f32 %v4334, %v4458
        %v4492 = vadd.f32 %v4335, %v4477
        %v4493 = vadd.f32 %v4336, %v4422
        %v4494 = vadd.f32 %v4337, %v4441
        %v4495 = vadd.f32 %v4338, %v4460
        %v4496 = vadd.f32 %v4339, %v4479
        %v4497 = vld [vmem:[%s2] sm:$0xff]
        %v4498 = vld [vmem:[%s2 + $0x8] sm:$0xff]
        %v4499 = vld [vmem:[%s2 + $0x10] sm:$0xff]
        %v4500 = vld [vmem:[%s2 + $0x18] sm:$0xff]
        %4502 = vset.pattern.permute.xlu0 0
        %4503 = vperm.xlu0 %4502, %v4497
        %v4504 = vpop.permute.xlu0 %4503
        %4507 = vset.pattern.permute.xlu0 0
        %4508 = vperm.xlu0 %4507, %v4498
        %v4509 = vpop.permute.xlu0 %4508
        %4512 = vset.pattern.permute.xlu0 0
        %4513 = vperm.xlu0 %4512, %v4499
        %v4514 = vpop.permute.xlu0 %4513
        %4517 = vset.pattern.permute.xlu0 0
        %4518 = vperm.xlu0 %4517, %v4500
        %v4519 = vpop.permute.xlu0 %4518
        %v4521 = vadd.f32 %v4481, %v4504
        %v4522 = vadd.f32 %v4482, %v4504
        %v4523 = vadd.f32 %v4483, %v4504
        %v4524 = vadd.f32 %v4484, %v4504
        %v4525 = vadd.f32 %v4485, %v4509
        %v4526 = vadd.f32 %v4486, %v4509
        %v4527 = vadd.f32 %v4487, %v4509
        %v4528 = vadd.f32 %v4488, %v4509
        %v4529 = vadd.f32 %v4489, %v4514
        %v4530 = vadd.f32 %v4490, %v4514
        %v4531 = vadd.f32 %v4491, %v4514
        %v4532 = vadd.f32 %v4492, %v4514
        %v4533 = vadd.f32 %v4493, %v4519
        %v4534 = vadd.f32 %v4494, %v4519
        %v4535 = vadd.f32 %v4495, %v4519
        %v4536 = vadd.f32 %v4496, %v4519
        %4537 = vst [vmem:[%s279] sm:$0xff] %v4521
        %4538 = vst [vmem:[%s279 + $0x8] sm:$0xff] %v4522
        %4539 = vst [vmem:[%s279 + $0x10] sm:$0xff] %v4523
        %4540 = vst [vmem:[%s279 + $0x18] sm:$0xff] %v4524
        %4541 = vst [vmem:[%s279 + $0x20] sm:$0xff] %v4525
        %4542 = vst [vmem:[%s279 + $0x28] sm:$0xff] %v4526
        %4543 = vst [vmem:[%s279 + $0x30] sm:$0xff] %v4527
        %4544 = vst [vmem:[%s279 + $0x38] sm:$0xff] %v4528
        %4545 = vst [vmem:[%s279 + $0x40] sm:$0xff] %v4529
        %4546 = vst [vmem:[%s279 + $0x48] sm:$0xff] %v4530
        %4547 = vst [vmem:[%s279 + $0x50] sm:$0xff] %v4531
        %4548 = vst [vmem:[%s279 + $0x58] sm:$0xff] %v4532
        %4549 = vst [vmem:[%s279 + $0x60] sm:$0xff] %v4533
        %4550 = vst [vmem:[%s279 + $0x68] sm:$0xff] %v4534
        %4551 = vst [vmem:[%s279 + $0x70] sm:$0xff] %v4535
        %4552 = vst [vmem:[%s279 + $0x78] sm:$0xff] %v4536
        %v4553 = vld [vmem:[%s306] sm:$0xf]
        %v4555 = vperm.slane %v4553, 0
        %v4556 = vperm.slane %v4553, 1
        %v4557 = vperm.slane %v4553, 2
        %v4558 = vperm.slane %v4553, 3
        %v4563 = vmul.f32 %v4521, %v4555
        %v4564 = vmul.f32 %v4522, %v4556
        %v4565 = vmul.f32 %v4523, %v4557
        %v4566 = vmul.f32 %v4524, %v4558
        %v4567 = vmul.f32 %v4525, %v4555
        %v4568 = vmul.f32 %v4526, %v4556
        %v4569 = vmul.f32 %v4527, %v4557
        %v4570 = vmul.f32 %v4528, %v4558
        %v4571 = vmul.f32 %v4529, %v4555
        %v4572 = vmul.f32 %v4530, %v4556
        %v4573 = vmul.f32 %v4531, %v4557
        %v4574 = vmul.f32 %v4532, %v4558
        %v4575 = vmul.f32 %v4533, %v4555
        %v4576 = vmul.f32 %v4534, %v4556
        %v4577 = vmul.f32 %v4535, %v4557
        %v4578 = vmul.f32 %v4536, %v4558
        %v4579 = vadd.f32 %v4563, %v4564
        %v4580 = vadd.f32 %v4579, %v4565
        %v4581 = vadd.f32 %v4580, %v4566
        %4582 = vadd.xlane.f32.xlu0 %v4581
        %v4583 = vpop.xlane.xlu0 %4582
        %v4584 = vadd.f32 %v4567, %v4568
        %v4585 = vadd.f32 %v4584, %v4569
        %v4586 = vadd.f32 %v4585, %v4570
        %4587 = vadd.xlane.f32.xlu0 %v4586
        %v4588 = vpop.xlane.xlu0 %4587
        %v4589 = vadd.f32 %v4571, %v4572
        %v4590 = vadd.f32 %v4589, %v4573
        %v4591 = vadd.f32 %v4590, %v4574
        %4592 = vadd.xlane.f32.xlu0 %v4591
        %v4593 = vpop.xlane.xlu0 %4592
        %v4594 = vadd.f32 %v4575, %v4576
        %v4595 = vadd.f32 %v4594, %v4577
        %v4596 = vadd.f32 %v4595, %v4578
        %4597 = vadd.xlane.f32.xlu0 %v4596
        %v4598 = vpop.xlane.xlu0 %4597
        %v4599 = vmul.f32 %v4563, %v4563
        %v4600 = vmul.f32 %v4564, %v4564
        %v4601 = vmul.f32 %v4565, %v4565
        %v4602 = vmul.f32 %v4566, %v4566
        %v4603 = vmul.f32 %v4567, %v4567
        %v4604 = vmul.f32 %v4568, %v4568
        %v4605 = vmul.f32 %v4569, %v4569
        %v4606 = vmul.f32 %v4570, %v4570
        %v4607 = vmul.f32 %v4571, %v4571
        %v4608 = vmul.f32 %v4572, %v4572
        %v4609 = vmul.f32 %v4573, %v4573
        %v4610 = vmul.f32 %v4574, %v4574
        %v4611 = vmul.f32 %v4575, %v4575
        %v4612 = vmul.f32 %v4576, %v4576
        %v4613 = vmul.f32 %v4577, %v4577
        %v4614 = vmul.f32 %v4578, %v4578
        %v4615 = vadd.f32 %v4599, %v4600
        %v4616 = vadd.f32 %v4615, %v4601
        %v4617 = vadd.f32 %v4616, %v4602
        %4618 = vadd.xlane.f32.xlu0 %v4617
        %v4619 = vpop.xlane.xlu0 %4618
        %v4620 = vadd.f32 %v4603, %v4604
        %v4621 = vadd.f32 %v4620, %v4605
        %v4622 = vadd.f32 %v4621, %v4606
        %4623 = vadd.xlane.f32.xlu0 %v4622
        %v4624 = vpop.xlane.xlu0 %4623
        %v4625 = vadd.f32 %v4607, %v4608
        %v4626 = vadd.f32 %v4625, %v4609
        %v4627 = vadd.f32 %v4626, %v4610
        %4628 = vadd.xlane.f32.xlu0 %v4627
        %v4629 = vpop.xlane.xlu0 %4628
        %v4630 = vadd.f32 %v4611, %v4612
        %v4631 = vadd.f32 %v4630, %v4613
        %v4632 = vadd.f32 %v4631, %v4614
        %4633 = vadd.xlane.f32.xlu0 %v4632
        %v4634 = vpop.xlane.xlu0 %4633
        %p4635 = scmp.eq.s32.totalorder %s23, 0
        // Predicated region
        $region37: #{dsconv_forward.4} parent=35 // pred_check
          %p4636 = pneg %p4635
        $region38: #{dsconv_forward.4} parent=35 // pred_check_branch
          %4638 = sbr.rel (%p4636) target = $region40
        $region39: #{dsconv_forward.4} parent=35 // pred_region
          %vm4639 = vcmask 7168
          %4640 = vst.msk [vmem:[%s313] sm:$0xff] %vm4639, 0.0
          %4641 = vst.msk [vmem:[%s313 + $0x8] sm:$0xff] %vm4639, 0.0
          %4642 = vst.msk [vmem:[%s313 + $0x10] sm:$0xff] %vm4639, 0.0
          %4643 = vst.msk [vmem:[%s313 + $0x18] sm:$0xff] %vm4639, 0.0
          %4644 = vst.msk [vmem:[%s318] sm:$0xff] %vm4639, 0.0
          %4645 = vst.msk [vmem:[%s318 + $0x8] sm:$0xff] %vm4639, 0.0
          %4646 = vst.msk [vmem:[%s318 + $0x10] sm:$0xff] %vm4639, 0.0
          %4647 = vst.msk [vmem:[%s318 + $0x18] sm:$0xff] %vm4639, 0.0
        $region40: #{dsconv_forward.4} parent=35 // pred_fallthru
          _
        %v4648 = vld [vmem:[%s313] sm:$0xff]
        %v4649 = vld [vmem:[%s313 + $0x8] sm:$0xff]
        %v4650 = vld [vmem:[%s313 + $0x10] sm:$0xff]
        %v4651 = vld [vmem:[%s313 + $0x18] sm:$0xff]
        %v4652 = vadd.f32 %v4648, %v4583
        %v4653 = vadd.f32 %v4649, %v4588
        %v4654 = vadd.f32 %v4650, %v4593
        %v4655 = vadd.f32 %v4651, %v4598
        %vm4656 = vcmask 7168
        %4657 = vst.msk [vmem:[%s313] sm:$0xff] %vm4656, %v4652
        %4658 = vst.msk [vmem:[%s313 + $0x8] sm:$0xff] %vm4656, %v4653
        %4659 = vst.msk [vmem:[%s313 + $0x10] sm:$0xff] %vm4656, %v4654
        %4660 = vst.msk [vmem:[%s313 + $0x18] sm:$0xff] %vm4656, %v4655
        %v4661 = vld [vmem:[%s318] sm:$0xff]
        %v4662 = vld [vmem:[%s318 + $0x8] sm:$0xff]
        %v4663 = vld [vmem:[%s318 + $0x10] sm:$0xff]
        %v4664 = vld [vmem:[%s318 + $0x18] sm:$0xff]
        %v4665 = vadd.f32 %v4661, %v4619
        %v4666 = vadd.f32 %v4662, %v4624
        %v4667 = vadd.f32 %v4663, %v4629
        %v4668 = vadd.f32 %v4664, %v4634
        %4669 = vst.msk [vmem:[%s318] sm:$0xff] %vm4656, %v4665
        %4670 = vst.msk [vmem:[%s318 + $0x8] sm:$0xff] %vm4656, %v4666
        %4671 = vst.msk [vmem:[%s318 + $0x10] sm:$0xff] %vm4656, %v4667
        %4672 = vst.msk [vmem:[%s318 + $0x18] sm:$0xff] %vm4656, %v4668
        %s4673 = sand.u32 %s136, 1
        %s4674 = sand.u32 %s136, 1
        %s4675 = smul.addr %s4674, 128
        %s4676 = scalar_lea.vmem [#allocation2], %s4675
        %p4677 = scmp.lt.s32.totalorder %s22, 1
        %s4678 = scalar_select %p4677, %s22, 1
        %s4679 = smul.addr %s4678, 4
        %s4680 = smul.addr %s4679, 8
        %s4681 = scalar_lea.vmem %s5, %s4680
        %p4682 = scmp.lt.s32.totalorder %s22, 1
        %s4683 = scalar_select %p4682, %s22, 1
        %s4684 = smul.addr %s4683, 4
        %s4685 = smul.addr %s4684, 8
        %s4686 = scalar_lea.vmem %s6, %s4685
        // Predicated region
        $region41: #{dsconv_forward.4} parent=35 // pred_check
          %p4687 = pneg %p146
        $region42: #{dsconv_forward.4} parent=35 // pred_check_branch
          %4689 = sbr.rel (%p4687) target = $region44
        $region43: #{dsconv_forward.4} parent=35 // pred_region
          %s4690 = smul.u32 4, %s23
          %s4691 = smul.addr %s22, 32
          %s4692 = sadd.s32 %s4690, %s4691
          %s4693 = smul.addr %s4692, 8
          %s4694 = scalar_lea.vmem %s4, %s4693
          // Predicated region
          $region45: #{dsconv_forward.4} parent=43 // pred_check
            _
          $region46: #{dsconv_forward.4} parent=43 // pred_check_branch
            %4696 = sbr.rel (0) target = $region48
          $region47: #{dsconv_forward.4} parent=43 // pred_region
            // Predicated region
            $region49: #{dsconv_forward.4} parent=47 // pred_check
              _
            $region50: #{dsconv_forward.4} parent=47 // pred_check_branch
              %4698 = sbr.rel (0) target = $region52
            $region51: #{dsconv_forward.4} parent=47 // pred_region
              loop: start=0, step=1, limit=1
              $region53: #{dsconv_forward.4} parent=51 // loop_pre_header
                _
              $region54: #{dsconv_forward.4} parent=51 // loop_header
                %s4700 = sphi 0, %s4704
                %p4701 = scmp.ge.s32.totalorder %s4700, 1
                %s4705 = sphi %s4676, %s4676
                %s4706 = sphi %s4694, %s4694
              $region55: #{dsconv_forward.4} parent=51 // loop_header_branch
                %4703 = sbr.rel (%p4701) target = $region59
              $region56: #{dsconv_forward.4} parent=51 // loop_body
                %v4707 = vld [vmem:[%s4705] sm:$0xff]
                %4708 = vst [vmem:[%s4706] sm:$0xff] %v4707
                %v4709 = vld [vmem:[%s4705 + $0x8] sm:$0xff]
                %4710 = vst [vmem:[%s4706 + $0x8] sm:$0xff] %v4709
                %v4711 = vld [vmem:[%s4705 + $0x10] sm:$0xff]
                %4712 = vst [vmem:[%s4706 + $0x10] sm:$0xff] %v4711
                %v4713 = vld [vmem:[%s4705 + $0x18] sm:$0xff]
                %4714 = vst [vmem:[%s4706 + $0x18] sm:$0xff] %v4713
                %v4715 = vld [vmem:[%s4705 + $0x20] sm:$0xff]
                %4716 = vst [vmem:[%s4706 + $0x40] sm:$0xff] %v4715
                %v4717 = vld [vmem:[%s4705 + $0x28] sm:$0xff]
                %4718 = vst [vmem:[%s4706 + $0x48] sm:$0xff] %v4717
                %v4719 = vld [vmem:[%s4705 + $0x30] sm:$0xff]
                %4720 = vst [vmem:[%s4706 + $0x50] sm:$0xff] %v4719
                %v4721 = vld [vmem:[%s4705 + $0x38] sm:$0xff]
                %4722 = vst [vmem:[%s4706 + $0x58] sm:$0xff] %v4721
                %v4723 = vld [vmem:[%s4705 + $0x40] sm:$0xff]
                %4724 = vst [vmem:[%s4706 + $0x80] sm:$0xff] %v4723
                %v4725 = vld [vmem:[%s4705 + $0x48] sm:$0xff]
                %4726 = vst [vmem:[%s4706 + $0x88] sm:$0xff] %v4725
                %v4727 = vld [vmem:[%s4705 + $0x50] sm:$0xff]
                %4728 = vst [vmem:[%s4706 + $0x90] sm:$0xff] %v4727
                %v4729 = vld [vmem:[%s4705 + $0x58] sm:$0xff]
                %4730 = vst [vmem:[%s4706 + $0x98] sm:$0xff] %v4729
                %v4731 = vld [vmem:[%s4705 + $0x60] sm:$0xff]
                %4732 = vst [vmem:[%s4706 + $0xc0] sm:$0xff] %v4731
                %v4733 = vld [vmem:[%s4705 + $0x68] sm:$0xff]
                %4734 = vst [vmem:[%s4706 + $0xc8] sm:$0xff] %v4733
                %v4735 = vld [vmem:[%s4705 + $0x70] sm:$0xff]
                %4736 = vst [vmem:[%s4706 + $0xd0] sm:$0xff] %v4735
                %v4737 = vld [vmem:[%s4705 + $0x78] sm:$0xff]
                %4738 = vst [vmem:[%s4706 + $0xd8] sm:$0xff] %v4737
              $region57: #{dsconv_forward.4} parent=51 // loop_footer
                %s4704 = sadd.s32 1, %s4700
              $region58: #{dsconv_forward.4} parent=51 // loop_footer_branch
                %4699 = sbr.rel target = $region54
              $region59: #{dsconv_forward.4} parent=51 // loop_exit
                _
            $region52: #{dsconv_forward.4} parent=47 // pred_fallthru
              _
            // Predicated region
            $region60: #{dsconv_forward.4} parent=47 // pred_check
              _
            $region61: #{dsconv_forward.4} parent=47 // pred_check_branch
              %4740 = sbr.rel target = $region63
            $region62: #{dsconv_forward.4} parent=47 // pred_region
              _
            $region63: #{dsconv_forward.4} parent=47 // pred_fallthru
              _
          $region48: #{dsconv_forward.4} parent=43 // pred_fallthru
            _
          %4741 = vnop
        $region44: #{dsconv_forward.4} parent=35 // pred_fallthru
          _
        // Predicated region
        $region64: #{dsconv_forward.4} parent=35 // pred_check
          %p4742 = pneg %p172
        $region65: #{dsconv_forward.4} parent=35 // pred_check_branch
          %4744 = sbr.rel (%p4742) target = $region67
        $region66: #{dsconv_forward.4} parent=35 // pred_region
          _
        $region67: #{dsconv_forward.4} parent=35 // pred_fallthru
          _
        // Predicated region
        $region68: #{dsconv_forward.4} parent=35 // pred_check
          %p4745 = pneg %p198
        $region69: #{dsconv_forward.4} parent=35 // pred_check_branch
          %4747 = sbr.rel (%p4745) target = $region71
        $region70: #{dsconv_forward.4} parent=35 // pred_region
          _
        $region71: #{dsconv_forward.4} parent=35 // pred_fallthru
          _
      $region36: #{dsconv_forward.4} parent=5 // pred_fallthru
        _
      %p4748 = scmp.le.s32.totalorder 2, %s13
      // Predicated region
      $region72: #{dsconv_forward.4} parent=5 // pred_check
        %p4749 = pneg %p4748
      $region73: #{dsconv_forward.4} parent=5 // pred_check_branch
        %4751 = sbr.rel (%p4749) target = $region75
      $region74: #{dsconv_forward.4} parent=5 // pred_region
        %s4752 = ssub.s32 %s13, 2
        // Predicated region
        $region76: #{dsconv_forward.4} parent=74 // pred_check
          %p4753 = pneg %p152
        $region77: #{dsconv_forward.4} parent=74 // pred_check_branch
          %4755 = sbr.rel (%p4753) target = $region79
        $region78: #{dsconv_forward.4} parent=74 // pred_region
          %s4756 = sand.u32 %s137, 1
          %s4757 = sand.u32 %s137, 1
          %s4758 = smul.addr %s4757, 128
          %s4759 = scalar_lea.vmem [#allocation2], %s4758
        $region79: #{dsconv_forward.4} parent=74 // pred_fallthru
          _
        // Predicated region
        $region80: #{dsconv_forward.4} parent=74 // pred_check
          %p4760 = pneg %p178
        $region81: #{dsconv_forward.4} parent=74 // pred_check_branch
          %4762 = sbr.rel (%p4760) target = $region83
        $region82: #{dsconv_forward.4} parent=74 // pred_region
          %p4763 = scmp.lt.s32.totalorder %s24, 1
          %s4764 = scalar_select %p4763, %s24, 1
          %s4765 = smul.addr %s4764, 4
          %s4766 = smul.addr %s4765, 8
          %s4767 = scalar_lea.vmem %s5, %s4766
        $region83: #{dsconv_forward.4} parent=74 // pred_fallthru
          _
        // Predicated region
        $region84: #{dsconv_forward.4} parent=74 // pred_check
          %p4768 = pneg %p204
        $region85: #{dsconv_forward.4} parent=74 // pred_check_branch
          %4770 = sbr.rel (%p4768) target = $region87
        $region86: #{dsconv_forward.4} parent=74 // pred_region
          %p4771 = scmp.lt.s32.totalorder %s24, 1
          %s4772 = scalar_select %p4771, %s24, 1
          %s4773 = smul.addr %s4772, 4
          %s4774 = smul.addr %s4773, 8
          %s4775 = scalar_lea.vmem %s6, %s4774
        $region87: #{dsconv_forward.4} parent=74 // pred_fallthru
          _
      $region75: #{dsconv_forward.4} parent=5 // pred_fallthru
        _
    $region6: #{dsconv_forward.4} parent=1 // loop_footer
      %s17 = sadd.s32 1, %s13
    $region7: #{dsconv_forward.4} parent=1 // loop_footer_branch
      %12 = sbr.rel target = $region3
    $region8: #{dsconv_forward.4} parent=1 // loop_exit
      _

// kernel: dsconv_forward.7
$region0: #{dsconv_forward.7}
  #allocation0 [shape = 'u32[]', space=smem, size = 0x4, offset = 0x4, fixed_abs, tag = 'smem constant byte address 0x4 - core index']
  #allocation1 [shape = 'u32[72,128]{1,0:T(1,128)}', space=vmem, size = 0x9000, scoped, tag = 'internal scratch']
  %s0 = inlined_call_operand.vmem [shape: f32[2,8,1024], index: 0, kind: input, shape index: {}]
  %s1 = inlined_call_operand.vmem [shape: f32[2,8,1], index: 1, kind: input, shape index: {}]
  %s2 = inlined_call_operand.vmem [shape: f32[2,8,1], index: 2, kind: input, shape index: {}]
  %s3 = inlined_call_operand.vmem [shape: f32[2,8,1024], index: 3, kind: output, shape index: {}]
  %s4 = sld [smem:[#allocation0]]
  $region45: #{dsconv_forward.7} parent=0
    _
  %s6 = ssub.s32 1, %s4
  %s7 = scalar_select 0, %s6, %s4
  loop: start=0, step=1, limit=6
  $region2: #{dsconv_forward.7} parent=0 // loop_pre_header
    _
  $region3: #{dsconv_forward.7} parent=0 // loop_header
    %s9 = sphi 0, %s13
    %p10 = scmp.ge.s32.totalorder %s9, 6
    %s16 = sphi 0, %s28
    %s17 = sphi 0, %s24
    %s18 = sphi 0, %s16
    %s19 = sphi 0, %s17
    %s20 = sphi 0, %s18
    %s21 = sphi 0, %s19
    %s33 = sphi 0, %s35
    %s36 = sphi 0, %s33
    %s37 = sphi 0, %s36
    %s53 = sphi 0, %s37
    %s59 = sphi 0, %s61
    %s62 = sphi 0, %s59
    %s63 = sphi 0, %s62
    %s79 = sphi 0, %s63
    %s85 = sphi 0, %s87
    %s88 = sphi 0, %s85
    %s89 = sphi 0, %s88
    %s105 = sphi 0, %s89
    %s113 = sphi 0, %s115
    %s116 = sphi 0, %s113
    %s117 = sphi 0, %s116
    %s133 = sphi 0, %s117
  $region4: #{dsconv_forward.7} parent=0 // loop_header_branch
    %12 = sbr.rel (%p10) target = $region8
  $region5: #{dsconv_forward.7} parent=0 // loop_body
    %s14 = ssub.s32 %s9, 1
    %s15 = ssub.s32 %s9, 2
    %s22 = sadd.s32 1, %s17
    %p23 = scmp.ge.s32.totalorder %s22, 2
    %s24 = scalar_select %p23, 0, %s22
    %s25 = sadd.s32 1, %s16
    %s26 = scalar_select %p23, %s25, %s16
    %p27 = scmp.ge.s32.totalorder %s26, 2
    %s28 = scalar_select %p27, 0, %s26
    %s29 = ssub.s32 %s16, %s28
    %s30 = ssub.s32 %s17, %s24
    %s31 = sor.u32 %s29, %s30
    %p32 = scmp.eq.s32.totalorder %s31, 0
    %s34 = sadd.s32 %s33, 1
    %s35 = scalar_select %p32, %s33, %s34
    %p38 = pneg %p32
    %p39 = scmp.eq.s32.totalorder %s9, 3
    %p40 = por %p38, %p39
    %p41 = scmp.ne.s32.totalorder %s33, %s36
    %p42 = scmp.eq.s32.totalorder %s9, 0
    %p43 = por %p41, %p42
    %p44 = scmp.ne.s32.totalorder %s33, %s36
    %p45 = scmp.eq.s32.totalorder %s14, 3
    %p46 = por %p44, %p45
    %p47 = scmp.ne.s32.totalorder %s36, %s37
    %p48 = scmp.eq.s32.totalorder %s14, 0
    %p49 = por %p47, %p48
    %p50 = scmp.ne.s32.totalorder %s36, %s37
    %p51 = scmp.eq.s32.totalorder %s15, 3
    %p52 = por %p50, %p51
    %p54 = scmp.ne.s32.totalorder %s37, %s53
    %p55 = scmp.eq.s32.totalorder %s15, 0
    %p56 = por %p54, %p55
    %s57 = ssub.s32 %s16, %s28
    %p58 = scmp.eq.s32.totalorder %s57, 0
    %s60 = sadd.s32 %s59, 1
    %s61 = scalar_select %p58, %s59, %s60
    %p64 = pneg %p58
    %p65 = scmp.eq.s32.totalorder %s9, 3
    %p66 = por %p64, %p65
    %p67 = scmp.ne.s32.totalorder %s59, %s62
    %p68 = scmp.eq.s32.totalorder %s9, 0
    %p69 = por %p67, %p68
    %p70 = scmp.ne.s32.totalorder %s59, %s62
    %p71 = scmp.eq.s32.totalorder %s14, 3
    %p72 = por %p70, %p71
    %p73 = scmp.ne.s32.totalorder %s62, %s63
    %p74 = scmp.eq.s32.totalorder %s14, 0
    %p75 = por %p73, %p74
    %p76 = scmp.ne.s32.totalorder %s62, %s63
    %p77 = scmp.eq.s32.totalorder %s15, 3
    %p78 = por %p76, %p77
    %p80 = scmp.ne.s32.totalorder %s63, %s79
    %p81 = scmp.eq.s32.totalorder %s15, 0
    %p82 = por %p80, %p81
    %s83 = ssub.s32 %s16, %s28
    %p84 = scmp.eq.s32.totalorder %s83, 0
    %s86 = sadd.s32 %s85, 1
    %s87 = scalar_select %p84, %s85, %s86
    %p90 = pneg %p84
    %p91 = scmp.eq.s32.totalorder %s9, 3
    %p92 = por %p90, %p91
    %p93 = scmp.ne.s32.totalorder %s85, %s88
    %p94 = scmp.eq.s32.totalorder %s9, 0
    %p95 = por %p93, %p94
    %p96 = scmp.ne.s32.totalorder %s85, %s88
    %p97 = scmp.eq.s32.totalorder %s14, 3
    %p98 = por %p96, %p97
    %p99 = scmp.ne.s32.totalorder %s88, %s89
    %p100 = scmp.eq.s32.totalorder %s14, 0
    %p101 = por %p99, %p100
    %p102 = scmp.ne.s32.totalorder %s88, %s89
    %p103 = scmp.eq.s32.totalorder %s15, 3
    %p104 = por %p102, %p103
    %p106 = scmp.ne.s32.totalorder %s89, %s105
    %p107 = scmp.eq.s32.totalorder %s15, 0
    %p108 = por %p106, %p107
    %s109 = ssub.s32 %s16, %s28
    %s110 = ssub.s32 %s17, %s24
    %s111 = sor.u32 %s109, %s110
    %p112 = scmp.eq.s32.totalorder %s111, 0
    %s114 = sadd.s32 %s113, 1
    %s115 = scalar_select %p112, %s113, %s114
    %p118 = pneg %p112
    %p119 = scmp.eq.s32.totalorder %s9, 3
    %p120 = por %p118, %p119
    %p121 = scmp.ne.s32.totalorder %s113, %s116
    %p122 = scmp.eq.s32.totalorder %s9, 0
    %p123 = por %p121, %p122
    %p124 = scmp.ne.s32.totalorder %s113, %s116
    %p125 = scmp.eq.s32.totalorder %s14, 3
    %p126 = por %p124, %p125
    %p127 = scmp.ne.s32.totalorder %s116, %s117
    %p128 = scmp.eq.s32.totalorder %s14, 0
    %p129 = por %p127, %p128
    %p130 = scmp.ne.s32.totalorder %s116, %s117
    %p131 = scmp.eq.s32.totalorder %s15, 3
    %p132 = por %p130, %p131
    %p134 = scmp.ne.s32.totalorder %s117, %s133
    %p135 = scmp.eq.s32.totalorder %s15, 0
    %p136 = por %p134, %p135
    %p137 = scmp.le.s32.totalorder 1, %s9
    %p138 = scmp.lt.s32.totalorder %s9, 5
    %p139 = pnand %p137, %p138
    %p140 = pneg %p139
    // Predicated region
    $region9: #{dsconv_forward.7} parent=5 // pred_check
      _
    $region10: #{dsconv_forward.7} parent=5 // pred_check_branch
      %142 = sbr.rel (%p139) target = $region12
    $region11: #{dsconv_forward.7} parent=5 // pred_region
      %s143 = ssub.s32 %s9, 1
    $region12: #{dsconv_forward.7} parent=5 // pred_fallthru
      _
    %p144 = scmp.lt.s32.totalorder %s9, 4
    // Predicated region
    $region13: #{dsconv_forward.7} parent=5 // pred_check
      %p145 = pneg %p144
    $region14: #{dsconv_forward.7} parent=5 // pred_check_branch
      %147 = sbr.rel (%p145) target = $region16
    $region15: #{dsconv_forward.7} parent=5 // pred_region
      // Predicated region
      $region17: #{dsconv_forward.7} parent=15 // pred_check
        %p148 = pneg %p43
      $region18: #{dsconv_forward.7} parent=15 // pred_check_branch
        %150 = sbr.rel (%p148) target = $region20
      $region19: #{dsconv_forward.7} parent=15 // pred_region
        %s151 = smul.u32 4, %s17
        %p152 = scmp.lt.s32.totalorder %s16, 1
        %s153 = scalar_select %p152, %s16, 1
        %p154 = scmp.lt.s32.totalorder %s151, 7
        %s155 = scalar_select %p154, %s151, 7
        %s156 = smul.addr %s153, 8
        %s157 = sadd.s32 %s155, %s156
        %s158 = smul.addr %s157, 8
        %s159 = scalar_lea.vmem %s0, %s158
        %s160 = smul.u32 4, %s17
      $region20: #{dsconv_forward.7} parent=15 // pred_fallthru
        _
      // Predicated region
      $region21: #{dsconv_forward.7} parent=15 // pred_check
        %p161 = pneg %p69
      $region22: #{dsconv_forward.7} parent=15 // pred_check_branch
        %163 = sbr.rel (%p161) target = $region24
      $region23: #{dsconv_forward.7} parent=15 // pred_region
        %p164 = scmp.lt.s32.totalorder %s16, 1
        %s165 = scalar_select %p164, %s16, 1
        %s166 = smul.addr %s165, 8
        %s167 = scalar_lea.vmem %s1, %s166
      $region24: #{dsconv_forward.7} parent=15 // pred_fallthru
        _
      // Predicated region
      $region25: #{dsconv_forward.7} parent=15 // pred_check
        %p168 = pneg %p95
      $region26: #{dsconv_forward.7} parent=15 // pred_check_branch
        %170 = sbr.rel (%p168) target = $region28
      $region27: #{dsconv_forward.7} parent=15 // pred_region
        %p171 = scmp.lt.s32.totalorder %s16, 1
        %s172 = scalar_select %p171, %s16, 1
        %s173 = smul.addr %s172, 8
        %s174 = scalar_lea.vmem %s2, %s173
      $region28: #{dsconv_forward.7} parent=15 // pred_fallthru
        _
    $region16: #{dsconv_forward.7} parent=5 // pred_fallthru
      _
    %p175 = scmp.le.s32.totalorder 1, %s9
    %p176 = scmp.lt.s32.totalorder %s9, 5
    %p177 = pnand %p175, %p176
    %p178 = pneg %p177
    // Predicated region
    $region29: #{dsconv_forward.7} parent=5 // pred_check
      _
    $region30: #{dsconv_forward.7} parent=5 // pred_check_branch
      %180 = sbr.rel (%p177) target = $region32
    $region31: #{dsconv_forward.7} parent=5 // pred_region
      %s181 = ssub.s32 %s9, 1
      %s182 = smul.u32 4, %s19
      %p183 = scmp.lt.s32.totalorder %s18, 1
      %s184 = scalar_select %p183, %s18, 1
      %p185 = scmp.lt.s32.totalorder %s182, 7
      %s186 = scalar_select %p185, %s182, 7
      %s187 = smul.addr %s184, 8
      %s188 = sadd.s32 %s186, %s187
      %s189 = smul.addr %s188, 8
      %s190 = scalar_lea.vmem %s0, %s189
      %p191 = pneg %p49
      %p192 = pneg %p46
      %p193 = scmp.lt.s32.totalorder %s18, 1
      %s194 = scalar_select %p193, %s18, 1
      %s195 = smul.addr %s194, 8
      %s196 = scalar_lea.vmem %s1, %s195
      %p197 = pneg %p75
      %p198 = pneg %p72
      %p199 = scmp.lt.s32.totalorder %s18, 1
      %s200 = scalar_select %p199, %s18, 1
      %s201 = smul.addr %s200, 8
      %s202 = scalar_lea.vmem %s2, %s201
      %p203 = pneg %p101
      %p204 = pneg %p98
      %p205 = pneg %p129
      %p206 = pneg %p126
      %s207 = smul.u32 4, %s19
      %p208 = scmp.lt.s32.totalorder %s18, 1
      %s209 = scalar_select %p208, %s18, 1
      %p210 = scmp.lt.s32.totalorder %s207, 7
      %s211 = scalar_select %p210, %s207, 7
      %s212 = smul.addr %s209, 8
      %s213 = sadd.s32 %s211, %s212
      %s214 = smul.addr %s213, 8
      %s215 = scalar_lea.vmem %s3, %s214
      %s216 = smul.u32 4, %s19
      %p217 = scmp.lt.s32.totalorder %s18, 1
      %s218 = scalar_select %p217, %s18, 1
      %p219 = scmp.lt.s32.totalorder %s216, 7
      %s220 = scalar_select %p219, %s216, 7
      %s221 = smul.addr %s218, 8
      %s222 = sadd.s32 %s220, %s221
      %s223 = smul.addr %s222, 8
      %s224 = scalar_lea.vmem %s0, %s223
      %s225 = smul.u32 4, %s19
      %p226 = scmp.lt.s32.totalorder %s18, 1
      %s227 = scalar_select %p226, %s18, 1
      %s228 = smul.addr %s227, 8
      %s229 = scalar_lea.vmem %s1, %s228
      %p230 = scmp.lt.s32.totalorder %s18, 1
      %s231 = scalar_select %p230, %s18, 1
      %s232 = smul.addr %s231, 8
      %s233 = scalar_lea.vmem %s2, %s232
      %s234 = smul.u32 4, %s19
      %p235 = scmp.lt.s32.totalorder %s18, 1
      %s236 = scalar_select %p235, %s18, 1
      %p237 = scmp.lt.s32.totalorder %s234, 7
      %s238 = scalar_select %p237, %s234, 7
      %s239 = smul.addr %s236, 8
      %s240 = sadd.s32 %s238, %s239
      %s241 = smul.addr %s240, 8
      %s242 = scalar_lea.vmem %s3, %s241
      %s243 = smul.u32 4, %s19
      %v244 = vld [vmem:[%s224] sm:$0xff]
      %v245 = vld [vmem:[%s224 + $0x8] sm:$0xff]
      %v246 = vld [vmem:[%s224 + $0x10] sm:$0xff]
      %v247 = vld [vmem:[%s224 + $0x18] sm:$0xff]
      %v248 = vld [vmem:[%s229] sm:$0xff]
      %250 = vset.pattern.permute.xlu0 0
      %251 = vperm.xlu0 %250, %v248
      %v252 = vpop.permute.xlu0 %251
      %v254 = vmul.f32 %v244, %v252
      %v255 = vmul.f32 %v245, %v252
      %v256 = vmul.f32 %v246, %v252
      %v257 = vmul.f32 %v247, %v252
      %v258 = vld [vmem:[%s233] sm:$0xff]
      %260 = vset.pattern.permute.xlu0 0
      %261 = vperm.xlu0 %260, %v258
      %v262 = vpop.permute.xlu0 %261
      %v264 = vadd.f32 %v254, %v262
      %v265 = vadd.f32 %v255, %v262
      %v266 = vadd.f32 %v256, %v262
      %v267 = vadd.f32 %v257, %v262
      %v268 = vmax.f32 %v264, 0.0
      %v269 = vmax.f32 %v265, 0.0
      %v270 = vmax.f32 %v266, 0.0
      %v271 = vmax.f32 %v267, 0.0
      %272 = vst [vmem:[%s242] sm:$0xff] %v268
      %273 = vst [vmem:[%s242 + $0x8] sm:$0xff] %v269
      %274 = vst [vmem:[%s242 + $0x10] sm:$0xff] %v270
      %275 = vst [vmem:[%s242 + $0x18] sm:$0xff] %v271
      %s276 = smul.u32 4, %s19
      %p277 = scmp.lt.s32.totalorder %s18, 1
      %s278 = scalar_select %p277, %s18, 1
      %p279 = scmp.lt.s32.totalorder %s276, 7
      %s280 = scalar_select %p279, %s276, 7
      %s281 = smul.addr %s278, 8
      %s282 = sadd.s32 %s280, %s281
      %s283 = smul.addr %s282, 8
      %s284 = scalar_lea.vmem %s3, %s283
      // Predicated region
      $region33: #{dsconv_forward.7} parent=31 // pred_check
        %p285 = pneg %p126
      $region34: #{dsconv_forward.7} parent=31 // pred_check_branch
        %287 = sbr.rel (%p285) target = $region36
      $region35: #{dsconv_forward.7} parent=31 // pred_region
        %s288 = smul.u32 4, %s19
      $region36: #{dsconv_forward.7} parent=31 // pred_fallthru
        _
    $region32: #{dsconv_forward.7} parent=5 // pred_fallthru
      _
    %p289 = scmp.le.s32.totalorder 2, %s9
    // Predicated region
    $region37: #{dsconv_forward.7} parent=5 // pred_check
      %p290 = pneg %p289
    $region38: #{dsconv_forward.7} parent=5 // pred_check_branch
      %292 = sbr.rel (%p290) target = $region40
    $region39: #{dsconv_forward.7} parent=5 // pred_region
      %s293 = ssub.s32 %s9, 2
      // Predicated region
      $region41: #{dsconv_forward.7} parent=39 // pred_check
        %p294 = pneg %p132
      $region42: #{dsconv_forward.7} parent=39 // pred_check_branch
        %296 = sbr.rel (%p294) target = $region44
      $region43: #{dsconv_forward.7} parent=39 // pred_region
        %s297 = smul.u32 4, %s21
        %p298 = scmp.lt.s32.totalorder %s20, 1
        %s299 = scalar_select %p298, %s20, 1
        %p300 = scmp.lt.s32.totalorder %s297, 7
        %s301 = scalar_select %p300, %s297, 7
        %s302 = smul.addr %s299, 8
        %s303 = sadd.s32 %s301, %s302
        %s304 = smul.addr %s303, 8
        %s305 = scalar_lea.vmem %s3, %s304
      $region44: #{dsconv_forward.7} parent=39 // pred_fallthru
        _
    $region40: #{dsconv_forward.7} parent=5 // pred_fallthru
      _
  $region6: #{dsconv_forward.7} parent=0 // loop_footer
    %s13 = sadd.s32 1, %s9
  $region7: #{dsconv_forward.7} parent=0 // loop_footer_branch
    %8 = sbr.rel target = $region3
  $region8: #{dsconv_forward.7} parent=0 // loop_exit
    _

// kernel: dsconv_forward.6
$region0: #{dsconv_forward.6}
  #allocation0 [shape = 'u32[]', space=smem, size = 0x4, offset = 0x4, fixed_abs, tag = 'smem constant byte address 0x4 - core index']
  #allocation1 [shape = 'u32[72,128]{1,0:T(1,128)}', space=vmem, size = 0x9000, scoped, tag = 'internal scratch']
  #allocation2 [shape = 'bf16[864,512]{1,0:T(8,128)(2,1)}', space=vmem, size = 0xd8000, scoped, tag = 'scratch operand']
  %s0 = inlined_call_operand.vmem [shape: bf16[2,2,32,768], index: 0, kind: input, shape index: {}]
  %s1 = inlined_call_operand.vmem [shape: bf16[8,864], index: 1, kind: input, shape index: {}]
  %s2 = inlined_call_operand.vmem [shape: f32[8,1], index: 2, kind: input, shape index: {}]
  %s3 = inlined_call_operand.vmem [shape: f32[1,1024], index: 3, kind: input, shape index: {}]
  %s4 = inlined_call_operand.vmem [shape: f32[2,8,1024], index: 4, kind: output, shape index: {0}]
  %s5 = inlined_call_operand.vmem [shape: f32[2,8,1], index: 5, kind: output, shape index: {1}]
  %s6 = inlined_call_operand.vmem [shape: f32[2,8,1], index: 6, kind: output, shape index: {2}]
  %7 = xla_tuple %s4, %s5, %s6
  %s8 = sld [smem:[#allocation0]]
  $region69: #{dsconv_forward.6} parent=0
    _
  %s10 = ssub.s32 1, %s8
  %s11 = scalar_select 0, %s10, %s8
  loop: start=0, step=1, limit=6
  $region2: #{dsconv_forward.6} parent=0 // loop_pre_header
    _
  $region3: #{dsconv_forward.6} parent=0 // loop_header
    %s13 = sphi 0, %s17
    %p14 = scmp.ge.s32.totalorder %s13, 6
    %s20 = sphi 0, %s32
    %s21 = sphi 0, %s28
    %s22 = sphi 0, %s20
    %s23 = sphi 0, %s21
    %s24 = sphi 0, %s22
    %s25 = sphi 0, %s23
    %s37 = sphi 0, %s39
    %s40 = sphi 0, %s37
    %s41 = sphi 0, %s40
    %s57 = sphi 0, %s41
    %s61 = sphi 0, %s61
    %s63 = sphi 0, %s61
    %s64 = sphi 0, %s63
    %s78 = sphi 0, %s64
    %s82 = sphi 0, %s82
    %s84 = sphi 0, %s82
    %s85 = sphi 0, %s84
    %s99 = sphi 0, %s85
    %s105 = sphi 0, %s107
    %s108 = sphi 0, %s105
    %s109 = sphi 0, %s108
    %s125 = sphi 0, %s109
    %s133 = sphi 0, %s135
    %s136 = sphi 0, %s133
    %s137 = sphi 0, %s136
    %s153 = sphi 0, %s137
    %s159 = sphi 0, %s161
    %s162 = sphi 0, %s159
    %s163 = sphi 0, %s162
    %s179 = sphi 0, %s163
    %s185 = sphi 0, %s187
    %s188 = sphi 0, %s185
    %s189 = sphi 0, %s188
    %s205 = sphi 0, %s189
  $region4: #{dsconv_forward.6} parent=0 // loop_header_branch
    %16 = sbr.rel (%p14) target = $region8
  $region5: #{dsconv_forward.6} parent=0 // loop_body
    %s18 = ssub.s32 %s13, 1
    %s19 = ssub.s32 %s13, 2
    %s26 = sadd.s32 1, %s21
    %p27 = scmp.ge.s32.totalorder %s26, 2
    %s28 = scalar_select %p27, 0, %s26
    %s29 = sadd.s32 1, %s20
    %s30 = scalar_select %p27, %s29, %s20
    %p31 = scmp.ge.s32.totalorder %s30, 2
    %s32 = scalar_select %p31, 0, %s30
    %s33 = ssub.s32 %s20, %s32
    %s34 = ssub.s32 %s21, %s28
    %s35 = sor.u32 %s33, %s34
    %p36 = scmp.eq.s32.totalorder %s35, 0
    %s38 = sadd.s32 %s37, 1
    %s39 = scalar_select %p36, %s37, %s38
    %p42 = pneg %p36
    %p43 = scmp.eq.s32.totalorder %s13, 3
    %p44 = por %p42, %p43
    %p45 = scmp.ne.s32.totalorder %s37, %s40
    %p46 = scmp.eq.s32.totalorder %s13, 0
    %p47 = por %p45, %p46
    %p48 = scmp.ne.s32.totalorder %s37, %s40
    %p49 = scmp.eq.s32.totalorder %s18, 3
    %p50 = por %p48, %p49
    %p51 = scmp.ne.s32.totalorder %s40, %s41
    %p52 = scmp.eq.s32.totalorder %s18, 0
    %p53 = por %p51, %p52
    %p54 = scmp.ne.s32.totalorder %s40, %s41
    %p55 = scmp.eq.s32.totalorder %s19, 3
    %p56 = por %p54, %p55
    %p58 = scmp.ne.s32.totalorder %s41, %s57
    %p59 = scmp.eq.s32.totalorder %s19, 0
    %p60 = por %p58, %p59
    %s62 = sadd.s32 %s61, 1
    %p65 = scmp.eq.s32.totalorder %s13, 3
    %p66 = scmp.ne.s32.totalorder %s61, %s63
    %p67 = scmp.eq.s32.totalorder %s13, 0
    %p68 = por %p66, %p67
    %p69 = scmp.ne.s32.totalorder %s61, %s63
    %p70 = scmp.eq.s32.totalorder %s18, 3
    %p71 = por %p69, %p70
    %p72 = scmp.ne.s32.totalorder %s63, %s64
    %p73 = scmp.eq.s32.totalorder %s18, 0
    %p74 = por %p72, %p73
    %p75 = scmp.ne.s32.totalorder %s63, %s64
    %p76 = scmp.eq.s32.totalorder %s19, 3
    %p77 = por %p75, %p76
    %p79 = scmp.ne.s32.totalorder %s64, %s78
    %p80 = scmp.eq.s32.totalorder %s19, 0
    %p81 = por %p79, %p80
    %s83 = sadd.s32 %s82, 1
    %p86 = scmp.eq.s32.totalorder %s13, 3
    %p87 = scmp.ne.s32.totalorder %s82, %s84
    %p88 = scmp.eq.s32.totalorder %s13, 0
    %p89 = por %p87, %p88
    %p90 = scmp.ne.s32.totalorder %s82, %s84
    %p91 = scmp.eq.s32.totalorder %s18, 3
    %p92 = por %p90, %p91
    %p93 = scmp.ne.s32.totalorder %s84, %s85
    %p94 = scmp.eq.s32.totalorder %s18, 0
    %p95 = por %p93, %p94
    %p96 = scmp.ne.s32.totalorder %s84, %s85
    %p97 = scmp.eq.s32.totalorder %s19, 3
    %p98 = por %p96, %p97
    %p100 = scmp.ne.s32.totalorder %s85, %s99
    %p101 = scmp.eq.s32.totalorder %s19, 0
    %p102 = por %p100, %p101
    %s103 = ssub.s32 %s21, %s28
    %p104 = scmp.eq.s32.totalorder %s103, 0
    %s106 = sadd.s32 %s105, 1
    %s107 = scalar_select %p104, %s105, %s106
    %p110 = pneg %p104
    %p111 = scmp.eq.s32.totalorder %s13, 3
    %p112 = por %p110, %p111
    %p113 = scmp.ne.s32.totalorder %s105, %s108
    %p114 = scmp.eq.s32.totalorder %s13, 0
    %p115 = por %p113, %p114
    %p116 = scmp.ne.s32.totalorder %s105, %s108
    %p117 = scmp.eq.s32.totalorder %s18, 3
    %p118 = por %p116, %p117
    %p119 = scmp.ne.s32.totalorder %s108, %s109
    %p120 = scmp.eq.s32.totalorder %s18, 0
    %p121 = por %p119, %p120
    %p122 = scmp.ne.s32.totalorder %s108, %s109
    %p123 = scmp.eq.s32.totalorder %s19, 3
    %p124 = por %p122, %p123
    %p126 = scmp.ne.s32.totalorder %s109, %s125
    %p127 = scmp.eq.s32.totalorder %s19, 0
    %p128 = por %p126, %p127
    %s129 = ssub.s32 %s20, %s32
    %s130 = ssub.s32 %s21, %s28
    %s131 = sor.u32 %s129, %s130
    %p132 = scmp.eq.s32.totalorder %s131, 0
    %s134 = sadd.s32 %s133, 1
    %s135 = scalar_select %p132, %s133, %s134
    %p138 = pneg %p132
    %p139 = scmp.eq.s32.totalorder %s13, 3
    %p140 = por %p138, %p139
    %p141 = scmp.ne.s32.totalorder %s133, %s136
    %p142 = scmp.eq.s32.totalorder %s13, 0
    %p143 = por %p141, %p142
    %p144 = scmp.ne.s32.totalorder %s133, %s136
    %p145 = scmp.eq.s32.totalorder %s18, 3
    %p146 = por %p144, %p145
    %p147 = scmp.ne.s32.totalorder %s136, %s137
    %p148 = scmp.eq.s32.totalorder %s18, 0
    %p149 = por %p147, %p148
    %p150 = scmp.ne.s32.totalorder %s136, %s137
    %p151 = scmp.eq.s32.totalorder %s19, 3
    %p152 = por %p150, %p151
    %p154 = scmp.ne.s32.totalorder %s137, %s153
    %p155 = scmp.eq.s32.totalorder %s19, 0
    %p156 = por %p154, %p155
    %s157 = ssub.s32 %s20, %s32
    %p158 = scmp.eq.s32.totalorder %s157, 0
    %s160 = sadd.s32 %s159, 1
    %s161 = scalar_select %p158, %s159, %s160
    %p164 = pneg %p158
    %p165 = scmp.eq.s32.totalorder %s13, 3
    %p166 = por %p164, %p165
    %p167 = scmp.ne.s32.totalorder %s159, %s162
    %p168 = scmp.eq.s32.totalorder %s13, 0
    %p169 = por %p167, %p168
    %p170 = scmp.ne.s32.totalorder %s159, %s162
    %p171 = scmp.eq.s32.totalorder %s18, 3
    %p172 = por %p170, %p171
    %p173 = scmp.ne.s32.totalorder %s162, %s163
    %p174 = scmp.eq.s32.totalorder %s18, 0
    %p175 = por %p173, %p174
    %p176 = scmp.ne.s32.totalorder %s162, %s163
    %p177 = scmp.eq.s32.totalorder %s19, 3
    %p178 = por %p176, %p177
    %p180 = scmp.ne.s32.totalorder %s163, %s179
    %p181 = scmp.eq.s32.totalorder %s19, 0
    %p182 = por %p180, %p181
    %s183 = ssub.s32 %s20, %s32
    %p184 = scmp.eq.s32.totalorder %s183, 0
    %s186 = sadd.s32 %s185, 1
    %s187 = scalar_select %p184, %s185, %s186
    %p190 = pneg %p184
    %p191 = scmp.eq.s32.totalorder %s13, 3
    %p192 = por %p190, %p191
    %p193 = scmp.ne.s32.totalorder %s185, %s188
    %p194 = scmp.eq.s32.totalorder %s13, 0
    %p195 = por %p193, %p194
    %p196 = scmp.ne.s32.totalorder %s185, %s188
    %p197 = scmp.eq.s32.totalorder %s18, 3
    %p198 = por %p196, %p197
    %p199 = scmp.ne.s32.totalorder %s188, %s189
    %p200 = scmp.eq.s32.totalorder %s18, 0
    %p201 = por %p199, %p200
    %p202 = scmp.ne.s32.totalorder %s188, %s189
    %p203 = scmp.eq.s32.totalorder %s19, 3
    %p204 = por %p202, %p203
    %p206 = scmp.ne.s32.totalorder %s189, %s205
    %p207 = scmp.eq.s32.totalorder %s19, 0
    %p208 = por %p206, %p207
    %p209 = scmp.le.s32.totalorder 1, %s13
    %p210 = scmp.lt.s32.totalorder %s13, 5
    %p211 = pnand %p209, %p210
    %p212 = pneg %p211
    // Predicated region
    $region9: #{dsconv_forward.6} parent=5 // pred_check
      _
    $region10: #{dsconv_forward.6} parent=5 // pred_check_branch
      %214 = sbr.rel (%p211) target = $region12
    $region11: #{dsconv_forward.6} parent=5 // pred_region
      %s215 = ssub.s32 %s13, 1
      // Predicated region
      $region13: #{dsconv_forward.6} parent=11 // pred_check
        %p216 = pneg %p74
      $region14: #{dsconv_forward.6} parent=11 // pred_check_branch
        %218 = sbr.rel (%p216) target = $region16
      $region15: #{dsconv_forward.6} parent=11 // pred_region
        _
      $region16: #{dsconv_forward.6} parent=11 // pred_fallthru
        _
      // Predicated region
      $region17: #{dsconv_forward.6} parent=11 // pred_check
        %p219 = pneg %p95
      $region18: #{dsconv_forward.6} parent=11 // pred_check_branch
        %221 = sbr.rel (%p219) target = $region20
      $region19: #{dsconv_forward.6} parent=11 // pred_region
        _
      $region20: #{dsconv_forward.6} parent=11 // pred_fallthru
        _
    $region12: #{dsconv_forward.6} parent=5 // pred_fallthru
      _
    %p222 = scmp.lt.s32.totalorder %s13, 4
    // Predicated region
    $region21: #{dsconv_forward.6} parent=5 // pred_check
      %p223 = pneg %p222
    $region22: #{dsconv_forward.6} parent=5 // pred_check_branch
      %225 = sbr.rel (%p223) target = $region24
    $region23: #{dsconv_forward.6} parent=5 // pred_region
      // Predicated region
      $region25: #{dsconv_forward.6} parent=23 // pred_check
        %p226 = pneg %p47
      $region26: #{dsconv_forward.6} parent=23 // pred_check_branch
        %228 = sbr.rel (%p226) target = $region28
      $region27: #{dsconv_forward.6} parent=23 // pred_region
        %p229 = scmp.lt.s32.totalorder %s20, 1
        %s230 = scalar_select %p229, %s20, 1
        %p231 = scmp.lt.s32.totalorder %s21, 1
        %s232 = scalar_select %p231, %s21, 1
        %s233 = smul.addr %s232, 24
        %s234 = smul.addr %s230, 48
        %s235 = sadd.s32 %s233, %s234
        %s236 = smul.addr %s235, 4
        %s237 = scalar_lea.vmem %s0, %s236
      $region28: #{dsconv_forward.6} parent=23 // pred_fallthru
        _
      // Predicated region
      $region29: #{dsconv_forward.6} parent=23 // pred_check
        %p238 = pneg %p115
      $region30: #{dsconv_forward.6} parent=23 // pred_check_branch
        %240 = sbr.rel (%p238) target = $region32
      $region31: #{dsconv_forward.6} parent=23 // pred_region
        %s241 = smul.u32 4, %s21
        %p242 = scmp.lt.s32.totalorder %s241, 7
        %s243 = scalar_select %p242, %s241, 7
        %s244 = scalar_lea.vmem %s3, %s243
        %s245 = smul.u32 4, %s21
      $region32: #{dsconv_forward.6} parent=23 // pred_fallthru
        _
    $region24: #{dsconv_forward.6} parent=5 // pred_fallthru
      _
    %p246 = scmp.le.s32.totalorder 1, %s13
    %p247 = scmp.lt.s32.totalorder %s13, 5
    %p248 = pnand %p246, %p247
    %p249 = pneg %p248
    // Predicated region
    $region33: #{dsconv_forward.6} parent=5 // pred_check
      _
    $region34: #{dsconv_forward.6} parent=5 // pred_check_branch
      %251 = sbr.rel (%p248) target = $region36
    $region35: #{dsconv_forward.6} parent=5 // pred_region
      %s252 = ssub.s32 %s13, 1
      %p253 = scmp.lt.s32.totalorder %s22, 1
      %s254 = scalar_select %p253, %s22, 1
      %p255 = scmp.lt.s32.totalorder %s23, 1
      %s256 = scalar_select %p255, %s23, 1
      %s257 = smul.addr %s256, 24
      %s258 = smul.addr %s254, 48
      %s259 = sadd.s32 %s257, %s258
      %s260 = smul.addr %s259, 4
      %s261 = scalar_lea.vmem %s0, %s260
      %p262 = pneg %p53
      %p263 = pneg %p50
      %p264 = pneg %p74
      %p265 = pneg %p71
      %p266 = pneg %p95
      %p267 = pneg %p92
      %s268 = smul.u32 4, %s23
      %p269 = scmp.lt.s32.totalorder %s268, 7
      %s270 = scalar_select %p269, %s268, 7
      %s271 = scalar_lea.vmem %s3, %s270
      %p272 = pneg %p121
      %p273 = pneg %p118
      %p274 = pneg %p149
      %p275 = pneg %p146
      %s276 = smul.u32 4, %s23
      %p277 = scmp.lt.s32.totalorder %s22, 1
      %s278 = scalar_select %p277, %s22, 1
      %p279 = scmp.lt.s32.totalorder %s276, 7
      %s280 = scalar_select %p279, %s276, 7
      %s281 = smul.addr %s278, 8
      %s282 = sadd.s32 %s280, %s281
      %s283 = smul.addr %s282, 8
      %s284 = scalar_lea.vmem %s4, %s283
      %p285 = pneg %p175
      %p286 = pneg %p172
      %p287 = scmp.lt.s32.totalorder %s22, 1
      %s288 = scalar_select %p287, %s22, 1
      %s289 = smul.addr %s288, 8
      %s290 = scalar_lea.vmem %s5, %s289
      %p291 = pneg %p201
      %p292 = pneg %p198
      %p293 = scmp.lt.s32.totalorder %s22, 1
      %s294 = scalar_select %p293, %s22, 1
      %s295 = smul.addr %s294, 8
      %s296 = scalar_lea.vmem %s6, %s295
      %p297 = scmp.lt.s32.totalorder %s22, 1
      %s298 = scalar_select %p297, %s22, 1
      %p299 = scmp.lt.s32.totalorder %s23, 1
      %s300 = scalar_select %p299, %s23, 1
      %s301 = smul.addr %s300, 24
      %s302 = smul.addr %s298, 48
      %s303 = sadd.s32 %s301, %s302
      %s304 = smul.addr %s303, 4
      %s305 = scalar_lea.vmem %s0, %s304
      %s306 = smul.u32 4, %s23
      %p307 = scmp.lt.s32.totalorder %s306, 7
      %s308 = scalar_select %p307, %s306, 7
      %s309 = scalar_lea.vmem %s3, %s308
      %s310 = smul.u32 4, %s23
      %s311 = smul.u32 4, %s23
      %p312 = scmp.lt.s32.totalorder %s22, 1
      %s313 = scalar_select %p312, %s22, 1
      %p314 = scmp.lt.s32.totalorder %s311, 7
      %s315 = scalar_select %p314, %s311, 7
      %s316 = smul.addr %s313, 8
      %s317 = sadd.s32 %s315, %s316
      %s318 = smul.addr %s317, 8
      %s319 = scalar_lea.vmem %s4, %s318
      %s320 = smul.u32 4, %s23
      %p321 = scmp.lt.s32.totalorder %s22, 1
      %s322 = scalar_select %p321, %s22, 1
      %s323 = smul.addr %s322, 8
      %s324 = scalar_lea.vmem %s5, %s323
      %p325 = scmp.lt.s32.totalorder %s22, 1
      %s326 = scalar_select %p325, %s22, 1
      %s327 = smul.addr %s326, 8
      %s328 = scalar_lea.vmem %s6, %s327
      %v330 = vld [vmem:[%s305] sm:$0xff]
      %v331 = vld [vmem:[%s305 + $0x8] sm:$0xff]
      %v332 = vld [vmem:[%s305 + $0x18] sm:$0xff]
      %v333 = vld [vmem:[%s305 + $0x20] sm:$0xff]
      %v334 = vld [vmem:[%s305 + $0x30] sm:$0xff]
      %v335 = vld [vmem:[%s305 + $0x38] sm:$0xff]
      %v336 = vld [vmem:[%s305 + $0x48] sm:$0xff]
      %v337 = vld [vmem:[%s305 + $0x50] sm:$0xff]
      %338 = vst [vmem:[#allocation2] sm:$0xff] %v330
      %339 = vst [vmem:[#allocation2 + $0x8] sm:$0xff] %v331
      %340 = vst [vmem:[#allocation2 + $0x10] sm:$0xff] %v332
      %341 = vst [vmem:[#allocation2 + $0x18] sm:$0xff] %v333
      %342 = vst [vmem:[#allocation2 + $0x20] sm:$0xff] %v334
      %343 = vst [vmem:[#allocation2 + $0x28] sm:$0xff] %v335
      %344 = vst [vmem:[#allocation2 + $0x30] sm:$0xff] %v336
      %345 = vst [vmem:[#allocation2 + $0x38] sm:$0xff] %v337
      %v346 = vld [vmem:[%s305] sm:$0xff]
      %v347 = vld [vmem:[%s305 + $0x8] sm:$0xff]
      %v348 = vld [vmem:[%s305 + $0x10] sm:$0xf]
      %v349 = vld [vmem:[%s305 + $0x18] sm:$0xff]
      %v350 = vld [vmem:[%s305 + $0x20] sm:$0xff]
      %v351 = vld [vmem:[%s305 + $0x28] sm:$0xf]
      %v352 = vld [vmem:[%s305 + $0x30] sm:$0xff]
      %v353 = vld [vmem:[%s305 + $0x38] sm:$0xff]
      %v354 = vld [vmem:[%s305 + $0x40] sm:$0xf]
      %v355 = vld [vmem:[%s305 + $0x48] sm:$0xff]
      %v356 = vld [vmem:[%s305 + $0x50] sm:$0xff]
      %v357 = vld [vmem:[%s305 + $0x58] sm:$0xf]
      %370 = vrot.lane.b32.xlu0 %v346, 127
      %v371 = vpop.permute.xlu0 %370
      %372 = vrot.lane.b32.xlu0 %v347, 127
      %v373 = vpop.permute.xlu0 %372
      %374 = vrot.lane.b32.xlu0 %v348, 127
      %v375 = vpop.permute.xlu0 %374
      %376 = vrot.lane.b32.xlu0 %v349, 127
      %v377 = vpop.permute.xlu0 %376
      %378 = vrot.lane.b32.xlu0 %v350, 127
      %v379 = vpop.permute.xlu0 %378
      %380 = vrot.lane.b32.xlu0 %v351, 127
      %v381 = vpop.permute.xlu0 %380
      %382 = vrot.lane.b32.xlu0 %v352, 127
      %v383 = vpop.permute.xlu0 %382
      %384 = vrot.lane.b32.xlu0 %v353, 127
      %v385 = vpop.permute.xlu0 %384
      %386 = vrot.lane.b32.xlu0 %v354, 127
      %v387 = vpop.permute.xlu0 %386
      %388 = vrot.lane.b32.xlu0 %v355, 127
      %v389 = vpop.permute.xlu0 %388
      %390 = vrot.lane.b32.xlu0 %v356, 127
      %v391 = vpop.permute.xlu0 %390
      %392 = vrot.lane.b32.xlu0 %v357, 127
      %v393 = vpop.permute.xlu0 %392
      %v394 = vrot.slane %v371, 4
      %v395 = vrot.slane %v373, 4
      %v396 = vrot.slane %v375, 4
      %v397 = vrot.slane %v377, 4
      %v398 = vrot.slane %v379, 4
      %v399 = vrot.slane %v381, 4
      %v400 = vrot.slane %v383, 4
      %v401 = vrot.slane %v385, 4
      %v402 = vrot.slane %v387, 4
      %v403 = vrot.slane %v389, 4
      %v404 = vrot.slane %v391, 4
      %v405 = vrot.slane %v393, 4
      %vm406 = vcmask 1043456
      %v407 = vsel %vm406, %v394, %v395
      %vm408 = vcmask 1039360
      %v409 = vsel %vm408, %v371, %v407
      %v410 = vsel %vm406, %v395, %v396
      %v411 = vsel %vm408, %v373, %v410
      %v412 = vsel %vm406, %v397, %v398
      %v413 = vsel %vm408, %v377, %v412
      %v414 = vsel %vm406, %v398, %v399
      %v415 = vsel %vm408, %v379, %v414
      %v416 = vsel %vm406, %v400, %v401
      %v417 = vsel %vm408, %v383, %v416
      %v418 = vsel %vm406, %v401, %v402
      %v419 = vsel %vm408, %v385, %v418
      %v420 = vsel %vm406, %v403, %v404
      %v421 = vsel %vm408, %v389, %v420
      %v422 = vsel %vm406, %v404, %v405
      %v423 = vsel %vm408, %v391, %v422
      %432 = vst [vmem:[#allocation2 + $0x40] sm:$0xff] %v409
      %433 = vst [vmem:[#allocation2 + $0x48] sm:$0xff] %v411
      %434 = vst [vmem:[#allocation2 + $0x50] sm:$0xff] %v413
      %435 = vst [vmem:[#allocation2 + $0x58] sm:$0xff] %v415
      %436 = vst [vmem:[#allocation2 + $0x60] sm:$0xff] %v417
      %437 = vst [vmem:[#allocation2 + $0x68] sm:$0xff] %v419
      %438 = vst [vmem:[#allocation2 + $0x70] sm:$0xff] %v421
      %439 = vst [vmem:[#allocation2 + $0x78] sm:$0xff] %v423
      %v440 = vld [vmem:[%s305] sm:$0xff]
      %v441 = vld [vmem:[%s305 + $0x8] sm:$0xff]
      %v442 = vld [vmem:[%s305 + $0x10] sm:$0xf]
      %v443 = vld [vmem:[%s305 + $0x18] sm:$0xff]
      %v444 = vld [vmem:[%s305 + $0x20] sm:$0xff]
      %v445 = vld [vmem:[%s305 + $0x28] sm:$0xf]
      %v446 = vld [vmem:[%s305 + $0x30] sm:$0xff]
      %v447 = vld [vmem:[%s305 + $0x38] sm:$0xff]
      %v448 = vld [vmem:[%s305 + $0x40] sm:$0xf]
      %v449 = vld [vmem:[%s305 + $0x48] sm:$0xff]
      %v450 = vld [vmem:[%s305 + $0x50] sm:$0xff]
      %v451 = vld [vmem:[%s305 + $0x58] sm:$0xf]
      %464 = vrot.lane.b32.xlu0 %v440, 126
      %v465 = vpop.permute.xlu0 %464
      %466 = vrot.lane.b32.xlu0 %v441, 126
      %v467 = vpop.permute.xlu0 %466
      %468 = vrot.lane.b32.xlu0 %v442, 126
      %v469 = vpop.permute.xlu0 %468
      %470 = vrot.lane.b32.xlu0 %v443, 126
      %v471 = vpop.permute.xlu0 %470
      %472 = vrot.lane.b32.xlu0 %v444, 126
      %v473 = vpop.permute.xlu0 %472
      %474 = vrot.lane.b32.xlu0 %v445, 126
      %v475 = vpop.permute.xlu0 %474
      %476 = vrot.lane.b32.xlu0 %v446, 126
      %v477 = vpop.permute.xlu0 %476
      %478 = vrot.lane.b32.xlu0 %v447, 126
      %v479 = vpop.permute.xlu0 %478
      %480 = vrot.lane.b32.xlu0 %v448, 126
      %v481 = vpop.permute.xlu0 %480
      %482 = vrot.lane.b32.xlu0 %v449, 126
      %v483 = vpop.permute.xlu0 %482
      %484 = vrot.lane.b32.xlu0 %v450, 126
      %v485 = vpop.permute.xlu0 %484
      %486 = vrot.lane.b32.xlu0 %v451, 126
      %v487 = vpop.permute.xlu0 %486
      %v488 = vrot.slane %v465, 4
      %v489 = vrot.slane %v467, 4
      %v490 = vrot.slane %v469, 4
      %v491 = vrot.slane %v471, 4
      %v492 = vrot.slane %v473, 4
      %v493 = vrot.slane %v475, 4
      %v494 = vrot.slane %v477, 4
      %v495 = vrot.slane %v479, 4
      %v496 = vrot.slane %v481, 4
      %v497 = vrot.slane %v483, 4
      %v498 = vrot.slane %v485, 4
      %v499 = vrot.slane %v487, 4
      %v500 = vsel %vm406, %v488, %v489
      %vm501 = vcmask 1031168
      %v502 = vsel %vm501, %v465, %v500
      %v503 = vsel %vm406, %v489, %v490
      %v504 = vsel %vm501, %v467, %v503
      %v505 = vsel %vm406, %v491, %v492
      %v506 = vsel %vm501, %v471, %v505
      %v507 = vsel %vm406, %v492, %v493
      %v508 = vsel %vm501, %v473, %v507
      %v509 = vsel %vm406, %v494, %v495
      %v510 = vsel %vm501, %v477, %v509
      %v511 = vsel %vm406, %v495, %v496
      %v512 = vsel %vm501, %v479, %v511
      %v513 = vsel %vm406, %v497, %v498
      %v514 = vsel %vm501, %v483, %v513
      %v515 = vsel %vm406, %v498, %v499
      %v516 = vsel %vm501, %v485, %v515
      %525 = vst [vmem:[#allocation2 + $0x80] sm:$0xff] %v502
      %526 = vst [vmem:[#allocation2 + $0x88] sm:$0xff] %v504
      %527 = vst [vmem:[#allocation2 + $0x90] sm:$0xff] %v506
      %528 = vst [vmem:[#allocation2 + $0x98] sm:$0xff] %v508
      %529 = vst [vmem:[#allocation2 + $0xa0] sm:$0xff] %v510
      %530 = vst [vmem:[#allocation2 + $0xa8] sm:$0xff] %v512
      %531 = vst [vmem:[#allocation2 + $0xb0] sm:$0xff] %v514
      %532 = vst [vmem:[#allocation2 + $0xb8] sm:$0xff] %v516
      %v533 = vld [vmem:[%s305] sm:$0xff]
      %v534 = vld [vmem:[%s305 + $0x8] sm:$0xff]
      %v535 = vld [vmem:[%s305 + $0x10] sm:$0xf]
      %v536 = vld [vmem:[%s305 + $0x18] sm:$0xff]
      %v537 = vld [vmem:[%s305 + $0x20] sm:$0xff]
      %v538 = vld [vmem:[%s305 + $0x28] sm:$0xf]
      %v539 = vld [vmem:[%s305 + $0x30] sm:$0xff]
      %v540 = vld [vmem:[%s305 + $0x38] sm:$0xff]
      %v541 = vld [vmem:[%s305 + $0x40] sm:$0xf]
      %v542 = vld [vmem:[%s305 + $0x48] sm:$0xff]
      %v543 = vld [vmem:[%s305 + $0x50] sm:$0xff]
      %v544 = vld [vmem:[%s305 + $0x58] sm:$0xf]
      %557 = vrot.lane.b32.xlu0 %v533, 118
      %v558 = vpop.permute.xlu0 %557
      %559 = vrot.lane.b32.xlu0 %v534, 118
      %v560 = vpop.permute.xlu0 %559
      %561 = vrot.lane.b32.xlu0 %v535, 118
      %v562 = vpop.permute.xlu0 %561
      %563 = vrot.lane.b32.xlu0 %v536, 118
      %v564 = vpop.permute.xlu0 %563
      %565 = vrot.lane.b32.xlu0 %v537, 118
      %v566 = vpop.permute.xlu0 %565
      %567 = vrot.lane.b32.xlu0 %v538, 118
      %v568 = vpop.permute.xlu0 %567
      %569 = vrot.lane.b32.xlu0 %v539, 118
      %v570 = vpop.permute.xlu0 %569
      %571 = vrot.lane.b32.xlu0 %v540, 118
      %v572 = vpop.permute.xlu0 %571
      %573 = vrot.lane.b32.xlu0 %v541, 118
      %v574 = vpop.permute.xlu0 %573
      %575 = vrot.lane.b32.xlu0 %v542, 118
      %v576 = vpop.permute.xlu0 %575
      %577 = vrot.lane.b32.xlu0 %v543, 118
      %v578 = vpop.permute.xlu0 %577
      %579 = vrot.lane.b32.xlu0 %v544, 118
      %v580 = vpop.permute.xlu0 %579
      %v581 = vrot.slane %v558, 4
      %v582 = vrot.slane %v560, 4
      %v583 = vrot.slane %v562, 4
      %v584 = vrot.slane %v564, 4
      %v585 = vrot.slane %v566, 4
      %v586 = vrot.slane %v568, 4
      %v587 = vrot.slane %v570, 4
      %v588 = vrot.slane %v572, 4
      %v589 = vrot.slane %v574, 4
      %v590 = vrot.slane %v576, 4
      %v591 = vrot.slane %v578, 4
      %v592 = vrot.slane %v580, 4
      %v593 = vsel %vm406, %v581, %v582
      %vm594 = vcmask 965632
      %v595 = vsel %vm594, %v558, %v593
      %v596 = vsel %vm406, %v582, %v583
      %v597 = vsel %vm594, %v560, %v596
      %v598 = vsel %vm406, %v584, %v585
      %v599 = vsel %vm594, %v564, %v598
      %v600 = vsel %vm406, %v585, %v586
      %v601 = vsel %vm594, %v566, %v600
      %v602 = vsel %vm406, %v587, %v588
      %v603 = vsel %vm594, %v570, %v602
      %v604 = vsel %vm406, %v588, %v589
      %v605 = vsel %vm594, %v572, %v604
      %v606 = vsel %vm406, %v590, %v591
      %v607 = vsel %vm594, %v576, %v606
      %v608 = vsel %vm406, %v591, %v592
      %v609 = vsel %vm594, %v578, %v608
      %618 = vst [vmem:[#allocation2 + $0xc0] sm:$0xff] %v595
      %619 = vst [vmem:[#allocation2 + $0xc8] sm:$0xff] %v597
      %620 = vst [vmem:[#allocation2 + $0xd0] sm:$0xff] %v599
      %621 = vst [vmem:[#allocation2 + $0xd8] sm:$0xff] %v601
      %622 = vst [vmem:[#allocation2 + $0xe0] sm:$0xff] %v603
      %623 = vst [vmem:[#allocation2 + $0xe8] sm:$0xff] %v605
      %624 = vst [vmem:[#allocation2 + $0xf0] sm:$0xff] %v607
      %625 = vst [vmem:[#allocation2 + $0xf8] sm:$0xff] %v609
      %v626 = vld [vmem:[%s305] sm:$0xff]
      %v627 = vld [vmem:[%s305 + $0x8] sm:$0xff]
      %v628 = vld [vmem:[%s305 + $0x10] sm:$0xf]
      %v629 = vld [vmem:[%s305 + $0x18] sm:$0xff]
      %v630 = vld [vmem:[%s305 + $0x20] sm:$0xff]
      %v631 = vld [vmem:[%s305 + $0x28] sm:$0xf]
      %v632 = vld [vmem:[%s305 + $0x30] sm:$0xff]
      %v633 = vld [vmem:[%s305 + $0x38] sm:$0xff]
      %v634 = vld [vmem:[%s305 + $0x40] sm:$0xf]
      %v635 = vld [vmem:[%s305 + $0x48] sm:$0xff]
      %v636 = vld [vmem:[%s305 + $0x50] sm:$0xff]
      %v637 = vld [vmem:[%s305 + $0x58] sm:$0xf]
      %650 = vrot.lane.b32.xlu0 %v626, 117
      %v651 = vpop.permute.xlu0 %650
      %652 = vrot.lane.b32.xlu0 %v627, 117
      %v653 = vpop.permute.xlu0 %652
      %654 = vrot.lane.b32.xlu0 %v628, 117
      %v655 = vpop.permute.xlu0 %654
      %656 = vrot.lane.b32.xlu0 %v629, 117
      %v657 = vpop.permute.xlu0 %656
      %658 = vrot.lane.b32.xlu0 %v630, 117
      %v659 = vpop.permute.xlu0 %658
      %660 = vrot.lane.b32.xlu0 %v631, 117
      %v661 = vpop.permute.xlu0 %660
      %662 = vrot.lane.b32.xlu0 %v632, 117
      %v663 = vpop.permute.xlu0 %662
      %664 = vrot.lane.b32.xlu0 %v633, 117
      %v665 = vpop.permute.xlu0 %664
      %666 = vrot.lane.b32.xlu0 %v634, 117
      %v667 = vpop.permute.xlu0 %666
      %668 = vrot.lane.b32.xlu0 %v635, 117
      %v669 = vpop.permute.xlu0 %668
      %670 = vrot.lane.b32.xlu0 %v636, 117
      %v671 = vpop.permute.xlu0 %670
      %672 = vrot.lane.b32.xlu0 %v637, 117
      %v673 = vpop.permute.xlu0 %672
      %v674 = vrot.slane %v651, 4
      %v675 = vrot.slane %v653, 4
      %v676 = vrot.slane %v655, 4
      %v677 = vrot.slane %v657, 4
      %v678 = vrot.slane %v659, 4
      %v679 = vrot.slane %v661, 4
      %v680 = vrot.slane %v663, 4
      %v681 = vrot.slane %v665, 4
      %v682 = vrot.slane %v667, 4
      %v683 = vrot.slane %v669, 4
      %v684 = vrot.slane %v671, 4
      %v685 = vrot.slane %v673, 4
      %v686 = vsel %vm406, %v674, %v675
      %vm687 = vcmask 957440
      %v688 = vsel %vm687, %v651, %v686
      %v689 = vsel %vm406, %v675, %v676
      %v690 = vsel %vm687, %v653, %v689
      %v691 = vsel %vm406, %v677, %v678
      %v692 = vsel %vm687, %v657, %v691
      %v693 = vsel %vm406, %v678, %v679
      %v694 = vsel %vm687, %v659, %v693
      %v695 = vsel %vm406, %v680, %v681
      %v696 = vsel %vm687, %v663, %v695
      %v697 = vsel %vm406, %v681, %v682
      %v698 = vsel %vm687, %v665, %v697
      %v699 = vsel %vm406, %v683, %v684
      %v700 = vsel %vm687, %v669, %v699
      %v701 = vsel %vm406, %v684, %v685
      %v702 = vsel %vm687, %v671, %v701
      %711 = vst [vmem:[#allocation2 + $0x100] sm:$0xff] %v688
      %712 = vst [vmem:[#allocation2 + $0x108] sm:$0xff] %v690
      %713 = vst [vmem:[#allocation2 + $0x110] sm:$0xff] %v692
      %714 = vst [vmem:[#allocation2 + $0x118] sm:$0xff] %v694
      %715 = vst [vmem:[#allocation2 + $0x120] sm:$0xff] %v696
      %716 = vst [vmem:[#allocation2 + $0x128] sm:$0xff] %v698
      %717 = vst [vmem:[#allocation2 + $0x130] sm:$0xff] %v700
      %718 = vst [vmem:[#allocation2 + $0x138] sm:$0xff] %v702
      %v719 = vld [vmem:[%s305] sm:$0xff]
      %v720 = vld [vmem:[%s305 + $0x8] sm:$0xff]
      %v721 = vld [vmem:[%s305 + $0x10] sm:$0xf]
      %v722 = vld [vmem:[%s305 + $0x18] sm:$0xff]
      %v723 = vld [vmem:[%s305 + $0x20] sm:$0xff]
      %v724 = vld [vmem:[%s305 + $0x28] sm:$0xf]
      %v725 = vld [vmem:[%s305 + $0x30] sm:$0xff]
      %v726 = vld [vmem:[%s305 + $0x38] sm:$0xff]
      %v727 = vld [vmem:[%s305 + $0x40] sm:$0xf]
      %v728 = vld [vmem:[%s305 + $0x48] sm:$0xff]
      %v729 = vld [vmem:[%s305 + $0x50] sm:$0xff]
      %v730 = vld [vmem:[%s305 + $0x58] sm:$0xf]
      %743 = vrot.lane.b32.xlu0 %v719, 116
      %v744 = vpop.permute.xlu0 %743
      %745 = vrot.lane.b32.xlu0 %v720, 116
      %v746 = vpop.permute.xlu0 %745
      %747 = vrot.lane.b32.xlu0 %v721, 116
      %v748 = vpop.permute.xlu0 %747
      %749 = vrot.lane.b32.xlu0 %v722, 116
      %v750 = vpop.permute.xlu0 %749
      %751 = vrot.lane.b32.xlu0 %v723, 116
      %v752 = vpop.permute.xlu0 %751
      %753 = vrot.lane.b32.xlu0 %v724, 116
      %v754 = vpop.permute.xlu0 %753
      %755 = vrot.lane.b32.xlu0 %v725, 116
      %v756 = vpop.permute.xlu0 %755
      %757 = vrot.lane.b32.xlu0 %v726, 116
      %v758 = vpop.permute.xlu0 %757
      %759 = vrot.lane.b32.xlu0 %v727, 116
      %v760 = vpop.permute.xlu0 %759
      %761 = vrot.lane.b32.xlu0 %v728, 116
      %v762 = vpop.permute.xlu0 %761
      %763 = vrot.lane.b32.xlu0 %v729, 116
      %v764 = vpop.permute.xlu0 %763
      %765 = vrot.lane.b32.xlu0 %v730, 116
      %v766 = vpop.permute.xlu0 %765
      %v767 = vrot.slane %v744, 4
      %v768 = vrot.slane %v746, 4
      %v769 = vrot.slane %v748, 4
      %v770 = vrot.slane %v750, 4
      %v771 = vrot.slane %v752, 4
      %v772 = vrot.slane %v754, 4
      %v773 = vrot.slane %v756, 4
      %v774 = vrot.slane %v758, 4
      %v775 = vrot.slane %v760, 4
      %v776 = vrot.slane %v762, 4
      %v777 = vrot.slane %v764, 4
      %v778 = vrot.slane %v766, 4
      %v779 = vsel %vm406, %v767, %v768
      %vm780 = vcmask 949248
      %v781 = vsel %vm780, %v744, %v779
      %v782 = vsel %vm406, %v768, %v769
      %v783 = vsel %vm780, %v746, %v782
      %v784 = vsel %vm406, %v770, %v771
      %v785 = vsel %vm780, %v750, %v784
      %v786 = vsel %vm406, %v771, %v772
      %v787 = vsel %vm780, %v752, %v786
      %v788 = vsel %vm406, %v773, %v774
      %v789 = vsel %vm780, %v756, %v788
      %v790 = vsel %vm406, %v774, %v775
      %v791 = vsel %vm780, %v758, %v790
      %v792 = vsel %vm406, %v776, %v777
      %v793 = vsel %vm780, %v762, %v792
      %v794 = vsel %vm406, %v777, %v778
      %v795 = vsel %vm780, %v764, %v794
      %804 = vst [vmem:[#allocation2 + $0x140] sm:$0xff] %v781
      %805 = vst [vmem:[#allocation2 + $0x148] sm:$0xff] %v783
      %806 = vst [vmem:[#allocation2 + $0x150] sm:$0xff] %v785
      %807 = vst [vmem:[#allocation2 + $0x158] sm:$0xff] %v787
      %808 = vst [vmem:[#allocation2 + $0x160] sm:$0xff] %v789
      %809 = vst [vmem:[#allocation2 + $0x168] sm:$0xff] %v791
      %810 = vst [vmem:[#allocation2 + $0x170] sm:$0xff] %v793
      %811 = vst [vmem:[#allocation2 + $0x178] sm:$0xff] %v795
      %v812 = vld [vmem:[%s305] sm:$0xff]
      %v813 = vld [vmem:[%s305 + $0x8] sm:$0xff]
      %v814 = vld [vmem:[%s305 + $0x10] sm:$0xf]
      %v815 = vld [vmem:[%s305 + $0x18] sm:$0xff]
      %v816 = vld [vmem:[%s305 + $0x20] sm:$0xff]
      %v817 = vld [vmem:[%s305 + $0x28] sm:$0xf]
      %v818 = vld [vmem:[%s305 + $0x30] sm:$0xff]
      %v819 = vld [vmem:[%s305 + $0x38] sm:$0xff]
      %v820 = vld [vmem:[%s305 + $0x40] sm:$0xf]
      %v821 = vld [vmem:[%s305 + $0x48] sm:$0xff]
      %v822 = vld [vmem:[%s305 + $0x50] sm:$0xff]
      %v823 = vld [vmem:[%s305 + $0x58] sm:$0xf]
      %836 = vrot.lane.b32.xlu0 %v812, 108
      %v837 = vpop.permute.xlu0 %836
      %838 = vrot.lane.b32.xlu0 %v813, 108
      %v839 = vpop.permute.xlu0 %838
      %840 = vrot.lane.b32.xlu0 %v814, 108
      %v841 = vpop.permute.xlu0 %840
      %842 = vrot.lane.b32.xlu0 %v815, 108
      %v843 = vpop.permute.xlu0 %842
      %844 = vrot.lane.b32.xlu0 %v816, 108
      %v845 = vpop.permute.xlu0 %844
      %846 = vrot.lane.b32.xlu0 %v817, 108
      %v847 = vpop.permute.xlu0 %846
      %848 = vrot.lane.b32.xlu0 %v818, 108
      %v849 = vpop.permute.xlu0 %848
      %850 = vrot.lane.b32.xlu0 %v819, 108
      %v851 = vpop.permute.xlu0 %850
      %852 = vrot.lane.b32.xlu0 %v820, 108
      %v853 = vpop.permute.xlu0 %852
      %854 = vrot.lane.b32.xlu0 %v821, 108
      %v855 = vpop.permute.xlu0 %854
      %856 = vrot.lane.b32.xlu0 %v822, 108
      %v857 = vpop.permute.xlu0 %856
      %858 = vrot.lane.b32.xlu0 %v823, 108
      %v859 = vpop.permute.xlu0 %858
      %v860 = vrot.slane %v837, 4
      %v861 = vrot.slane %v839, 4
      %v862 = vrot.slane %v841, 4
      %v863 = vrot.slane %v843, 4
      %v864 = vrot.slane %v845, 4
      %v865 = vrot.slane %v847, 4
      %v866 = vrot.slane %v849, 4
      %v867 = vrot.slane %v851, 4
      %v868 = vrot.slane %v853, 4
      %v869 = vrot.slane %v855, 4
      %v870 = vrot.slane %v857, 4
      %v871 = vrot.slane %v859, 4
      %v872 = vsel %vm406, %v860, %v861
      %vm873 = vcmask 883712
      %v874 = vsel %vm873, %v837, %v872
      %v875 = vsel %vm406, %v861, %v862
      %v876 = vsel %vm873, %v839, %v875
      %v877 = vsel %vm406, %v863, %v864
      %v878 = vsel %vm873, %v843, %v877
      %v879 = vsel %vm406, %v864, %v865
      %v880 = vsel %vm873, %v845, %v879
      %v881 = vsel %vm406, %v866, %v867
      %v882 = vsel %vm873, %v849, %v881
      %v883 = vsel %vm406, %v867, %v868
      %v884 = vsel %vm873, %v851, %v883
      %v885 = vsel %vm406, %v869, %v870
      %v886 = vsel %vm873, %v855, %v885
      %v887 = vsel %vm406, %v870, %v871
      %v888 = vsel %vm873, %v857, %v887
      %897 = vst [vmem:[#allocation2 + $0x180] sm:$0xff] %v874
      %898 = vst [vmem:[#allocation2 + $0x188] sm:$0xff] %v876
      %899 = vst [vmem:[#allocation2 + $0x190] sm:$0xff] %v878
      %900 = vst [vmem:[#allocation2 + $0x198] sm:$0xff] %v880
      %901 = vst [vmem:[#allocation2 + $0x1a0] sm:$0xff] %v882
      %902 = vst [vmem:[#allocation2 + $0x1a8] sm:$0xff] %v884
      %903 = vst [vmem:[#allocation2 + $0x1b0] sm:$0xff] %v886
      %904 = vst [vmem:[#allocation2 + $0x1b8] sm:$0xff] %v888
      %v905 = vld [vmem:[%s305] sm:$0xff]
      %v906 = vld [vmem:[%s305 + $0x8] sm:$0xff]
      %v907 = vld [vmem:[%s305 + $0x10] sm:$0xf]
      %v908 = vld [vmem:[%s305 + $0x18] sm:$0xff]
      %v909 = vld [vmem:[%s305 + $0x20] sm:$0xff]
      %v910 = vld [vmem:[%s305 + $0x28] sm:$0xf]
      %v911 = vld [vmem:[%s305 + $0x30] sm:$0xff]
      %v912 = vld [vmem:[%s305 + $0x38] sm:$0xff]
      %v913 = vld [vmem:[%s305 + $0x40] sm:$0xf]
      %v914 = vld [vmem:[%s305 + $0x48] sm:$0xff]
      %v915 = vld [vmem:[%s305 + $0x50] sm:$0xff]
      %v916 = vld [vmem:[%s305 + $0x58] sm:$0xf]
      %929 = vrot.lane.b32.xlu0 %v905, 107
      %v930 = vpop.permute.xlu0 %929
      %931 = vrot.lane.b32.xlu0 %v906, 107
      %v932 = vpop.permute.xlu0 %931
      %933 = vrot.lane.b32.xlu0 %v907, 107
      %v934 = vpop.permute.xlu0 %933
      %935 = vrot.lane.b32.xlu0 %v908, 107
      %v936 = vpop.permute.xlu0 %935
      %937 = vrot.lane.b32.xlu0 %v909, 107
      %v938 = vpop.permute.xlu0 %937
      %939 = vrot.lane.b32.xlu0 %v910, 107
      %v940 = vpop.permute.xlu0 %939
      %941 = vrot.lane.b32.xlu0 %v911, 107
      %v942 = vpop.permute.xlu0 %941
      %943 = vrot.lane.b32.xlu0 %v912, 107
      %v944 = vpop.permute.xlu0 %943
      %945 = vrot.lane.b32.xlu0 %v913, 107
      %v946 = vpop.permute.xlu0 %945
      %947 = vrot.lane.b32.xlu0 %v914, 107
      %v948 = vpop.permute.xlu0 %947
      %949 = vrot.lane.b32.xlu0 %v915, 107
      %v950 = vpop.permute.xlu0 %949
      %951 = vrot.lane.b32.xlu0 %v916, 107
      %v952 = vpop.permute.xlu0 %951
      %v953 = vrot.slane %v930, 4
      %v954 = vrot.slane %v932, 4
      %v955 = vrot.slane %v934, 4
      %v956 = vrot.slane %v936, 4
      %v957 = vrot.slane %v938, 4
      %v958 = vrot.slane %v940, 4
      %v959 = vrot.slane %v942, 4
      %v960 = vrot.slane %v944, 4
      %v961 = vrot.slane %v946, 4
      %v962 = vrot.slane %v948, 4
      %v963 = vrot.slane %v950, 4
      %v964 = vrot.slane %v952, 4
      %v965 = vsel %vm406, %v953, %v954
      %vm966 = vcmask 875520
      %v967 = vsel %vm966, %v930, %v965
      %v968 = vsel %vm406, %v954, %v955
      %v969 = vsel %vm966, %v932, %v968
      %v970 = vsel %vm406, %v956, %v957
      %v971 = vsel %vm966, %v936, %v970
      %v972 = vsel %vm406, %v957, %v958
      %v973 = vsel %vm966, %v938, %v972
      %v974 = vsel %vm406, %v959, %v960
      %v975 = vsel %vm966, %v942, %v974
      %v976 = vsel %vm406, %v960, %v961
      %v977 = vsel %vm966, %v944, %v976
      %v978 = vsel %vm406, %v962, %v963
      %v979 = vsel %vm966, %v948, %v978
      %v980 = vsel %vm406, %v963, %v964
      %v981 = vsel %vm966, %v950, %v980
      %990 = vst [vmem:[#allocation2 + $0x1c0] sm:$0xff] %v967
      %991 = vst [vmem:[#allocation2 + $0x1c8] sm:$0xff] %v969
      %992 = vst [vmem:[#allocation2 + $0x1d0] sm:$0xff] %v971
      %993 = vst [vmem:[#allocation2 + $0x1d8] sm:$0xff] %v973
      %994 = vst [vmem:[#allocation2 + $0x1e0] sm:$0xff] %v975
      %995 = vst [vmem:[#allocation2 + $0x1e8] sm:$0xff] %v977
      %996 = vst [vmem:[#allocation2 + $0x1f0] sm:$0xff] %v979
      %997 = vst [vmem:[#allocation2 + $0x1f8] sm:$0xff] %v981
      %v998 = vld [vmem:[%s305] sm:$0xff]
      %v999 = vld [vmem:[%s305 + $0x8] sm:$0xff]
      %v1000 = vld [vmem:[%s305 + $0x10] sm:$0xf]
      %v1001 = vld [vmem:[%s305 + $0x18] sm:$0xff]
      %v1002 = vld [vmem:[%s305 + $0x20] sm:$0xff]
      %v1003 = vld [vmem:[%s305 + $0x28] sm:$0xf]
      %v1004 = vld [vmem:[%s305 + $0x30] sm:$0xff]
      %v1005 = vld [vmem:[%s305 + $0x38] sm:$0xff]
      %v1006 = vld [vmem:[%s305 + $0x40] sm:$0xf]
      %v1007 = vld [vmem:[%s305 + $0x48] sm:$0xff]
      %v1008 = vld [vmem:[%s305 + $0x50] sm:$0xff]
      %v1009 = vld [vmem:[%s305 + $0x58] sm:$0xf]
      %1022 = vrot.lane.b32.xlu0 %v998, 106
      %v1023 = vpop.permute.xlu0 %1022
      %1024 = vrot.lane.b32.xlu0 %v999, 106
      %v1025 = vpop.permute.xlu0 %1024
      %1026 = vrot.lane.b32.xlu0 %v1000, 106
      %v1027 = vpop.permute.xlu0 %1026
      %1028 = vrot.lane.b32.xlu0 %v1001, 106
      %v1029 = vpop.permute.xlu0 %1028
      %1030 = vrot.lane.b32.xlu0 %v1002, 106
      %v1031 = vpop.permute.xlu0 %1030
      %1032 = vrot.lane.b32.xlu0 %v1003, 106
      %v1033 = vpop.permute.xlu0 %1032
      %1034 = vrot.lane.b32.xlu0 %v1004, 106
      %v1035 = vpop.permute.xlu0 %1034
      %1036 = vrot.lane.b32.xlu0 %v1005, 106
      %v1037 = vpop.permute.xlu0 %1036
      %1038 = vrot.lane.b32.xlu0 %v1006, 106
      %v1039 = vpop.permute.xlu0 %1038
      %1040 = vrot.lane.b32.xlu0 %v1007, 106
      %v1041 = vpop.permute.xlu0 %1040
      %1042 = vrot.lane.b32.xlu0 %v1008, 106
      %v1043 = vpop.permute.xlu0 %1042
      %1044 = vrot.lane.b32.xlu0 %v1009, 106
      %v1045 = vpop.permute.xlu0 %1044
      %v1046 = vrot.slane %v1023, 4
      %v1047 = vrot.slane %v1025, 4
      %v1048 = vrot.slane %v1027, 4
      %v1049 = vrot.slane %v1029, 4
      %v1050 = vrot.slane %v1031, 4
      %v1051 = vrot.slane %v1033, 4
      %v1052 = vrot.slane %v1035, 4
      %v1053 = vrot.slane %v1037, 4
      %v1054 = vrot.slane %v1039, 4
      %v1055 = vrot.slane %v1041, 4
      %v1056 = vrot.slane %v1043, 4
      %v1057 = vrot.slane %v1045, 4
      %v1058 = vsel %vm406, %v1046, %v1047
      %vm1059 = vcmask 867328
      %v1060 = vsel %vm1059, %v1023, %v1058
      %v1061 = vsel %vm406, %v1047, %v1048
      %v1062 = vsel %vm1059, %v1025, %v1061
      %v1063 = vsel %vm406, %v1049, %v1050
      %v1064 = vsel %vm1059, %v1029, %v1063
      %v1065 = vsel %vm406, %v1050, %v1051
      %v1066 = vsel %vm1059, %v1031, %v1065
      %v1067 = vsel %vm406, %v1052, %v1053
      %v1068 = vsel %vm1059, %v1035, %v1067
      %v1069 = vsel %vm406, %v1053, %v1054
      %v1070 = vsel %vm1059, %v1037, %v1069
      %v1071 = vsel %vm406, %v1055, %v1056
      %v1072 = vsel %vm1059, %v1041, %v1071
      %v1073 = vsel %vm406, %v1056, %v1057
      %v1074 = vsel %vm1059, %v1043, %v1073
      %1083 = vst [vmem:[#allocation2 + $0x200] sm:$0xff] %v1060
      %1084 = vst [vmem:[#allocation2 + $0x208] sm:$0xff] %v1062
      %1085 = vst [vmem:[#allocation2 + $0x210] sm:$0xff] %v1064
      %1086 = vst [vmem:[#allocation2 + $0x218] sm:$0xff] %v1066
      %1087 = vst [vmem:[#allocation2 + $0x220] sm:$0xff] %v1068
      %1088 = vst [vmem:[#allocation2 + $0x228] sm:$0xff] %v1070
      %1089 = vst [vmem:[#allocation2 + $0x230] sm:$0xff] %v1072
      %1090 = vst [vmem:[#allocation2 + $0x238] sm:$0xff] %v1074
      %v1091 = vld [vmem:[%s305] sm:$0xff]
      %v1092 = vld [vmem:[%s305 + $0x8] sm:$0xff]
      %v1093 = vld [vmem:[%s305 + $0x10] sm:$0xf]
      %v1094 = vld [vmem:[%s305 + $0x18] sm:$0xff]
      %v1095 = vld [vmem:[%s305 + $0x20] sm:$0xff]
      %v1096 = vld [vmem:[%s305 + $0x28] sm:$0xf]
      %v1097 = vld [vmem:[%s305 + $0x30] sm:$0xff]
      %v1098 = vld [vmem:[%s305 + $0x38] sm:$0xff]
      %v1099 = vld [vmem:[%s305 + $0x40] sm:$0xf]
      %v1100 = vld [vmem:[%s305 + $0x48] sm:$0xff]
      %v1101 = vld [vmem:[%s305 + $0x50] sm:$0xff]
      %v1102 = vld [vmem:[%s305 + $0x58] sm:$0xf]
      %1115 = vrot.lane.b32.xlu0 %v1091, 28
      %v1116 = vpop.permute.xlu0 %1115
      %1117 = vrot.lane.b32.xlu0 %v1092, 28
      %v1118 = vpop.permute.xlu0 %1117
      %1119 = vrot.lane.b32.xlu0 %v1093, 28
      %v1120 = vpop.permute.xlu0 %1119
      %1121 = vrot.lane.b32.xlu0 %v1094, 28
      %v1122 = vpop.permute.xlu0 %1121
      %1123 = vrot.lane.b32.xlu0 %v1095, 28
      %v1124 = vpop.permute.xlu0 %1123
      %1125 = vrot.lane.b32.xlu0 %v1096, 28
      %v1126 = vpop.permute.xlu0 %1125
      %1127 = vrot.lane.b32.xlu0 %v1097, 28
      %v1128 = vpop.permute.xlu0 %1127
      %1129 = vrot.lane.b32.xlu0 %v1098, 28
      %v1130 = vpop.permute.xlu0 %1129
      %1131 = vrot.lane.b32.xlu0 %v1099, 28
      %v1132 = vpop.permute.xlu0 %1131
      %1133 = vrot.lane.b32.xlu0 %v1100, 28
      %v1134 = vpop.permute.xlu0 %1133
      %1135 = vrot.lane.b32.xlu0 %v1101, 28
      %v1136 = vpop.permute.xlu0 %1135
      %1137 = vrot.lane.b32.xlu0 %v1102, 28
      %v1138 = vpop.permute.xlu0 %1137
      %v1139 = vrot.slane %v1116, 4
      %v1140 = vrot.slane %v1118, 4
      %v1141 = vrot.slane %v1120, 4
      %v1142 = vrot.slane %v1122, 4
      %v1143 = vrot.slane %v1124, 4
      %v1144 = vrot.slane %v1126, 4
      %v1145 = vrot.slane %v1128, 4
      %v1146 = vrot.slane %v1130, 4
      %v1147 = vrot.slane %v1132, 4
      %v1148 = vrot.slane %v1134, 4
      %v1149 = vrot.slane %v1136, 4
      %v1150 = vrot.slane %v1138, 4
      %v1151 = vsel %vm406, %v1139, %v1140
      %vm1152 = vcmask 228352
      %v1153 = vsel %vm1152, %v1116, %v1151
      %v1154 = vsel %vm406, %v1140, %v1141
      %v1155 = vsel %vm1152, %v1118, %v1154
      %v1156 = vsel %vm406, %v1142, %v1143
      %v1157 = vsel %vm1152, %v1122, %v1156
      %v1158 = vsel %vm406, %v1143, %v1144
      %v1159 = vsel %vm1152, %v1124, %v1158
      %v1160 = vsel %vm406, %v1145, %v1146
      %v1161 = vsel %vm1152, %v1128, %v1160
      %v1162 = vsel %vm406, %v1146, %v1147
      %v1163 = vsel %vm1152, %v1130, %v1162
      %v1164 = vsel %vm406, %v1148, %v1149
      %v1165 = vsel %vm1152, %v1134, %v1164
      %v1166 = vsel %vm406, %v1149, %v1150
      %v1167 = vsel %vm1152, %v1136, %v1166
      %1176 = vst [vmem:[#allocation2 + $0x240] sm:$0xff] %v1153
      %1177 = vst [vmem:[#allocation2 + $0x248] sm:$0xff] %v1155
      %1178 = vst [vmem:[#allocation2 + $0x250] sm:$0xff] %v1157
      %1179 = vst [vmem:[#allocation2 + $0x258] sm:$0xff] %v1159
      %1180 = vst [vmem:[#allocation2 + $0x260] sm:$0xff] %v1161
      %1181 = vst [vmem:[#allocation2 + $0x268] sm:$0xff] %v1163
      %1182 = vst [vmem:[#allocation2 + $0x270] sm:$0xff] %v1165
      %1183 = vst [vmem:[#allocation2 + $0x278] sm:$0xff] %v1167
      %v1184 = vld [vmem:[%s305] sm:$0xff]
      %v1185 = vld [vmem:[%s305 + $0x8] sm:$0xff]
      %v1186 = vld [vmem:[%s305 + $0x10] sm:$0xf]
      %v1187 = vld [vmem:[%s305 + $0x18] sm:$0xff]
      %v1188 = vld [vmem:[%s305 + $0x20] sm:$0xff]
      %v1189 = vld [vmem:[%s305 + $0x28] sm:$0xf]
      %v1190 = vld [vmem:[%s305 + $0x30] sm:$0xff]
      %v1191 = vld [vmem:[%s305 + $0x38] sm:$0xff]
      %v1192 = vld [vmem:[%s305 + $0x40] sm:$0xf]
      %v1193 = vld [vmem:[%s305 + $0x48] sm:$0xff]
      %v1194 = vld [vmem:[%s305 + $0x50] sm:$0xff]
      %v1195 = vld [vmem:[%s305 + $0x58] sm:$0xf]
      %1208 = vrot.lane.b32.xlu0 %v1184, 27
      %v1209 = vpop.permute.xlu0 %1208
      %1210 = vrot.lane.b32.xlu0 %v1185, 27
      %v1211 = vpop.permute.xlu0 %1210
      %1212 = vrot.lane.b32.xlu0 %v1186, 27
      %v1213 = vpop.permute.xlu0 %1212
      %1214 = vrot.lane.b32.xlu0 %v1187, 27
      %v1215 = vpop.permute.xlu0 %1214
      %1216 = vrot.lane.b32.xlu0 %v1188, 27
      %v1217 = vpop.permute.xlu0 %1216
      %1218 = vrot.lane.b32.xlu0 %v1189, 27
      %v1219 = vpop.permute.xlu0 %1218
      %1220 = vrot.lane.b32.xlu0 %v1190, 27
      %v1221 = vpop.permute.xlu0 %1220
      %1222 = vrot.lane.b32.xlu0 %v1191, 27
      %v1223 = vpop.permute.xlu0 %1222
      %1224 = vrot.lane.b32.xlu0 %v1192, 27
      %v1225 = vpop.permute.xlu0 %1224
      %1226 = vrot.lane.b32.xlu0 %v1193, 27
      %v1227 = vpop.permute.xlu0 %1226
      %1228 = vrot.lane.b32.xlu0 %v1194, 27
      %v1229 = vpop.permute.xlu0 %1228
      %1230 = vrot.lane.b32.xlu0 %v1195, 27
      %v1231 = vpop.permute.xlu0 %1230
      %v1232 = vrot.slane %v1209, 4
      %v1233 = vrot.slane %v1211, 4
      %v1234 = vrot.slane %v1213, 4
      %v1235 = vrot.slane %v1215, 4
      %v1236 = vrot.slane %v1217, 4
      %v1237 = vrot.slane %v1219, 4
      %v1238 = vrot.slane %v1221, 4
      %v1239 = vrot.slane %v1223, 4
      %v1240 = vrot.slane %v1225, 4
      %v1241 = vrot.slane %v1227, 4
      %v1242 = vrot.slane %v1229, 4
      %v1243 = vrot.slane %v1231, 4
      %v1244 = vsel %vm406, %v1232, %v1233
      %vm1245 = vcmask 220160
      %v1246 = vsel %vm1245, %v1209, %v1244
      %v1247 = vsel %vm406, %v1233, %v1234
      %v1248 = vsel %vm1245, %v1211, %v1247
      %v1249 = vsel %vm406, %v1235, %v1236
      %v1250 = vsel %vm1245, %v1215, %v1249
      %v1251 = vsel %vm406, %v1236, %v1237
      %v1252 = vsel %vm1245, %v1217, %v1251
      %v1253 = vsel %vm406, %v1238, %v1239
      %v1254 = vsel %vm1245, %v1221, %v1253
      %v1255 = vsel %vm406, %v1239, %v1240
      %v1256 = vsel %vm1245, %v1223, %v1255
      %v1257 = vsel %vm406, %v1241, %v1242
      %v1258 = vsel %vm1245, %v1227, %v1257
      %v1259 = vsel %vm406, %v1242, %v1243
      %v1260 = vsel %vm1245, %v1229, %v1259
      %1269 = vst [vmem:[#allocation2 + $0x280] sm:$0xff] %v1246
      %1270 = vst [vmem:[#allocation2 + $0x288] sm:$0xff] %v1248
      %1271 = vst [vmem:[#allocation2 + $0x290] sm:$0xff] %v1250
      %1272 = vst [vmem:[#allocation2 + $0x298] sm:$0xff] %v1252
      %1273 = vst [vmem:[#allocation2 + $0x2a0] sm:$0xff] %v1254
      %1274 = vst [vmem:[#allocation2 + $0x2a8] sm:$0xff] %v1256
      %1275 = vst [vmem:[#allocation2 + $0x2b0] sm:$0xff] %v1258
      %1276 = vst [vmem:[#allocation2 + $0x2b8] sm:$0xff] %v1260
      %v1277 = vld [vmem:[%s305] sm:$0xff]
      %v1278 = vld [vmem:[%s305 + $0x8] sm:$0xff]
      %v1279 = vld [vmem:[%s305 + $0x10] sm:$0xf]
      %v1280 = vld [vmem:[%s305 + $0x18] sm:$0xff]
      %v1281 = vld [vmem:[%s305 + $0x20] sm:$0xff]
      %v1282 = vld [vmem:[%s305 + $0x28] sm:$0xf]
      %v1283 = vld [vmem:[%s305 + $0x30] sm:$0xff]
      %v1284 = vld [vmem:[%s305 + $0x38] sm:$0xff]
      %v1285 = vld [vmem:[%s305 + $0x40] sm:$0xf]
      %v1286 = vld [vmem:[%s305 + $0x48] sm:$0xff]
      %v1287 = vld [vmem:[%s305 + $0x50] sm:$0xff]
      %v1288 = vld [vmem:[%s305 + $0x58] sm:$0xf]
      %1301 = vrot.lane.b32.xlu0 %v1277, 26
      %v1302 = vpop.permute.xlu0 %1301
      %1303 = vrot.lane.b32.xlu0 %v1278, 26
      %v1304 = vpop.permute.xlu0 %1303
      %1305 = vrot.lane.b32.xlu0 %v1279, 26
      %v1306 = vpop.permute.xlu0 %1305
      %1307 = vrot.lane.b32.xlu0 %v1280, 26
      %v1308 = vpop.permute.xlu0 %1307
      %1309 = vrot.lane.b32.xlu0 %v1281, 26
      %v1310 = vpop.permute.xlu0 %1309
      %1311 = vrot.lane.b32.xlu0 %v1282, 26
      %v1312 = vpop.permute.xlu0 %1311
      %1313 = vrot.lane.b32.xlu0 %v1283, 26
      %v1314 = vpop.permute.xlu0 %1313
      %1315 = vrot.lane.b32.xlu0 %v1284, 26
      %v1316 = vpop.permute.xlu0 %1315
      %1317 = vrot.lane.b32.xlu0 %v1285, 26
      %v1318 = vpop.permute.xlu0 %1317
      %1319 = vrot.lane.b32.xlu0 %v1286, 26
      %v1320 = vpop.permute.xlu0 %1319
      %1321 = vrot.lane.b32.xlu0 %v1287, 26
      %v1322 = vpop.permute.xlu0 %1321
      %1323 = vrot.lane.b32.xlu0 %v1288, 26
      %v1324 = vpop.permute.xlu0 %1323
      %v1325 = vrot.slane %v1302, 4
      %v1326 = vrot.slane %v1304, 4
      %v1327 = vrot.slane %v1306, 4
      %v1328 = vrot.slane %v1308, 4
      %v1329 = vrot.slane %v1310, 4
      %v1330 = vrot.slane %v1312, 4
      %v1331 = vrot.slane %v1314, 4
      %v1332 = vrot.slane %v1316, 4
      %v1333 = vrot.slane %v1318, 4
      %v1334 = vrot.slane %v1320, 4
      %v1335 = vrot.slane %v1322, 4
      %v1336 = vrot.slane %v1324, 4
      %v1337 = vsel %vm406, %v1325, %v1326
      %vm1338 = vcmask 211968
      %v1339 = vsel %vm1338, %v1302, %v1337
      %v1340 = vsel %vm406, %v1326, %v1327
      %v1341 = vsel %vm1338, %v1304, %v1340
      %v1342 = vsel %vm406, %v1328, %v1329
      %v1343 = vsel %vm1338, %v1308, %v1342
      %v1344 = vsel %vm406, %v1329, %v1330
      %v1345 = vsel %vm1338, %v1310, %v1344
      %v1346 = vsel %vm406, %v1331, %v1332
      %v1347 = vsel %vm1338, %v1314, %v1346
      %v1348 = vsel %vm406, %v1332, %v1333
      %v1349 = vsel %vm1338, %v1316, %v1348
      %v1350 = vsel %vm406, %v1334, %v1335
      %v1351 = vsel %vm1338, %v1320, %v1350
      %v1352 = vsel %vm406, %v1335, %v1336
      %v1353 = vsel %vm1338, %v1322, %v1352
      %1362 = vst [vmem:[#allocation2 + $0x2c0] sm:$0xff] %v1339
      %1363 = vst [vmem:[#allocation2 + $0x2c8] sm:$0xff] %v1341
      %1364 = vst [vmem:[#allocation2 + $0x2d0] sm:$0xff] %v1343
      %1365 = vst [vmem:[#allocation2 + $0x2d8] sm:$0xff] %v1345
      %1366 = vst [vmem:[#allocation2 + $0x2e0] sm:$0xff] %v1347
      %1367 = vst [vmem:[#allocation2 + $0x2e8] sm:$0xff] %v1349
      %1368 = vst [vmem:[#allocation2 + $0x2f0] sm:$0xff] %v1351
      %1369 = vst [vmem:[#allocation2 + $0x2f8] sm:$0xff] %v1353
      %v1370 = vld [vmem:[%s305] sm:$0xff]
      %v1371 = vld [vmem:[%s305 + $0x8] sm:$0xff]
      %v1372 = vld [vmem:[%s305 + $0x10] sm:$0xf]
      %v1373 = vld [vmem:[%s305 + $0x18] sm:$0xff]
      %v1374 = vld [vmem:[%s305 + $0x20] sm:$0xff]
      %v1375 = vld [vmem:[%s305 + $0x28] sm:$0xf]
      %v1376 = vld [vmem:[%s305 + $0x30] sm:$0xff]
      %v1377 = vld [vmem:[%s305 + $0x38] sm:$0xff]
      %v1378 = vld [vmem:[%s305 + $0x40] sm:$0xf]
      %v1379 = vld [vmem:[%s305 + $0x48] sm:$0xff]
      %v1380 = vld [vmem:[%s305 + $0x50] sm:$0xff]
      %v1381 = vld [vmem:[%s305 + $0x58] sm:$0xf]
      %1394 = vrot.lane.b32.xlu0 %v1370, 18
      %v1395 = vpop.permute.xlu0 %1394
      %1396 = vrot.lane.b32.xlu0 %v1371, 18
      %v1397 = vpop.permute.xlu0 %1396
      %1398 = vrot.lane.b32.xlu0 %v1372, 18
      %v1399 = vpop.permute.xlu0 %1398
      %1400 = vrot.lane.b32.xlu0 %v1373, 18
      %v1401 = vpop.permute.xlu0 %1400
      %1402 = vrot.lane.b32.xlu0 %v1374, 18
      %v1403 = vpop.permute.xlu0 %1402
      %1404 = vrot.lane.b32.xlu0 %v1375, 18
      %v1405 = vpop.permute.xlu0 %1404
      %1406 = vrot.lane.b32.xlu0 %v1376, 18
      %v1407 = vpop.permute.xlu0 %1406
      %1408 = vrot.lane.b32.xlu0 %v1377, 18
      %v1409 = vpop.permute.xlu0 %1408
      %1410 = vrot.lane.b32.xlu0 %v1378, 18
      %v1411 = vpop.permute.xlu0 %1410
      %1412 = vrot.lane.b32.xlu0 %v1379, 18
      %v1413 = vpop.permute.xlu0 %1412
      %1414 = vrot.lane.b32.xlu0 %v1380, 18
      %v1415 = vpop.permute.xlu0 %1414
      %1416 = vrot.lane.b32.xlu0 %v1381, 18
      %v1417 = vpop.permute.xlu0 %1416
      %v1418 = vrot.slane %v1395, 4
      %v1419 = vrot.slane %v1397, 4
      %v1420 = vrot.slane %v1399, 4
      %v1421 = vrot.slane %v1401, 4
      %v1422 = vrot.slane %v1403, 4
      %v1423 = vrot.slane %v1405, 4
      %v1424 = vrot.slane %v1407, 4
      %v1425 = vrot.slane %v1409, 4
      %v1426 = vrot.slane %v1411, 4
      %v1427 = vrot.slane %v1413, 4
      %v1428 = vrot.slane %v1415, 4
      %v1429 = vrot.slane %v1417, 4
      %v1430 = vsel %vm406, %v1418, %v1419
      %vm1431 = vcmask 146432
      %v1432 = vsel %vm1431, %v1395, %v1430
      %v1433 = vsel %vm406, %v1419, %v1420
      %v1434 = vsel %vm1431, %v1397, %v1433
      %v1435 = vsel %vm406, %v1421, %v1422
      %v1436 = vsel %vm1431, %v1401, %v1435
      %v1437 = vsel %vm406, %v1422, %v1423
      %v1438 = vsel %vm1431, %v1403, %v1437
      %v1439 = vsel %vm406, %v1424, %v1425
      %v1440 = vsel %vm1431, %v1407, %v1439
      %v1441 = vsel %vm406, %v1425, %v1426
      %v1442 = vsel %vm1431, %v1409, %v1441
      %v1443 = vsel %vm406, %v1427, %v1428
      %v1444 = vsel %vm1431, %v1413, %v1443
      %v1445 = vsel %vm406, %v1428, %v1429
      %v1446 = vsel %vm1431, %v1415, %v1445
      %1455 = vst [vmem:[#allocation2 + $0x300] sm:$0xff] %v1432
      %1456 = vst [vmem:[#allocation2 + $0x308] sm:$0xff] %v1434
      %1457 = vst [vmem:[#allocation2 + $0x310] sm:$0xff] %v1436
      %1458 = vst [vmem:[#allocation2 + $0x318] sm:$0xff] %v1438
      %1459 = vst [vmem:[#allocation2 + $0x320] sm:$0xff] %v1440
      %1460 = vst [vmem:[#allocation2 + $0x328] sm:$0xff] %v1442
      %1461 = vst [vmem:[#allocation2 + $0x330] sm:$0xff] %v1444
      %1462 = vst [vmem:[#allocation2 + $0x338] sm:$0xff] %v1446
      %v1463 = vld [vmem:[%s305] sm:$0xff]
      %v1464 = vld [vmem:[%s305 + $0x8] sm:$0xff]
      %v1465 = vld [vmem:[%s305 + $0x10] sm:$0xf]
      %v1466 = vld [vmem:[%s305 + $0x18] sm:$0xff]
      %v1467 = vld [vmem:[%s305 + $0x20] sm:$0xff]
      %v1468 = vld [vmem:[%s305 + $0x28] sm:$0xf]
      %v1469 = vld [vmem:[%s305 + $0x30] sm:$0xff]
      %v1470 = vld [vmem:[%s305 + $0x38] sm:$0xff]
      %v1471 = vld [vmem:[%s305 + $0x40] sm:$0xf]
      %v1472 = vld [vmem:[%s305 + $0x48] sm:$0xff]
      %v1473 = vld [vmem:[%s305 + $0x50] sm:$0xff]
      %v1474 = vld [vmem:[%s305 + $0x58] sm:$0xf]
      %1487 = vrot.lane.b32.xlu0 %v1463, 17
      %v1488 = vpop.permute.xlu0 %1487
      %1489 = vrot.lane.b32.xlu0 %v1464, 17
      %v1490 = vpop.permute.xlu0 %1489
      %1491 = vrot.lane.b32.xlu0 %v1465, 17
      %v1492 = vpop.permute.xlu0 %1491
      %1493 = vrot.lane.b32.xlu0 %v1466, 17
      %v1494 = vpop.permute.xlu0 %1493
      %1495 = vrot.lane.b32.xlu0 %v1467, 17
      %v1496 = vpop.permute.xlu0 %1495
      %1497 = vrot.lane.b32.xlu0 %v1468, 17
      %v1498 = vpop.permute.xlu0 %1497
      %1499 = vrot.lane.b32.xlu0 %v1469, 17
      %v1500 = vpop.permute.xlu0 %1499
      %1501 = vrot.lane.b32.xlu0 %v1470, 17
      %v1502 = vpop.permute.xlu0 %1501
      %1503 = vrot.lane.b32.xlu0 %v1471, 17
      %v1504 = vpop.permute.xlu0 %1503
      %1505 = vrot.lane.b32.xlu0 %v1472, 17
      %v1506 = vpop.permute.xlu0 %1505
      %1507 = vrot.lane.b32.xlu0 %v1473, 17
      %v1508 = vpop.permute.xlu0 %1507
      %1509 = vrot.lane.b32.xlu0 %v1474, 17
      %v1510 = vpop.permute.xlu0 %1509
      %v1511 = vrot.slane %v1488, 4
      %v1512 = vrot.slane %v1490, 4
      %v1513 = vrot.slane %v1492, 4
      %v1514 = vrot.slane %v1494, 4
      %v1515 = vrot.slane %v1496, 4
      %v1516 = vrot.slane %v1498, 4
      %v1517 = vrot.slane %v1500, 4
      %v1518 = vrot.slane %v1502, 4
      %v1519 = vrot.slane %v1504, 4
      %v1520 = vrot.slane %v1506, 4
      %v1521 = vrot.slane %v1508, 4
      %v1522 = vrot.slane %v1510, 4
      %v1523 = vsel %vm406, %v1511, %v1512
      %vm1524 = vcmask 138240
      %v1525 = vsel %vm1524, %v1488, %v1523
      %v1526 = vsel %vm406, %v1512, %v1513
      %v1527 = vsel %vm1524, %v1490, %v1526
      %v1528 = vsel %vm406, %v1514, %v1515
      %v1529 = vsel %vm1524, %v1494, %v1528
      %v1530 = vsel %vm406, %v1515, %v1516
      %v1531 = vsel %vm1524, %v1496, %v1530
      %v1532 = vsel %vm406, %v1517, %v1518
      %v1533 = vsel %vm1524, %v1500, %v1532
      %v1534 = vsel %vm406, %v1518, %v1519
      %v1535 = vsel %vm1524, %v1502, %v1534
      %v1536 = vsel %vm406, %v1520, %v1521
      %v1537 = vsel %vm1524, %v1506, %v1536
      %v1538 = vsel %vm406, %v1521, %v1522
      %v1539 = vsel %vm1524, %v1508, %v1538
      %1548 = vst [vmem:[#allocation2 + $0x340] sm:$0xff] %v1525
      %1549 = vst [vmem:[#allocation2 + $0x348] sm:$0xff] %v1527
      %1550 = vst [vmem:[#allocation2 + $0x350] sm:$0xff] %v1529
      %1551 = vst [vmem:[#allocation2 + $0x358] sm:$0xff] %v1531
      %1552 = vst [vmem:[#allocation2 + $0x360] sm:$0xff] %v1533
      %1553 = vst [vmem:[#allocation2 + $0x368] sm:$0xff] %v1535
      %1554 = vst [vmem:[#allocation2 + $0x370] sm:$0xff] %v1537
      %1555 = vst [vmem:[#allocation2 + $0x378] sm:$0xff] %v1539
      %v1556 = vld [vmem:[%s305] sm:$0xff]
      %v1557 = vld [vmem:[%s305 + $0x8] sm:$0xff]
      %v1558 = vld [vmem:[%s305 + $0x10] sm:$0xf]
      %v1559 = vld [vmem:[%s305 + $0x18] sm:$0xff]
      %v1560 = vld [vmem:[%s305 + $0x20] sm:$0xff]
      %v1561 = vld [vmem:[%s305 + $0x28] sm:$0xf]
      %v1562 = vld [vmem:[%s305 + $0x30] sm:$0xff]
      %v1563 = vld [vmem:[%s305 + $0x38] sm:$0xff]
      %v1564 = vld [vmem:[%s305 + $0x40] sm:$0xf]
      %v1565 = vld [vmem:[%s305 + $0x48] sm:$0xff]
      %v1566 = vld [vmem:[%s305 + $0x50] sm:$0xff]
      %v1567 = vld [vmem:[%s305 + $0x58] sm:$0xf]
      %1580 = vrot.lane.b32.xlu0 %v1556, 16
      %v1581 = vpop.permute.xlu0 %1580
      %1582 = vrot.lane.b32.xlu0 %v1557, 16
      %v1583 = vpop.permute.xlu0 %1582
      %1584 = vrot.lane.b32.xlu0 %v1558, 16
      %v1585 = vpop.permute.xlu0 %1584
      %1586 = vrot.lane.b32.xlu0 %v1559, 16
      %v1587 = vpop.permute.xlu0 %1586
      %1588 = vrot.lane.b32.xlu0 %v1560, 16
      %v1589 = vpop.permute.xlu0 %1588
      %1590 = vrot.lane.b32.xlu0 %v1561, 16
      %v1591 = vpop.permute.xlu0 %1590
      %1592 = vrot.lane.b32.xlu0 %v1562, 16
      %v1593 = vpop.permute.xlu0 %1592
      %1594 = vrot.lane.b32.xlu0 %v1563, 16
      %v1595 = vpop.permute.xlu0 %1594
      %1596 = vrot.lane.b32.xlu0 %v1564, 16
      %v1597 = vpop.permute.xlu0 %1596
      %1598 = vrot.lane.b32.xlu0 %v1565, 16
      %v1599 = vpop.permute.xlu0 %1598
      %1600 = vrot.lane.b32.xlu0 %v1566, 16
      %v1601 = vpop.permute.xlu0 %1600
      %1602 = vrot.lane.b32.xlu0 %v1567, 16
      %v1603 = vpop.permute.xlu0 %1602
      %v1604 = vrot.slane %v1581, 4
      %v1605 = vrot.slane %v1583, 4
      %v1606 = vrot.slane %v1585, 4
      %v1607 = vrot.slane %v1587, 4
      %v1608 = vrot.slane %v1589, 4
      %v1609 = vrot.slane %v1591, 4
      %v1610 = vrot.slane %v1593, 4
      %v1611 = vrot.slane %v1595, 4
      %v1612 = vrot.slane %v1597, 4
      %v1613 = vrot.slane %v1599, 4
      %v1614 = vrot.slane %v1601, 4
      %v1615 = vrot.slane %v1603, 4
      %v1616 = vsel %vm406, %v1604, %v1605
      %vm1617 = vcmask 130048
      %v1618 = vsel %vm1617, %v1581, %v1616
      %v1619 = vsel %vm406, %v1605, %v1606
      %v1620 = vsel %vm1617, %v1583, %v1619
      %v1621 = vsel %vm406, %v1607, %v1608
      %v1622 = vsel %vm1617, %v1587, %v1621
      %v1623 = vsel %vm406, %v1608, %v1609
      %v1624 = vsel %vm1617, %v1589, %v1623
      %v1625 = vsel %vm406, %v1610, %v1611
      %v1626 = vsel %vm1617, %v1593, %v1625
      %v1627 = vsel %vm406, %v1611, %v1612
      %v1628 = vsel %vm1617, %v1595, %v1627
      %v1629 = vsel %vm406, %v1613, %v1614
      %v1630 = vsel %vm1617, %v1599, %v1629
      %v1631 = vsel %vm406, %v1614, %v1615
      %v1632 = vsel %vm1617, %v1601, %v1631
      %1641 = vst [vmem:[#allocation2 + $0x380] sm:$0xff] %v1618
      %1642 = vst [vmem:[#allocation2 + $0x388] sm:$0xff] %v1620
      %1643 = vst [vmem:[#allocation2 + $0x390] sm:$0xff] %v1622
      %1644 = vst [vmem:[#allocation2 + $0x398] sm:$0xff] %v1624
      %1645 = vst [vmem:[#allocation2 + $0x3a0] sm:$0xff] %v1626
      %1646 = vst [vmem:[#allocation2 + $0x3a8] sm:$0xff] %v1628
      %1647 = vst [vmem:[#allocation2 + $0x3b0] sm:$0xff] %v1630
      %1648 = vst [vmem:[#allocation2 + $0x3b8] sm:$0xff] %v1632
      %v1649 = vld [vmem:[%s305] sm:$0xff]
      %v1650 = vld [vmem:[%s305 + $0x8] sm:$0xff]
      %v1651 = vld [vmem:[%s305 + $0x10] sm:$0xf]
      %v1652 = vld [vmem:[%s305 + $0x18] sm:$0xff]
      %v1653 = vld [vmem:[%s305 + $0x20] sm:$0xff]
      %v1654 = vld [vmem:[%s305 + $0x28] sm:$0xf]
      %v1655 = vld [vmem:[%s305 + $0x30] sm:$0xff]
      %v1656 = vld [vmem:[%s305 + $0x38] sm:$0xff]
      %v1657 = vld [vmem:[%s305 + $0x40] sm:$0xf]
      %v1658 = vld [vmem:[%s305 + $0x48] sm:$0xff]
      %v1659 = vld [vmem:[%s305 + $0x50] sm:$0xff]
      %v1660 = vld [vmem:[%s305 + $0x58] sm:$0xf]
      %1673 = vrot.lane.b32.xlu0 %v1649, 8
      %v1674 = vpop.permute.xlu0 %1673
      %1675 = vrot.lane.b32.xlu0 %v1650, 8
      %v1676 = vpop.permute.xlu0 %1675
      %1677 = vrot.lane.b32.xlu0 %v1651, 8
      %v1678 = vpop.permute.xlu0 %1677
      %1679 = vrot.lane.b32.xlu0 %v1652, 8
      %v1680 = vpop.permute.xlu0 %1679
      %1681 = vrot.lane.b32.xlu0 %v1653, 8
      %v1682 = vpop.permute.xlu0 %1681
      %1683 = vrot.lane.b32.xlu0 %v1654, 8
      %v1684 = vpop.permute.xlu0 %1683
      %1685 = vrot.lane.b32.xlu0 %v1655, 8
      %v1686 = vpop.permute.xlu0 %1685
      %1687 = vrot.lane.b32.xlu0 %v1656, 8
      %v1688 = vpop.permute.xlu0 %1687
      %1689 = vrot.lane.b32.xlu0 %v1657, 8
      %v1690 = vpop.permute.xlu0 %1689
      %1691 = vrot.lane.b32.xlu0 %v1658, 8
      %v1692 = vpop.permute.xlu0 %1691
      %1693 = vrot.lane.b32.xlu0 %v1659, 8
      %v1694 = vpop.permute.xlu0 %1693
      %1695 = vrot.lane.b32.xlu0 %v1660, 8
      %v1696 = vpop.permute.xlu0 %1695
      %v1697 = vrot.slane %v1674, 4
      %v1698 = vrot.slane %v1676, 4
      %v1699 = vrot.slane %v1678, 4
      %v1700 = vrot.slane %v1680, 4
      %v1701 = vrot.slane %v1682, 4
      %v1702 = vrot.slane %v1684, 4
      %v1703 = vrot.slane %v1686, 4
      %v1704 = vrot.slane %v1688, 4
      %v1705 = vrot.slane %v1690, 4
      %v1706 = vrot.slane %v1692, 4
      %v1707 = vrot.slane %v1694, 4
      %v1708 = vrot.slane %v1696, 4
      %v1709 = vsel %vm406, %v1697, %v1698
      %vm1710 = vcmask 64512
      %v1711 = vsel %vm1710, %v1674, %v1709
      %v1712 = vsel %vm406, %v1698, %v1699
      %v1713 = vsel %vm1710, %v1676, %v1712
      %v1714 = vsel %vm406, %v1700, %v1701
      %v1715 = vsel %vm1710, %v1680, %v1714
      %v1716 = vsel %vm406, %v1701, %v1702
      %v1717 = vsel %vm1710, %v1682, %v1716
      %v1718 = vsel %vm406, %v1703, %v1704
      %v1719 = vsel %vm1710, %v1686, %v1718
      %v1720 = vsel %vm406, %v1704, %v1705
      %v1721 = vsel %vm1710, %v1688, %v1720
      %v1722 = vsel %vm406, %v1706, %v1707
      %v1723 = vsel %vm1710, %v1692, %v1722
      %v1724 = vsel %vm406, %v1707, %v1708
      %v1725 = vsel %vm1710, %v1694, %v1724
      %1734 = vst [vmem:[#allocation2 + $0x3c0] sm:$0xff] %v1711
      %1735 = vst [vmem:[#allocation2 + $0x3c8] sm:$0xff] %v1713
      %1736 = vst [vmem:[#allocation2 + $0x3d0] sm:$0xff] %v1715
      %1737 = vst [vmem:[#allocation2 + $0x3d8] sm:$0xff] %v1717
      %1738 = vst [vmem:[#allocation2 + $0x3e0] sm:$0xff] %v1719
      %1739 = vst [vmem:[#allocation2 + $0x3e8] sm:$0xff] %v1721
      %1740 = vst [vmem:[#allocation2 + $0x3f0] sm:$0xff] %v1723
      %1741 = vst [vmem:[#allocation2 + $0x3f8] sm:$0xff] %v1725
      %v1742 = vld [vmem:[%s305] sm:$0xff]
      %v1743 = vld [vmem:[%s305 + $0x8] sm:$0xff]
      %v1744 = vld [vmem:[%s305 + $0x10] sm:$0xf]
      %v1745 = vld [vmem:[%s305 + $0x18] sm:$0xff]
      %v1746 = vld [vmem:[%s305 + $0x20] sm:$0xff]
      %v1747 = vld [vmem:[%s305 + $0x28] sm:$0xf]
      %v1748 = vld [vmem:[%s305 + $0x30] sm:$0xff]
      %v1749 = vld [vmem:[%s305 + $0x38] sm:$0xff]
      %v1750 = vld [vmem:[%s305 + $0x40] sm:$0xf]
      %v1751 = vld [vmem:[%s305 + $0x48] sm:$0xff]
      %v1752 = vld [vmem:[%s305 + $0x50] sm:$0xff]
      %v1753 = vld [vmem:[%s305 + $0x58] sm:$0xf]
      %1766 = vrot.lane.b32.xlu0 %v1742, 7
      %v1767 = vpop.permute.xlu0 %1766
      %1768 = vrot.lane.b32.xlu0 %v1743, 7
      %v1769 = vpop.permute.xlu0 %1768
      %1770 = vrot.lane.b32.xlu0 %v1744, 7
      %v1771 = vpop.permute.xlu0 %1770
      %1772 = vrot.lane.b32.xlu0 %v1745, 7
      %v1773 = vpop.permute.xlu0 %1772
      %1774 = vrot.lane.b32.xlu0 %v1746, 7
      %v1775 = vpop.permute.xlu0 %1774
      %1776 = vrot.lane.b32.xlu0 %v1747, 7
      %v1777 = vpop.permute.xlu0 %1776
      %1778 = vrot.lane.b32.xlu0 %v1748, 7
      %v1779 = vpop.permute.xlu0 %1778
      %1780 = vrot.lane.b32.xlu0 %v1749, 7
      %v1781 = vpop.permute.xlu0 %1780
      %1782 = vrot.lane.b32.xlu0 %v1750, 7
      %v1783 = vpop.permute.xlu0 %1782
      %1784 = vrot.lane.b32.xlu0 %v1751, 7
      %v1785 = vpop.permute.xlu0 %1784
      %1786 = vrot.lane.b32.xlu0 %v1752, 7
      %v1787 = vpop.permute.xlu0 %1786
      %1788 = vrot.lane.b32.xlu0 %v1753, 7
      %v1789 = vpop.permute.xlu0 %1788
      %v1790 = vrot.slane %v1767, 4
      %v1791 = vrot.slane %v1769, 4
      %v1792 = vrot.slane %v1771, 4
      %v1793 = vrot.slane %v1773, 4
      %v1794 = vrot.slane %v1775, 4
      %v1795 = vrot.slane %v1777, 4
      %v1796 = vrot.slane %v1779, 4
      %v1797 = vrot.slane %v1781, 4
      %v1798 = vrot.slane %v1783, 4
      %v1799 = vrot.slane %v1785, 4
      %v1800 = vrot.slane %v1787, 4
      %v1801 = vrot.slane %v1789, 4
      %v1802 = vsel %vm406, %v1790, %v1791
      %vm1803 = vcmask 56320
      %v1804 = vsel %vm1803, %v1767, %v1802
      %v1805 = vsel %vm406, %v1791, %v1792
      %v1806 = vsel %vm1803, %v1769, %v1805
      %v1807 = vsel %vm406, %v1793, %v1794
      %v1808 = vsel %vm1803, %v1773, %v1807
      %v1809 = vsel %vm406, %v1794, %v1795
      %v1810 = vsel %vm1803, %v1775, %v1809
      %v1811 = vsel %vm406, %v1796, %v1797
      %v1812 = vsel %vm1803, %v1779, %v1811
      %v1813 = vsel %vm406, %v1797, %v1798
      %v1814 = vsel %vm1803, %v1781, %v1813
      %v1815 = vsel %vm406, %v1799, %v1800
      %v1816 = vsel %vm1803, %v1785, %v1815
      %v1817 = vsel %vm406, %v1800, %v1801
      %v1818 = vsel %vm1803, %v1787, %v1817
      %1827 = vst [vmem:[#allocation2 + $0x400] sm:$0xff] %v1804
      %1828 = vst [vmem:[#allocation2 + $0x408] sm:$0xff] %v1806
      %1829 = vst [vmem:[#allocation2 + $0x410] sm:$0xff] %v1808
      %1830 = vst [vmem:[#allocation2 + $0x418] sm:$0xff] %v1810
      %1831 = vst [vmem:[#allocation2 + $0x420] sm:$0xff] %v1812
      %1832 = vst [vmem:[#allocation2 + $0x428] sm:$0xff] %v1814
      %1833 = vst [vmem:[#allocation2 + $0x430] sm:$0xff] %v1816
      %1834 = vst [vmem:[#allocation2 + $0x438] sm:$0xff] %v1818
      %v1835 = vld [vmem:[%s305] sm:$0xff]
      %v1836 = vld [vmem:[%s305 + $0x8] sm:$0xff]
      %v1837 = vld [vmem:[%s305 + $0x10] sm:$0xf]
      %v1838 = vld [vmem:[%s305 + $0x18] sm:$0xff]
      %v1839 = vld [vmem:[%s305 + $0x20] sm:$0xff]
      %v1840 = vld [vmem:[%s305 + $0x28] sm:$0xf]
      %v1841 = vld [vmem:[%s305 + $0x30] sm:$0xff]
      %v1842 = vld [vmem:[%s305 + $0x38] sm:$0xff]
      %v1843 = vld [vmem:[%s305 + $0x40] sm:$0xf]
      %v1844 = vld [vmem:[%s305 + $0x48] sm:$0xff]
      %v1845 = vld [vmem:[%s305 + $0x50] sm:$0xff]
      %v1846 = vld [vmem:[%s305 + $0x58] sm:$0xf]
      %1859 = vrot.lane.b32.xlu0 %v1835, 6
      %v1860 = vpop.permute.xlu0 %1859
      %1861 = vrot.lane.b32.xlu0 %v1836, 6
      %v1862 = vpop.permute.xlu0 %1861
      %1863 = vrot.lane.b32.xlu0 %v1837, 6
      %v1864 = vpop.permute.xlu0 %1863
      %1865 = vrot.lane.b32.xlu0 %v1838, 6
      %v1866 = vpop.permute.xlu0 %1865
      %1867 = vrot.lane.b32.xlu0 %v1839, 6
      %v1868 = vpop.permute.xlu0 %1867
      %1869 = vrot.lane.b32.xlu0 %v1840, 6
      %v1870 = vpop.permute.xlu0 %1869
      %1871 = vrot.lane.b32.xlu0 %v1841, 6
      %v1872 = vpop.permute.xlu0 %1871
      %1873 = vrot.lane.b32.xlu0 %v1842, 6
      %v1874 = vpop.permute.xlu0 %1873
      %1875 = vrot.lane.b32.xlu0 %v1843, 6
      %v1876 = vpop.permute.xlu0 %1875
      %1877 = vrot.lane.b32.xlu0 %v1844, 6
      %v1878 = vpop.permute.xlu0 %1877
      %1879 = vrot.lane.b32.xlu0 %v1845, 6
      %v1880 = vpop.permute.xlu0 %1879
      %1881 = vrot.lane.b32.xlu0 %v1846, 6
      %v1882 = vpop.permute.xlu0 %1881
      %v1883 = vrot.slane %v1860, 4
      %v1884 = vrot.slane %v1862, 4
      %v1885 = vrot.slane %v1864, 4
      %v1886 = vrot.slane %v1866, 4
      %v1887 = vrot.slane %v1868, 4
      %v1888 = vrot.slane %v1870, 4
      %v1889 = vrot.slane %v1872, 4
      %v1890 = vrot.slane %v1874, 4
      %v1891 = vrot.slane %v1876, 4
      %v1892 = vrot.slane %v1878, 4
      %v1893 = vrot.slane %v1880, 4
      %v1894 = vrot.slane %v1882, 4
      %v1895 = vsel %vm406, %v1883, %v1884
      %vm1896 = vcmask 48128
      %v1897 = vsel %vm1896, %v1860, %v1895
      %v1898 = vsel %vm406, %v1884, %v1885
      %v1899 = vsel %vm1896, %v1862, %v1898
      %v1900 = vsel %vm406, %v1886, %v1887
      %v1901 = vsel %vm1896, %v1866, %v1900
      %v1902 = vsel %vm406, %v1887, %v1888
      %v1903 = vsel %vm1896, %v1868, %v1902
      %v1904 = vsel %vm406, %v1889, %v1890
      %v1905 = vsel %vm1896, %v1872, %v1904
      %v1906 = vsel %vm406, %v1890, %v1891
      %v1907 = vsel %vm1896, %v1874, %v1906
      %v1908 = vsel %vm406, %v1892, %v1893
      %v1909 = vsel %vm1896, %v1878, %v1908
      %v1910 = vsel %vm406, %v1893, %v1894
      %v1911 = vsel %vm1896, %v1880, %v1910
      %1920 = vst [vmem:[#allocation2 + $0x440] sm:$0xff] %v1897
      %1921 = vst [vmem:[#allocation2 + $0x448] sm:$0xff] %v1899
      %1922 = vst [vmem:[#allocation2 + $0x450] sm:$0xff] %v1901
      %1923 = vst [vmem:[#allocation2 + $0x458] sm:$0xff] %v1903
      %1924 = vst [vmem:[#allocation2 + $0x460] sm:$0xff] %v1905
      %1925 = vst [vmem:[#allocation2 + $0x468] sm:$0xff] %v1907
      %1926 = vst [vmem:[#allocation2 + $0x470] sm:$0xff] %v1909
      %1927 = vst [vmem:[#allocation2 + $0x478] sm:$0xff] %v1911
      %v1928 = vld [vmem:[%s305 + $0x4] sm:$0xff]
      %v1929 = vld [vmem:[%s305 + $0xc] sm:$0xff]
      %v1930 = vld [vmem:[%s305 + $0x14] sm:$0xf]
      %v1931 = vld [vmem:[%s305 + $0x1c] sm:$0xff]
      %v1932 = vld [vmem:[%s305 + $0x24] sm:$0xff]
      %v1933 = vld [vmem:[%s305 + $0x2c] sm:$0xf]
      %v1934 = vld [vmem:[%s305 + $0x34] sm:$0xff]
      %v1935 = vld [vmem:[%s305 + $0x3c] sm:$0xff]
      %v1936 = vld [vmem:[%s305 + $0x44] sm:$0xf]
      %v1937 = vld [vmem:[%s305 + $0x4c] sm:$0xff]
      %v1938 = vld [vmem:[%s305 + $0x54] sm:$0xff]
      %v1939 = vld [vmem:[%s305 + $0x5c] sm:$0xf]
      %1952 = vrot.lane.b32.xlu0 %v1928, 56
      %v1953 = vpop.permute.xlu0 %1952
      %1954 = vrot.lane.b32.xlu0 %v1929, 56
      %v1955 = vpop.permute.xlu0 %1954
      %1956 = vrot.lane.b32.xlu0 %v1930, 56
      %v1957 = vpop.permute.xlu0 %1956
      %1958 = vrot.lane.b32.xlu0 %v1931, 56
      %v1959 = vpop.permute.xlu0 %1958
      %1960 = vrot.lane.b32.xlu0 %v1932, 56
      %v1961 = vpop.permute.xlu0 %1960
      %1962 = vrot.lane.b32.xlu0 %v1933, 56
      %v1963 = vpop.permute.xlu0 %1962
      %1964 = vrot.lane.b32.xlu0 %v1934, 56
      %v1965 = vpop.permute.xlu0 %1964
      %1966 = vrot.lane.b32.xlu0 %v1935, 56
      %v1967 = vpop.permute.xlu0 %1966
      %1968 = vrot.lane.b32.xlu0 %v1936, 56
      %v1969 = vpop.permute.xlu0 %1968
      %1970 = vrot.lane.b32.xlu0 %v1937, 56
      %v1971 = vpop.permute.xlu0 %1970
      %1972 = vrot.lane.b32.xlu0 %v1938, 56
      %v1973 = vpop.permute.xlu0 %1972
      %1974 = vrot.lane.b32.xlu0 %v1939, 56
      %v1975 = vpop.permute.xlu0 %1974
      %v1976 = vrot.slane %v1953, 4
      %v1977 = vrot.slane %v1955, 4
      %v1978 = vrot.slane %v1957, 4
      %v1979 = vrot.slane %v1959, 4
      %v1980 = vrot.slane %v1961, 4
      %v1981 = vrot.slane %v1963, 4
      %v1982 = vrot.slane %v1965, 4
      %v1983 = vrot.slane %v1967, 4
      %v1984 = vrot.slane %v1969, 4
      %v1985 = vrot.slane %v1971, 4
      %v1986 = vrot.slane %v1973, 4
      %v1987 = vrot.slane %v1975, 4
      %v1988 = vsel %vm406, %v1976, %v1977
      %vm1989 = vcmask 457728
      %v1990 = vsel %vm1989, %v1953, %v1988
      %v1991 = vsel %vm406, %v1977, %v1978
      %v1992 = vsel %vm1989, %v1955, %v1991
      %v1993 = vsel %vm406, %v1979, %v1980
      %v1994 = vsel %vm1989, %v1959, %v1993
      %v1995 = vsel %vm406, %v1980, %v1981
      %v1996 = vsel %vm1989, %v1961, %v1995
      %v1997 = vsel %vm406, %v1982, %v1983
      %v1998 = vsel %vm1989, %v1965, %v1997
      %v1999 = vsel %vm406, %v1983, %v1984
      %v2000 = vsel %vm1989, %v1967, %v1999
      %v2001 = vsel %vm406, %v1985, %v1986
      %v2002 = vsel %vm1989, %v1971, %v2001
      %v2003 = vsel %vm406, %v1986, %v1987
      %v2004 = vsel %vm1989, %v1973, %v2003
      %2013 = vst [vmem:[#allocation2 + $0x480] sm:$0xff] %v1990
      %2014 = vst [vmem:[#allocation2 + $0x488] sm:$0xff] %v1992
      %2015 = vst [vmem:[#allocation2 + $0x490] sm:$0xff] %v1994
      %2016 = vst [vmem:[#allocation2 + $0x498] sm:$0xff] %v1996
      %2017 = vst [vmem:[#allocation2 + $0x4a0] sm:$0xff] %v1998
      %2018 = vst [vmem:[#allocation2 + $0x4a8] sm:$0xff] %v2000
      %2019 = vst [vmem:[#allocation2 + $0x4b0] sm:$0xff] %v2002
      %2020 = vst [vmem:[#allocation2 + $0x4b8] sm:$0xff] %v2004
      %v2021 = vld [vmem:[%s305 + $0x4] sm:$0xff]
      %v2022 = vld [vmem:[%s305 + $0xc] sm:$0xff]
      %v2023 = vld [vmem:[%s305 + $0x14] sm:$0xf]
      %v2024 = vld [vmem:[%s305 + $0x1c] sm:$0xff]
      %v2025 = vld [vmem:[%s305 + $0x24] sm:$0xff]
      %v2026 = vld [vmem:[%s305 + $0x2c] sm:$0xf]
      %v2027 = vld [vmem:[%s305 + $0x34] sm:$0xff]
      %v2028 = vld [vmem:[%s305 + $0x3c] sm:$0xff]
      %v2029 = vld [vmem:[%s305 + $0x44] sm:$0xf]
      %v2030 = vld [vmem:[%s305 + $0x4c] sm:$0xff]
      %v2031 = vld [vmem:[%s305 + $0x54] sm:$0xff]
      %v2032 = vld [vmem:[%s305 + $0x5c] sm:$0xf]
      %2045 = vrot.lane.b32.xlu0 %v2021, 55
      %v2046 = vpop.permute.xlu0 %2045
      %2047 = vrot.lane.b32.xlu0 %v2022, 55
      %v2048 = vpop.permute.xlu0 %2047
      %2049 = vrot.lane.b32.xlu0 %v2023, 55
      %v2050 = vpop.permute.xlu0 %2049
      %2051 = vrot.lane.b32.xlu0 %v2024, 55
      %v2052 = vpop.permute.xlu0 %2051
      %2053 = vrot.lane.b32.xlu0 %v2025, 55
      %v2054 = vpop.permute.xlu0 %2053
      %2055 = vrot.lane.b32.xlu0 %v2026, 55
      %v2056 = vpop.permute.xlu0 %2055
      %2057 = vrot.lane.b32.xlu0 %v2027, 55
      %v2058 = vpop.permute.xlu0 %2057
      %2059 = vrot.lane.b32.xlu0 %v2028, 55
      %v2060 = vpop.permute.xlu0 %2059
      %2061 = vrot.lane.b32.xlu0 %v2029, 55
      %v2062 = vpop.permute.xlu0 %2061
      %2063 = vrot.lane.b32.xlu0 %v2030, 55
      %v2064 = vpop.permute.xlu0 %2063
      %2065 = vrot.lane.b32.xlu0 %v2031, 55
      %v2066 = vpop.permute.xlu0 %2065
      %2067 = vrot.lane.b32.xlu0 %v2032, 55
      %v2068 = vpop.permute.xlu0 %2067
      %v2069 = vrot.slane %v2046, 4
      %v2070 = vrot.slane %v2048, 4
      %v2071 = vrot.slane %v2050, 4
      %v2072 = vrot.slane %v2052, 4
      %v2073 = vrot.slane %v2054, 4
      %v2074 = vrot.slane %v2056, 4
      %v2075 = vrot.slane %v2058, 4
      %v2076 = vrot.slane %v2060, 4
      %v2077 = vrot.slane %v2062, 4
      %v2078 = vrot.slane %v2064, 4
      %v2079 = vrot.slane %v2066, 4
      %v2080 = vrot.slane %v2068, 4
      %v2081 = vsel %vm406, %v2069, %v2070
      %vm2082 = vcmask 449536
      %v2083 = vsel %vm2082, %v2046, %v2081
      %v2084 = vsel %vm406, %v2070, %v2071
      %v2085 = vsel %vm2082, %v2048, %v2084
      %v2086 = vsel %vm406, %v2072, %v2073
      %v2087 = vsel %vm2082, %v2052, %v2086
      %v2088 = vsel %vm406, %v2073, %v2074
      %v2089 = vsel %vm2082, %v2054, %v2088
      %v2090 = vsel %vm406, %v2075, %v2076
      %v2091 = vsel %vm2082, %v2058, %v2090
      %v2092 = vsel %vm406, %v2076, %v2077
      %v2093 = vsel %vm2082, %v2060, %v2092
      %v2094 = vsel %vm406, %v2078, %v2079
      %v2095 = vsel %vm2082, %v2064, %v2094
      %v2096 = vsel %vm406, %v2079, %v2080
      %v2097 = vsel %vm2082, %v2066, %v2096
      %2106 = vst [vmem:[#allocation2 + $0x4c0] sm:$0xff] %v2083
      %2107 = vst [vmem:[#allocation2 + $0x4c8] sm:$0xff] %v2085
      %2108 = vst [vmem:[#allocation2 + $0x4d0] sm:$0xff] %v2087
      %2109 = vst [vmem:[#allocation2 + $0x4d8] sm:$0xff] %v2089
      %2110 = vst [vmem:[#allocation2 + $0x4e0] sm:$0xff] %v2091
      %2111 = vst [vmem:[#allocation2 + $0x4e8] sm:$0xff] %v2093
      %2112 = vst [vmem:[#allocation2 + $0x4f0] sm:$0xff] %v2095
      %2113 = vst [vmem:[#allocation2 + $0x4f8] sm:$0xff] %v2097
      %v2114 = vld [vmem:[%s305 + $0x4] sm:$0xff]
      %v2115 = vld [vmem:[%s305 + $0xc] sm:$0xff]
      %v2116 = vld [vmem:[%s305 + $0x14] sm:$0xf]
      %v2117 = vld [vmem:[%s305 + $0x1c] sm:$0xff]
      %v2118 = vld [vmem:[%s305 + $0x24] sm:$0xff]
      %v2119 = vld [vmem:[%s305 + $0x2c] sm:$0xf]
      %v2120 = vld [vmem:[%s305 + $0x34] sm:$0xff]
      %v2121 = vld [vmem:[%s305 + $0x3c] sm:$0xff]
      %v2122 = vld [vmem:[%s305 + $0x44] sm:$0xf]
      %v2123 = vld [vmem:[%s305 + $0x4c] sm:$0xff]
      %v2124 = vld [vmem:[%s305 + $0x54] sm:$0xff]
      %v2125 = vld [vmem:[%s305 + $0x5c] sm:$0xf]
      %2138 = vrot.lane.b32.xlu0 %v2114, 54
      %v2139 = vpop.permute.xlu0 %2138
      %2140 = vrot.lane.b32.xlu0 %v2115, 54
      %v2141 = vpop.permute.xlu0 %2140
      %2142 = vrot.lane.b32.xlu0 %v2116, 54
      %v2143 = vpop.permute.xlu0 %2142
      %2144 = vrot.lane.b32.xlu0 %v2117, 54
      %v2145 = vpop.permute.xlu0 %2144
      %2146 = vrot.lane.b32.xlu0 %v2118, 54
      %v2147 = vpop.permute.xlu0 %2146
      %2148 = vrot.lane.b32.xlu0 %v2119, 54
      %v2149 = vpop.permute.xlu0 %2148
      %2150 = vrot.lane.b32.xlu0 %v2120, 54
      %v2151 = vpop.permute.xlu0 %2150
      %2152 = vrot.lane.b32.xlu0 %v2121, 54
      %v2153 = vpop.permute.xlu0 %2152
      %2154 = vrot.lane.b32.xlu0 %v2122, 54
      %v2155 = vpop.permute.xlu0 %2154
      %2156 = vrot.lane.b32.xlu0 %v2123, 54
      %v2157 = vpop.permute.xlu0 %2156
      %2158 = vrot.lane.b32.xlu0 %v2124, 54
      %v2159 = vpop.permute.xlu0 %2158
      %2160 = vrot.lane.b32.xlu0 %v2125, 54
      %v2161 = vpop.permute.xlu0 %2160
      %v2162 = vrot.slane %v2139, 4
      %v2163 = vrot.slane %v2141, 4
      %v2164 = vrot.slane %v2143, 4
      %v2165 = vrot.slane %v2145, 4
      %v2166 = vrot.slane %v2147, 4
      %v2167 = vrot.slane %v2149, 4
      %v2168 = vrot.slane %v2151, 4
      %v2169 = vrot.slane %v2153, 4
      %v2170 = vrot.slane %v2155, 4
      %v2171 = vrot.slane %v2157, 4
      %v2172 = vrot.slane %v2159, 4
      %v2173 = vrot.slane %v2161, 4
      %v2174 = vsel %vm406, %v2162, %v2163
      %vm2175 = vcmask 441344
      %v2176 = vsel %vm2175, %v2139, %v2174
      %v2177 = vsel %vm406, %v2163, %v2164
      %v2178 = vsel %vm2175, %v2141, %v2177
      %v2179 = vsel %vm406, %v2165, %v2166
      %v2180 = vsel %vm2175, %v2145, %v2179
      %v2181 = vsel %vm406, %v2166, %v2167
      %v2182 = vsel %vm2175, %v2147, %v2181
      %v2183 = vsel %vm406, %v2168, %v2169
      %v2184 = vsel %vm2175, %v2151, %v2183
      %v2185 = vsel %vm406, %v2169, %v2170
      %v2186 = vsel %vm2175, %v2153, %v2185
      %v2187 = vsel %vm406, %v2171, %v2172
      %v2188 = vsel %vm2175, %v2157, %v2187
      %v2189 = vsel %vm406, %v2172, %v2173
      %v2190 = vsel %vm2175, %v2159, %v2189
      %2199 = vst [vmem:[#allocation2 + $0x500] sm:$0xff] %v2176
      %2200 = vst [vmem:[#allocation2 + $0x508] sm:$0xff] %v2178
      %2201 = vst [vmem:[#allocation2 + $0x510] sm:$0xff] %v2180
      %2202 = vst [vmem:[#allocation2 + $0x518] sm:$0xff] %v2182
      %2203 = vst [vmem:[#allocation2 + $0x520] sm:$0xff] %v2184
      %2204 = vst [vmem:[#allocation2 + $0x528] sm:$0xff] %v2186
      %2205 = vst [vmem:[#allocation2 + $0x530] sm:$0xff] %v2188
      %2206 = vst [vmem:[#allocation2 + $0x538] sm:$0xff] %v2190
      %v2207 = vld [vmem:[%s305 + $0x4] sm:$0xff]
      %v2208 = vld [vmem:[%s305 + $0xc] sm:$0xff]
      %v2209 = vld [vmem:[%s305 + $0x14] sm:$0xf]
      %v2210 = vld [vmem:[%s305 + $0x1c] sm:$0xff]
      %v2211 = vld [vmem:[%s305 + $0x24] sm:$0xff]
      %v2212 = vld [vmem:[%s305 + $0x2c] sm:$0xf]
      %v2213 = vld [vmem:[%s305 + $0x34] sm:$0xff]
      %v2214 = vld [vmem:[%s305 + $0x3c] sm:$0xff]
      %v2215 = vld [vmem:[%s305 + $0x44] sm:$0xf]
      %v2216 = vld [vmem:[%s305 + $0x4c] sm:$0xff]
      %v2217 = vld [vmem:[%s305 + $0x54] sm:$0xff]
      %v2218 = vld [vmem:[%s305 + $0x5c] sm:$0xf]
      %2231 = vrot.lane.b32.xlu0 %v2207, 46
      %v2232 = vpop.permute.xlu0 %2231
      %2233 = vrot.lane.b32.xlu0 %v2208, 46
      %v2234 = vpop.permute.xlu0 %2233
      %2235 = vrot.lane.b32.xlu0 %v2209, 46
      %v2236 = vpop.permute.xlu0 %2235
      %2237 = vrot.lane.b32.xlu0 %v2210, 46
      %v2238 = vpop.permute.xlu0 %2237
      %2239 = vrot.lane.b32.xlu0 %v2211, 46
      %v2240 = vpop.permute.xlu0 %2239
      %2241 = vrot.lane.b32.xlu0 %v2212, 46
      %v2242 = vpop.permute.xlu0 %2241
      %2243 = vrot.lane.b32.xlu0 %v2213, 46
      %v2244 = vpop.permute.xlu0 %2243
      %2245 = vrot.lane.b32.xlu0 %v2214, 46
      %v2246 = vpop.permute.xlu0 %2245
      %2247 = vrot.lane.b32.xlu0 %v2215, 46
      %v2248 = vpop.permute.xlu0 %2247
      %2249 = vrot.lane.b32.xlu0 %v2216, 46
      %v2250 = vpop.permute.xlu0 %2249
      %2251 = vrot.lane.b32.xlu0 %v2217, 46
      %v2252 = vpop.permute.xlu0 %2251
      %2253 = vrot.lane.b32.xlu0 %v2218, 46
      %v2254 = vpop.permute.xlu0 %2253
      %v2255 = vrot.slane %v2232, 4
      %v2256 = vrot.slane %v2234, 4
      %v2257 = vrot.slane %v2236, 4
      %v2258 = vrot.slane %v2238, 4
      %v2259 = vrot.slane %v2240, 4
      %v2260 = vrot.slane %v2242, 4
      %v2261 = vrot.slane %v2244, 4
      %v2262 = vrot.slane %v2246, 4
      %v2263 = vrot.slane %v2248, 4
      %v2264 = vrot.slane %v2250, 4
      %v2265 = vrot.slane %v2252, 4
      %v2266 = vrot.slane %v2254, 4
      %v2267 = vsel %vm406, %v2255, %v2256
      %vm2268 = vcmask 375808
      %v2269 = vsel %vm2268, %v2232, %v2267
      %v2270 = vsel %vm406, %v2256, %v2257
      %v2271 = vsel %vm2268, %v2234, %v2270
      %v2272 = vsel %vm406, %v2258, %v2259
      %v2273 = vsel %vm2268, %v2238, %v2272
      %v2274 = vsel %vm406, %v2259, %v2260
      %v2275 = vsel %vm2268, %v2240, %v2274
      %v2276 = vsel %vm406, %v2261, %v2262
      %v2277 = vsel %vm2268, %v2244, %v2276
      %v2278 = vsel %vm406, %v2262, %v2263
      %v2279 = vsel %vm2268, %v2246, %v2278
      %v2280 = vsel %vm406, %v2264, %v2265
      %v2281 = vsel %vm2268, %v2250, %v2280
      %v2282 = vsel %vm406, %v2265, %v2266
      %v2283 = vsel %vm2268, %v2252, %v2282
      %2292 = vst [vmem:[#allocation2 + $0x540] sm:$0xff] %v2269
      %2293 = vst [vmem:[#allocation2 + $0x548] sm:$0xff] %v2271
      %2294 = vst [vmem:[#allocation2 + $0x550] sm:$0xff] %v2273
      %2295 = vst [vmem:[#allocation2 + $0x558] sm:$0xff] %v2275
      %2296 = vst [vmem:[#allocation2 + $0x560] sm:$0xff] %v2277
      %2297 = vst [vmem:[#allocation2 + $0x568] sm:$0xff] %v2279
      %2298 = vst [vmem:[#allocation2 + $0x570] sm:$0xff] %v2281
      %2299 = vst [vmem:[#allocation2 + $0x578] sm:$0xff] %v2283
      %v2300 = vld [vmem:[%s305 + $0x4] sm:$0xff]
      %v2301 = vld [vmem:[%s305 + $0xc] sm:$0xff]
      %v2302 = vld [vmem:[%s305 + $0x14] sm:$0xf]
      %v2303 = vld [vmem:[%s305 + $0x1c] sm:$0xff]
      %v2304 = vld [vmem:[%s305 + $0x24] sm:$0xff]
      %v2305 = vld [vmem:[%s305 + $0x2c] sm:$0xf]
      %v2306 = vld [vmem:[%s305 + $0x34] sm:$0xff]
      %v2307 = vld [vmem:[%s305 + $0x3c] sm:$0xff]
      %v2308 = vld [vmem:[%s305 + $0x44] sm:$0xf]
      %v2309 = vld [vmem:[%s305 + $0x4c] sm:$0xff]
      %v2310 = vld [vmem:[%s305 + $0x54] sm:$0xff]
      %v2311 = vld [vmem:[%s305 + $0x5c] sm:$0xf]
      %2324 = vrot.lane.b32.xlu0 %v2300, 45
      %v2325 = vpop.permute.xlu0 %2324
      %2326 = vrot.lane.b32.xlu0 %v2301, 45
      %v2327 = vpop.permute.xlu0 %2326
      %2328 = vrot.lane.b32.xlu0 %v2302, 45
      %v2329 = vpop.permute.xlu0 %2328
      %2330 = vrot.lane.b32.xlu0 %v2303, 45
      %v2331 = vpop.permute.xlu0 %2330
      %2332 = vrot.lane.b32.xlu0 %v2304, 45
      %v2333 = vpop.permute.xlu0 %2332
      %2334 = vrot.lane.b32.xlu0 %v2305, 45
      %v2335 = vpop.permute.xlu0 %2334
      %2336 = vrot.lane.b32.xlu0 %v2306, 45
      %v2337 = vpop.permute.xlu0 %2336
      %2338 = vrot.lane.b32.xlu0 %v2307, 45
      %v2339 = vpop.permute.xlu0 %2338
      %2340 = vrot.lane.b32.xlu0 %v2308, 45
      %v2341 = vpop.permute.xlu0 %2340
      %2342 = vrot.lane.b32.xlu0 %v2309, 45
      %v2343 = vpop.permute.xlu0 %2342
      %2344 = vrot.lane.b32.xlu0 %v2310, 45
      %v2345 = vpop.permute.xlu0 %2344
      %2346 = vrot.lane.b32.xlu0 %v2311, 45
      %v2347 = vpop.permute.xlu0 %2346
      %v2348 = vrot.slane %v2325, 4
      %v2349 = vrot.slane %v2327, 4
      %v2350 = vrot.slane %v2329, 4
      %v2351 = vrot.slane %v2331, 4
      %v2352 = vrot.slane %v2333, 4
      %v2353 = vrot.slane %v2335, 4
      %v2354 = vrot.slane %v2337, 4
      %v2355 = vrot.slane %v2339, 4
      %v2356 = vrot.slane %v2341, 4
      %v2357 = vrot.slane %v2343, 4
      %v2358 = vrot.slane %v2345, 4
      %v2359 = vrot.slane %v2347, 4
      %v2360 = vsel %vm406, %v2348, %v2349
      %vm2361 = vcmask 367616
      %v2362 = vsel %vm2361, %v2325, %v2360
      %v2363 = vsel %vm406, %v2349, %v2350
      %v2364 = vsel %vm2361, %v2327, %v2363
      %v2365 = vsel %vm406, %v2351, %v2352
      %v2366 = vsel %vm2361, %v2331, %v2365
      %v2367 = vsel %vm406, %v2352, %v2353
      %v2368 = vsel %vm2361, %v2333, %v2367
      %v2369 = vsel %vm406, %v2354, %v2355
      %v2370 = vsel %vm2361, %v2337, %v2369
      %v2371 = vsel %vm406, %v2355, %v2356
      %v2372 = vsel %vm2361, %v2339, %v2371
      %v2373 = vsel %vm406, %v2357, %v2358
      %v2374 = vsel %vm2361, %v2343, %v2373
      %v2375 = vsel %vm406, %v2358, %v2359
      %v2376 = vsel %vm2361, %v2345, %v2375
      %2385 = vst [vmem:[#allocation2 + $0x580] sm:$0xff] %v2362
      %2386 = vst [vmem:[#allocation2 + $0x588] sm:$0xff] %v2364
      %2387 = vst [vmem:[#allocation2 + $0x590] sm:$0xff] %v2366
      %2388 = vst [vmem:[#allocation2 + $0x598] sm:$0xff] %v2368
      %2389 = vst [vmem:[#allocation2 + $0x5a0] sm:$0xff] %v2370
      %2390 = vst [vmem:[#allocation2 + $0x5a8] sm:$0xff] %v2372
      %2391 = vst [vmem:[#allocation2 + $0x5b0] sm:$0xff] %v2374
      %2392 = vst [vmem:[#allocation2 + $0x5b8] sm:$0xff] %v2376
      %v2393 = vld [vmem:[%s305 + $0x4] sm:$0xff]
      %v2394 = vld [vmem:[%s305 + $0xc] sm:$0xff]
      %v2395 = vld [vmem:[%s305 + $0x14] sm:$0xf]
      %v2396 = vld [vmem:[%s305 + $0x1c] sm:$0xff]
      %v2397 = vld [vmem:[%s305 + $0x24] sm:$0xff]
      %v2398 = vld [vmem:[%s305 + $0x2c] sm:$0xf]
      %v2399 = vld [vmem:[%s305 + $0x34] sm:$0xff]
      %v2400 = vld [vmem:[%s305 + $0x3c] sm:$0xff]
      %v2401 = vld [vmem:[%s305 + $0x44] sm:$0xf]
      %v2402 = vld [vmem:[%s305 + $0x4c] sm:$0xff]
      %v2403 = vld [vmem:[%s305 + $0x54] sm:$0xff]
      %v2404 = vld [vmem:[%s305 + $0x5c] sm:$0xf]
      %2417 = vrot.lane.b32.xlu0 %v2393, 44
      %v2418 = vpop.permute.xlu0 %2417
      %2419 = vrot.lane.b32.xlu0 %v2394, 44
      %v2420 = vpop.permute.xlu0 %2419
      %2421 = vrot.lane.b32.xlu0 %v2395, 44
      %v2422 = vpop.permute.xlu0 %2421
      %2423 = vrot.lane.b32.xlu0 %v2396, 44
      %v2424 = vpop.permute.xlu0 %2423
      %2425 = vrot.lane.b32.xlu0 %v2397, 44
      %v2426 = vpop.permute.xlu0 %2425
      %2427 = vrot.lane.b32.xlu0 %v2398, 44
      %v2428 = vpop.permute.xlu0 %2427
      %2429 = vrot.lane.b32.xlu0 %v2399, 44
      %v2430 = vpop.permute.xlu0 %2429
      %2431 = vrot.lane.b32.xlu0 %v2400, 44
      %v2432 = vpop.permute.xlu0 %2431
      %2433 = vrot.lane.b32.xlu0 %v2401, 44
      %v2434 = vpop.permute.xlu0 %2433
      %2435 = vrot.lane.b32.xlu0 %v2402, 44
      %v2436 = vpop.permute.xlu0 %2435
      %2437 = vrot.lane.b32.xlu0 %v2403, 44
      %v2438 = vpop.permute.xlu0 %2437
      %2439 = vrot.lane.b32.xlu0 %v2404, 44
      %v2440 = vpop.permute.xlu0 %2439
      %v2441 = vrot.slane %v2418, 4
      %v2442 = vrot.slane %v2420, 4
      %v2443 = vrot.slane %v2422, 4
      %v2444 = vrot.slane %v2424, 4
      %v2445 = vrot.slane %v2426, 4
      %v2446 = vrot.slane %v2428, 4
      %v2447 = vrot.slane %v2430, 4
      %v2448 = vrot.slane %v2432, 4
      %v2449 = vrot.slane %v2434, 4
      %v2450 = vrot.slane %v2436, 4
      %v2451 = vrot.slane %v2438, 4
      %v2452 = vrot.slane %v2440, 4
      %v2453 = vsel %vm406, %v2441, %v2442
      %vm2454 = vcmask 359424
      %v2455 = vsel %vm2454, %v2418, %v2453
      %v2456 = vsel %vm406, %v2442, %v2443
      %v2457 = vsel %vm2454, %v2420, %v2456
      %v2458 = vsel %vm406, %v2444, %v2445
      %v2459 = vsel %vm2454, %v2424, %v2458
      %v2460 = vsel %vm406, %v2445, %v2446
      %v2461 = vsel %vm2454, %v2426, %v2460
      %v2462 = vsel %vm406, %v2447, %v2448
      %v2463 = vsel %vm2454, %v2430, %v2462
      %v2464 = vsel %vm406, %v2448, %v2449
      %v2465 = vsel %vm2454, %v2432, %v2464
      %v2466 = vsel %vm406, %v2450, %v2451
      %v2467 = vsel %vm2454, %v2436, %v2466
      %v2468 = vsel %vm406, %v2451, %v2452
      %v2469 = vsel %vm2454, %v2438, %v2468
      %2478 = vst [vmem:[#allocation2 + $0x5c0] sm:$0xff] %v2455
      %2479 = vst [vmem:[#allocation2 + $0x5c8] sm:$0xff] %v2457
      %2480 = vst [vmem:[#allocation2 + $0x5d0] sm:$0xff] %v2459
      %2481 = vst [vmem:[#allocation2 + $0x5d8] sm:$0xff] %v2461
      %2482 = vst [vmem:[#allocation2 + $0x5e0] sm:$0xff] %v2463
      %2483 = vst [vmem:[#allocation2 + $0x5e8] sm:$0xff] %v2465
      %2484 = vst [vmem:[#allocation2 + $0x5f0] sm:$0xff] %v2467
      %2485 = vst [vmem:[#allocation2 + $0x5f8] sm:$0xff] %v2469
      %v2486 = vld [vmem:[%s305 + $0x4] sm:$0xff]
      %v2487 = vld [vmem:[%s305 + $0xc] sm:$0xff]
      %v2488 = vld [vmem:[%s305 + $0x14] sm:$0xf]
      %v2489 = vld [vmem:[%s305 + $0x1c] sm:$0xff]
      %v2490 = vld [vmem:[%s305 + $0x24] sm:$0xff]
      %v2491 = vld [vmem:[%s305 + $0x2c] sm:$0xf]
      %v2492 = vld [vmem:[%s305 + $0x34] sm:$0xff]
      %v2493 = vld [vmem:[%s305 + $0x3c] sm:$0xff]
      %v2494 = vld [vmem:[%s305 + $0x44] sm:$0xf]
      %v2495 = vld [vmem:[%s305 + $0x4c] sm:$0xff]
      %v2496 = vld [vmem:[%s305 + $0x54] sm:$0xff]
      %v2497 = vld [vmem:[%s305 + $0x5c] sm:$0xf]
      %2510 = vrot.lane.b32.xlu0 %v2486, 36
      %v2511 = vpop.permute.xlu0 %2510
      %2512 = vrot.lane.b32.xlu0 %v2487, 36
      %v2513 = vpop.permute.xlu0 %2512
      %2514 = vrot.lane.b32.xlu0 %v2488, 36
      %v2515 = vpop.permute.xlu0 %2514
      %2516 = vrot.lane.b32.xlu0 %v2489, 36
      %v2517 = vpop.permute.xlu0 %2516
      %2518 = vrot.lane.b32.xlu0 %v2490, 36
      %v2519 = vpop.permute.xlu0 %2518
      %2520 = vrot.lane.b32.xlu0 %v2491, 36
      %v2521 = vpop.permute.xlu0 %2520
      %2522 = vrot.lane.b32.xlu0 %v2492, 36
      %v2523 = vpop.permute.xlu0 %2522
      %2524 = vrot.lane.b32.xlu0 %v2493, 36
      %v2525 = vpop.permute.xlu0 %2524
      %2526 = vrot.lane.b32.xlu0 %v2494, 36
      %v2527 = vpop.permute.xlu0 %2526
      %2528 = vrot.lane.b32.xlu0 %v2495, 36
      %v2529 = vpop.permute.xlu0 %2528
      %2530 = vrot.lane.b32.xlu0 %v2496, 36
      %v2531 = vpop.permute.xlu0 %2530
      %2532 = vrot.lane.b32.xlu0 %v2497, 36
      %v2533 = vpop.permute.xlu0 %2532
      %v2534 = vrot.slane %v2511, 4
      %v2535 = vrot.slane %v2513, 4
      %v2536 = vrot.slane %v2515, 4
      %v2537 = vrot.slane %v2517, 4
      %v2538 = vrot.slane %v2519, 4
      %v2539 = vrot.slane %v2521, 4
      %v2540 = vrot.slane %v2523, 4
      %v2541 = vrot.slane %v2525, 4
      %v2542 = vrot.slane %v2527, 4
      %v2543 = vrot.slane %v2529, 4
      %v2544 = vrot.slane %v2531, 4
      %v2545 = vrot.slane %v2533, 4
      %v2546 = vsel %vm406, %v2534, %v2535
      %vm2547 = vcmask 293888
      %v2548 = vsel %vm2547, %v2511, %v2546
      %v2549 = vsel %vm406, %v2535, %v2536
      %v2550 = vsel %vm2547, %v2513, %v2549
      %v2551 = vsel %vm406, %v2537, %v2538
      %v2552 = vsel %vm2547, %v2517, %v2551
      %v2553 = vsel %vm406, %v2538, %v2539
      %v2554 = vsel %vm2547, %v2519, %v2553
      %v2555 = vsel %vm406, %v2540, %v2541
      %v2556 = vsel %vm2547, %v2523, %v2555
      %v2557 = vsel %vm406, %v2541, %v2542
      %v2558 = vsel %vm2547, %v2525, %v2557
      %v2559 = vsel %vm406, %v2543, %v2544
      %v2560 = vsel %vm2547, %v2529, %v2559
      %v2561 = vsel %vm406, %v2544, %v2545
      %v2562 = vsel %vm2547, %v2531, %v2561
      %2571 = vst [vmem:[#allocation2 + $0x600] sm:$0xff] %v2548
      %2572 = vst [vmem:[#allocation2 + $0x608] sm:$0xff] %v2550
      %2573 = vst [vmem:[#allocation2 + $0x610] sm:$0xff] %v2552
      %2574 = vst [vmem:[#allocation2 + $0x618] sm:$0xff] %v2554
      %2575 = vst [vmem:[#allocation2 + $0x620] sm:$0xff] %v2556
      %2576 = vst [vmem:[#allocation2 + $0x628] sm:$0xff] %v2558
      %2577 = vst [vmem:[#allocation2 + $0x630] sm:$0xff] %v2560
      %2578 = vst [vmem:[#allocation2 + $0x638] sm:$0xff] %v2562
      %v2579 = vld [vmem:[%s305 + $0x4] sm:$0xff]
      %v2580 = vld [vmem:[%s305 + $0xc] sm:$0xff]
      %v2581 = vld [vmem:[%s305 + $0x14] sm:$0xf]
      %v2582 = vld [vmem:[%s305 + $0x1c] sm:$0xff]
      %v2583 = vld [vmem:[%s305 + $0x24] sm:$0xff]
      %v2584 = vld [vmem:[%s305 + $0x2c] sm:$0xf]
      %v2585 = vld [vmem:[%s305 + $0x34] sm:$0xff]
      %v2586 = vld [vmem:[%s305 + $0x3c] sm:$0xff]
      %v2587 = vld [vmem:[%s305 + $0x44] sm:$0xf]
      %v2588 = vld [vmem:[%s305 + $0x4c] sm:$0xff]
      %v2589 = vld [vmem:[%s305 + $0x54] sm:$0xff]
      %v2590 = vld [vmem:[%s305 + $0x5c] sm:$0xf]
      %2603 = vrot.lane.b32.xlu0 %v2579, 35
      %v2604 = vpop.permute.xlu0 %2603
      %2605 = vrot.lane.b32.xlu0 %v2580, 35
      %v2606 = vpop.permute.xlu0 %2605
      %2607 = vrot.lane.b32.xlu0 %v2581, 35
      %v2608 = vpop.permute.xlu0 %2607
      %2609 = vrot.lane.b32.xlu0 %v2582, 35
      %v2610 = vpop.permute.xlu0 %2609
      %2611 = vrot.lane.b32.xlu0 %v2583, 35
      %v2612 = vpop.permute.xlu0 %2611
      %2613 = vrot.lane.b32.xlu0 %v2584, 35
      %v2614 = vpop.permute.xlu0 %2613
      %2615 = vrot.lane.b32.xlu0 %v2585, 35
      %v2616 = vpop.permute.xlu0 %2615
      %2617 = vrot.lane.b32.xlu0 %v2586, 35
      %v2618 = vpop.permute.xlu0 %2617
      %2619 = vrot.lane.b32.xlu0 %v2587, 35
      %v2620 = vpop.permute.xlu0 %2619
      %2621 = vrot.lane.b32.xlu0 %v2588, 35
      %v2622 = vpop.permute.xlu0 %2621
      %2623 = vrot.lane.b32.xlu0 %v2589, 35
      %v2624 = vpop.permute.xlu0 %2623
      %2625 = vrot.lane.b32.xlu0 %v2590, 35
      %v2626 = vpop.permute.xlu0 %2625
      %v2627 = vrot.slane %v2604, 4
      %v2628 = vrot.slane %v2606, 4
      %v2629 = vrot.slane %v2608, 4
      %v2630 = vrot.slane %v2610, 4
      %v2631 = vrot.slane %v2612, 4
      %v2632 = vrot.slane %v2614, 4
      %v2633 = vrot.slane %v2616, 4
      %v2634 = vrot.slane %v2618, 4
      %v2635 = vrot.slane %v2620, 4
      %v2636 = vrot.slane %v2622, 4
      %v2637 = vrot.slane %v2624, 4
      %v2638 = vrot.slane %v2626, 4
      %v2639 = vsel %vm406, %v2627, %v2628
      %vm2640 = vcmask 285696
      %v2641 = vsel %vm2640, %v2604, %v2639
      %v2642 = vsel %vm406, %v2628, %v2629
      %v2643 = vsel %vm2640, %v2606, %v2642
      %v2644 = vsel %vm406, %v2630, %v2631
      %v2645 = vsel %vm2640, %v2610, %v2644
      %v2646 = vsel %vm406, %v2631, %v2632
      %v2647 = vsel %vm2640, %v2612, %v2646
      %v2648 = vsel %vm406, %v2633, %v2634
      %v2649 = vsel %vm2640, %v2616, %v2648
      %v2650 = vsel %vm406, %v2634, %v2635
      %v2651 = vsel %vm2640, %v2618, %v2650
      %v2652 = vsel %vm406, %v2636, %v2637
      %v2653 = vsel %vm2640, %v2622, %v2652
      %v2654 = vsel %vm406, %v2637, %v2638
      %v2655 = vsel %vm2640, %v2624, %v2654
      %2664 = vst [vmem:[#allocation2 + $0x640] sm:$0xff] %v2641
      %2665 = vst [vmem:[#allocation2 + $0x648] sm:$0xff] %v2643
      %2666 = vst [vmem:[#allocation2 + $0x650] sm:$0xff] %v2645
      %2667 = vst [vmem:[#allocation2 + $0x658] sm:$0xff] %v2647
      %2668 = vst [vmem:[#allocation2 + $0x660] sm:$0xff] %v2649
      %2669 = vst [vmem:[#allocation2 + $0x668] sm:$0xff] %v2651
      %2670 = vst [vmem:[#allocation2 + $0x670] sm:$0xff] %v2653
      %2671 = vst [vmem:[#allocation2 + $0x678] sm:$0xff] %v2655
      %v2672 = vld [vmem:[%s305 + $0x4] sm:$0xff]
      %v2673 = vld [vmem:[%s305 + $0xc] sm:$0xff]
      %v2674 = vld [vmem:[%s305 + $0x14] sm:$0xf]
      %v2675 = vld [vmem:[%s305 + $0x1c] sm:$0xff]
      %v2676 = vld [vmem:[%s305 + $0x24] sm:$0xff]
      %v2677 = vld [vmem:[%s305 + $0x2c] sm:$0xf]
      %v2678 = vld [vmem:[%s305 + $0x34] sm:$0xff]
      %v2679 = vld [vmem:[%s305 + $0x3c] sm:$0xff]
      %v2680 = vld [vmem:[%s305 + $0x44] sm:$0xf]
      %v2681 = vld [vmem:[%s305 + $0x4c] sm:$0xff]
      %v2682 = vld [vmem:[%s305 + $0x54] sm:$0xff]
      %v2683 = vld [vmem:[%s305 + $0x5c] sm:$0xf]
      %2696 = vrot.lane.b32.xlu0 %v2672, 34
      %v2697 = vpop.permute.xlu0 %2696
      %2698 = vrot.lane.b32.xlu0 %v2673, 34
      %v2699 = vpop.permute.xlu0 %2698
      %2700 = vrot.lane.b32.xlu0 %v2674, 34
      %v2701 = vpop.permute.xlu0 %2700
      %2702 = vrot.lane.b32.xlu0 %v2675, 34
      %v2703 = vpop.permute.xlu0 %2702
      %2704 = vrot.lane.b32.xlu0 %v2676, 34
      %v2705 = vpop.permute.xlu0 %2704
      %2706 = vrot.lane.b32.xlu0 %v2677, 34
      %v2707 = vpop.permute.xlu0 %2706
      %2708 = vrot.lane.b32.xlu0 %v2678, 34
      %v2709 = vpop.permute.xlu0 %2708
      %2710 = vrot.lane.b32.xlu0 %v2679, 34
      %v2711 = vpop.permute.xlu0 %2710
      %2712 = vrot.lane.b32.xlu0 %v2680, 34
      %v2713 = vpop.permute.xlu0 %2712
      %2714 = vrot.lane.b32.xlu0 %v2681, 34
      %v2715 = vpop.permute.xlu0 %2714
      %2716 = vrot.lane.b32.xlu0 %v2682, 34
      %v2717 = vpop.permute.xlu0 %2716
      %2718 = vrot.lane.b32.xlu0 %v2683, 34
      %v2719 = vpop.permute.xlu0 %2718
      %v2720 = vrot.slane %v2697, 4
      %v2721 = vrot.slane %v2699, 4
      %v2722 = vrot.slane %v2701, 4
      %v2723 = vrot.slane %v2703, 4
      %v2724 = vrot.slane %v2705, 4
      %v2725 = vrot.slane %v2707, 4
      %v2726 = vrot.slane %v2709, 4
      %v2727 = vrot.slane %v2711, 4
      %v2728 = vrot.slane %v2713, 4
      %v2729 = vrot.slane %v2715, 4
      %v2730 = vrot.slane %v2717, 4
      %v2731 = vrot.slane %v2719, 4
      %v2732 = vsel %vm406, %v2720, %v2721
      %vm2733 = vcmask 277504
      %v2734 = vsel %vm2733, %v2697, %v2732
      %v2735 = vsel %vm406, %v2721, %v2722
      %v2736 = vsel %vm2733, %v2699, %v2735
      %v2737 = vsel %vm406, %v2723, %v2724
      %v2738 = vsel %vm2733, %v2703, %v2737
      %v2739 = vsel %vm406, %v2724, %v2725
      %v2740 = vsel %vm2733, %v2705, %v2739
      %v2741 = vsel %vm406, %v2726, %v2727
      %v2742 = vsel %vm2733, %v2709, %v2741
      %v2743 = vsel %vm406, %v2727, %v2728
      %v2744 = vsel %vm2733, %v2711, %v2743
      %v2745 = vsel %vm406, %v2729, %v2730
      %v2746 = vsel %vm2733, %v2715, %v2745
      %v2747 = vsel %vm406, %v2730, %v2731
      %v2748 = vsel %vm2733, %v2717, %v2747
      %2757 = vst [vmem:[#allocation2 + $0x680] sm:$0xff] %v2734
      %2758 = vst [vmem:[#allocation2 + $0x688] sm:$0xff] %v2736
      %2759 = vst [vmem:[#allocation2 + $0x690] sm:$0xff] %v2738
      %2760 = vst [vmem:[#allocation2 + $0x698] sm:$0xff] %v2740
      %2761 = vst [vmem:[#allocation2 + $0x6a0] sm:$0xff] %v2742
      %2762 = vst [vmem:[#allocation2 + $0x6a8] sm:$0xff] %v2744
      %2763 = vst [vmem:[#allocation2 + $0x6b0] sm:$0xff] %v2746
      %2764 = vst [vmem:[#allocation2 + $0x6b8] sm:$0xff] %v2748
      %v2765 = vld [vmem:[%s1] sm:$0xff]
      %v2766 = vld [vmem:[%s1 + $0x8] sm:$0xff]
      %v2767 = vld [vmem:[%s1 + $0x10] sm:$0xff]
      %v2768 = vld [vmem:[%s1 + $0x18] sm:$0xf]
      %v2769 = vld [vmem:[#allocation2] sm:$0xff]
      %v2770 = vld [vmem:[#allocation2 + $0x8] sm:$0xff]
      %v2771 = vld [vmem:[#allocation2 + $0x10] sm:$0xff]
      %v2772 = vld [vmem:[#allocation2 + $0x18] sm:$0xff]
      %v2773 = vld [vmem:[#allocation2 + $0x20] sm:$0xff]
      %v2774 = vld [vmem:[#allocation2 + $0x28] sm:$0xff]
      %v2775 = vld [vmem:[#allocation2 + $0x30] sm:$0xff]
      %v2776 = vld [vmem:[#allocation2 + $0x38] sm:$0xff]
      %v2777 = vld [vmem:[#allocation2 + $0x40] sm:$0xff]
      %v2778 = vld [vmem:[#allocation2 + $0x48] sm:$0xff]
      %v2779 = vld [vmem:[#allocation2 + $0x50] sm:$0xff]
      %v2780 = vld [vmem:[#allocation2 + $0x58] sm:$0xff]
      %v2781 = vld [vmem:[#allocation2 + $0x60] sm:$0xff]
      %v2782 = vld [vmem:[#allocation2 + $0x68] sm:$0xff]
      %v2783 = vld [vmem:[#allocation2 + $0x70] sm:$0xff]
      %v2784 = vld [vmem:[#allocation2 + $0x78] sm:$0xff]
      %v2785 = vld [vmem:[#allocation2 + $0x80] sm:$0xff]
      %v2786 = vld [vmem:[#allocation2 + $0x88] sm:$0xff]
      %v2787 = vld [vmem:[#allocation2 + $0x90] sm:$0xff]
      %v2788 = vld [vmem:[#allocation2 + $0x98] sm:$0xff]
      %v2789 = vld [vmem:[#allocation2 + $0xa0] sm:$0xff]
      %v2790 = vld [vmem:[#allocation2 + $0xa8] sm:$0xff]
      %v2791 = vld [vmem:[#allocation2 + $0xb0] sm:$0xff]
      %v2792 = vld [vmem:[#allocation2 + $0xb8] sm:$0xff]
      %v2793 = vld [vmem:[#allocation2 + $0xc0] sm:$0xff]
      %v2794 = vld [vmem:[#allocation2 + $0xc8] sm:$0xff]
      %v2795 = vld [vmem:[#allocation2 + $0xd0] sm:$0xff]
      %v2796 = vld [vmem:[#allocation2 + $0xd8] sm:$0xff]
      %v2797 = vld [vmem:[#allocation2 + $0xe0] sm:$0xff]
      %v2798 = vld [vmem:[#allocation2 + $0xe8] sm:$0xff]
      %v2799 = vld [vmem:[#allocation2 + $0xf0] sm:$0xff]
      %v2800 = vld [vmem:[#allocation2 + $0xf8] sm:$0xff]
      %v2801 = vld [vmem:[#allocation2 + $0x100] sm:$0xff]
      %v2802 = vld [vmem:[#allocation2 + $0x108] sm:$0xff]
      %v2803 = vld [vmem:[#allocation2 + $0x110] sm:$0xff]
      %v2804 = vld [vmem:[#allocation2 + $0x118] sm:$0xff]
      %v2805 = vld [vmem:[#allocation2 + $0x120] sm:$0xff]
      %v2806 = vld [vmem:[#allocation2 + $0x128] sm:$0xff]
      %v2807 = vld [vmem:[#allocation2 + $0x130] sm:$0xff]
      %v2808 = vld [vmem:[#allocation2 + $0x138] sm:$0xff]
      %v2809 = vld [vmem:[#allocation2 + $0x140] sm:$0xff]
      %v2810 = vld [vmem:[#allocation2 + $0x148] sm:$0xff]
      %v2811 = vld [vmem:[#allocation2 + $0x150] sm:$0xff]
      %v2812 = vld [vmem:[#allocation2 + $0x158] sm:$0xff]
      %v2813 = vld [vmem:[#allocation2 + $0x160] sm:$0xff]
      %v2814 = vld [vmem:[#allocation2 + $0x168] sm:$0xff]
      %v2815 = vld [vmem:[#allocation2 + $0x170] sm:$0xff]
      %v2816 = vld [vmem:[#allocation2 + $0x178] sm:$0xff]
      %v2817 = vld [vmem:[#allocation2 + $0x180] sm:$0xff]
      %v2818 = vld [vmem:[#allocation2 + $0x188] sm:$0xff]
      %v2819 = vld [vmem:[#allocation2 + $0x190] sm:$0xff]
      %v2820 = vld [vmem:[#allocation2 + $0x198] sm:$0xff]
      %v2821 = vld [vmem:[#allocation2 + $0x1a0] sm:$0xff]
      %v2822 = vld [vmem:[#allocation2 + $0x1a8] sm:$0xff]
      %v2823 = vld [vmem:[#allocation2 + $0x1b0] sm:$0xff]
      %v2824 = vld [vmem:[#allocation2 + $0x1b8] sm:$0xff]
      %v2825 = vld [vmem:[#allocation2 + $0x1c0] sm:$0xff]
      %v2826 = vld [vmem:[#allocation2 + $0x1c8] sm:$0xff]
      %v2827 = vld [vmem:[#allocation2 + $0x1d0] sm:$0xff]
      %v2828 = vld [vmem:[#allocation2 + $0x1d8] sm:$0xff]
      %v2829 = vld [vmem:[#allocation2 + $0x1e0] sm:$0xff]
      %v2830 = vld [vmem:[#allocation2 + $0x1e8] sm:$0xff]
      %v2831 = vld [vmem:[#allocation2 + $0x1f0] sm:$0xff]
      %v2832 = vld [vmem:[#allocation2 + $0x1f8] sm:$0xff]
      %v2833 = vld [vmem:[#allocation2 + $0x200] sm:$0xff]
      %v2834 = vld [vmem:[#allocation2 + $0x208] sm:$0xff]
      %v2835 = vld [vmem:[#allocation2 + $0x210] sm:$0xff]
      %v2836 = vld [vmem:[#allocation2 + $0x218] sm:$0xff]
      %v2837 = vld [vmem:[#allocation2 + $0x220] sm:$0xff]
      %v2838 = vld [vmem:[#allocation2 + $0x228] sm:$0xff]
      %v2839 = vld [vmem:[#allocation2 + $0x230] sm:$0xff]
      %v2840 = vld [vmem:[#allocation2 + $0x238] sm:$0xff]
      %v2841 = vld [vmem:[#allocation2 + $0x240] sm:$0xff]
      %v2842 = vld [vmem:[#allocation2 + $0x248] sm:$0xff]
      %v2843 = vld [vmem:[#allocation2 + $0x250] sm:$0xff]
      %v2844 = vld [vmem:[#allocation2 + $0x258] sm:$0xff]
      %v2845 = vld [vmem:[#allocation2 + $0x260] sm:$0xff]
      %v2846 = vld [vmem:[#allocation2 + $0x268] sm:$0xff]
      %v2847 = vld [vmem:[#allocation2 + $0x270] sm:$0xff]
      %v2848 = vld [vmem:[#allocation2 + $0x278] sm:$0xff]
      %v2849 = vld [vmem:[#allocation2 + $0x280] sm:$0xff]
      %v2850 = vld [vmem:[#allocation2 + $0x288] sm:$0xff]
      %v2851 = vld [vmem:[#allocation2 + $0x290] sm:$0xff]
      %v2852 = vld [vmem:[#allocation2 + $0x298] sm:$0xff]
      %v2853 = vld [vmem:[#allocation2 + $0x2a0] sm:$0xff]
      %v2854 = vld [vmem:[#allocation2 + $0x2a8] sm:$0xff]
      %v2855 = vld [vmem:[#allocation2 + $0x2b0] sm:$0xff]
      %v2856 = vld [vmem:[#allocation2 + $0x2b8] sm:$0xff]
      %v2857 = vld [vmem:[#allocation2 + $0x2c0] sm:$0xff]
      %v2858 = vld [vmem:[#allocation2 + $0x2c8] sm:$0xff]
      %v2859 = vld [vmem:[#allocation2 + $0x2d0] sm:$0xff]
      %v2860 = vld [vmem:[#allocation2 + $0x2d8] sm:$0xff]
      %v2861 = vld [vmem:[#allocation2 + $0x2e0] sm:$0xff]
      %v2862 = vld [vmem:[#allocation2 + $0x2e8] sm:$0xff]
      %v2863 = vld [vmem:[#allocation2 + $0x2f0] sm:$0xff]
      %v2864 = vld [vmem:[#allocation2 + $0x2f8] sm:$0xff]
      %v2865 = vld [vmem:[#allocation2 + $0x300] sm:$0xff]
      %v2866 = vld [vmem:[#allocation2 + $0x308] sm:$0xff]
      %v2867 = vld [vmem:[#allocation2 + $0x310] sm:$0xff]
      %v2868 = vld [vmem:[#allocation2 + $0x318] sm:$0xff]
      %v2869 = vld [vmem:[#allocation2 + $0x320] sm:$0xff]
      %v2870 = vld [vmem:[#allocation2 + $0x328] sm:$0xff]
      %v2871 = vld [vmem:[#allocation2 + $0x330] sm:$0xff]
      %v2872 = vld [vmem:[#allocation2 + $0x338] sm:$0xff]
      %v2873 = vld [vmem:[#allocation2 + $0x340] sm:$0xff]
      %v2874 = vld [vmem:[#allocation2 + $0x348] sm:$0xff]
      %v2875 = vld [vmem:[#allocation2 + $0x350] sm:$0xff]
      %v2876 = vld [vmem:[#allocation2 + $0x358] sm:$0xff]
      %v2877 = vld [vmem:[#allocation2 + $0x360] sm:$0xff]
      %v2878 = vld [vmem:[#allocation2 + $0x368] sm:$0xff]
      %v2879 = vld [vmem:[#allocation2 + $0x370] sm:$0xff]
      %v2880 = vld [vmem:[#allocation2 + $0x378] sm:$0xff]
      %v2881 = vld [vmem:[#allocation2 + $0x380] sm:$0xff]
      %v2882 = vld [vmem:[#allocation2 + $0x388] sm:$0xff]
      %v2883 = vld [vmem:[#allocation2 + $0x390] sm:$0xff]
      %v2884 = vld [vmem:[#allocation2 + $0x398] sm:$0xff]
      %v2885 = vld [vmem:[#allocation2 + $0x3a0] sm:$0xff]
      %v2886 = vld [vmem:[#allocation2 + $0x3a8] sm:$0xff]
      %v2887 = vld [vmem:[#allocation2 + $0x3b0] sm:$0xff]
      %v2888 = vld [vmem:[#allocation2 + $0x3b8] sm:$0xff]
      %v2889 = vld [vmem:[#allocation2 + $0x3c0] sm:$0xff]
      %v2890 = vld [vmem:[#allocation2 + $0x3c8] sm:$0xff]
      %v2891 = vld [vmem:[#allocation2 + $0x3d0] sm:$0xff]
      %v2892 = vld [vmem:[#allocation2 + $0x3d8] sm:$0xff]
      %v2893 = vld [vmem:[#allocation2 + $0x3e0] sm:$0xff]
      %v2894 = vld [vmem:[#allocation2 + $0x3e8] sm:$0xff]
      %v2895 = vld [vmem:[#allocation2 + $0x3f0] sm:$0xff]
      %v2896 = vld [vmem:[#allocation2 + $0x3f8] sm:$0xff]
      %v2897 = vld [vmem:[#allocation2 + $0x400] sm:$0xff]
      %v2898 = vld [vmem:[#allocation2 + $0x408] sm:$0xff]
      %v2899 = vld [vmem:[#allocation2 + $0x410] sm:$0xff]
      %v2900 = vld [vmem:[#allocation2 + $0x418] sm:$0xff]
      %v2901 = vld [vmem:[#allocation2 + $0x420] sm:$0xff]
      %v2902 = vld [vmem:[#allocation2 + $0x428] sm:$0xff]
      %v2903 = vld [vmem:[#allocation2 + $0x430] sm:$0xff]
      %v2904 = vld [vmem:[#allocation2 + $0x438] sm:$0xff]
      %v2905 = vld [vmem:[#allocation2 + $0x440] sm:$0xff]
      %v2906 = vld [vmem:[#allocation2 + $0x448] sm:$0xff]
      %v2907 = vld [vmem:[#allocation2 + $0x450] sm:$0xff]
      %v2908 = vld [vmem:[#allocation2 + $0x458] sm:$0xff]
      %v2909 = vld [vmem:[#allocation2 + $0x460] sm:$0xff]
      %v2910 = vld [vmem:[#allocation2 + $0x468] sm:$0xff]
      %v2911 = vld [vmem:[#allocation2 + $0x470] sm:$0xff]
      %v2912 = vld [vmem:[#allocation2 + $0x478] sm:$0xff]
      %v2913 = vld [vmem:[#allocation2 + $0x480] sm:$0xff]
      %v2914 = vld [vmem:[#allocation2 + $0x488] sm:$0xff]
      %v2915 = vld [vmem:[#allocation2 + $0x490] sm:$0xff]
      %v2916 = vld [vmem:[#allocation2 + $0x498] sm:$0xff]
      %v2917 = vld [vmem:[#allocation2 + $0x4a0] sm:$0xff]
      %v2918 = vld [vmem:[#allocation2 + $0x4a8] sm:$0xff]
      %v2919 = vld [vmem:[#allocation2 + $0x4b0] sm:$0xff]
      %v2920 = vld [vmem:[#allocation2 + $0x4b8] sm:$0xff]
      %v2921 = vld [vmem:[#allocation2 + $0x4c0] sm:$0xff]
      %v2922 = vld [vmem:[#allocation2 + $0x4c8] sm:$0xff]
      %v2923 = vld [vmem:[#allocation2 + $0x4d0] sm:$0xff]
      %v2924 = vld [vmem:[#allocation2 + $0x4d8] sm:$0xff]
      %v2925 = vld [vmem:[#allocation2 + $0x4e0] sm:$0xff]
      %v2926 = vld [vmem:[#allocation2 + $0x4e8] sm:$0xff]
      %v2927 = vld [vmem:[#allocation2 + $0x4f0] sm:$0xff]
      %v2928 = vld [vmem:[#allocation2 + $0x4f8] sm:$0xff]
      %v2929 = vld [vmem:[#allocation2 + $0x500] sm:$0xff]
      %v2930 = vld [vmem:[#allocation2 + $0x508] sm:$0xff]
      %v2931 = vld [vmem:[#allocation2 + $0x510] sm:$0xff]
      %v2932 = vld [vmem:[#allocation2 + $0x518] sm:$0xff]
      %v2933 = vld [vmem:[#allocation2 + $0x520] sm:$0xff]
      %v2934 = vld [vmem:[#allocation2 + $0x528] sm:$0xff]
      %v2935 = vld [vmem:[#allocation2 + $0x530] sm:$0xff]
      %v2936 = vld [vmem:[#allocation2 + $0x538] sm:$0xff]
      %v2937 = vld [vmem:[#allocation2 + $0x540] sm:$0xff]
      %v2938 = vld [vmem:[#allocation2 + $0x548] sm:$0xff]
      %v2939 = vld [vmem:[#allocation2 + $0x550] sm:$0xff]
      %v2940 = vld [vmem:[#allocation2 + $0x558] sm:$0xff]
      %v2941 = vld [vmem:[#allocation2 + $0x560] sm:$0xff]
      %v2942 = vld [vmem:[#allocation2 + $0x568] sm:$0xff]
      %v2943 = vld [vmem:[#allocation2 + $0x570] sm:$0xff]
      %v2944 = vld [vmem:[#allocation2 + $0x578] sm:$0xff]
      %v2945 = vld [vmem:[#allocation2 + $0x580] sm:$0xff]
      %v2946 = vld [vmem:[#allocation2 + $0x588] sm:$0xff]
      %v2947 = vld [vmem:[#allocation2 + $0x590] sm:$0xff]
      %v2948 = vld [vmem:[#allocation2 + $0x598] sm:$0xff]
      %v2949 = vld [vmem:[#allocation2 + $0x5a0] sm:$0xff]
      %v2950 = vld [vmem:[#allocation2 + $0x5a8] sm:$0xff]
      %v2951 = vld [vmem:[#allocation2 + $0x5b0] sm:$0xff]
      %v2952 = vld [vmem:[#allocation2 + $0x5b8] sm:$0xff]
      %v2953 = vld [vmem:[#allocation2 + $0x5c0] sm:$0xff]
      %v2954 = vld [vmem:[#allocation2 + $0x5c8] sm:$0xff]
      %v2955 = vld [vmem:[#allocation2 + $0x5d0] sm:$0xff]
      %v2956 = vld [vmem:[#allocation2 + $0x5d8] sm:$0xff]
      %v2957 = vld [vmem:[#allocation2 + $0x5e0] sm:$0xff]
      %v2958 = vld [vmem:[#allocation2 + $0x5e8] sm:$0xff]
      %v2959 = vld [vmem:[#allocation2 + $0x5f0] sm:$0xff]
      %v2960 = vld [vmem:[#allocation2 + $0x5f8] sm:$0xff]
      %v2961 = vld [vmem:[#allocation2 + $0x600] sm:$0xff]
      %v2962 = vld [vmem:[#allocation2 + $0x608] sm:$0xff]
      %v2963 = vld [vmem:[#allocation2 + $0x610] sm:$0xff]
      %v2964 = vld [vmem:[#allocation2 + $0x618] sm:$0xff]
      %v2965 = vld [vmem:[#allocation2 + $0x620] sm:$0xff]
      %v2966 = vld [vmem:[#allocation2 + $0x628] sm:$0xff]
      %v2967 = vld [vmem:[#allocation2 + $0x630] sm:$0xff]
      %v2968 = vld [vmem:[#allocation2 + $0x638] sm:$0xff]
      %v2969 = vld [vmem:[#allocation2 + $0x640] sm:$0xff]
      %v2970 = vld [vmem:[#allocation2 + $0x648] sm:$0xff]
      %v2971 = vld [vmem:[#allocation2 + $0x650] sm:$0xff]
      %v2972 = vld [vmem:[#allocation2 + $0x658] sm:$0xff]
      %v2973 = vld [vmem:[#allocation2 + $0x660] sm:$0xff]
      %v2974 = vld [vmem:[#allocation2 + $0x668] sm:$0xff]
      %v2975 = vld [vmem:[#allocation2 + $0x670] sm:$0xff]
      %v2976 = vld [vmem:[#allocation2 + $0x678] sm:$0xff]
      %v2977 = vld [vmem:[#allocation2 + $0x680] sm:$0xff]
      %v2978 = vld [vmem:[#allocation2 + $0x688] sm:$0xff]
      %v2979 = vld [vmem:[#allocation2 + $0x690] sm:$0xff]
      %v2980 = vld [vmem:[#allocation2 + $0x698] sm:$0xff]
      %v2981 = vld [vmem:[#allocation2 + $0x6a0] sm:$0xff]
      %v2982 = vld [vmem:[#allocation2 + $0x6a8] sm:$0xff]
      %v2983 = vld [vmem:[#allocation2 + $0x6b0] sm:$0xff]
      %v2984 = vld [vmem:[#allocation2 + $0x6b8] sm:$0xff]
      %v2985 = vld [vmem:[%s2] sm:$0xff]
      %2987 = vset.pattern.permute.xlu0 0
      %2988 = vperm.xlu0 %2987, %v2985
      %v2989 = vpop.permute.xlu0 %2988
      %v2995 = vunpack.c.l.b16 %v2765
      %v2996 = vunpack.c.h.b16 %v2765
      %v2997 = vunpack.c.l.b16 %v2766
      %v2998 = vunpack.c.h.b16 %v2766
      %v2999 = vunpack.c.l.b16 %v2767
      %v3000 = vunpack.c.h.b16 %v2767
      %v3001 = vunpack.c.l.b16 %v2768
      %v3002 = vpack.c.b16 %v2995, %v2995
      %v3003 = vpack.c.b16 %v2996, %v2996
      %v3004 = vpack.c.b16 %v2997, %v2997
      %v3005 = vpack.c.b16 %v2998, %v2998
      %v3006 = vpack.c.b16 %v2999, %v2999
      %v3007 = vpack.c.b16 %v3000, %v3000
      %v3008 = vpack.c.b16 %v3001, %v3001
      %v3231 = vunpack.c.l.b16 %v2769
      %v3232 = vunpack.c.h.b16 %v2769
      %v3233 = vunpack.c.l.b16 %v2770
      %v3234 = vunpack.c.h.b16 %v2770
      %v3235 = vunpack.c.l.b16 %v2771
      %v3236 = vunpack.c.h.b16 %v2771
      %v3237 = vunpack.c.l.b16 %v2772
      %v3238 = vunpack.c.h.b16 %v2772
      %v3239 = vunpack.c.l.b16 %v2773
      %v3240 = vunpack.c.h.b16 %v2773
      %v3241 = vunpack.c.l.b16 %v2774
      %v3242 = vunpack.c.h.b16 %v2774
      %v3243 = vunpack.c.l.b16 %v2775
      %v3244 = vunpack.c.h.b16 %v2775
      %v3245 = vunpack.c.l.b16 %v2776
      %v3246 = vunpack.c.h.b16 %v2776
      %v3247 = vunpack.c.l.b16 %v2777
      %v3248 = vunpack.c.h.b16 %v2777
      %v3249 = vunpack.c.l.b16 %v2778
      %v3250 = vunpack.c.h.b16 %v2778
      %v3251 = vunpack.c.l.b16 %v2779
      %v3252 = vunpack.c.h.b16 %v2779
      %v3253 = vunpack.c.l.b16 %v2780
      %v3254 = vunpack.c.h.b16 %v2780
      %v3255 = vunpack.c.l.b16 %v2781
      %v3256 = vunpack.c.h.b16 %v2781
      %v3257 = vunpack.c.l.b16 %v2782
      %v3258 = vunpack.c.h.b16 %v2782
      %v3259 = vunpack.c.l.b16 %v2783
      %v3260 = vunpack.c.h.b16 %v2783
      %v3261 = vunpack.c.l.b16 %v2784
      %v3262 = vunpack.c.h.b16 %v2784
      %v3263 = vunpack.c.l.b16 %v2785
      %v3264 = vunpack.c.h.b16 %v2785
      %v3265 = vunpack.c.l.b16 %v2786
      %v3266 = vunpack.c.h.b16 %v2786
      %v3267 = vunpack.c.l.b16 %v2787
      %v3268 = vunpack.c.h.b16 %v2787
      %v3269 = vunpack.c.l.b16 %v2788
      %v3270 = vunpack.c.h.b16 %v2788
      %v3271 = vunpack.c.l.b16 %v2789
      %v3272 = vunpack.c.h.b16 %v2789
      %v3273 = vunpack.c.l.b16 %v2790
      %v3274 = vunpack.c.h.b16 %v2790
      %v3275 = vunpack.c.l.b16 %v2791
      %v3276 = vunpack.c.h.b16 %v2791
      %v3277 = vunpack.c.l.b16 %v2792
      %v3278 = vunpack.c.h.b16 %v2792
      %v3279 = vunpack.c.l.b16 %v2793
      %v3280 = vunpack.c.h.b16 %v2793
      %v3281 = vunpack.c.l.b16 %v2794
      %v3282 = vunpack.c.h.b16 %v2794
      %v3283 = vunpack.c.l.b16 %v2795
      %v3284 = vunpack.c.h.b16 %v2795
      %v3285 = vunpack.c.l.b16 %v2796
      %v3286 = vunpack.c.h.b16 %v2796
      %v3287 = vunpack.c.l.b16 %v2797
      %v3288 = vunpack.c.h.b16 %v2797
      %v3289 = vunpack.c.l.b16 %v2798
      %v3290 = vunpack.c.h.b16 %v2798
      %v3291 = vunpack.c.l.b16 %v2799
      %v3292 = vunpack.c.h.b16 %v2799
      %v3293 = vunpack.c.l.b16 %v2800
      %v3294 = vunpack.c.h.b16 %v2800
      %v3295 = vunpack.c.l.b16 %v2801
      %v3296 = vunpack.c.h.b16 %v2801
      %v3297 = vunpack.c.l.b16 %v2802
      %v3298 = vunpack.c.h.b16 %v2802
      %v3299 = vunpack.c.l.b16 %v2803
      %v3300 = vunpack.c.h.b16 %v2803
      %v3301 = vunpack.c.l.b16 %v2804
      %v3302 = vunpack.c.h.b16 %v2804
      %v3303 = vunpack.c.l.b16 %v2805
      %v3304 = vunpack.c.h.b16 %v2805
      %v3305 = vunpack.c.l.b16 %v2806
      %v3306 = vunpack.c.h.b16 %v2806
      %v3307 = vunpack.c.l.b16 %v2807
      %v3308 = vunpack.c.h.b16 %v2807
      %v3309 = vunpack.c.l.b16 %v2808
      %v3310 = vunpack.c.h.b16 %v2808
      %v3311 = vunpack.c.l.b16 %v2809
      %v3312 = vunpack.c.h.b16 %v2809
      %v3313 = vunpack.c.l.b16 %v2810
      %v3314 = vunpack.c.h.b16 %v2810
      %v3315 = vunpack.c.l.b16 %v2811
      %v3316 = vunpack.c.h.b16 %v2811
      %v3317 = vunpack.c.l.b16 %v2812
      %v3318 = vunpack.c.h.b16 %v2812
      %v3319 = vunpack.c.l.b16 %v2813
      %v3320 = vunpack.c.h.b16 %v2813
      %v3321 = vunpack.c.l.b16 %v2814
      %v3322 = vunpack.c.h.b16 %v2814
      %v3323 = vunpack.c.l.b16 %v2815
      %v3324 = vunpack.c.h.b16 %v2815
      %v3325 = vunpack.c.l.b16 %v2816
      %v3326 = vunpack.c.h.b16 %v2816
      %v3327 = vunpack.c.l.b16 %v2817
      %v3328 = vunpack.c.h.b16 %v2817
      %v3329 = vunpack.c.l.b16 %v2818
      %v3330 = vunpack.c.h.b16 %v2818
      %v3331 = vunpack.c.l.b16 %v2819
      %v3332 = vunpack.c.h.b16 %v2819
      %v3333 = vunpack.c.l.b16 %v2820
      %v3334 = vunpack.c.h.b16 %v2820
      %v3335 = vunpack.c.l.b16 %v2821
      %v3336 = vunpack.c.h.b16 %v2821
      %v3337 = vunpack.c.l.b16 %v2822
      %v3338 = vunpack.c.h.b16 %v2822
      %v3339 = vunpack.c.l.b16 %v2823
      %v3340 = vunpack.c.h.b16 %v2823
      %v3341 = vunpack.c.l.b16 %v2824
      %v3342 = vunpack.c.h.b16 %v2824
      %v3343 = vunpack.c.l.b16 %v2825
      %v3344 = vunpack.c.h.b16 %v2825
      %v3345 = vunpack.c.l.b16 %v2826
      %v3346 = vunpack.c.h.b16 %v2826
      %v3347 = vunpack.c.l.b16 %v2827
      %v3348 = vunpack.c.h.b16 %v2827
      %v3349 = vunpack.c.l.b16 %v2828
      %v3350 = vunpack.c.h.b16 %v2828
      %v3351 = vunpack.c.l.b16 %v2829
      %v3352 = vunpack.c.h.b16 %v2829
      %v3353 = vunpack.c.l.b16 %v2830
      %v3354 = vunpack.c.h.b16 %v2830
      %v3355 = vunpack.c.l.b16 %v2831
      %v3356 = vunpack.c.h.b16 %v2831
      %v3357 = vunpack.c.l.b16 %v2832
      %v3358 = vunpack.c.h.b16 %v2832
      %v3359 = vunpack.c.l.b16 %v2833
      %v3360 = vunpack.c.h.b16 %v2833
      %v3361 = vunpack.c.l.b16 %v2834
      %v3362 = vunpack.c.h.b16 %v2834
      %v3363 = vunpack.c.l.b16 %v2835
      %v3364 = vunpack.c.h.b16 %v2835
      %v3365 = vunpack.c.l.b16 %v2836
      %v3366 = vunpack.c.h.b16 %v2836
      %v3367 = vunpack.c.l.b16 %v2837
      %v3368 = vunpack.c.h.b16 %v2837
      %v3369 = vunpack.c.l.b16 %v2838
      %v3370 = vunpack.c.h.b16 %v2838
      %v3371 = vunpack.c.l.b16 %v2839
      %v3372 = vunpack.c.h.b16 %v2839
      %v3373 = vunpack.c.l.b16 %v2840
      %v3374 = vunpack.c.h.b16 %v2840
      %v3375 = vunpack.c.l.b16 %v2841
      %v3376 = vunpack.c.h.b16 %v2841
      %v3377 = vunpack.c.l.b16 %v2842
      %v3378 = vunpack.c.h.b16 %v2842
      %v3379 = vunpack.c.l.b16 %v2843
      %v3380 = vunpack.c.h.b16 %v2843
      %v3381 = vunpack.c.l.b16 %v2844
      %v3382 = vunpack.c.h.b16 %v2844
      %v3383 = vunpack.c.l.b16 %v2845
      %v3384 = vunpack.c.h.b16 %v2845
      %v3385 = vunpack.c.l.b16 %v2846
      %v3386 = vunpack.c.h.b16 %v2846
      %v3387 = vunpack.c.l.b16 %v2847
      %v3388 = vunpack.c.h.b16 %v2847
      %v3389 = vunpack.c.l.b16 %v2848
      %v3390 = vunpack.c.h.b16 %v2848
      %v3391 = vunpack.c.l.b16 %v2849
      %v3392 = vunpack.c.h.b16 %v2849
      %v3393 = vunpack.c.l.b16 %v2850
      %v3394 = vunpack.c.h.b16 %v2850
      %v3395 = vunpack.c.l.b16 %v2851
      %v3396 = vunpack.c.h.b16 %v2851
      %v3397 = vunpack.c.l.b16 %v2852
      %v3398 = vunpack.c.h.b16 %v2852
      %v3399 = vunpack.c.l.b16 %v2853
      %v3400 = vunpack.c.h.b16 %v2853
      %v3401 = vunpack.c.l.b16 %v2854
      %v3402 = vunpack.c.h.b16 %v2854
      %v3403 = vunpack.c.l.b16 %v2855
      %v3404 = vunpack.c.h.b16 %v2855
      %v3405 = vunpack.c.l.b16 %v2856
      %v3406 = vunpack.c.h.b16 %v2856
      %v3407 = vunpack.c.l.b16 %v2857
      %v3408 = vunpack.c.h.b16 %v2857
      %v3409 = vunpack.c.l.b16 %v2858
      %v3410 = vunpack.c.h.b16 %v2858
      %v3411 = vunpack.c.l.b16 %v2859
      %v3412 = vunpack.c.h.b16 %v2859
      %v3413 = vunpack.c.l.b16 %v2860
      %v3414 = vunpack.c.h.b16 %v2860
      %v3415 = vunpack.c.l.b16 %v2861
      %v3416 = vunpack.c.h.b16 %v2861
      %v3417 = vunpack.c.l.b16 %v2862
      %v3418 = vunpack.c.h.b16 %v2862
      %v3419 = vunpack.c.l.b16 %v2863
      %v3420 = vunpack.c.h.b16 %v2863
      %v3421 = vunpack.c.l.b16 %v2864
      %v3422 = vunpack.c.h.b16 %v2864
      %v3423 = vunpack.c.l.b16 %v2865
      %v3424 = vunpack.c.h.b16 %v2865
      %v3425 = vunpack.c.l.b16 %v2866
      %v3426 = vunpack.c.h.b16 %v2866
      %v3427 = vunpack.c.l.b16 %v2867
      %v3428 = vunpack.c.h.b16 %v2867
      %v3429 = vunpack.c.l.b16 %v2868
      %v3430 = vunpack.c.h.b16 %v2868
      %v3431 = vunpack.c.l.b16 %v2869
      %v3432 = vunpack.c.h.b16 %v2869
      %v3433 = vunpack.c.l.b16 %v2870
      %v3434 = vunpack.c.h.b16 %v2870
      %v3435 = vunpack.c.l.b16 %v2871
      %v3436 = vunpack.c.h.b16 %v2871
      %v3437 = vunpack.c.l.b16 %v2872
      %v3438 = vunpack.c.h.b16 %v2872
      %v3439 = vunpack.c.l.b16 %v2873
      %v3440 = vunpack.c.h.b16 %v2873
      %v3441 = vunpack.c.l.b16 %v2874
      %v3442 = vunpack.c.h.b16 %v2874
      %v3443 = vunpack.c.l.b16 %v2875
      %v3444 = vunpack.c.h.b16 %v2875
      %v3445 = vunpack.c.l.b16 %v2876
      %v3446 = vunpack.c.h.b16 %v2876
      %v3447 = vunpack.c.l.b16 %v2877
      %v3448 = vunpack.c.h.b16 %v2877
      %v3449 = vunpack.c.l.b16 %v2878
      %v3450 = vunpack.c.h.b16 %v2878
      %v3451 = vunpack.c.l.b16 %v2879
      %v3452 = vunpack.c.h.b16 %v2879
      %v3453 = vunpack.c.l.b16 %v2880
      %v3454 = vunpack.c.h.b16 %v2880
      %v3455 = vunpack.c.l.b16 %v2881
      %v3456 = vunpack.c.h.b16 %v2881
      %v3457 = vunpack.c.l.b16 %v2882
      %v3458 = vunpack.c.h.b16 %v2882
      %v3459 = vunpack.c.l.b16 %v2883
      %v3460 = vunpack.c.h.b16 %v2883
      %v3461 = vunpack.c.l.b16 %v2884
      %v3462 = vunpack.c.h.b16 %v2884
      %v3463 = vunpack.c.l.b16 %v2885
      %v3464 = vunpack.c.h.b16 %v2885
      %v3465 = vunpack.c.l.b16 %v2886
      %v3466 = vunpack.c.h.b16 %v2886
      %v3467 = vunpack.c.l.b16 %v2887
      %v3468 = vunpack.c.h.b16 %v2887
      %v3469 = vunpack.c.l.b16 %v2888
      %v3470 = vunpack.c.h.b16 %v2888
      %v3471 = vunpack.c.l.b16 %v2889
      %v3472 = vunpack.c.h.b16 %v2889
      %v3473 = vunpack.c.l.b16 %v2890
      %v3474 = vunpack.c.h.b16 %v2890
      %v3475 = vunpack.c.l.b16 %v2891
      %v3476 = vunpack.c.h.b16 %v2891
      %v3477 = vunpack.c.l.b16 %v2892
      %v3478 = vunpack.c.h.b16 %v2892
      %v3479 = vunpack.c.l.b16 %v2893
      %v3480 = vunpack.c.h.b16 %v2893
      %v3481 = vunpack.c.l.b16 %v2894
      %v3482 = vunpack.c.h.b16 %v2894
      %v3483 = vunpack.c.l.b16 %v2895
      %v3484 = vunpack.c.h.b16 %v2895
      %v3485 = vunpack.c.l.b16 %v2896
      %v3486 = vunpack.c.h.b16 %v2896
      %v3487 = vunpack.c.l.b16 %v2897
      %v3488 = vunpack.c.h.b16 %v2897
      %v3489 = vunpack.c.l.b16 %v2898
      %v3490 = vunpack.c.h.b16 %v2898
      %v3491 = vunpack.c.l.b16 %v2899
      %v3492 = vunpack.c.h.b16 %v2899
      %v3493 = vunpack.c.l.b16 %v2900
      %v3494 = vunpack.c.h.b16 %v2900
      %v3495 = vunpack.c.l.b16 %v2901
      %v3496 = vunpack.c.h.b16 %v2901
      %v3497 = vunpack.c.l.b16 %v2902
      %v3498 = vunpack.c.h.b16 %v2902
      %v3499 = vunpack.c.l.b16 %v2903
      %v3500 = vunpack.c.h.b16 %v2903
      %v3501 = vunpack.c.l.b16 %v2904
      %v3502 = vunpack.c.h.b16 %v2904
      %v3503 = vunpack.c.l.b16 %v2905
      %v3504 = vunpack.c.h.b16 %v2905
      %v3505 = vunpack.c.l.b16 %v2906
      %v3506 = vunpack.c.h.b16 %v2906
      %v3507 = vunpack.c.l.b16 %v2907
      %v3508 = vunpack.c.h.b16 %v2907
      %v3509 = vunpack.c.l.b16 %v2908
      %v3510 = vunpack.c.h.b16 %v2908
      %v3511 = vunpack.c.l.b16 %v2909
      %v3512 = vunpack.c.h.b16 %v2909
      %v3513 = vunpack.c.l.b16 %v2910
      %v3514 = vunpack.c.h.b16 %v2910
      %v3515 = vunpack.c.l.b16 %v2911
      %v3516 = vunpack.c.h.b16 %v2911
      %v3517 = vunpack.c.l.b16 %v2912
      %v3518 = vunpack.c.h.b16 %v2912
      %v3519 = vunpack.c.l.b16 %v2913
      %v3520 = vunpack.c.h.b16 %v2913
      %v3521 = vunpack.c.l.b16 %v2914
      %v3522 = vunpack.c.h.b16 %v2914
      %v3523 = vunpack.c.l.b16 %v2915
      %v3524 = vunpack.c.h.b16 %v2915
      %v3525 = vunpack.c.l.b16 %v2916
      %v3526 = vunpack.c.h.b16 %v2916
      %v3527 = vunpack.c.l.b16 %v2917
      %v3528 = vunpack.c.h.b16 %v2917
      %v3529 = vunpack.c.l.b16 %v2918
      %v3530 = vunpack.c.h.b16 %v2918
      %v3531 = vunpack.c.l.b16 %v2919
      %v3532 = vunpack.c.h.b16 %v2919
      %v3533 = vunpack.c.l.b16 %v2920
      %v3534 = vunpack.c.h.b16 %v2920
      %v3535 = vunpack.c.l.b16 %v2921
      %v3536 = vunpack.c.h.b16 %v2921
      %v3537 = vunpack.c.l.b16 %v2922
      %v3538 = vunpack.c.h.b16 %v2922
      %v3539 = vunpack.c.l.b16 %v2923
      %v3540 = vunpack.c.h.b16 %v2923
      %v3541 = vunpack.c.l.b16 %v2924
      %v3542 = vunpack.c.h.b16 %v2924
      %v3543 = vunpack.c.l.b16 %v2925
      %v3544 = vunpack.c.h.b16 %v2925
      %v3545 = vunpack.c.l.b16 %v2926
      %v3546 = vunpack.c.h.b16 %v2926
      %v3547 = vunpack.c.l.b16 %v2927
      %v3548 = vunpack.c.h.b16 %v2927
      %v3549 = vunpack.c.l.b16 %v2928
      %v3550 = vunpack.c.h.b16 %v2928
      %v3551 = vunpack.c.l.b16 %v2929
      %v3552 = vunpack.c.h.b16 %v2929
      %v3553 = vunpack.c.l.b16 %v2930
      %v3554 = vunpack.c.h.b16 %v2930
      %v3555 = vunpack.c.l.b16 %v2931
      %v3556 = vunpack.c.h.b16 %v2931
      %v3557 = vunpack.c.l.b16 %v2932
      %v3558 = vunpack.c.h.b16 %v2932
      %v3559 = vunpack.c.l.b16 %v2933
      %v3560 = vunpack.c.h.b16 %v2933
      %v3561 = vunpack.c.l.b16 %v2934
      %v3562 = vunpack.c.h.b16 %v2934
      %v3563 = vunpack.c.l.b16 %v2935
      %v3564 = vunpack.c.h.b16 %v2935
      %v3565 = vunpack.c.l.b16 %v2936
      %v3566 = vunpack.c.h.b16 %v2936
      %v3567 = vunpack.c.l.b16 %v2937
      %v3568 = vunpack.c.h.b16 %v2937
      %v3569 = vunpack.c.l.b16 %v2938
      %v3570 = vunpack.c.h.b16 %v2938
      %v3571 = vunpack.c.l.b16 %v2939
      %v3572 = vunpack.c.h.b16 %v2939
      %v3573 = vunpack.c.l.b16 %v2940
      %v3574 = vunpack.c.h.b16 %v2940
      %v3575 = vunpack.c.l.b16 %v2941
      %v3576 = vunpack.c.h.b16 %v2941
      %v3577 = vunpack.c.l.b16 %v2942
      %v3578 = vunpack.c.h.b16 %v2942
      %v3579 = vunpack.c.l.b16 %v2943
      %v3580 = vunpack.c.h.b16 %v2943
      %v3581 = vunpack.c.l.b16 %v2944
      %v3582 = vunpack.c.h.b16 %v2944
      %v3583 = vunpack.c.l.b16 %v2945
      %v3584 = vunpack.c.h.b16 %v2945
      %v3585 = vunpack.c.l.b16 %v2946
      %v3586 = vunpack.c.h.b16 %v2946
      %v3587 = vunpack.c.l.b16 %v2947
      %v3588 = vunpack.c.h.b16 %v2947
      %v3589 = vunpack.c.l.b16 %v2948
      %v3590 = vunpack.c.h.b16 %v2948
      %v3591 = vunpack.c.l.b16 %v2949
      %v3592 = vunpack.c.h.b16 %v2949
      %v3593 = vunpack.c.l.b16 %v2950
      %v3594 = vunpack.c.h.b16 %v2950
      %v3595 = vunpack.c.l.b16 %v2951
      %v3596 = vunpack.c.h.b16 %v2951
      %v3597 = vunpack.c.l.b16 %v2952
      %v3598 = vunpack.c.h.b16 %v2952
      %v3599 = vunpack.c.l.b16 %v2953
      %v3600 = vunpack.c.h.b16 %v2953
      %v3601 = vunpack.c.l.b16 %v2954
      %v3602 = vunpack.c.h.b16 %v2954
      %v3603 = vunpack.c.l.b16 %v2955
      %v3604 = vunpack.c.h.b16 %v2955
      %v3605 = vunpack.c.l.b16 %v2956
      %v3606 = vunpack.c.h.b16 %v2956
      %v3607 = vunpack.c.l.b16 %v2957
      %v3608 = vunpack.c.h.b16 %v2957
      %v3609 = vunpack.c.l.b16 %v2958
      %v3610 = vunpack.c.h.b16 %v2958
      %v3611 = vunpack.c.l.b16 %v2959
      %v3612 = vunpack.c.h.b16 %v2959
      %v3613 = vunpack.c.l.b16 %v2960
      %v3614 = vunpack.c.h.b16 %v2960
      %v3615 = vunpack.c.l.b16 %v2961
      %v3616 = vunpack.c.h.b16 %v2961
      %v3617 = vunpack.c.l.b16 %v2962
      %v3618 = vunpack.c.h.b16 %v2962
      %v3619 = vunpack.c.l.b16 %v2963
      %v3620 = vunpack.c.h.b16 %v2963
      %v3621 = vunpack.c.l.b16 %v2964
      %v3622 = vunpack.c.h.b16 %v2964
      %v3623 = vunpack.c.l.b16 %v2965
      %v3624 = vunpack.c.h.b16 %v2965
      %v3625 = vunpack.c.l.b16 %v2966
      %v3626 = vunpack.c.h.b16 %v2966
      %v3627 = vunpack.c.l.b16 %v2967
      %v3628 = vunpack.c.h.b16 %v2967
      %v3629 = vunpack.c.l.b16 %v2968
      %v3630 = vunpack.c.h.b16 %v2968
      %v3631 = vunpack.c.l.b16 %v2969
      %v3632 = vunpack.c.h.b16 %v2969
      %v3633 = vunpack.c.l.b16 %v2970
      %v3634 = vunpack.c.h.b16 %v2970
      %v3635 = vunpack.c.l.b16 %v2971
      %v3636 = vunpack.c.h.b16 %v2971
      %v3637 = vunpack.c.l.b16 %v2972
      %v3638 = vunpack.c.h.b16 %v2972
      %v3639 = vunpack.c.l.b16 %v2973
      %v3640 = vunpack.c.h.b16 %v2973
      %v3641 = vunpack.c.l.b16 %v2974
      %v3642 = vunpack.c.h.b16 %v2974
      %v3643 = vunpack.c.l.b16 %v2975
      %v3644 = vunpack.c.h.b16 %v2975
      %v3645 = vunpack.c.l.b16 %v2976
      %v3646 = vunpack.c.h.b16 %v2976
      %v3647 = vunpack.c.l.b16 %v2977
      %v3648 = vunpack.c.h.b16 %v2977
      %v3649 = vunpack.c.l.b16 %v2978
      %v3650 = vunpack.c.h.b16 %v2978
      %v3651 = vunpack.c.l.b16 %v2979
      %v3652 = vunpack.c.h.b16 %v2979
      %v3653 = vunpack.c.l.b16 %v2980
      %v3654 = vunpack.c.h.b16 %v2980
      %v3655 = vunpack.c.l.b16 %v2981
      %v3656 = vunpack.c.h.b16 %v2981
      %v3657 = vunpack.c.l.b16 %v2982
      %v3658 = vunpack.c.h.b16 %v2982
      %v3659 = vunpack.c.l.b16 %v2983
      %v3660 = vunpack.c.h.b16 %v2983
      %v3661 = vunpack.c.l.b16 %v2984
      %v3662 = vunpack.c.h.b16 %v2984
      %v3663 = vpack.c.b16 %v3235, %v3231
      %v3664 = vpack.c.b16 %v3236, %v3232
      %v3665 = vpack.c.b16 %v3237, %v3233
      %v3666 = vpack.c.b16 %v3238, %v3234
      %v3667 = vpack.c.b16 %v3243, %v3239
      %v3668 = vpack.c.b16 %v3244, %v3240
      %v3669 = vpack.c.b16 %v3245, %v3241
      %v3670 = vpack.c.b16 %v3246, %v3242
      %v3671 = vpack.c.b16 %v3251, %v3247
      %v3672 = vpack.c.b16 %v3252, %v3248
      %v3673 = vpack.c.b16 %v3253, %v3249
      %v3674 = vpack.c.b16 %v3254, %v3250
      %v3675 = vpack.c.b16 %v3259, %v3255
      %v3676 = vpack.c.b16 %v3260, %v3256
      %v3677 = vpack.c.b16 %v3261, %v3257
      %v3678 = vpack.c.b16 %v3262, %v3258
      %v3679 = vpack.c.b16 %v3267, %v3263
      %v3680 = vpack.c.b16 %v3268, %v3264
      %v3681 = vpack.c.b16 %v3269, %v3265
      %v3682 = vpack.c.b16 %v3270, %v3266
      %v3683 = vpack.c.b16 %v3275, %v3271
      %v3684 = vpack.c.b16 %v3276, %v3272
      %v3685 = vpack.c.b16 %v3277, %v3273
      %v3686 = vpack.c.b16 %v3278, %v3274
      %v3687 = vpack.c.b16 %v3283, %v3279
      %v3688 = vpack.c.b16 %v3284, %v3280
      %v3689 = vpack.c.b16 %v3285, %v3281
      %v3690 = vpack.c.b16 %v3286, %v3282
      %v3691 = vpack.c.b16 %v3291, %v3287
      %v3692 = vpack.c.b16 %v3292, %v3288
      %v3693 = vpack.c.b16 %v3293, %v3289
      %v3694 = vpack.c.b16 %v3294, %v3290
      %v3695 = vpack.c.b16 %v3299, %v3295
      %v3696 = vpack.c.b16 %v3300, %v3296
      %v3697 = vpack.c.b16 %v3301, %v3297
      %v3698 = vpack.c.b16 %v3302, %v3298
      %v3699 = vpack.c.b16 %v3307, %v3303
      %v3700 = vpack.c.b16 %v3308, %v3304
      %v3701 = vpack.c.b16 %v3309, %v3305
      %v3702 = vpack.c.b16 %v3310, %v3306
      %v3703 = vpack.c.b16 %v3315, %v3311
      %v3704 = vpack.c.b16 %v3316, %v3312
      %v3705 = vpack.c.b16 %v3317, %v3313
      %v3706 = vpack.c.b16 %v3318, %v3314
      %v3707 = vpack.c.b16 %v3323, %v3319
      %v3708 = vpack.c.b16 %v3324, %v3320
      %v3709 = vpack.c.b16 %v3325, %v3321
      %v3710 = vpack.c.b16 %v3326, %v3322
      %v3711 = vpack.c.b16 %v3331, %v3327
      %v3712 = vpack.c.b16 %v3332, %v3328
      %v3713 = vpack.c.b16 %v3333, %v3329
      %v3714 = vpack.c.b16 %v3334, %v3330
      %v3715 = vpack.c.b16 %v3339, %v3335
      %v3716 = vpack.c.b16 %v3340, %v3336
      %v3717 = vpack.c.b16 %v3341, %v3337
      %v3718 = vpack.c.b16 %v3342, %v3338
      %v3719 = vpack.c.b16 %v3347, %v3343
      %v3720 = vpack.c.b16 %v3348, %v3344
      %v3721 = vpack.c.b16 %v3349, %v3345
      %v3722 = vpack.c.b16 %v3350, %v3346
      %v3723 = vpack.c.b16 %v3355, %v3351
      %v3724 = vpack.c.b16 %v3356, %v3352
      %v3725 = vpack.c.b16 %v3357, %v3353
      %v3726 = vpack.c.b16 %v3358, %v3354
      %v3727 = vpack.c.b16 %v3363, %v3359
      %v3728 = vpack.c.b16 %v3364, %v3360
      %v3729 = vpack.c.b16 %v3365, %v3361
      %v3730 = vpack.c.b16 %v3366, %v3362
      %v3731 = vpack.c.b16 %v3371, %v3367
      %v3732 = vpack.c.b16 %v3372, %v3368
      %v3733 = vpack.c.b16 %v3373, %v3369
      %v3734 = vpack.c.b16 %v3374, %v3370
      %v3735 = vpack.c.b16 %v3379, %v3375
      %v3736 = vpack.c.b16 %v3380, %v3376
      %v3737 = vpack.c.b16 %v3381, %v3377
      %v3738 = vpack.c.b16 %v3382, %v3378
      %v3739 = vpack.c.b16 %v3387, %v3383
      %v3740 = vpack.c.b16 %v3388, %v3384
      %v3741 = vpack.c.b16 %v3389, %v3385
      %v3742 = vpack.c.b16 %v3390, %v3386
      %v3743 = vpack.c.b16 %v3395, %v3391
      %v3744 = vpack.c.b16 %v3396, %v3392
      %v3745 = vpack.c.b16 %v3397, %v3393
      %v3746 = vpack.c.b16 %v3398, %v3394
      %v3747 = vpack.c.b16 %v3403, %v3399
      %v3748 = vpack.c.b16 %v3404, %v3400
      %v3749 = vpack.c.b16 %v3405, %v3401
      %v3750 = vpack.c.b16 %v3406, %v3402
      %v3751 = vpack.c.b16 %v3411, %v3407
      %v3752 = vpack.c.b16 %v3412, %v3408
      %v3753 = vpack.c.b16 %v3413, %v3409
      %v3754 = vpack.c.b16 %v3414, %v3410
      %v3755 = vpack.c.b16 %v3419, %v3415
      %v3756 = vpack.c.b16 %v3420, %v3416
      %v3757 = vpack.c.b16 %v3421, %v3417
      %v3758 = vpack.c.b16 %v3422, %v3418
      %v3759 = vpack.c.b16 %v3427, %v3423
      %v3760 = vpack.c.b16 %v3428, %v3424
      %v3761 = vpack.c.b16 %v3429, %v3425
      %v3762 = vpack.c.b16 %v3430, %v3426
      %v3763 = vpack.c.b16 %v3435, %v3431
      %v3764 = vpack.c.b16 %v3436, %v3432
      %v3765 = vpack.c.b16 %v3437, %v3433
      %v3766 = vpack.c.b16 %v3438, %v3434
      %v3767 = vpack.c.b16 %v3443, %v3439
      %v3768 = vpack.c.b16 %v3444, %v3440
      %v3769 = vpack.c.b16 %v3445, %v3441
      %v3770 = vpack.c.b16 %v3446, %v3442
      %v3771 = vpack.c.b16 %v3451, %v3447
      %v3772 = vpack.c.b16 %v3452, %v3448
      %v3773 = vpack.c.b16 %v3453, %v3449
      %v3774 = vpack.c.b16 %v3454, %v3450
      %v3775 = vpack.c.b16 %v3459, %v3455
      %v3776 = vpack.c.b16 %v3460, %v3456
      %v3777 = vpack.c.b16 %v3461, %v3457
      %v3778 = vpack.c.b16 %v3462, %v3458
      %v3779 = vpack.c.b16 %v3467, %v3463
      %v3780 = vpack.c.b16 %v3468, %v3464
      %v3781 = vpack.c.b16 %v3469, %v3465
      %v3782 = vpack.c.b16 %v3470, %v3466
      %v3783 = vpack.c.b16 %v3475, %v3471
      %v3784 = vpack.c.b16 %v3476, %v3472
      %v3785 = vpack.c.b16 %v3477, %v3473
      %v3786 = vpack.c.b16 %v3478, %v3474
      %v3787 = vpack.c.b16 %v3483, %v3479
      %v3788 = vpack.c.b16 %v3484, %v3480
      %v3789 = vpack.c.b16 %v3485, %v3481
      %v3790 = vpack.c.b16 %v3486, %v3482
      %v3791 = vpack.c.b16 %v3491, %v3487
      %v3792 = vpack.c.b16 %v3492, %v3488
      %v3793 = vpack.c.b16 %v3493, %v3489
      %v3794 = vpack.c.b16 %v3494, %v3490
      %v3795 = vpack.c.b16 %v3499, %v3495
      %v3796 = vpack.c.b16 %v3500, %v3496
      %v3797 = vpack.c.b16 %v3501, %v3497
      %v3798 = vpack.c.b16 %v3502, %v3498
      %v3799 = vpack.c.b16 %v3507, %v3503
      %v3800 = vpack.c.b16 %v3508, %v3504
      %v3801 = vpack.c.b16 %v3509, %v3505
      %v3802 = vpack.c.b16 %v3510, %v3506
      %v3803 = vpack.c.b16 %v3515, %v3511
      %v3804 = vpack.c.b16 %v3516, %v3512
      %v3805 = vpack.c.b16 %v3517, %v3513
      %v3806 = vpack.c.b16 %v3518, %v3514
      %v3807 = vpack.c.b16 %v3523, %v3519
      %v3808 = vpack.c.b16 %v3524, %v3520
      %v3809 = vpack.c.b16 %v3525, %v3521
      %v3810 = vpack.c.b16 %v3526, %v3522
      %v3811 = vpack.c.b16 %v3531, %v3527
      %v3812 = vpack.c.b16 %v3532, %v3528
      %v3813 = vpack.c.b16 %v3533, %v3529
      %v3814 = vpack.c.b16 %v3534, %v3530
      %v3815 = vpack.c.b16 %v3539, %v3535
      %v3816 = vpack.c.b16 %v3540, %v3536
      %v3817 = vpack.c.b16 %v3541, %v3537
      %v3818 = vpack.c.b16 %v3542, %v3538
      %v3819 = vpack.c.b16 %v3547, %v3543
      %v3820 = vpack.c.b16 %v3548, %v3544
      %v3821 = vpack.c.b16 %v3549, %v3545
      %v3822 = vpack.c.b16 %v3550, %v3546
      %v3823 = vpack.c.b16 %v3555, %v3551
      %v3824 = vpack.c.b16 %v3556, %v3552
      %v3825 = vpack.c.b16 %v3557, %v3553
      %v3826 = vpack.c.b16 %v3558, %v3554
      %v3827 = vpack.c.b16 %v3563, %v3559
      %v3828 = vpack.c.b16 %v3564, %v3560
      %v3829 = vpack.c.b16 %v3565, %v3561
      %v3830 = vpack.c.b16 %v3566, %v3562
      %v3831 = vpack.c.b16 %v3571, %v3567
      %v3832 = vpack.c.b16 %v3572, %v3568
      %v3833 = vpack.c.b16 %v3573, %v3569
      %v3834 = vpack.c.b16 %v3574, %v3570
      %v3835 = vpack.c.b16 %v3579, %v3575
      %v3836 = vpack.c.b16 %v3580, %v3576
      %v3837 = vpack.c.b16 %v3581, %v3577
      %v3838 = vpack.c.b16 %v3582, %v3578
      %v3839 = vpack.c.b16 %v3587, %v3583
      %v3840 = vpack.c.b16 %v3588, %v3584
      %v3841 = vpack.c.b16 %v3589, %v3585
      %v3842 = vpack.c.b16 %v3590, %v3586
      %v3843 = vpack.c.b16 %v3595, %v3591
      %v3844 = vpack.c.b16 %v3596, %v3592
      %v3845 = vpack.c.b16 %v3597, %v3593
      %v3846 = vpack.c.b16 %v3598, %v3594
      %v3847 = vpack.c.b16 %v3603, %v3599
      %v3848 = vpack.c.b16 %v3604, %v3600
      %v3849 = vpack.c.b16 %v3605, %v3601
      %v3850 = vpack.c.b16 %v3606, %v3602
      %v3851 = vpack.c.b16 %v3611, %v3607
      %v3852 = vpack.c.b16 %v3612, %v3608
      %v3853 = vpack.c.b16 %v3613, %v3609
      %v3854 = vpack.c.b16 %v3614, %v3610
      %v3855 = vpack.c.b16 %v3619, %v3615
      %v3856 = vpack.c.b16 %v3620, %v3616
      %v3857 = vpack.c.b16 %v3621, %v3617
      %v3858 = vpack.c.b16 %v3622, %v3618
      %v3859 = vpack.c.b16 %v3627, %v3623
      %v3860 = vpack.c.b16 %v3628, %v3624
      %v3861 = vpack.c.b16 %v3629, %v3625
      %v3862 = vpack.c.b16 %v3630, %v3626
      %v3863 = vpack.c.b16 %v3635, %v3631
      %v3864 = vpack.c.b16 %v3636, %v3632
      %v3865 = vpack.c.b16 %v3637, %v3633
      %v3866 = vpack.c.b16 %v3638, %v3634
      %v3867 = vpack.c.b16 %v3643, %v3639
      %v3868 = vpack.c.b16 %v3644, %v3640
      %v3869 = vpack.c.b16 %v3645, %v3641
      %v3870 = vpack.c.b16 %v3646, %v3642
      %v3871 = vpack.c.b16 %v3651, %v3647
      %v3872 = vpack.c.b16 %v3652, %v3648
      %v3873 = vpack.c.b16 %v3653, %v3649
      %v3874 = vpack.c.b16 %v3654, %v3650
      %v3875 = vpack.c.b16 %v3659, %v3655
      %v3876 = vpack.c.b16 %v3660, %v3656
      %v3877 = vpack.c.b16 %v3661, %v3657
      %v3878 = vpack.c.b16 %v3662, %v3658
      %vm4095 = vcmask 785408
      %v4097 = vsel %vm4095, %v3008, 0
      %4099 = vmatpush.bf16.msra.mxu0 %v3691
      %4100 = vmatpush.bf16.msra.mxu0 %v3687
      %4101 = vmatpush.bf16.msra.mxu0 %v3683
      %4102 = vmatpush.bf16.msra.mxu0 %v3679
      %4103 = vmatpush.bf16.msra.mxu0 %v3675
      %4104 = vmatpush.bf16.msra.mxu0 %v3671
      %4105 = vmatpush.bf16.msra.mxu0 %v3667
      %4106 = vmatpush.bf16.msra.mxu0 %v3663
      %4107 = vmatmul.bf16.gmra.mxu0 %v3002
      %v4108 = vpop.f32.mrf.mxu0
      %v4109 = vadd.f32 %v2989, %v4108
      %v4110 = vpop.f32.mrf.mxu0
      %4111 = vdwg.mxu0
      %4112 = vmatpush.bf16.msra.mxu0 %v3723
      %4113 = vmatpush.bf16.msra.mxu0 %v3719
      %4114 = vmatpush.bf16.msra.mxu0 %v3715
      %4115 = vmatpush.bf16.msra.mxu0 %v3711
      %4116 = vmatpush.bf16.msra.mxu0 %v3707
      %4117 = vmatpush.bf16.msra.mxu0 %v3703
      %4118 = vmatpush.bf16.msra.mxu0 %v3699
      %4119 = vmatpush.bf16.msra.mxu0 %v3695
      %4120 = vmatmul.bf16.gmra.mxu0 %v3003
      %v4121 = vpop.f32.mrf.mxu0
      %v4122 = vadd.f32 %v4109, %v4121
      %v4123 = vpop.f32.mrf.mxu0
      %4124 = vdwg.mxu0
      %4125 = vmatpush.bf16.msra.mxu0 %v3755
      %4126 = vmatpush.bf16.msra.mxu0 %v3751
      %4127 = vmatpush.bf16.msra.mxu0 %v3747
      %4128 = vmatpush.bf16.msra.mxu0 %v3743
      %4129 = vmatpush.bf16.msra.mxu0 %v3739
      %4130 = vmatpush.bf16.msra.mxu0 %v3735
      %4131 = vmatpush.bf16.msra.mxu0 %v3731
      %4132 = vmatpush.bf16.msra.mxu0 %v3727
      %4133 = vmatmul.bf16.gmra.mxu0 %v3004
      %v4134 = vpop.f32.mrf.mxu0
      %v4135 = vadd.f32 %v4122, %v4134
      %v4136 = vpop.f32.mrf.mxu0
      %4137 = vdwg.mxu0
      %4138 = vmatpush.bf16.msra.mxu0 %v3787
      %4139 = vmatpush.bf16.msra.mxu0 %v3783
      %4140 = vmatpush.bf16.msra.mxu0 %v3779
      %4141 = vmatpush.bf16.msra.mxu0 %v3775
      %4142 = vmatpush.bf16.msra.mxu0 %v3771
      %4143 = vmatpush.bf16.msra.mxu0 %v3767
      %4144 = vmatpush.bf16.msra.mxu0 %v3763
      %4145 = vmatpush.bf16.msra.mxu0 %v3759
      %4146 = vmatmul.bf16.gmra.mxu0 %v3005
      %v4147 = vpop.f32.mrf.mxu0
      %v4148 = vadd.f32 %v4135, %v4147
      %v4149 = vpop.f32.mrf.mxu0
      %4150 = vdwg.mxu0
      %4151 = vmatpush.bf16.msra.mxu0 %v3819
      %4152 = vmatpush.bf16.msra.mxu0 %v3815
      %4153 = vmatpush.bf16.msra.mxu0 %v3811
      %4154 = vmatpush.bf16.msra.mxu0 %v3807
      %4155 = vmatpush.bf16.msra.mxu0 %v3803
      %4156 = vmatpush.bf16.msra.mxu0 %v3799
      %4157 = vmatpush.bf16.msra.mxu0 %v3795
      %4158 = vmatpush.bf16.msra.mxu0 %v3791
      %4159 = vmatmul.bf16.gmra.mxu0 %v3006
      %v4160 = vpop.f32.mrf.mxu0
      %v4161 = vadd.f32 %v4148, %v4160
      %v4162 = vpop.f32.mrf.mxu0
      %4163 = vdwg.mxu0
      %4164 = vmatpush.bf16.msra.mxu0 %v3851
      %4165 = vmatpush.bf16.msra.mxu0 %v3847
      %4166 = vmatpush.bf16.msra.mxu0 %v3843
      %4167 = vmatpush.bf16.msra.mxu0 %v3839
      %4168 = vmatpush.bf16.msra.mxu0 %v3835
      %4169 = vmatpush.bf16.msra.mxu0 %v3831
      %4170 = vmatpush.bf16.msra.mxu0 %v3827
      %4171 = vmatpush.bf16.msra.mxu0 %v3823
      %4172 = vmatmul.bf16.gmra.mxu0 %v3007
      %v4173 = vpop.f32.mrf.mxu0
      %v4174 = vadd.f32 %v4161, %v4173
      %v4175 = vpop.f32.mrf.mxu0
      %4176 = vdwg.mxu0
      %4177 = vmatpush.bf16.msra.mxu0 0
      %4178 = vmatpush.bf16.msra.mxu0 0
      %4179 = vmatpush.bf16.msra.mxu0 %v3875
      %4180 = vmatpush.bf16.msra.mxu0 %v3871
      %4181 = vmatpush.bf16.msra.mxu0 %v3867
      %4182 = vmatpush.bf16.msra.mxu0 %v3863
      %4183 = vmatpush.bf16.msra.mxu0 %v3859
      %4184 = vmatpush.bf16.msra.mxu0 %v3855
      %4185 = vmatmul.bf16.gmra.mxu0 %v4097
      %v4186 = vpop.f32.mrf.mxu0
      %v4187 = vadd.f32 %v4174, %v4186
      %v4188 = vpop.f32.mrf.mxu0
      %4189 = vdwg.mxu0
      %4190 = vmatpush.bf16.msra.mxu0 %v3692
      %4191 = vmatpush.bf16.msra.mxu0 %v3688
      %4192 = vmatpush.bf16.msra.mxu0 %v3684
      %4193 = vmatpush.bf16.msra.mxu0 %v3680
      %4194 = vmatpush.bf16.msra.mxu0 %v3676
      %4195 = vmatpush.bf16.msra.mxu0 %v3672
      %4196 = vmatpush.bf16.msra.mxu0 %v3668
      %4197 = vmatpush.bf16.msra.mxu0 %v3664
      %4198 = vmatmul.bf16.gmra.mxu0 %v3002
      %v4199 = vpop.f32.mrf.mxu0
      %v4200 = vadd.f32 %v2989, %v4199
      %v4201 = vpop.f32.mrf.mxu0
      %4202 = vdwg.mxu0
      %4203 = vmatpush.bf16.msra.mxu0 %v3724
      %4204 = vmatpush.bf16.msra.mxu0 %v3720
      %4205 = vmatpush.bf16.msra.mxu0 %v3716
      %4206 = vmatpush.bf16.msra.mxu0 %v3712
      %4207 = vmatpush.bf16.msra.mxu0 %v3708
      %4208 = vmatpush.bf16.msra.mxu0 %v3704
      %4209 = vmatpush.bf16.msra.mxu0 %v3700
      %4210 = vmatpush.bf16.msra.mxu0 %v3696
      %4211 = vmatmul.bf16.gmra.mxu0 %v3003
      %v4212 = vpop.f32.mrf.mxu0
      %v4213 = vadd.f32 %v4200, %v4212
      %v4214 = vpop.f32.mrf.mxu0
      %4215 = vdwg.mxu0
      %4216 = vmatpush.bf16.msra.mxu0 %v3756
      %4217 = vmatpush.bf16.msra.mxu0 %v3752
      %4218 = vmatpush.bf16.msra.mxu0 %v3748
      %4219 = vmatpush.bf16.msra.mxu0 %v3744
      %4220 = vmatpush.bf16.msra.mxu0 %v3740
      %4221 = vmatpush.bf16.msra.mxu0 %v3736
      %4222 = vmatpush.bf16.msra.mxu0 %v3732
      %4223 = vmatpush.bf16.msra.mxu0 %v3728
      %4224 = vmatmul.bf16.gmra.mxu0 %v3004
      %v4225 = vpop.f32.mrf.mxu0
      %v4226 = vadd.f32 %v4213, %v4225
      %v4227 = vpop.f32.mrf.mxu0
      %4228 = vdwg.mxu0
      %4229 = vmatpush.bf16.msra.mxu0 %v3788
      %4230 = vmatpush.bf16.msra.mxu0 %v3784
      %4231 = vmatpush.bf16.msra.mxu0 %v3780
      %4232 = vmatpush.bf16.msra.mxu0 %v3776
      %4233 = vmatpush.bf16.msra.mxu0 %v3772
      %4234 = vmatpush.bf16.msra.mxu0 %v3768
      %4235 = vmatpush.bf16.msra.mxu0 %v3764
      %4236 = vmatpush.bf16.msra.mxu0 %v3760
      %4237 = vmatmul.bf16.gmra.mxu0 %v3005
      %v4238 = vpop.f32.mrf.mxu0
      %v4239 = vadd.f32 %v4226, %v4238
      %v4240 = vpop.f32.mrf.mxu0
      %4241 = vdwg.mxu0
      %4242 = vmatpush.bf16.msra.mxu0 %v3820
      %4243 = vmatpush.bf16.msra.mxu0 %v3816
      %4244 = vmatpush.bf16.msra.mxu0 %v3812
      %4245 = vmatpush.bf16.msra.mxu0 %v3808
      %4246 = vmatpush.bf16.msra.mxu0 %v3804
      %4247 = vmatpush.bf16.msra.mxu0 %v3800
      %4248 = vmatpush.bf16.msra.mxu0 %v3796
      %4249 = vmatpush.bf16.msra.mxu0 %v3792
      %4250 = vmatmul.bf16.gmra.mxu0 %v3006
      %v4251 = vpop.f32.mrf.mxu0
      %v4252 = vadd.f32 %v4239, %v4251
      %v4253 = vpop.f32.mrf.mxu0
      %4254 = vdwg.mxu0
      %4255 = vmatpush.bf16.msra.mxu0 %v3852
      %4256 = vmatpush.bf16.msra.mxu0 %v3848
      %4257 = vmatpush.bf16.msra.mxu0 %v3844
      %4258 = vmatpush.bf16.msra.mxu0 %v3840
      %4259 = vmatpush.bf16.msra.mxu0 %v3836
      %4260 = vmatpush.bf16.msra.mxu0 %v3832
      %4261 = vmatpush.bf16.msra.mxu0 %v3828
      %4262 = vmatpush.bf16.msra.mxu0 %v3824
      %4263 = vmatmul.bf16.gmra.mxu0 %v3007
      %v4264 = vpop.f32.mrf.mxu0
      %v4265 = vadd.f32 %v4252, %v4264
      %v4266 = vpop.f32.mrf.mxu0
      %4267 = vdwg.mxu0
      %4268 = vmatpush.bf16.msra.mxu0 0
      %4269 = vmatpush.bf16.msra.mxu0 0
      %4270 = vmatpush.bf16.msra.mxu0 %v3876
      %4271 = vmatpush.bf16.msra.mxu0 %v3872
      %4272 = vmatpush.bf16.msra.mxu0 %v3868
      %4273 = vmatpush.bf16.msra.mxu0 %v3864
      %4274 = vmatpush.bf16.msra.mxu0 %v3860
      %4275 = vmatpush.bf16.msra.mxu0 %v3856
      %4276 = vmatmul.bf16.gmra.mxu0 %v4097
      %v4277 = vpop.f32.mrf.mxu0
      %v4278 = vadd.f32 %v4265, %v4277
      %v4279 = vpop.f32.mrf.mxu0
      %4280 = vdwg.mxu0
      %4281 = vmatpush.bf16.msra.mxu0 %v3693
      %4282 = vmatpush.bf16.msra.mxu0 %v3689
      %4283 = vmatpush.bf16.msra.mxu0 %v3685
      %4284 = vmatpush.bf16.msra.mxu0 %v3681
      %4285 = vmatpush.bf16.msra.mxu0 %v3677
      %4286 = vmatpush.bf16.msra.mxu0 %v3673
      %4287 = vmatpush.bf16.msra.mxu0 %v3669
      %4288 = vmatpush.bf16.msra.mxu0 %v3665
      %4289 = vmatmul.bf16.gmra.mxu0 %v3002
      %v4290 = vpop.f32.mrf.mxu0
      %v4291 = vadd.f32 %v2989, %v4290
      %v4292 = vpop.f32.mrf.mxu0
      %4293 = vdwg.mxu0
      %4294 = vmatpush.bf16.msra.mxu0 %v3725
      %4295 = vmatpush.bf16.msra.mxu0 %v3721
      %4296 = vmatpush.bf16.msra.mxu0 %v3717
      %4297 = vmatpush.bf16.msra.mxu0 %v3713
      %4298 = vmatpush.bf16.msra.mxu0 %v3709
      %4299 = vmatpush.bf16.msra.mxu0 %v3705
      %4300 = vmatpush.bf16.msra.mxu0 %v3701
      %4301 = vmatpush.bf16.msra.mxu0 %v3697
      %4302 = vmatmul.bf16.gmra.mxu0 %v3003
      %v4303 = vpop.f32.mrf.mxu0
      %v4304 = vadd.f32 %v4291, %v4303
      %v4305 = vpop.f32.mrf.mxu0
      %4306 = vdwg.mxu0
      %4307 = vmatpush.bf16.msra.mxu0 %v3757
      %4308 = vmatpush.bf16.msra.mxu0 %v3753
      %4309 = vmatpush.bf16.msra.mxu0 %v3749
      %4310 = vmatpush.bf16.msra.mxu0 %v3745
      %4311 = vmatpush.bf16.msra.mxu0 %v3741
      %4312 = vmatpush.bf16.msra.mxu0 %v3737
      %4313 = vmatpush.bf16.msra.mxu0 %v3733
      %4314 = vmatpush.bf16.msra.mxu0 %v3729
      %4315 = vmatmul.bf16.gmra.mxu0 %v3004
      %v4316 = vpop.f32.mrf.mxu0
      %v4317 = vadd.f32 %v4304, %v4316
      %v4318 = vpop.f32.mrf.mxu0
      %4319 = vdwg.mxu0
      %4320 = vmatpush.bf16.msra.mxu0 %v3789
      %4321 = vmatpush.bf16.msra.mxu0 %v3785
      %4322 = vmatpush.bf16.msra.mxu0 %v3781
      %4323 = vmatpush.bf16.msra.mxu0 %v3777
      %4324 = vmatpush.bf16.msra.mxu0 %v3773
      %4325 = vmatpush.bf16.msra.mxu0 %v3769
      %4326 = vmatpush.bf16.msra.mxu0 %v3765
      %4327 = vmatpush.bf16.msra.mxu0 %v3761
      %4328 = vmatmul.bf16.gmra.mxu0 %v3005
      %v4329 = vpop.f32.mrf.mxu0
      %v4330 = vadd.f32 %v4317, %v4329
      %v4331 = vpop.f32.mrf.mxu0
      %4332 = vdwg.mxu0
      %4333 = vmatpush.bf16.msra.mxu0 %v3821
      %4334 = vmatpush.bf16.msra.mxu0 %v3817
      %4335 = vmatpush.bf16.msra.mxu0 %v3813
      %4336 = vmatpush.bf16.msra.mxu0 %v3809
      %4337 = vmatpush.bf16.msra.mxu0 %v3805
      %4338 = vmatpush.bf16.msra.mxu0 %v3801
      %4339 = vmatpush.bf16.msra.mxu0 %v3797
      %4340 = vmatpush.bf16.msra.mxu0 %v3793
      %4341 = vmatmul.bf16.gmra.mxu0 %v3006
      %v4342 = vpop.f32.mrf.mxu0
      %v4343 = vadd.f32 %v4330, %v4342
      %v4344 = vpop.f32.mrf.mxu0
      %4345 = vdwg.mxu0
      %4346 = vmatpush.bf16.msra.mxu0 %v3853
      %4347 = vmatpush.bf16.msra.mxu0 %v3849
      %4348 = vmatpush.bf16.msra.mxu0 %v3845
      %4349 = vmatpush.bf16.msra.mxu0 %v3841
      %4350 = vmatpush.bf16.msra.mxu0 %v3837
      %4351 = vmatpush.bf16.msra.mxu0 %v3833
      %4352 = vmatpush.bf16.msra.mxu0 %v3829
      %4353 = vmatpush.bf16.msra.mxu0 %v3825
      %4354 = vmatmul.bf16.gmra.mxu0 %v3007
      %v4355 = vpop.f32.mrf.mxu0
      %v4356 = vadd.f32 %v4343, %v4355
      %v4357 = vpop.f32.mrf.mxu0
      %4358 = vdwg.mxu0
      %4359 = vmatpush.bf16.msra.mxu0 0
      %4360 = vmatpush.bf16.msra.mxu0 0
      %4361 = vmatpush.bf16.msra.mxu0 %v3877
      %4362 = vmatpush.bf16.msra.mxu0 %v3873
      %4363 = vmatpush.bf16.msra.mxu0 %v3869
      %4364 = vmatpush.bf16.msra.mxu0 %v3865
      %4365 = vmatpush.bf16.msra.mxu0 %v3861
      %4366 = vmatpush.bf16.msra.mxu0 %v3857
      %4367 = vmatmul.bf16.gmra.mxu0 %v4097
      %v4368 = vpop.f32.mrf.mxu0
      %v4369 = vadd.f32 %v4356, %v4368
      %v4370 = vpop.f32.mrf.mxu0
      %4371 = vdwg.mxu0
      %4372 = vmatpush.bf16.msra.mxu0 %v3694
      %4373 = vmatpush.bf16.msra.mxu0 %v3690
      %4374 = vmatpush.bf16.msra.mxu0 %v3686
      %4375 = vmatpush.bf16.msra.mxu0 %v3682
      %4376 = vmatpush.bf16.msra.mxu0 %v3678
      %4377 = vmatpush.bf16.msra.mxu0 %v3674
      %4378 = vmatpush.bf16.msra.mxu0 %v3670
      %4379 = vmatpush.bf16.msra.mxu0 %v3666
      %4380 = vmatmul.bf16.gmra.mxu0 %v3002
      %v4381 = vpop.f32.mrf.mxu0
      %v4382 = vadd.f32 %v2989, %v4381
      %v4383 = vpop.f32.mrf.mxu0
      %4384 = vdwg.mxu0
      %4385 = vmatpush.bf16.msra.mxu0 %v3726
      %4386 = vmatpush.bf16.msra.mxu0 %v3722
      %4387 = vmatpush.bf16.msra.mxu0 %v3718
      %4388 = vmatpush.bf16.msra.mxu0 %v3714
      %4389 = vmatpush.bf16.msra.mxu0 %v3710
      %4390 = vmatpush.bf16.msra.mxu0 %v3706
      %4391 = vmatpush.bf16.msra.mxu0 %v3702
      %4392 = vmatpush.bf16.msra.mxu0 %v3698
      %4393 = vmatmul.bf16.gmra.mxu0 %v3003
      %v4394 = vpop.f32.mrf.mxu0
      %v4395 = vadd.f32 %v4382, %v4394
      %v4396 = vpop.f32.mrf.mxu0
      %4397 = vdwg.mxu0
      %4398 = vmatpush.bf16.msra.mxu0 %v3758
      %4399 = vmatpush.bf16.msra.mxu0 %v3754
      %4400 = vmatpush.bf16.msra.mxu0 %v3750
      %4401 = vmatpush.bf16.msra.mxu0 %v3746
      %4402 = vmatpush.bf16.msra.mxu0 %v3742
      %4403 = vmatpush.bf16.msra.mxu0 %v3738
      %4404 = vmatpush.bf16.msra.mxu0 %v3734
      %4405 = vmatpush.bf16.msra.mxu0 %v3730
      %4406 = vmatmul.bf16.gmra.mxu0 %v3004
      %v4407 = vpop.f32.mrf.mxu0
      %v4408 = vadd.f32 %v4395, %v4407
      %v4409 = vpop.f32.mrf.mxu0
      %4410 = vdwg.mxu0
      %4411 = vmatpush.bf16.msra.mxu0 %v3790
      %4412 = vmatpush.bf16.msra.mxu0 %v3786
      %4413 = vmatpush.bf16.msra.mxu0 %v3782
      %4414 = vmatpush.bf16.msra.mxu0 %v3778
      %4415 = vmatpush.bf16.msra.mxu0 %v3774
      %4416 = vmatpush.bf16.msra.mxu0 %v3770
      %4417 = vmatpush.bf16.msra.mxu0 %v3766
      %4418 = vmatpush.bf16.msra.mxu0 %v3762
      %4419 = vmatmul.bf16.gmra.mxu0 %v3005
      %v4420 = vpop.f32.mrf.mxu0
      %v4421 = vadd.f32 %v4408, %v4420
      %v4422 = vpop.f32.mrf.mxu0
      %4423 = vdwg.mxu0
      %4424 = vmatpush.bf16.msra.mxu0 %v3822
      %4425 = vmatpush.bf16.msra.mxu0 %v3818
      %4426 = vmatpush.bf16.msra.mxu0 %v3814
      %4427 = vmatpush.bf16.msra.mxu0 %v3810
      %4428 = vmatpush.bf16.msra.mxu0 %v3806
      %4429 = vmatpush.bf16.msra.mxu0 %v3802
      %4430 = vmatpush.bf16.msra.mxu0 %v3798
      %4431 = vmatpush.bf16.msra.mxu0 %v3794
      %4432 = vmatmul.bf16.gmra.mxu0 %v3006
      %v4433 = vpop.f32.mrf.mxu0
      %v4434 = vadd.f32 %v4421, %v4433
      %v4435 = vpop.f32.mrf.mxu0
      %4436 = vdwg.mxu0
      %4437 = vmatpush.bf16.msra.mxu0 %v3854
      %4438 = vmatpush.bf16.msra.mxu0 %v3850
      %4439 = vmatpush.bf16.msra.mxu0 %v3846
      %4440 = vmatpush.bf16.msra.mxu0 %v3842
      %4441 = vmatpush.bf16.msra.mxu0 %v3838
      %4442 = vmatpush.bf16.msra.mxu0 %v3834
      %4443 = vmatpush.bf16.msra.mxu0 %v3830
      %4444 = vmatpush.bf16.msra.mxu0 %v3826
      %4445 = vmatmul.bf16.gmra.mxu0 %v3007
      %v4446 = vpop.f32.mrf.mxu0
      %v4447 = vadd.f32 %v4434, %v4446
      %v4448 = vpop.f32.mrf.mxu0
      %4449 = vdwg.mxu0
      %4450 = vmatpush.bf16.msra.mxu0 0
      %4451 = vmatpush.bf16.msra.mxu0 0
      %4452 = vmatpush.bf16.msra.mxu0 %v3878
      %4453 = vmatpush.bf16.msra.mxu0 %v3874
      %4454 = vmatpush.bf16.msra.mxu0 %v3870
      %4455 = vmatpush.bf16.msra.mxu0 %v3866
      %4456 = vmatpush.bf16.msra.mxu0 %v3862
      %4457 = vmatpush.bf16.msra.mxu0 %v3858
      %4458 = vmatmul.bf16.gmra.mxu0 %v4097
      %v4459 = vpop.f32.mrf.mxu0
      %v4460 = vadd.f32 %v4447, %v4459
      %v4461 = vpop.f32.mrf.mxu0
      %4462 = vdwg.mxu0
      %4463 = vst [vmem:[%s319] sm:$0xff] %v4187
      %4464 = vst [vmem:[%s319 + $0x8] sm:$0xff] %v4278
      %4465 = vst [vmem:[%s319 + $0x10] sm:$0xff] %v4369
      %4466 = vst [vmem:[%s319 + $0x18] sm:$0xff] %v4460
      %v4467 = vld [vmem:[%s309] sm:$0xf]
      %v4469 = vperm.slane %v4467, 0
      %v4470 = vperm.slane %v4467, 1
      %v4471 = vperm.slane %v4467, 2
      %v4472 = vperm.slane %v4467, 3
      %v4477 = vmul.f32 %v4187, %v4469
      %v4478 = vmul.f32 %v4278, %v4470
      %v4479 = vmul.f32 %v4369, %v4471
      %v4480 = vmul.f32 %v4460, %v4472
      %v4481 = vadd.f32 %v4477, %v4478
      %v4482 = vadd.f32 %v4481, %v4479
      %v4483 = vadd.f32 %v4482, %v4480
      %4484 = vadd.xlane.f32.xlu0 %v4483
      %v4485 = vpop.xlane.xlu0 %4484
      %v4486 = vmul.f32 %v4477, %v4477
      %v4487 = vmul.f32 %v4478, %v4478
      %v4488 = vmul.f32 %v4479, %v4479
      %v4489 = vmul.f32 %v4480, %v4480
      %v4490 = vadd.f32 %v4486, %v4487
      %v4491 = vadd.f32 %v4490, %v4488
      %v4492 = vadd.f32 %v4491, %v4489
      %4493 = vadd.xlane.f32.xlu0 %v4492
      %v4494 = vpop.xlane.xlu0 %4493
      %p4495 = scmp.eq.s32.totalorder %s23, 0
      // Predicated region
      $region37: #{dsconv_forward.6} parent=35 // pred_check
        %p4496 = pneg %p4495
      $region38: #{dsconv_forward.6} parent=35 // pred_check_branch
        %4498 = sbr.rel (%p4496) target = $region40
      $region39: #{dsconv_forward.6} parent=35 // pred_region
        %vm4499 = vcmask 7168
        %4500 = vst.msk [vmem:[%s324] sm:$0xff] %vm4499, 0.0
        %4501 = vst.msk [vmem:[%s328] sm:$0xff] %vm4499, 0.0
      $region40: #{dsconv_forward.6} parent=35 // pred_fallthru
        _
      %v4502 = vld [vmem:[%s324] sm:$0xff]
      %v4503 = vadd.f32 %v4502, %v4485
      %vm4504 = vcmask 7168
      %4505 = vst.msk [vmem:[%s324] sm:$0xff] %vm4504, %v4503
      %v4506 = vld [vmem:[%s328] sm:$0xff]
      %v4507 = vadd.f32 %v4506, %v4494
      %4508 = vst.msk [vmem:[%s328] sm:$0xff] %vm4504, %v4507
      %s4509 = smul.u32 4, %s23
      %p4510 = scmp.lt.s32.totalorder %s22, 1
      %s4511 = scalar_select %p4510, %s22, 1
      %p4512 = scmp.lt.s32.totalorder %s4509, 7
      %s4513 = scalar_select %p4512, %s4509, 7
      %s4514 = smul.addr %s4511, 8
      %s4515 = sadd.s32 %s4513, %s4514
      %s4516 = smul.addr %s4515, 8
      %s4517 = scalar_lea.vmem %s4, %s4516
      %p4518 = scmp.lt.s32.totalorder %s22, 1
      %s4519 = scalar_select %p4518, %s22, 1
      %s4520 = smul.addr %s4519, 8
      %s4521 = scalar_lea.vmem %s5, %s4520
      %p4522 = scmp.lt.s32.totalorder %s22, 1
      %s4523 = scalar_select %p4522, %s22, 1
      %s4524 = smul.addr %s4523, 8
      %s4525 = scalar_lea.vmem %s6, %s4524
      // Predicated region
      $region41: #{dsconv_forward.6} parent=35 // pred_check
        %p4526 = pneg %p146
      $region42: #{dsconv_forward.6} parent=35 // pred_check_branch
        %4528 = sbr.rel (%p4526) target = $region44
      $region43: #{dsconv_forward.6} parent=35 // pred_region
        %s4529 = smul.u32 4, %s23
      $region44: #{dsconv_forward.6} parent=35 // pred_fallthru
        _
      // Predicated region
      $region45: #{dsconv_forward.6} parent=35 // pred_check
        %p4530 = pneg %p172
      $region46: #{dsconv_forward.6} parent=35 // pred_check_branch
        %4532 = sbr.rel (%p4530) target = $region48
      $region47: #{dsconv_forward.6} parent=35 // pred_region
        _
      $region48: #{dsconv_forward.6} parent=35 // pred_fallthru
        _
      // Predicated region
      $region49: #{dsconv_forward.6} parent=35 // pred_check
        %p4533 = pneg %p198
      $region50: #{dsconv_forward.6} parent=35 // pred_check_branch
        %4535 = sbr.rel (%p4533) target = $region52
      $region51: #{dsconv_forward.6} parent=35 // pred_region
        _
      $region52: #{dsconv_forward.6} parent=35 // pred_fallthru
        _
    $region36: #{dsconv_forward.6} parent=5 // pred_fallthru
      _
    %p4536 = scmp.le.s32.totalorder 2, %s13
    // Predicated region
    $region53: #{dsconv_forward.6} parent=5 // pred_check
      %p4537 = pneg %p4536
    $region54: #{dsconv_forward.6} parent=5 // pred_check_branch
      %4539 = sbr.rel (%p4537) target = $region56
    $region55: #{dsconv_forward.6} parent=5 // pred_region
      %s4540 = ssub.s32 %s13, 2
      // Predicated region
      $region57: #{dsconv_forward.6} parent=55 // pred_check
        %p4541 = pneg %p152
      $region58: #{dsconv_forward.6} parent=55 // pred_check_branch
        %4543 = sbr.rel (%p4541) target = $region60
      $region59: #{dsconv_forward.6} parent=55 // pred_region
        %s4544 = smul.u32 4, %s25
        %p4545 = scmp.lt.s32.totalorder %s24, 1
        %s4546 = scalar_select %p4545, %s24, 1
        %p4547 = scmp.lt.s32.totalorder %s4544, 7
        %s4548 = scalar_select %p4547, %s4544, 7
        %s4549 = smul.addr %s4546, 8
        %s4550 = sadd.s32 %s4548, %s4549
        %s4551 = smul.addr %s4550, 8
        %s4552 = scalar_lea.vmem %s4, %s4551
      $region60: #{dsconv_forward.6} parent=55 // pred_fallthru
        _
      // Predicated region
      $region61: #{dsconv_forward.6} parent=55 // pred_check
        %p4553 = pneg %p178
      $region62: #{dsconv_forward.6} parent=55 // pred_check_branch
        %4555 = sbr.rel (%p4553) target = $region64
      $region63: #{dsconv_forward.6} parent=55 // pred_region
        %p4556 = scmp.lt.s32.totalorder %s24, 1
        %s4557 = scalar_select %p4556, %s24, 1
        %s4558 = smul.addr %s4557, 8
        %s4559 = scalar_lea.vmem %s5, %s4558
      $region64: #{dsconv_forward.6} parent=55 // pred_fallthru
        _
      // Predicated region
      $region65: #{dsconv_forward.6} parent=55 // pred_check
        %p4560 = pneg %p204
      $region66: #{dsconv_forward.6} parent=55 // pred_check_branch
        %4562 = sbr.rel (%p4560) target = $region68
      $region67: #{dsconv_forward.6} parent=55 // pred_region
        %p4563 = scmp.lt.s32.totalorder %s24, 1
        %s4564 = scalar_select %p4563, %s24, 1
        %s4565 = smul.addr %s4564, 8
        %s4566 = scalar_lea.vmem %s6, %s4565
      $region68: #{dsconv_forward.6} parent=55 // pred_fallthru
        _
    $region56: #{dsconv_forward.6} parent=5 // pred_fallthru
      _
  $region6: #{dsconv_forward.6} parent=0 // loop_footer
    %s17 = sadd.s32 1, %s13
  $region7: #{dsconv_forward.6} parent=0 // loop_footer_branch
    %12 = sbr.rel target = $region3
  $region8: #{dsconv_forward.6} parent=0 // loop_exit
    _

</llo_original>
